<compile_context>
chip_gen: v7x
topology: tpu7x:2x2x1
jax: 0.10.0
libtpu: 0.0.40
codegen_flags: <defaults>
</compile_context>

<pallas_src>
from functools import partial

import jax
import jax.numpy as jnp
import numpy as np
from jax.experimental import pallas as pl
from jax.experimental.pallas import tpu as pltpu


def _round_up(n, m):
    return ((n + m - 1) // m) * m


def _pick_b_blk(batch):
    """Batch rows per grid step: big enough to amortize per-step overhead,
    small enough to keep >=2 grid steps (pipelining / megacore) for small B."""
    b8 = _round_up(batch, 8)
    if b8 >= 64:
        return 32
    if b8 <= 8:
        return 8
    return max(8, (b8 // 2) // 8 * 8)


def _dcl_head_kernel(x_ref, wm_ref, pool2_ref, wstack_ref, bmask_ref,
                     logits_ref, mask_ref):
    # x block: (b_blk, C//g, g*HW) -- channel groups on sublanes, merged
    # (group, spatial) on lanes.  Upcast once (bf16 features supported).
    x = x_ref[...].astype(jnp.float32)
    b_blk, _, L = x.shape
    g = wstack_ref.shape[0]
    hw = L // g
    inv_hw = 1.0 / hw

    # --- Convmask (1x1 conv): lane-broadcast weight (host constant), then a
    #     sublane (channel) reduction on the VPU/XLU ---
    s = jnp.sum(x * wm_ref[...][None, :, :], axis=1)          # (b_blk, g*HW)

    # --- AvgPool2d(2,2) as a lane-dense MXU matmul; bias folded post-pool
    #     (pool weights sum to 1); tanh on the EUP.  Padded columns are
    #     sliced off outside the kernel. ---
    mp = jnp.dot(s, pool2_ref[...], preferred_element_type=jnp.float32)
    mask_ref[...] = jnp.tanh(mp + bmask_ref[0])

    # --- AdaptiveAvgPool2d(1) + classifier/classifier_swap (fused, padded) ---
    # TODO(synk): on v7x the per-group lane reduction below could be moved to
    # the MXU (x.reshape(b*C2, L) @ half-indicator columns) at the cost of a
    # small (b_blk, C) relayout; kept on the XLU here since it lowers robustly
    # and hides under DMA on v5e/v6e.
    acc = jnp.zeros((b_blk, wstack_ref.shape[2]), jnp.float32)
    for j in range(g):                                        # g is static (<=2)
        fj = jnp.sum(x[:, :, j * hw:(j + 1) * hw], axis=2) * inv_hw  # (b_blk, C2)
        acc = acc + jnp.dot(fj, wstack_ref[j],
                            preferred_element_type=jnp.float32)
    logits_ref[...] = acc


@partial(jax.jit, static_argnames=("b_blk",))
def dcl_head(x_nchw, w_mask, b_mask, w_cls, w_swap, b_blk=None):
    """Forward of DCL downstream of the backbone.

    x_nchw : (B, 576, H, W) backbone features (NCHW; f32 or bf16)
    w_mask : (1, 576, 1, 1) Conv2d weight   b_mask : (1,) Conv2d bias
    w_cls  : (num_classes, 576)             w_swap : (n_swap, 576)
    Returns (classifier_logits, classifier_swap_logits, mask_flat).
    """
    B, C, H, W = x_nchw.shape
    HW = H * W
    Hq, Wq = H // 2, W // 2               # AvgPool2d(2,2) floors odd dims
    HW4 = Hq * Wq
    nc = w_cls.shape[0]
    ns = w_swap.shape[0]
    nco = nc + ns

    # Lane-merge factor: fold g channels into the lane axis (free reshape of
    # contiguous NCHW) so the 128-lane vregs are full when HW < 128.
    if HW < 128 and 128 % HW == 0 and C % (128 // HW) == 0:
        g = 128 // HW
    else:
        g = 1
    C2 = C // g
    L = g * HW

    if b_blk is None:
        b_blk = _pick_b_blk(B)
    Bp = _round_up(B, b_blk)

    # Native layout, free reshape (no transpose), input dtype preserved.
    x = x_nchw.reshape(B, C2, L)
    if Bp != B:
        x = jnp.pad(x, ((0, Bp - B), (0, 0), (0, 0)))

    # Lane-dense padded output widths (unmasked vector stores).
    NPAD = _round_up(max(nco, 1), 128)
    MPAD = _round_up(max(HW4, 1), 128)

    # Constant pooling matrix: pool_t[p, q] = 0.25 if pixel p lies in the 2x2
    # window of pooled output q (odd rows/cols floor-cropped like PyTorch).
    # Tiled over the g channel groups and zero-padded to MPAD columns.
    h_idx = np.arange(HW) // W
    w_idx = np.arange(HW) % W
    q_of_p = np.where((h_idx // 2 < Hq) & (w_idx // 2 < Wq),
                      (h_idx // 2) * Wq + (w_idx // 2), -1)
    pool_np = (q_of_p[:, None] == np.arange(HW4)[None, :]).astype(np.float32) * 0.25
    pool_np = np.tile(pool_np, (g, 1))                        # (L, HW4)
    pool_np = np.pad(pool_np, ((0, 0), (0, MPAD - HW4)))      # (L, MPAD)
    pool2 = jnp.asarray(pool_np)

    # Convmask weight pre-broadcast on the host to the merged (C2, L) layout:
    # wm[c2, j*HW + p] = w[g*c2 + j].
    wm = jnp.repeat(w_mask.reshape(C2, g).astype(jnp.float32), HW, axis=1)
    bmask = b_mask.reshape(1).astype(jnp.float32)             # SMEM scalar

    # classifier + classifier_swap fused (bias-free), zero-padded to NPAD
    # lane-dense columns, split by channel residue mod g to match the merged
    # layout: wstack[j] = wcomb rows for channels {g*c2 + j}.
    wcomb = jnp.concatenate([w_cls, w_swap], axis=0).T.astype(jnp.float32)  # (C, nco)
    wcomb = jnp.pad(wcomb, ((0, 0), (0, NPAD - nco)))
    wstack = jnp.stack([wcomb[j::g] for j in range(g)], axis=0)  # (g, C2, NPAD)

    grid_spec = pltpu.PrefetchScalarGridSpec(
        num_scalar_prefetch=0,
        grid=(Bp // b_blk,),
        in_specs=[
            pl.BlockSpec((b_blk, C2, L), lambda b: (b, 0, 0)),      # x
            pl.BlockSpec((C2, L), lambda b: (0, 0)),                # conv weight
            pl.BlockSpec((L, MPAD), lambda b: (0, 0)),              # pooling mat
            pl.BlockSpec((g, C2, NPAD), lambda b: (0, 0, 0)),       # classifier
            pl.BlockSpec(memory_space=pltpu.MemorySpace.SMEM),      # conv bias
        ],
        out_specs=[
            pl.BlockSpec((b_blk, NPAD), lambda b: (b, 0)),          # fused logits
            pl.BlockSpec((b_blk, MPAD), lambda b: (b, 0)),          # mask
        ],
    )

    itemsize = jnp.dtype(x.dtype).itemsize
    cost = pl.CostEstimate(
        flops=int(Bp * (3 * C * HW + 2 * L * MPAD + 2 * C * NPAD)),
        transcendentals=int(Bp * MPAD),
        bytes_accessed=int(itemsize * Bp * C * HW
                           + 4 * (C2 * L + L * MPAD + g * C2 * NPAD
                                  + Bp * NPAD + Bp * MPAD)),
    )

    logits, mask = pl.pallas_call(
        _dcl_head_kernel,
        out_shape=(jax.ShapeDtypeStruct((Bp, NPAD), jnp.float32),
                   jax.ShapeDtypeStruct((Bp, MPAD), jnp.float32)),
        grid_spec=grid_spec,
        compiler_params=pltpu.CompilerParams(
            dimension_semantics=("parallel",),      # megacore / v7x 2-TC sharding
            vmem_limit_bytes=32 * 1024 * 1024),     # explicit budget (v5e/v7x)
        cost_estimate=cost,
    )(x, wm, pool2, wstack, bmask)

    logits = logits[:B, :nco]
    return logits[:, :nc], logits[:, nc:], mask[:B, :HW4]


def dcl_head_ref(x_nchw, w_mask, b_mask, w_cls, w_swap):
    """Pure-JAX reference mirroring the PyTorch forward semantics."""
    B, C, H, W = x_nchw.shape
    Hq, Wq = H // 2, W // 2
    x_f = x_nchw.astype(jnp.float32)
    m = jnp.einsum("bchw,oc->bohw", x_f, w_mask.reshape(1, C).astype(jnp.float32))
    m = m + b_mask.reshape(1, 1, 1, 1)
    m = m[:, :, :2 * Hq, :2 * Wq].reshape(B, 1, Hq, 2, Wq, 2).mean(axis=(3, 5))
    m = jnp.tanh(m).reshape(B, -1)
    feat = x_f.mean(axis=(2, 3))
    return feat @ w_cls.T, feat @ w_swap.T, m


if __name__ == "__main__":
    num_classes = 10
    cls_2, cls_2xmul = True, False          # classifier_swap: Linear(576, 2)
    n_swap = 2 * num_classes if cls_2xmul else 2

    B, C, H, W = 12, 576, 8, 8              # small backbone feature map
    key = jax.random.PRNGKey(0)
    k_x, k_wm, k_bm, k_wc, k_ws = jax.random.split(key, 5)

    x = jax.random.normal(k_x, (B, C, H, W), dtype=jnp.float32)
    w_mask = jax.random.normal(k_wm, (1, C, 1, 1), dtype=jnp.float32) * 0.05
    b_mask = jax.random.normal(k_bm, (1,), dtype=jnp.float32) * 0.05
    w_cls = jax.random.normal(k_wc, (num_classes, C), dtype=jnp.float32) * 0.05
    w_swap = jax.random.normal(k_ws, (n_swap, C), dtype=jnp.float32) * 0.05

    out_cls, out_swap, out_mask = dcl_head(x, w_mask, b_mask, w_cls, w_swap)
    jax.block_until_ready((out_cls, out_swap, out_mask))

    ref_cls, ref_swap, ref_mask = dcl_head_ref(x, w_mask, b_mask, w_cls, w_swap)
    assert out_cls.shape == (B, num_classes)
    assert out_swap.shape == (B, n_swap)
    assert out_mask.shape == (B, (H // 2) * (W // 2))
    assert jnp.allclose(out_cls, ref_cls, atol=1e-4, rtol=1e-4)
    assert jnp.allclose(out_swap, ref_swap, atol=1e-4, rtol=1e-4)
    assert jnp.allclose(out_mask, ref_mask, atol=1e-4, rtol=1e-4)

    print("KERNEL_OK")
</pallas_src>

<mosaic_0001>
module attributes {stable_mosaic.version = 11 : i64} {
  func.func @_dcl_head_kernel(%arg0: i32, %arg1: memref<8x288x128xf32, #tpu.memory_space<vmem>>, %arg2: memref<288x128xf32, #tpu.memory_space<vmem>>, %arg3: memref<128x128xf32, #tpu.memory_space<vmem>>, %arg4: memref<2x288x128xf32, #tpu.memory_space<vmem>>, %arg5: memref<1xf32, #tpu.memory_space<smem>>, %arg6: memref<8x128xf32, #tpu.memory_space<vmem>>, %arg7: memref<8x128xf32, #tpu.memory_space<vmem>>) attributes {dimension_semantics = [#tpu.dimension_semantics<parallel>], iteration_bounds = array<i64: 2>, scalar_prefetch = 0 : i64, scratch_operands = 0 : i64, tpu.core_type = #tpu.core_type<tc>, window_params = [{transform_indices = @transform_0, window_bounds = array<i64: 8, 288, 128>}, {pipeline_mode = #tpu.pipeline_mode<synchronous>, transform_indices = @transform_1, window_bounds = array<i64: 288, 128>}, {pipeline_mode = #tpu.pipeline_mode<synchronous>, transform_indices = @transform_2, window_bounds = array<i64: 128, 128>}, {pipeline_mode = #tpu.pipeline_mode<synchronous>, transform_indices = @transform_3, window_bounds = array<i64: 2, 288, 128>}, {transform_indices = @transform_4, window_bounds = array<i64: 1>}, {transform_indices = @transform_5, window_bounds = array<i64: 8, 128>}, {transform_indices = @transform_6, window_bounds = array<i64: 8, 128>}]} {
    %c0 = arith.constant 0 : index
    %c0_0 = arith.constant 0 : index
    %c0_1 = arith.constant 0 : index
    %0 = vector.load %arg1[%c0, %c0_0, %c0_1] : memref<8x288x128xf32, #tpu.memory_space<vmem>>, vector<8x288x128xf32>
    %c0_2 = arith.constant 0 : index
    %c0_3 = arith.constant 0 : index
    %1 = vector.load %arg2[%c0_2, %c0_3] : memref<288x128xf32, #tpu.memory_space<vmem>>, vector<288x128xf32>
    %2 = vector.shape_cast %1 : vector<288x128xf32> to vector<1x288x128xf32>
    %3 = vector.broadcast %2 : vector<1x288x128xf32> to vector<8x288x128xf32>
    %4 = arith.mulf %0, %3 : vector<8x288x128xf32>
    %cst = arith.constant dense<0.000000e+00> : vector<8x128xf32>
    %5 = vector.multi_reduction <add>, %4, %cst [1] : vector<8x288x128xf32> to vector<8x128xf32>
    %c0_4 = arith.constant 0 : index
    %c0_5 = arith.constant 0 : index
    %6 = vector.load %arg3[%c0_4, %c0_5] : memref<128x128xf32, #tpu.memory_space<vmem>>, vector<128x128xf32>
    %cst_6 = arith.constant dense<0.000000e+00> : vector<8x128xf32>
    %7 = tpu.matmul %5, %6, %cst_6 {dimension_numbers = #tpu.dot_dimension_numbers<[1], [0], [0], [1], [0, 0, 1, 1], [], []>} : vector<8x128xf32>, vector<128x128xf32>, vector<8x128xf32> -> vector<8x128xf32>
    %c0_7 = arith.constant 0 : index
    %8 = memref.load %arg5[%c0_7] : memref<1xf32, #tpu.memory_space<smem>>
    %9 = vector.broadcast %8 : f32 to vector<8x128xf32>
    %10 = arith.addf %7, %9 : vector<8x128xf32>
    %11 = math.tanh %10 : vector<8x128xf32>
    %c0_8 = arith.constant 0 : index
    %c0_9 = arith.constant 0 : index
    %12 = vector.load %arg7[%c0_8, %c0_9] : memref<8x128xf32, #tpu.memory_space<vmem>>, vector<8x128xf32>
    tpu.vector_store %arg7[%c0_8, %c0_9], %11 {strides = array<i32>} : memref<8x128xf32, #tpu.memory_space<vmem>>, vector<8x128xf32>,
    %cst_10 = arith.constant 0.000000e+00 : f32
    %13 = vector.broadcast %cst_10 : f32 to vector<8x128xf32>
    %14 = vector.extract_strided_slice %0 {offsets = [0, 0, 0], sizes = [8, 288, 64], strides = [1, 1, 1]} : vector<8x288x128xf32> to vector<8x288x64xf32>
    %cst_11 = arith.constant dense<0.000000e+00> : vector<8x288xf32>
    %15 = vector.multi_reduction <add>, %14, %cst_11 [2] : vector<8x288x64xf32> to vector<8x288xf32>
    %cst_12 = arith.constant 1.562500e-02 : f32
    %16 = vector.broadcast %cst_12 : f32 to vector<8x288xf32>
    %17 = arith.mulf %15, %16 : vector<8x288xf32>
    %c0_13 = arith.constant 0 : index
    %c0_14 = arith.constant 0 : index
    %c0_15 = arith.constant 0 : index
    %18 = vector.load %arg4[%c0_13, %c0_14, %c0_15] : memref<2x288x128xf32, #tpu.memory_space<vmem>>, vector<1x288x128xf32>
    %19 = vector.shape_cast %18 : vector<1x288x128xf32> to vector<288x128xf32>
    %cst_16 = arith.constant dense<0.000000e+00> : vector<8x128xf32>
    %20 = tpu.matmul %17, %19, %cst_16 {dimension_numbers = #tpu.dot_dimension_numbers<[1], [0], [0], [1], [0, 0, 1, 1], [], []>} : vector<8x288xf32>, vector<288x128xf32>, vector<8x128xf32> -> vector<8x128xf32>
    %21 = arith.addf %13, %20 : vector<8x128xf32>
    %22 = vector.extract_strided_slice %0 {offsets = [0, 0, 64], sizes = [8, 288, 64], strides = [1, 1, 1]} : vector<8x288x128xf32> to vector<8x288x64xf32>
    %cst_17 = arith.constant dense<0.000000e+00> : vector<8x288xf32>
    %23 = vector.multi_reduction <add>, %22, %cst_17 [2] : vector<8x288x64xf32> to vector<8x288xf32>
    %cst_18 = arith.constant 1.562500e-02 : f32
    %24 = vector.broadcast %cst_18 : f32 to vector<8x288xf32>
    %25 = arith.mulf %23, %24 : vector<8x288xf32>
    %c1 = arith.constant 1 : index
    %c0_19 = arith.constant 0 : index
    %c0_20 = arith.constant 0 : index
    %26 = vector.load %arg4[%c1, %c0_19, %c0_20] : memref<2x288x128xf32, #tpu.memory_space<vmem>>, vector<1x288x128xf32>
    %27 = vector.shape_cast %26 : vector<1x288x128xf32> to vector<288x128xf32>
    %cst_21 = arith.constant dense<0.000000e+00> : vector<8x128xf32>
    %28 = tpu.matmul %25, %27, %cst_21 {dimension_numbers = #tpu.dot_dimension_numbers<[1], [0], [0], [1], [0, 0, 1, 1], [], []>} : vector<8x288xf32>, vector<288x128xf32>, vector<8x128xf32> -> vector<8x128xf32>
    %29 = arith.addf %21, %28 : vector<8x128xf32>
    %c0_22 = arith.constant 0 : index
    %c0_23 = arith.constant 0 : index
    %30 = vector.load %arg6[%c0_22, %c0_23] : memref<8x128xf32, #tpu.memory_space<vmem>>, vector<8x128xf32>
    tpu.vector_store %arg6[%c0_22, %c0_23], %29 {strides = array<i32>} : memref<8x128xf32, #tpu.memory_space<vmem>>, vector<8x128xf32>,
    return
  }
  func.func @transform_0(%arg0: i32) -> (i32, i32, i32) {
    %c0_i32 = arith.constant 0 : i32
    %c0_i32_0 = arith.constant 0 : i32
    %c0_i32_1 = arith.constant 0 : i32
    return %arg0, %c0_i32, %c0_i32_0 : i32, i32, i32
  }
  func.func @transform_1(%arg0: i32) -> (i32, i32) {
    %c0_i32 = arith.constant 0 : i32
    %c0_i32_0 = arith.constant 0 : i32
    %c0_i32_1 = arith.constant 0 : i32
    return %c0_i32, %c0_i32_0 : i32, i32
  }
  func.func @transform_2(%arg0: i32) -> (i32, i32) {
    %c0_i32 = arith.constant 0 : i32
    %c0_i32_0 = arith.constant 0 : i32
    %c0_i32_1 = arith.constant 0 : i32
    return %c0_i32, %c0_i32_0 : i32, i32
  }
  func.func @transform_3(%arg0: i32) -> (i32, i32, i32) {
    %c0_i32 = arith.constant 0 : i32
    %c0_i32_0 = arith.constant 0 : i32
    %c0_i32_1 = arith.constant 0 : i32
    %c0_i32_2 = arith.constant 0 : i32
    return %c0_i32, %c0_i32_0, %c0_i32_1 : i32, i32, i32
  }
  func.func @transform_4(%arg0: i32) -> i32 {
    %c0_i32 = arith.constant 0 : i32
    %c0_i32_0 = arith.constant 0 : i32
    return %c0_i32 : i32
  }
  func.func @transform_5(%arg0: i32) -> (i32, i32) {
    %c0_i32 = arith.constant 0 : i32
    %c0_i32_0 = arith.constant 0 : i32
    return %arg0, %c0_i32 : i32, i32
  }
  func.func @transform_6(%arg0: i32) -> (i32, i32) {
    %c0_i32 = arith.constant 0 : i32
    %c0_i32_0 = arith.constant 0 : i32
    return %arg0, %c0_i32 : i32, i32
  }
}

</mosaic_0001>

<llo_original>
// kernel: dcl_head.1
$region0: #{dcl_head.1}
  #allocation0 [shape = 'u32[]', space=smem, size = 0x4, offset = 0x4, fixed_abs, tag = 'smem constant byte address 0x4 - core index']
  #allocation1 [shape = 'u32[144,128]{1,0:T(1,128)}', space=vmem, size = 0x12000, scoped, tag = 'internal scratch']
  #allocation2 [shape = 'f32[1]{0:T(128)S(6)}', space=smem, size = 0x200, scoped, tag = 'scoped memory for dcl_head.1']
  %s0 = inlined_call_operand.vmem [shape: f32[16,288,128], index: 0, kind: input, shape index: {}]
  %s1 = inlined_call_operand.vmem [shape: f32[288,128], index: 1, kind: input, shape index: {}]
  %s2 = inlined_call_operand.vmem [shape: f32[128,128], index: 2, kind: input, shape index: {}]
  %s3 = inlined_call_operand.vmem [shape: f32[2,288,128], index: 3, kind: input, shape index: {}]
  %s4 = inlined_call_operand.<no memory space> [shape: f32[1], index: 4, kind: input, shape index: {}]
  %s5 = inlined_call_operand.vmem [shape: f32[16,128], index: 5, kind: output, shape index: {0}]
  %s6 = inlined_call_operand.hbm [shape: f32[16,128], index: 6, kind: output, shape index: {1}]
  %7 = xla_tuple %s5, %s6
  %s8 = sld [smem:[#allocation0]]
  $region61: #{dcl_head.1} parent=0
    _
  %s10 = ssub.s32 1, %s8
  %s11 = scalar_select 0, %s10, %s8
  %12 = sst [smem:[#allocation2]] %s4
  $region1: #{dcl_head.1} parent=0
    #allocation3 [shape = 'u8[8192]{0}', space=vmem, size = 0x2000, scoped, tag = 'output window, operand 1']
    #allocation4 [shape = 's32[2]{0}', space=sflag, size = 0x8, scoped, tag = 'scoped memory for dcl_head.1']
    %13 = vsyncpa [#allocation4], 0
    %s14 = scalar_lea.sflag [#allocation4], 1
    %15 = vsyncpa %s14, 0
    loop: start=0, step=1, limit=4
    $region2: #{dcl_head.1} parent=1 // loop_pre_header
      _
    $region3: #{dcl_head.1} parent=1 // loop_header
      %s17 = sphi 0, %s21
      %p18 = scmp.ge.s32.totalorder %s17, 4
      %s27 = sphi 0, %s29
      %s30 = sphi 0, %s27
      %s31 = sphi 0, %s30
      %s47 = sphi 0, %s31
      %s51 = sphi 0, %s51
      %s53 = sphi 0, %s51
      %s54 = sphi 0, %s53
      %s68 = sphi 0, %s54
      %s72 = sphi 0, %s72
      %s74 = sphi 0, %s72
      %s75 = sphi 0, %s74
      %s89 = sphi 0, %s75
      %s93 = sphi 0, %s93
      %s95 = sphi 0, %s93
      %s96 = sphi 0, %s95
      %s110 = sphi 0, %s96
      %s114 = sphi 0, %s114
      %s116 = sphi 0, %s114
      %s117 = sphi 0, %s116
      %s131 = sphi 0, %s117
      %s137 = sphi 0, %s139
      %s140 = sphi 0, %s137
      %s141 = sphi 0, %s140
      %s157 = sphi 0, %s141
      %s163 = sphi 0, %s165
      %s166 = sphi 0, %s163
      %s167 = sphi 0, %s166
      %s183 = sphi 0, %s167
    $region4: #{dcl_head.1} parent=1 // loop_header_branch
      %20 = sbr.rel (%p18) target = $region8
    $region5: #{dcl_head.1} parent=1 // loop_body
      %s22 = ssub.s32 %s17, 1
      %s23 = ssub.s32 %s17, 2
      %s24 = sadd.s32 %s17, 1
      %s25 = ssub.s32 %s17, %s24
      %p26 = scmp.eq.s32.totalorder %s25, 0
      %s28 = sadd.s32 %s27, 1
      %s29 = scalar_select %p26, %s27, %s28
      %p32 = pneg %p26
      %p33 = scmp.eq.s32.totalorder %s17, 1
      %p34 = por %p32, %p33
      %p35 = scmp.ne.s32.totalorder %s27, %s30
      %p36 = scmp.eq.s32.totalorder %s17, 0
      %p37 = por %p35, %p36
      %p38 = scmp.ne.s32.totalorder %s27, %s30
      %p39 = scmp.eq.s32.totalorder %s22, 1
      %p40 = por %p38, %p39
      %p41 = scmp.ne.s32.totalorder %s30, %s31
      %p42 = scmp.eq.s32.totalorder %s22, 0
      %p43 = por %p41, %p42
      %p44 = scmp.ne.s32.totalorder %s30, %s31
      %p45 = scmp.eq.s32.totalorder %s23, 1
      %p46 = por %p44, %p45
      %p48 = scmp.ne.s32.totalorder %s31, %s47
      %p49 = scmp.eq.s32.totalorder %s23, 0
      %p50 = por %p48, %p49
      %s52 = sadd.s32 %s51, 1
      %p55 = scmp.eq.s32.totalorder %s17, 1
      %p56 = scmp.ne.s32.totalorder %s51, %s53
      %p57 = scmp.eq.s32.totalorder %s17, 0
      %p58 = por %p56, %p57
      %p59 = scmp.ne.s32.totalorder %s51, %s53
      %p60 = scmp.eq.s32.totalorder %s22, 1
      %p61 = por %p59, %p60
      %p62 = scmp.ne.s32.totalorder %s53, %s54
      %p63 = scmp.eq.s32.totalorder %s22, 0
      %p64 = por %p62, %p63
      %p65 = scmp.ne.s32.totalorder %s53, %s54
      %p66 = scmp.eq.s32.totalorder %s23, 1
      %p67 = por %p65, %p66
      %p69 = scmp.ne.s32.totalorder %s54, %s68
      %p70 = scmp.eq.s32.totalorder %s23, 0
      %p71 = por %p69, %p70
      %s73 = sadd.s32 %s72, 1
      %p76 = scmp.eq.s32.totalorder %s17, 1
      %p77 = scmp.ne.s32.totalorder %s72, %s74
      %p78 = scmp.eq.s32.totalorder %s17, 0
      %p79 = por %p77, %p78
      %p80 = scmp.ne.s32.totalorder %s72, %s74
      %p81 = scmp.eq.s32.totalorder %s22, 1
      %p82 = por %p80, %p81
      %p83 = scmp.ne.s32.totalorder %s74, %s75
      %p84 = scmp.eq.s32.totalorder %s22, 0
      %p85 = por %p83, %p84
      %p86 = scmp.ne.s32.totalorder %s74, %s75
      %p87 = scmp.eq.s32.totalorder %s23, 1
      %p88 = por %p86, %p87
      %p90 = scmp.ne.s32.totalorder %s75, %s89
      %p91 = scmp.eq.s32.totalorder %s23, 0
      %p92 = por %p90, %p91
      %s94 = sadd.s32 %s93, 1
      %p97 = scmp.eq.s32.totalorder %s17, 1
      %p98 = scmp.ne.s32.totalorder %s93, %s95
      %p99 = scmp.eq.s32.totalorder %s17, 0
      %p100 = por %p98, %p99
      %p101 = scmp.ne.s32.totalorder %s93, %s95
      %p102 = scmp.eq.s32.totalorder %s22, 1
      %p103 = por %p101, %p102
      %p104 = scmp.ne.s32.totalorder %s95, %s96
      %p105 = scmp.eq.s32.totalorder %s22, 0
      %p106 = por %p104, %p105
      %p107 = scmp.ne.s32.totalorder %s95, %s96
      %p108 = scmp.eq.s32.totalorder %s23, 1
      %p109 = por %p107, %p108
      %p111 = scmp.ne.s32.totalorder %s96, %s110
      %p112 = scmp.eq.s32.totalorder %s23, 0
      %p113 = por %p111, %p112
      %s115 = sadd.s32 %s114, 1
      %p118 = scmp.eq.s32.totalorder %s17, 1
      %p119 = scmp.ne.s32.totalorder %s114, %s116
      %p120 = scmp.eq.s32.totalorder %s17, 0
      %p121 = por %p119, %p120
      %p122 = scmp.ne.s32.totalorder %s114, %s116
      %p123 = scmp.eq.s32.totalorder %s22, 1
      %p124 = por %p122, %p123
      %p125 = scmp.ne.s32.totalorder %s116, %s117
      %p126 = scmp.eq.s32.totalorder %s22, 0
      %p127 = por %p125, %p126
      %p128 = scmp.ne.s32.totalorder %s116, %s117
      %p129 = scmp.eq.s32.totalorder %s23, 1
      %p130 = por %p128, %p129
      %p132 = scmp.ne.s32.totalorder %s117, %s131
      %p133 = scmp.eq.s32.totalorder %s23, 0
      %p134 = por %p132, %p133
      %s135 = ssub.s32 %s17, %s24
      %p136 = scmp.eq.s32.totalorder %s135, 0
      %s138 = sadd.s32 %s137, 1
      %s139 = scalar_select %p136, %s137, %s138
      %p142 = pneg %p136
      %p143 = scmp.eq.s32.totalorder %s17, 1
      %p144 = por %p142, %p143
      %p145 = scmp.ne.s32.totalorder %s137, %s140
      %p146 = scmp.eq.s32.totalorder %s17, 0
      %p147 = por %p145, %p146
      %p148 = scmp.ne.s32.totalorder %s137, %s140
      %p149 = scmp.eq.s32.totalorder %s22, 1
      %p150 = por %p148, %p149
      %p151 = scmp.ne.s32.totalorder %s140, %s141
      %p152 = scmp.eq.s32.totalorder %s22, 0
      %p153 = por %p151, %p152
      %p154 = scmp.ne.s32.totalorder %s140, %s141
      %p155 = scmp.eq.s32.totalorder %s23, 1
      %p156 = por %p154, %p155
      %p158 = scmp.ne.s32.totalorder %s141, %s157
      %p159 = scmp.eq.s32.totalorder %s23, 0
      %p160 = por %p158, %p159
      %s161 = ssub.s32 %s17, %s24
      %p162 = scmp.eq.s32.totalorder %s161, 0
      %s164 = sadd.s32 %s163, 1
      %s165 = scalar_select %p162, %s163, %s164
      %p168 = pneg %p162
      %p169 = scmp.eq.s32.totalorder %s17, 1
      %p170 = por %p168, %p169
      %p171 = scmp.ne.s32.totalorder %s163, %s166
      %p172 = scmp.eq.s32.totalorder %s17, 0
      %p173 = por %p171, %p172
      %p174 = scmp.ne.s32.totalorder %s163, %s166
      %p175 = scmp.eq.s32.totalorder %s22, 1
      %p176 = por %p174, %p175
      %p177 = scmp.ne.s32.totalorder %s166, %s167
      %p178 = scmp.eq.s32.totalorder %s22, 0
      %p179 = por %p177, %p178
      %p180 = scmp.ne.s32.totalorder %s166, %s167
      %p181 = scmp.eq.s32.totalorder %s23, 1
      %p182 = por %p180, %p181
      %p184 = scmp.ne.s32.totalorder %s167, %s183
      %p185 = scmp.eq.s32.totalorder %s23, 0
      %p186 = por %p184, %p185
      %p187 = scmp.le.s32.totalorder 1, %s17
      %p188 = scmp.lt.s32.totalorder %s17, 3
      %p189 = pnand %p187, %p188
      %p190 = pneg %p189
      // Predicated region
      $region9: #{dcl_head.1} parent=5 // pred_check
        _
      $region10: #{dcl_head.1} parent=5 // pred_check_branch
        %192 = sbr.rel (%p189) target = $region12
      $region11: #{dcl_head.1} parent=5 // pred_region
        %s193 = ssub.s32 %s17, 1
        // Predicated region
        $region13: #{dcl_head.1} parent=11 // pred_check
          %p194 = pneg %p64
        $region14: #{dcl_head.1} parent=11 // pred_check_branch
          %196 = sbr.rel (%p194) target = $region16
        $region15: #{dcl_head.1} parent=11 // pred_region
          _
        $region16: #{dcl_head.1} parent=11 // pred_fallthru
          _
        // Predicated region
        $region17: #{dcl_head.1} parent=11 // pred_check
          %p197 = pneg %p85
        $region18: #{dcl_head.1} parent=11 // pred_check_branch
          %199 = sbr.rel (%p197) target = $region20
        $region19: #{dcl_head.1} parent=11 // pred_region
          _
        $region20: #{dcl_head.1} parent=11 // pred_fallthru
          _
        // Predicated region
        $region21: #{dcl_head.1} parent=11 // pred_check
          %p200 = pneg %p106
        $region22: #{dcl_head.1} parent=11 // pred_check_branch
          %202 = sbr.rel (%p200) target = $region24
        $region23: #{dcl_head.1} parent=11 // pred_region
          _
        $region24: #{dcl_head.1} parent=11 // pred_fallthru
          _
        // Predicated region
        $region25: #{dcl_head.1} parent=11 // pred_check
          %p203 = pneg %p127
        $region26: #{dcl_head.1} parent=11 // pred_check_branch
          %205 = sbr.rel (%p203) target = $region28
        $region27: #{dcl_head.1} parent=11 // pred_region
          _
        $region28: #{dcl_head.1} parent=11 // pred_fallthru
          _
      $region12: #{dcl_head.1} parent=5 // pred_fallthru
        _
      %p206 = scmp.lt.s32.totalorder %s17, 2
      // Predicated region
      $region29: #{dcl_head.1} parent=5 // pred_check
        %p207 = pneg %p206
      $region30: #{dcl_head.1} parent=5 // pred_check_branch
        %209 = sbr.rel (%p207) target = $region32
      $region31: #{dcl_head.1} parent=5 // pred_region
        // Predicated region
        $region33: #{dcl_head.1} parent=31 // pred_check
          %p210 = pneg %p37
        $region34: #{dcl_head.1} parent=31 // pred_check_branch
          %212 = sbr.rel (%p210) target = $region36
        $region35: #{dcl_head.1} parent=31 // pred_region
          %s213 = smul.u32 8, %s17
          %p214 = scmp.lt.s32.totalorder %s213, 15
          %s215 = scalar_select %p214, %s213, 15
          %s216 = smul.addr %s215, 36
          %s217 = smul.addr %s216, 8
          %s218 = scalar_lea.vmem %s0, %s217
          %s219 = smul.u32 8, %s17
        $region36: #{dcl_head.1} parent=31 // pred_fallthru
          _
      $region32: #{dcl_head.1} parent=5 // pred_fallthru
        _
      %p220 = scmp.le.s32.totalorder 1, %s17
      %p221 = scmp.lt.s32.totalorder %s17, 3
      %p222 = pnand %p220, %p221
      %p223 = pneg %p222
      // Predicated region
      $region37: #{dcl_head.1} parent=5 // pred_check
        _
      $region38: #{dcl_head.1} parent=5 // pred_check_branch
        %225 = sbr.rel (%p222) target = $region40
      $region39: #{dcl_head.1} parent=5 // pred_region
        %s226 = ssub.s32 %s17, 1
        %s227 = smul.u32 8, %s22
        %p228 = scmp.lt.s32.totalorder %s227, 15
        %s229 = scalar_select %p228, %s227, 15
        %s230 = smul.addr %s229, 36
        %s231 = smul.addr %s230, 8
        %s232 = scalar_lea.vmem %s0, %s231
        %p233 = pneg %p43
        %p234 = pneg %p40
        %p235 = pneg %p64
        %p236 = pneg %p61
        %p237 = pneg %p85
        %p238 = pneg %p82
        %p239 = pneg %p106
        %p240 = pneg %p103
        %p241 = pneg %p127
        %p242 = pneg %p124
        %p243 = pneg %p153
        %p244 = pneg %p150
        %p245 = scmp.lt.s32.totalorder %s22, 1
        %s246 = scalar_select %p245, %s22, 1
        %s247 = smul.addr %s246, 8
        %s248 = scalar_lea.vmem %s5, %s247
        %p249 = pneg %p179
        %p250 = pneg %p176
        %s251 = sand.u32 %s166, 1
        %s252 = scalar_lea.sflag [#allocation4], %s251
        %s253 = sand.u32 %s166, 1
        %s254 = smul.addr %s253, 8
        %s255 = scalar_lea.vmem [#allocation3], %s254
        %s256 = smul.u32 8, %s22
        %p257 = scmp.lt.s32.totalorder %s256, 15
        %s258 = scalar_select %p257, %s256, 15
        %s259 = smul.addr %s258, 36
        %s260 = smul.addr %s259, 8
        %s261 = scalar_lea.vmem %s0, %s260
        %s262 = smul.u32 8, %s22
        %p263 = scmp.lt.s32.totalorder %s22, 1
        %s264 = scalar_select %p263, %s22, 1
        %s265 = smul.addr %s264, 8
        %s266 = scalar_lea.vmem %s5, %s265
        %v267 = vld [vmem:[%s261] sm:$0xff]
        %v268 = vld [vmem:[%s261 + $0x8] sm:$0xff]
        %v269 = vld [vmem:[%s261 + $0x10] sm:$0xff]
        %v270 = vld [vmem:[%s261 + $0x18] sm:$0xff]
        %v271 = vld [vmem:[%s261 + $0x20] sm:$0xff]
        %v272 = vld [vmem:[%s261 + $0x28] sm:$0xff]
        %v273 = vld [vmem:[%s261 + $0x30] sm:$0xff]
        %v274 = vld [vmem:[%s261 + $0x38] sm:$0xff]
        %v275 = vld [vmem:[%s261 + $0x40] sm:$0xff]
        %v276 = vld [vmem:[%s261 + $0x48] sm:$0xff]
        %v277 = vld [vmem:[%s261 + $0x50] sm:$0xff]
        %v278 = vld [vmem:[%s261 + $0x58] sm:$0xff]
        %v279 = vld [vmem:[%s261 + $0x60] sm:$0xff]
        %v280 = vld [vmem:[%s261 + $0x68] sm:$0xff]
        %v281 = vld [vmem:[%s261 + $0x70] sm:$0xff]
        %v282 = vld [vmem:[%s261 + $0x78] sm:$0xff]
        %v283 = vld [vmem:[%s261 + $0x80] sm:$0xff]
        %v284 = vld [vmem:[%s261 + $0x88] sm:$0xff]
        %v285 = vld [vmem:[%s261 + $0x90] sm:$0xff]
        %v286 = vld [vmem:[%s261 + $0x98] sm:$0xff]
        %v287 = vld [vmem:[%s261 + $0xa0] sm:$0xff]
        %v288 = vld [vmem:[%s261 + $0xa8] sm:$0xff]
        %v289 = vld [vmem:[%s261 + $0xb0] sm:$0xff]
        %v290 = vld [vmem:[%s261 + $0xb8] sm:$0xff]
        %v291 = vld [vmem:[%s261 + $0xc0] sm:$0xff]
        %v292 = vld [vmem:[%s261 + $0xc8] sm:$0xff]
        %v293 = vld [vmem:[%s261 + $0xd0] sm:$0xff]
        %v294 = vld [vmem:[%s261 + $0xd8] sm:$0xff]
        %v295 = vld [vmem:[%s261 + $0xe0] sm:$0xff]
        %v296 = vld [vmem:[%s261 + $0xe8] sm:$0xff]
        %v297 = vld [vmem:[%s261 + $0xf0] sm:$0xff]
        %v298 = vld [vmem:[%s261 + $0xf8] sm:$0xff]
        %v299 = vld [vmem:[%s261 + $0x100] sm:$0xff]
        %v300 = vld [vmem:[%s261 + $0x108] sm:$0xff]
        %v301 = vld [vmem:[%s261 + $0x110] sm:$0xff]
        %v302 = vld [vmem:[%s261 + $0x118] sm:$0xff]
        %v303 = vld [vmem:[%s261 + $0x120] sm:$0xff]
        %v304 = vld [vmem:[%s261 + $0x128] sm:$0xff]
        %v305 = vld [vmem:[%s261 + $0x130] sm:$0xff]
        %v306 = vld [vmem:[%s261 + $0x138] sm:$0xff]
        %v307 = vld [vmem:[%s261 + $0x140] sm:$0xff]
        %v308 = vld [vmem:[%s261 + $0x148] sm:$0xff]
        %v309 = vld [vmem:[%s261 + $0x150] sm:$0xff]
        %v310 = vld [vmem:[%s261 + $0x158] sm:$0xff]
        %v311 = vld [vmem:[%s261 + $0x160] sm:$0xff]
        %v312 = vld [vmem:[%s261 + $0x168] sm:$0xff]
        %v313 = vld [vmem:[%s261 + $0x170] sm:$0xff]
        %v314 = vld [vmem:[%s261 + $0x178] sm:$0xff]
        %v315 = vld [vmem:[%s261 + $0x180] sm:$0xff]
        %v316 = vld [vmem:[%s261 + $0x188] sm:$0xff]
        %v317 = vld [vmem:[%s261 + $0x190] sm:$0xff]
        %v318 = vld [vmem:[%s261 + $0x198] sm:$0xff]
        %v319 = vld [vmem:[%s261 + $0x1a0] sm:$0xff]
        %v320 = vld [vmem:[%s261 + $0x1a8] sm:$0xff]
        %v321 = vld [vmem:[%s261 + $0x1b0] sm:$0xff]
        %v322 = vld [vmem:[%s261 + $0x1b8] sm:$0xff]
        %v323 = vld [vmem:[%s261 + $0x1c0] sm:$0xff]
        %v324 = vld [vmem:[%s261 + $0x1c8] sm:$0xff]
        %v325 = vld [vmem:[%s261 + $0x1d0] sm:$0xff]
        %v326 = vld [vmem:[%s261 + $0x1d8] sm:$0xff]
        %v327 = vld [vmem:[%s261 + $0x1e0] sm:$0xff]
        %v328 = vld [vmem:[%s261 + $0x1e8] sm:$0xff]
        %v329 = vld [vmem:[%s261 + $0x1f0] sm:$0xff]
        %v330 = vld [vmem:[%s261 + $0x1f8] sm:$0xff]
        %v331 = vld [vmem:[%s261 + $0x200] sm:$0xff]
        %v332 = vld [vmem:[%s261 + $0x208] sm:$0xff]
        %v333 = vld [vmem:[%s261 + $0x210] sm:$0xff]
        %v334 = vld [vmem:[%s261 + $0x218] sm:$0xff]
        %v335 = vld [vmem:[%s261 + $0x220] sm:$0xff]
        %v336 = vld [vmem:[%s261 + $0x228] sm:$0xff]
        %v337 = vld [vmem:[%s261 + $0x230] sm:$0xff]
        %v338 = vld [vmem:[%s261 + $0x238] sm:$0xff]
        %v339 = vld [vmem:[%s261 + $0x240] sm:$0xff]
        %v340 = vld [vmem:[%s261 + $0x248] sm:$0xff]
        %v341 = vld [vmem:[%s261 + $0x250] sm:$0xff]
        %v342 = vld [vmem:[%s261 + $0x258] sm:$0xff]
        %v343 = vld [vmem:[%s261 + $0x260] sm:$0xff]
        %v344 = vld [vmem:[%s261 + $0x268] sm:$0xff]
        %v345 = vld [vmem:[%s261 + $0x270] sm:$0xff]
        %v346 = vld [vmem:[%s261 + $0x278] sm:$0xff]
        %v347 = vld [vmem:[%s261 + $0x280] sm:$0xff]
        %v348 = vld [vmem:[%s261 + $0x288] sm:$0xff]
        %v349 = vld [vmem:[%s261 + $0x290] sm:$0xff]
        %v350 = vld [vmem:[%s261 + $0x298] sm:$0xff]
        %v351 = vld [vmem:[%s261 + $0x2a0] sm:$0xff]
        %v352 = vld [vmem:[%s261 + $0x2a8] sm:$0xff]
        %v353 = vld [vmem:[%s261 + $0x2b0] sm:$0xff]
        %v354 = vld [vmem:[%s261 + $0x2b8] sm:$0xff]
        %v355 = vld [vmem:[%s261 + $0x2c0] sm:$0xff]
        %v356 = vld [vmem:[%s261 + $0x2c8] sm:$0xff]
        %v357 = vld [vmem:[%s261 + $0x2d0] sm:$0xff]
        %v358 = vld [vmem:[%s261 + $0x2d8] sm:$0xff]
        %v359 = vld [vmem:[%s261 + $0x2e0] sm:$0xff]
        %v360 = vld [vmem:[%s261 + $0x2e8] sm:$0xff]
        %v361 = vld [vmem:[%s261 + $0x2f0] sm:$0xff]
        %v362 = vld [vmem:[%s261 + $0x2f8] sm:$0xff]
        %v363 = vld [vmem:[%s261 + $0x300] sm:$0xff]
        %v364 = vld [vmem:[%s261 + $0x308] sm:$0xff]
        %v365 = vld [vmem:[%s261 + $0x310] sm:$0xff]
        %v366 = vld [vmem:[%s261 + $0x318] sm:$0xff]
        %v367 = vld [vmem:[%s261 + $0x320] sm:$0xff]
        %v368 = vld [vmem:[%s261 + $0x328] sm:$0xff]
        %v369 = vld [vmem:[%s261 + $0x330] sm:$0xff]
        %v370 = vld [vmem:[%s261 + $0x338] sm:$0xff]
        %v371 = vld [vmem:[%s261 + $0x340] sm:$0xff]
        %v372 = vld [vmem:[%s261 + $0x348] sm:$0xff]
        %v373 = vld [vmem:[%s261 + $0x350] sm:$0xff]
        %v374 = vld [vmem:[%s261 + $0x358] sm:$0xff]
        %v375 = vld [vmem:[%s261 + $0x360] sm:$0xff]
        %v376 = vld [vmem:[%s261 + $0x368] sm:$0xff]
        %v377 = vld [vmem:[%s261 + $0x370] sm:$0xff]
        %v378 = vld [vmem:[%s261 + $0x378] sm:$0xff]
        %v379 = vld [vmem:[%s261 + $0x380] sm:$0xff]
        %v380 = vld [vmem:[%s261 + $0x388] sm:$0xff]
        %v381 = vld [vmem:[%s261 + $0x390] sm:$0xff]
        %v382 = vld [vmem:[%s261 + $0x398] sm:$0xff]
        %v383 = vld [vmem:[%s261 + $0x3a0] sm:$0xff]
        %v384 = vld [vmem:[%s261 + $0x3a8] sm:$0xff]
        %v385 = vld [vmem:[%s261 + $0x3b0] sm:$0xff]
        %v386 = vld [vmem:[%s261 + $0x3b8] sm:$0xff]
        %v387 = vld [vmem:[%s261 + $0x3c0] sm:$0xff]
        %v388 = vld [vmem:[%s261 + $0x3c8] sm:$0xff]
        %v389 = vld [vmem:[%s261 + $0x3d0] sm:$0xff]
        %v390 = vld [vmem:[%s261 + $0x3d8] sm:$0xff]
        %v391 = vld [vmem:[%s261 + $0x3e0] sm:$0xff]
        %v392 = vld [vmem:[%s261 + $0x3e8] sm:$0xff]
        %v393 = vld [vmem:[%s261 + $0x3f0] sm:$0xff]
        %v394 = vld [vmem:[%s261 + $0x3f8] sm:$0xff]
        %v395 = vld [vmem:[%s261 + $0x400] sm:$0xff]
        %v396 = vld [vmem:[%s261 + $0x408] sm:$0xff]
        %v397 = vld [vmem:[%s261 + $0x410] sm:$0xff]
        %v398 = vld [vmem:[%s261 + $0x418] sm:$0xff]
        %v399 = vld [vmem:[%s261 + $0x420] sm:$0xff]
        %v400 = vld [vmem:[%s261 + $0x428] sm:$0xff]
        %v401 = vld [vmem:[%s261 + $0x430] sm:$0xff]
        %v402 = vld [vmem:[%s261 + $0x438] sm:$0xff]
        %v403 = vld [vmem:[%s261 + $0x440] sm:$0xff]
        %v404 = vld [vmem:[%s261 + $0x448] sm:$0xff]
        %v405 = vld [vmem:[%s261 + $0x450] sm:$0xff]
        %v406 = vld [vmem:[%s261 + $0x458] sm:$0xff]
        %v407 = vld [vmem:[%s261 + $0x460] sm:$0xff]
        %v408 = vld [vmem:[%s261 + $0x468] sm:$0xff]
        %v409 = vld [vmem:[%s261 + $0x470] sm:$0xff]
        %v410 = vld [vmem:[%s261 + $0x478] sm:$0xff]
        %v411 = vld [vmem:[%s261 + $0x480] sm:$0xff]
        %v412 = vld [vmem:[%s261 + $0x488] sm:$0xff]
        %v413 = vld [vmem:[%s261 + $0x490] sm:$0xff]
        %v414 = vld [vmem:[%s261 + $0x498] sm:$0xff]
        %v415 = vld [vmem:[%s261 + $0x4a0] sm:$0xff]
        %v416 = vld [vmem:[%s261 + $0x4a8] sm:$0xff]
        %v417 = vld [vmem:[%s261 + $0x4b0] sm:$0xff]
        %v418 = vld [vmem:[%s261 + $0x4b8] sm:$0xff]
        %v419 = vld [vmem:[%s261 + $0x4c0] sm:$0xff]
        %v420 = vld [vmem:[%s261 + $0x4c8] sm:$0xff]
        %v421 = vld [vmem:[%s261 + $0x4d0] sm:$0xff]
        %v422 = vld [vmem:[%s261 + $0x4d8] sm:$0xff]
        %v423 = vld [vmem:[%s261 + $0x4e0] sm:$0xff]
        %v424 = vld [vmem:[%s261 + $0x4e8] sm:$0xff]
        %v425 = vld [vmem:[%s261 + $0x4f0] sm:$0xff]
        %v426 = vld [vmem:[%s261 + $0x4f8] sm:$0xff]
        %v427 = vld [vmem:[%s261 + $0x500] sm:$0xff]
        %v428 = vld [vmem:[%s261 + $0x508] sm:$0xff]
        %v429 = vld [vmem:[%s261 + $0x510] sm:$0xff]
        %v430 = vld [vmem:[%s261 + $0x518] sm:$0xff]
        %v431 = vld [vmem:[%s261 + $0x520] sm:$0xff]
        %v432 = vld [vmem:[%s261 + $0x528] sm:$0xff]
        %v433 = vld [vmem:[%s261 + $0x530] sm:$0xff]
        %v434 = vld [vmem:[%s261 + $0x538] sm:$0xff]
        %v435 = vld [vmem:[%s261 + $0x540] sm:$0xff]
        %v436 = vld [vmem:[%s261 + $0x548] sm:$0xff]
        %v437 = vld [vmem:[%s261 + $0x550] sm:$0xff]
        %v438 = vld [vmem:[%s261 + $0x558] sm:$0xff]
        %v439 = vld [vmem:[%s261 + $0x560] sm:$0xff]
        %v440 = vld [vmem:[%s261 + $0x568] sm:$0xff]
        %v441 = vld [vmem:[%s261 + $0x570] sm:$0xff]
        %v442 = vld [vmem:[%s261 + $0x578] sm:$0xff]
        %v443 = vld [vmem:[%s261 + $0x580] sm:$0xff]
        %v444 = vld [vmem:[%s261 + $0x588] sm:$0xff]
        %v445 = vld [vmem:[%s261 + $0x590] sm:$0xff]
        %v446 = vld [vmem:[%s261 + $0x598] sm:$0xff]
        %v447 = vld [vmem:[%s261 + $0x5a0] sm:$0xff]
        %v448 = vld [vmem:[%s261 + $0x5a8] sm:$0xff]
        %v449 = vld [vmem:[%s261 + $0x5b0] sm:$0xff]
        %v450 = vld [vmem:[%s261 + $0x5b8] sm:$0xff]
        %v451 = vld [vmem:[%s261 + $0x5c0] sm:$0xff]
        %v452 = vld [vmem:[%s261 + $0x5c8] sm:$0xff]
        %v453 = vld [vmem:[%s261 + $0x5d0] sm:$0xff]
        %v454 = vld [vmem:[%s261 + $0x5d8] sm:$0xff]
        %v455 = vld [vmem:[%s261 + $0x5e0] sm:$0xff]
        %v456 = vld [vmem:[%s261 + $0x5e8] sm:$0xff]
        %v457 = vld [vmem:[%s261 + $0x5f0] sm:$0xff]
        %v458 = vld [vmem:[%s261 + $0x5f8] sm:$0xff]
        %v459 = vld [vmem:[%s261 + $0x600] sm:$0xff]
        %v460 = vld [vmem:[%s261 + $0x608] sm:$0xff]
        %v461 = vld [vmem:[%s261 + $0x610] sm:$0xff]
        %v462 = vld [vmem:[%s261 + $0x618] sm:$0xff]
        %v463 = vld [vmem:[%s261 + $0x620] sm:$0xff]
        %v464 = vld [vmem:[%s261 + $0x628] sm:$0xff]
        %v465 = vld [vmem:[%s261 + $0x630] sm:$0xff]
        %v466 = vld [vmem:[%s261 + $0x638] sm:$0xff]
        %v467 = vld [vmem:[%s261 + $0x640] sm:$0xff]
        %v468 = vld [vmem:[%s261 + $0x648] sm:$0xff]
        %v469 = vld [vmem:[%s261 + $0x650] sm:$0xff]
        %v470 = vld [vmem:[%s261 + $0x658] sm:$0xff]
        %v471 = vld [vmem:[%s261 + $0x660] sm:$0xff]
        %v472 = vld [vmem:[%s261 + $0x668] sm:$0xff]
        %v473 = vld [vmem:[%s261 + $0x670] sm:$0xff]
        %v474 = vld [vmem:[%s261 + $0x678] sm:$0xff]
        %v475 = vld [vmem:[%s261 + $0x680] sm:$0xff]
        %v476 = vld [vmem:[%s261 + $0x688] sm:$0xff]
        %v477 = vld [vmem:[%s261 + $0x690] sm:$0xff]
        %v478 = vld [vmem:[%s261 + $0x698] sm:$0xff]
        %v479 = vld [vmem:[%s261 + $0x6a0] sm:$0xff]
        %v480 = vld [vmem:[%s261 + $0x6a8] sm:$0xff]
        %v481 = vld [vmem:[%s261 + $0x6b0] sm:$0xff]
        %v482 = vld [vmem:[%s261 + $0x6b8] sm:$0xff]
        %v483 = vld [vmem:[%s261 + $0x6c0] sm:$0xff]
        %v484 = vld [vmem:[%s261 + $0x6c8] sm:$0xff]
        %v485 = vld [vmem:[%s261 + $0x6d0] sm:$0xff]
        %v486 = vld [vmem:[%s261 + $0x6d8] sm:$0xff]
        %v487 = vld [vmem:[%s261 + $0x6e0] sm:$0xff]
        %v488 = vld [vmem:[%s261 + $0x6e8] sm:$0xff]
        %v489 = vld [vmem:[%s261 + $0x6f0] sm:$0xff]
        %v490 = vld [vmem:[%s261 + $0x6f8] sm:$0xff]
        %v491 = vld [vmem:[%s261 + $0x700] sm:$0xff]
        %v492 = vld [vmem:[%s261 + $0x708] sm:$0xff]
        %v493 = vld [vmem:[%s261 + $0x710] sm:$0xff]
        %v494 = vld [vmem:[%s261 + $0x718] sm:$0xff]
        %v495 = vld [vmem:[%s261 + $0x720] sm:$0xff]
        %v496 = vld [vmem:[%s261 + $0x728] sm:$0xff]
        %v497 = vld [vmem:[%s261 + $0x730] sm:$0xff]
        %v498 = vld [vmem:[%s261 + $0x738] sm:$0xff]
        %v499 = vld [vmem:[%s261 + $0x740] sm:$0xff]
        %v500 = vld [vmem:[%s261 + $0x748] sm:$0xff]
        %v501 = vld [vmem:[%s261 + $0x750] sm:$0xff]
        %v502 = vld [vmem:[%s261 + $0x758] sm:$0xff]
        %v503 = vld [vmem:[%s261 + $0x760] sm:$0xff]
        %v504 = vld [vmem:[%s261 + $0x768] sm:$0xff]
        %v505 = vld [vmem:[%s261 + $0x770] sm:$0xff]
        %v506 = vld [vmem:[%s261 + $0x778] sm:$0xff]
        %v507 = vld [vmem:[%s261 + $0x780] sm:$0xff]
        %v508 = vld [vmem:[%s261 + $0x788] sm:$0xff]
        %v509 = vld [vmem:[%s261 + $0x790] sm:$0xff]
        %v510 = vld [vmem:[%s261 + $0x798] sm:$0xff]
        %v511 = vld [vmem:[%s261 + $0x7a0] sm:$0xff]
        %v512 = vld [vmem:[%s261 + $0x7a8] sm:$0xff]
        %v513 = vld [vmem:[%s261 + $0x7b0] sm:$0xff]
        %v514 = vld [vmem:[%s261 + $0x7b8] sm:$0xff]
        %v515 = vld [vmem:[%s261 + $0x7c0] sm:$0xff]
        %v516 = vld [vmem:[%s261 + $0x7c8] sm:$0xff]
        %v517 = vld [vmem:[%s261 + $0x7d0] sm:$0xff]
        %v518 = vld [vmem:[%s261 + $0x7d8] sm:$0xff]
        %v519 = vld [vmem:[%s261 + $0x7e0] sm:$0xff]
        %v520 = vld [vmem:[%s261 + $0x7e8] sm:$0xff]
        %v521 = vld [vmem:[%s261 + $0x7f0] sm:$0xff]
        %v522 = vld [vmem:[%s261 + $0x7f8] sm:$0xff]
        %v523 = vld [vmem:[%s261 + $0x800] sm:$0xff]
        %v524 = vld [vmem:[%s261 + $0x808] sm:$0xff]
        %v525 = vld [vmem:[%s261 + $0x810] sm:$0xff]
        %v526 = vld [vmem:[%s261 + $0x818] sm:$0xff]
        %v527 = vld [vmem:[%s261 + $0x820] sm:$0xff]
        %v528 = vld [vmem:[%s261 + $0x828] sm:$0xff]
        %v529 = vld [vmem:[%s261 + $0x830] sm:$0xff]
        %v530 = vld [vmem:[%s261 + $0x838] sm:$0xff]
        %v531 = vld [vmem:[%s261 + $0x840] sm:$0xff]
        %v532 = vld [vmem:[%s261 + $0x848] sm:$0xff]
        %v533 = vld [vmem:[%s261 + $0x850] sm:$0xff]
        %v534 = vld [vmem:[%s261 + $0x858] sm:$0xff]
        %v535 = vld [vmem:[%s261 + $0x860] sm:$0xff]
        %v536 = vld [vmem:[%s261 + $0x868] sm:$0xff]
        %v537 = vld [vmem:[%s261 + $0x870] sm:$0xff]
        %v538 = vld [vmem:[%s261 + $0x878] sm:$0xff]
        %v539 = vld [vmem:[%s261 + $0x880] sm:$0xff]
        %v540 = vld [vmem:[%s261 + $0x888] sm:$0xff]
        %v541 = vld [vmem:[%s261 + $0x890] sm:$0xff]
        %v542 = vld [vmem:[%s261 + $0x898] sm:$0xff]
        %v543 = vld [vmem:[%s261 + $0x8a0] sm:$0xff]
        %v544 = vld [vmem:[%s261 + $0x8a8] sm:$0xff]
        %v545 = vld [vmem:[%s261 + $0x8b0] sm:$0xff]
        %v546 = vld [vmem:[%s261 + $0x8b8] sm:$0xff]
        %v547 = vld [vmem:[%s261 + $0x8c0] sm:$0xff]
        %v548 = vld [vmem:[%s261 + $0x8c8] sm:$0xff]
        %v549 = vld [vmem:[%s261 + $0x8d0] sm:$0xff]
        %v550 = vld [vmem:[%s261 + $0x8d8] sm:$0xff]
        %v551 = vld [vmem:[%s261 + $0x8e0] sm:$0xff]
        %v552 = vld [vmem:[%s261 + $0x8e8] sm:$0xff]
        %v553 = vld [vmem:[%s261 + $0x8f0] sm:$0xff]
        %v554 = vld [vmem:[%s261 + $0x8f8] sm:$0xff]
        %v555 = vld [vmem:[%s1] sm:$0xff]
        %v556 = vld [vmem:[%s1 + $0x8] sm:$0xff]
        %v557 = vld [vmem:[%s1 + $0x10] sm:$0xff]
        %v558 = vld [vmem:[%s1 + $0x18] sm:$0xff]
        %v559 = vld [vmem:[%s1 + $0x20] sm:$0xff]
        %v560 = vld [vmem:[%s1 + $0x28] sm:$0xff]
        %v561 = vld [vmem:[%s1 + $0x30] sm:$0xff]
        %v562 = vld [vmem:[%s1 + $0x38] sm:$0xff]
        %v563 = vld [vmem:[%s1 + $0x40] sm:$0xff]
        %v564 = vld [vmem:[%s1 + $0x48] sm:$0xff]
        %v565 = vld [vmem:[%s1 + $0x50] sm:$0xff]
        %v566 = vld [vmem:[%s1 + $0x58] sm:$0xff]
        %v567 = vld [vmem:[%s1 + $0x60] sm:$0xff]
        %v568 = vld [vmem:[%s1 + $0x68] sm:$0xff]
        %v569 = vld [vmem:[%s1 + $0x70] sm:$0xff]
        %v570 = vld [vmem:[%s1 + $0x78] sm:$0xff]
        %v571 = vld [vmem:[%s1 + $0x80] sm:$0xff]
        %v572 = vld [vmem:[%s1 + $0x88] sm:$0xff]
        %v573 = vld [vmem:[%s1 + $0x90] sm:$0xff]
        %v574 = vld [vmem:[%s1 + $0x98] sm:$0xff]
        %v575 = vld [vmem:[%s1 + $0xa0] sm:$0xff]
        %v576 = vld [vmem:[%s1 + $0xa8] sm:$0xff]
        %v577 = vld [vmem:[%s1 + $0xb0] sm:$0xff]
        %v578 = vld [vmem:[%s1 + $0xb8] sm:$0xff]
        %v579 = vld [vmem:[%s1 + $0xc0] sm:$0xff]
        %v580 = vld [vmem:[%s1 + $0xc8] sm:$0xff]
        %v581 = vld [vmem:[%s1 + $0xd0] sm:$0xff]
        %v582 = vld [vmem:[%s1 + $0xd8] sm:$0xff]
        %v583 = vld [vmem:[%s1 + $0xe0] sm:$0xff]
        %v584 = vld [vmem:[%s1 + $0xe8] sm:$0xff]
        %v585 = vld [vmem:[%s1 + $0xf0] sm:$0xff]
        %v586 = vld [vmem:[%s1 + $0xf8] sm:$0xff]
        %v587 = vld [vmem:[%s1 + $0x100] sm:$0xff]
        %v588 = vld [vmem:[%s1 + $0x108] sm:$0xff]
        %v589 = vld [vmem:[%s1 + $0x110] sm:$0xff]
        %v590 = vld [vmem:[%s1 + $0x118] sm:$0xff]
        %v591 = vmul.f32 %v267, %v555
        %v592 = vmul.f32 %v268, %v556
        %v593 = vmul.f32 %v269, %v557
        %v594 = vmul.f32 %v270, %v558
        %v595 = vmul.f32 %v271, %v559
        %v596 = vmul.f32 %v272, %v560
        %v597 = vmul.f32 %v273, %v561
        %v598 = vmul.f32 %v274, %v562
        %v599 = vmul.f32 %v275, %v563
        %v600 = vmul.f32 %v276, %v564
        %v601 = vmul.f32 %v277, %v565
        %v602 = vmul.f32 %v278, %v566
        %v603 = vmul.f32 %v279, %v567
        %v604 = vmul.f32 %v280, %v568
        %v605 = vmul.f32 %v281, %v569
        %v606 = vmul.f32 %v282, %v570
        %v607 = vmul.f32 %v283, %v571
        %v608 = vmul.f32 %v284, %v572
        %v609 = vmul.f32 %v285, %v573
        %v610 = vmul.f32 %v286, %v574
        %v611 = vmul.f32 %v287, %v575
        %v612 = vmul.f32 %v288, %v576
        %v613 = vmul.f32 %v289, %v577
        %v614 = vmul.f32 %v290, %v578
        %v615 = vmul.f32 %v291, %v579
        %v616 = vmul.f32 %v292, %v580
        %v617 = vmul.f32 %v293, %v581
        %v618 = vmul.f32 %v294, %v582
        %v619 = vmul.f32 %v295, %v583
        %v620 = vmul.f32 %v296, %v584
        %v621 = vmul.f32 %v297, %v585
        %v622 = vmul.f32 %v298, %v586
        %v623 = vmul.f32 %v299, %v587
        %v624 = vmul.f32 %v300, %v588
        %v625 = vmul.f32 %v301, %v589
        %v626 = vmul.f32 %v302, %v590
        %v627 = vmul.f32 %v303, %v555
        %v628 = vmul.f32 %v304, %v556
        %v629 = vmul.f32 %v305, %v557
        %v630 = vmul.f32 %v306, %v558
        %v631 = vmul.f32 %v307, %v559
        %v632 = vmul.f32 %v308, %v560
        %v633 = vmul.f32 %v309, %v561
        %v634 = vmul.f32 %v310, %v562
        %v635 = vmul.f32 %v311, %v563
        %v636 = vmul.f32 %v312, %v564
        %v637 = vmul.f32 %v313, %v565
        %v638 = vmul.f32 %v314, %v566
        %v639 = vmul.f32 %v315, %v567
        %v640 = vmul.f32 %v316, %v568
        %v641 = vmul.f32 %v317, %v569
        %v642 = vmul.f32 %v318, %v570
        %v643 = vmul.f32 %v319, %v571
        %v644 = vmul.f32 %v320, %v572
        %v645 = vmul.f32 %v321, %v573
        %v646 = vmul.f32 %v322, %v574
        %v647 = vmul.f32 %v323, %v575
        %v648 = vmul.f32 %v324, %v576
        %v649 = vmul.f32 %v325, %v577
        %v650 = vmul.f32 %v326, %v578
        %v651 = vmul.f32 %v327, %v579
        %v652 = vmul.f32 %v328, %v580
        %v653 = vmul.f32 %v329, %v581
        %v654 = vmul.f32 %v330, %v582
        %v655 = vmul.f32 %v331, %v583
        %v656 = vmul.f32 %v332, %v584
        %v657 = vmul.f32 %v333, %v585
        %v658 = vmul.f32 %v334, %v586
        %v659 = vmul.f32 %v335, %v587
        %v660 = vmul.f32 %v336, %v588
        %v661 = vmul.f32 %v337, %v589
        %v662 = vmul.f32 %v338, %v590
        %v663 = vmul.f32 %v339, %v555
        %v664 = vmul.f32 %v340, %v556
        %v665 = vmul.f32 %v341, %v557
        %v666 = vmul.f32 %v342, %v558
        %v667 = vmul.f32 %v343, %v559
        %v668 = vmul.f32 %v344, %v560
        %v669 = vmul.f32 %v345, %v561
        %v670 = vmul.f32 %v346, %v562
        %v671 = vmul.f32 %v347, %v563
        %v672 = vmul.f32 %v348, %v564
        %v673 = vmul.f32 %v349, %v565
        %v674 = vmul.f32 %v350, %v566
        %v675 = vmul.f32 %v351, %v567
        %v676 = vmul.f32 %v352, %v568
        %v677 = vmul.f32 %v353, %v569
        %v678 = vmul.f32 %v354, %v570
        %v679 = vmul.f32 %v355, %v571
        %v680 = vmul.f32 %v356, %v572
        %v681 = vmul.f32 %v357, %v573
        %v682 = vmul.f32 %v358, %v574
        %v683 = vmul.f32 %v359, %v575
        %v684 = vmul.f32 %v360, %v576
        %v685 = vmul.f32 %v361, %v577
        %v686 = vmul.f32 %v362, %v578
        %v687 = vmul.f32 %v363, %v579
        %v688 = vmul.f32 %v364, %v580
        %v689 = vmul.f32 %v365, %v581
        %v690 = vmul.f32 %v366, %v582
        %v691 = vmul.f32 %v367, %v583
        %v692 = vmul.f32 %v368, %v584
        %v693 = vmul.f32 %v369, %v585
        %v694 = vmul.f32 %v370, %v586
        %v695 = vmul.f32 %v371, %v587
        %v696 = vmul.f32 %v372, %v588
        %v697 = vmul.f32 %v373, %v589
        %v698 = vmul.f32 %v374, %v590
        %v699 = vmul.f32 %v375, %v555
        %v700 = vmul.f32 %v376, %v556
        %v701 = vmul.f32 %v377, %v557
        %v702 = vmul.f32 %v378, %v558
        %v703 = vmul.f32 %v379, %v559
        %v704 = vmul.f32 %v380, %v560
        %v705 = vmul.f32 %v381, %v561
        %v706 = vmul.f32 %v382, %v562
        %v707 = vmul.f32 %v383, %v563
        %v708 = vmul.f32 %v384, %v564
        %v709 = vmul.f32 %v385, %v565
        %v710 = vmul.f32 %v386, %v566
        %v711 = vmul.f32 %v387, %v567
        %v712 = vmul.f32 %v388, %v568
        %v713 = vmul.f32 %v389, %v569
        %v714 = vmul.f32 %v390, %v570
        %v715 = vmul.f32 %v391, %v571
        %v716 = vmul.f32 %v392, %v572
        %v717 = vmul.f32 %v393, %v573
        %v718 = vmul.f32 %v394, %v574
        %v719 = vmul.f32 %v395, %v575
        %v720 = vmul.f32 %v396, %v576
        %v721 = vmul.f32 %v397, %v577
        %v722 = vmul.f32 %v398, %v578
        %v723 = vmul.f32 %v399, %v579
        %v724 = vmul.f32 %v400, %v580
        %v725 = vmul.f32 %v401, %v581
        %v726 = vmul.f32 %v402, %v582
        %v727 = vmul.f32 %v403, %v583
        %v728 = vmul.f32 %v404, %v584
        %v729 = vmul.f32 %v405, %v585
        %v730 = vmul.f32 %v406, %v586
        %v731 = vmul.f32 %v407, %v587
        %v732 = vmul.f32 %v408, %v588
        %v733 = vmul.f32 %v409, %v589
        %v734 = vmul.f32 %v410, %v590
        %v735 = vmul.f32 %v411, %v555
        %v736 = vmul.f32 %v412, %v556
        %v737 = vmul.f32 %v413, %v557
        %v738 = vmul.f32 %v414, %v558
        %v739 = vmul.f32 %v415, %v559
        %v740 = vmul.f32 %v416, %v560
        %v741 = vmul.f32 %v417, %v561
        %v742 = vmul.f32 %v418, %v562
        %v743 = vmul.f32 %v419, %v563
        %v744 = vmul.f32 %v420, %v564
        %v745 = vmul.f32 %v421, %v565
        %v746 = vmul.f32 %v422, %v566
        %v747 = vmul.f32 %v423, %v567
        %v748 = vmul.f32 %v424, %v568
        %v749 = vmul.f32 %v425, %v569
        %v750 = vmul.f32 %v426, %v570
        %v751 = vmul.f32 %v427, %v571
        %v752 = vmul.f32 %v428, %v572
        %v753 = vmul.f32 %v429, %v573
        %v754 = vmul.f32 %v430, %v574
        %v755 = vmul.f32 %v431, %v575
        %v756 = vmul.f32 %v432, %v576
        %v757 = vmul.f32 %v433, %v577
        %v758 = vmul.f32 %v434, %v578
        %v759 = vmul.f32 %v435, %v579
        %v760 = vmul.f32 %v436, %v580
        %v761 = vmul.f32 %v437, %v581
        %v762 = vmul.f32 %v438, %v582
        %v763 = vmul.f32 %v439, %v583
        %v764 = vmul.f32 %v440, %v584
        %v765 = vmul.f32 %v441, %v585
        %v766 = vmul.f32 %v442, %v586
        %v767 = vmul.f32 %v443, %v587
        %v768 = vmul.f32 %v444, %v588
        %v769 = vmul.f32 %v445, %v589
        %v770 = vmul.f32 %v446, %v590
        %v771 = vmul.f32 %v447, %v555
        %v772 = vmul.f32 %v448, %v556
        %v773 = vmul.f32 %v449, %v557
        %v774 = vmul.f32 %v450, %v558
        %v775 = vmul.f32 %v451, %v559
        %v776 = vmul.f32 %v452, %v560
        %v777 = vmul.f32 %v453, %v561
        %v778 = vmul.f32 %v454, %v562
        %v779 = vmul.f32 %v455, %v563
        %v780 = vmul.f32 %v456, %v564
        %v781 = vmul.f32 %v457, %v565
        %v782 = vmul.f32 %v458, %v566
        %v783 = vmul.f32 %v459, %v567
        %v784 = vmul.f32 %v460, %v568
        %v785 = vmul.f32 %v461, %v569
        %v786 = vmul.f32 %v462, %v570
        %v787 = vmul.f32 %v463, %v571
        %v788 = vmul.f32 %v464, %v572
        %v789 = vmul.f32 %v465, %v573
        %v790 = vmul.f32 %v466, %v574
        %v791 = vmul.f32 %v467, %v575
        %v792 = vmul.f32 %v468, %v576
        %v793 = vmul.f32 %v469, %v577
        %v794 = vmul.f32 %v470, %v578
        %v795 = vmul.f32 %v471, %v579
        %v796 = vmul.f32 %v472, %v580
        %v797 = vmul.f32 %v473, %v581
        %v798 = vmul.f32 %v474, %v582
        %v799 = vmul.f32 %v475, %v583
        %v800 = vmul.f32 %v476, %v584
        %v801 = vmul.f32 %v477, %v585
        %v802 = vmul.f32 %v478, %v586
        %v803 = vmul.f32 %v479, %v587
        %v804 = vmul.f32 %v480, %v588
        %v805 = vmul.f32 %v481, %v589
        %v806 = vmul.f32 %v482, %v590
        %v807 = vmul.f32 %v483, %v555
        %v808 = vmul.f32 %v484, %v556
        %v809 = vmul.f32 %v485, %v557
        %v810 = vmul.f32 %v486, %v558
        %v811 = vmul.f32 %v487, %v559
        %v812 = vmul.f32 %v488, %v560
        %v813 = vmul.f32 %v489, %v561
        %v814 = vmul.f32 %v490, %v562
        %v815 = vmul.f32 %v491, %v563
        %v816 = vmul.f32 %v492, %v564
        %v817 = vmul.f32 %v493, %v565
        %v818 = vmul.f32 %v494, %v566
        %v819 = vmul.f32 %v495, %v567
        %v820 = vmul.f32 %v496, %v568
        %v821 = vmul.f32 %v497, %v569
        %v822 = vmul.f32 %v498, %v570
        %v823 = vmul.f32 %v499, %v571
        %v824 = vmul.f32 %v500, %v572
        %v825 = vmul.f32 %v501, %v573
        %v826 = vmul.f32 %v502, %v574
        %v827 = vmul.f32 %v503, %v575
        %v828 = vmul.f32 %v504, %v576
        %v829 = vmul.f32 %v505, %v577
        %v830 = vmul.f32 %v506, %v578
        %v831 = vmul.f32 %v507, %v579
        %v832 = vmul.f32 %v508, %v580
        %v833 = vmul.f32 %v509, %v581
        %v834 = vmul.f32 %v510, %v582
        %v835 = vmul.f32 %v511, %v583
        %v836 = vmul.f32 %v512, %v584
        %v837 = vmul.f32 %v513, %v585
        %v838 = vmul.f32 %v514, %v586
        %v839 = vmul.f32 %v515, %v587
        %v840 = vmul.f32 %v516, %v588
        %v841 = vmul.f32 %v517, %v589
        %v842 = vmul.f32 %v518, %v590
        %v843 = vmul.f32 %v519, %v555
        %v844 = vmul.f32 %v520, %v556
        %v845 = vmul.f32 %v521, %v557
        %v846 = vmul.f32 %v522, %v558
        %v847 = vmul.f32 %v523, %v559
        %v848 = vmul.f32 %v524, %v560
        %v849 = vmul.f32 %v525, %v561
        %v850 = vmul.f32 %v526, %v562
        %v851 = vmul.f32 %v527, %v563
        %v852 = vmul.f32 %v528, %v564
        %v853 = vmul.f32 %v529, %v565
        %v854 = vmul.f32 %v530, %v566
        %v855 = vmul.f32 %v531, %v567
        %v856 = vmul.f32 %v532, %v568
        %v857 = vmul.f32 %v533, %v569
        %v858 = vmul.f32 %v534, %v570
        %v859 = vmul.f32 %v535, %v571
        %v860 = vmul.f32 %v536, %v572
        %v861 = vmul.f32 %v537, %v573
        %v862 = vmul.f32 %v538, %v574
        %v863 = vmul.f32 %v539, %v575
        %v864 = vmul.f32 %v540, %v576
        %v865 = vmul.f32 %v541, %v577
        %v866 = vmul.f32 %v542, %v578
        %v867 = vmul.f32 %v543, %v579
        %v868 = vmul.f32 %v544, %v580
        %v869 = vmul.f32 %v545, %v581
        %v870 = vmul.f32 %v546, %v582
        %v871 = vmul.f32 %v547, %v583
        %v872 = vmul.f32 %v548, %v584
        %v873 = vmul.f32 %v549, %v585
        %v874 = vmul.f32 %v550, %v586
        %v875 = vmul.f32 %v551, %v587
        %v876 = vmul.f32 %v552, %v588
        %v877 = vmul.f32 %v553, %v589
        %v878 = vmul.f32 %v554, %v590
        %v879 = vadd.f32 %v591, %v592
        %v880 = vadd.f32 %v879, %v593
        %v881 = vadd.f32 %v880, %v594
        %v882 = vadd.f32 %v881, %v595
        %v883 = vadd.f32 %v882, %v596
        %v884 = vadd.f32 %v883, %v597
        %v885 = vadd.f32 %v884, %v598
        %v886 = vadd.f32 %v885, %v599
        %v887 = vadd.f32 %v886, %v600
        %v888 = vadd.f32 %v887, %v601
        %v889 = vadd.f32 %v888, %v602
        %v890 = vadd.f32 %v889, %v603
        %v891 = vadd.f32 %v890, %v604
        %v892 = vadd.f32 %v891, %v605
        %v893 = vadd.f32 %v892, %v606
        %v894 = vadd.f32 %v893, %v607
        %v895 = vadd.f32 %v894, %v608
        %v896 = vadd.f32 %v895, %v609
        %v897 = vadd.f32 %v896, %v610
        %v898 = vadd.f32 %v897, %v611
        %v899 = vadd.f32 %v898, %v612
        %v900 = vadd.f32 %v899, %v613
        %v901 = vadd.f32 %v900, %v614
        %v902 = vadd.f32 %v901, %v615
        %v903 = vadd.f32 %v902, %v616
        %v904 = vadd.f32 %v903, %v617
        %v905 = vadd.f32 %v904, %v618
        %v906 = vadd.f32 %v905, %v619
        %v907 = vadd.f32 %v906, %v620
        %v908 = vadd.f32 %v907, %v621
        %v909 = vadd.f32 %v908, %v622
        %v910 = vadd.f32 %v909, %v623
        %v911 = vadd.f32 %v910, %v624
        %v912 = vadd.f32 %v911, %v625
        %v913 = vadd.f32 %v912, %v626
        %v914 = vrot.slane %v913, 4
        %v915 = vadd.f32 %v913, %v914
        %v916 = vrot.slane %v915, 2
        %v917 = vadd.f32 %v915, %v916
        %v918 = vrot.slane %v917, 1
        %v919 = vadd.f32 %v917, %v918
        %v920 = vadd.f32 %v627, %v628
        %v921 = vadd.f32 %v920, %v629
        %v922 = vadd.f32 %v921, %v630
        %v923 = vadd.f32 %v922, %v631
        %v924 = vadd.f32 %v923, %v632
        %v925 = vadd.f32 %v924, %v633
        %v926 = vadd.f32 %v925, %v634
        %v927 = vadd.f32 %v926, %v635
        %v928 = vadd.f32 %v927, %v636
        %v929 = vadd.f32 %v928, %v637
        %v930 = vadd.f32 %v929, %v638
        %v931 = vadd.f32 %v930, %v639
        %v932 = vadd.f32 %v931, %v640
        %v933 = vadd.f32 %v932, %v641
        %v934 = vadd.f32 %v933, %v642
        %v935 = vadd.f32 %v934, %v643
        %v936 = vadd.f32 %v935, %v644
        %v937 = vadd.f32 %v936, %v645
        %v938 = vadd.f32 %v937, %v646
        %v939 = vadd.f32 %v938, %v647
        %v940 = vadd.f32 %v939, %v648
        %v941 = vadd.f32 %v940, %v649
        %v942 = vadd.f32 %v941, %v650
        %v943 = vadd.f32 %v942, %v651
        %v944 = vadd.f32 %v943, %v652
        %v945 = vadd.f32 %v944, %v653
        %v946 = vadd.f32 %v945, %v654
        %v947 = vadd.f32 %v946, %v655
        %v948 = vadd.f32 %v947, %v656
        %v949 = vadd.f32 %v948, %v657
        %v950 = vadd.f32 %v949, %v658
        %v951 = vadd.f32 %v950, %v659
        %v952 = vadd.f32 %v951, %v660
        %v953 = vadd.f32 %v952, %v661
        %v954 = vadd.f32 %v953, %v662
        %v955 = vrot.slane %v954, 4
        %v956 = vadd.f32 %v954, %v955
        %v957 = vrot.slane %v956, 2
        %v958 = vadd.f32 %v956, %v957
        %v959 = vrot.slane %v958, 1
        %v960 = vadd.f32 %v958, %v959
        %v961 = vadd.f32 %v663, %v664
        %v962 = vadd.f32 %v961, %v665
        %v963 = vadd.f32 %v962, %v666
        %v964 = vadd.f32 %v963, %v667
        %v965 = vadd.f32 %v964, %v668
        %v966 = vadd.f32 %v965, %v669
        %v967 = vadd.f32 %v966, %v670
        %v968 = vadd.f32 %v967, %v671
        %v969 = vadd.f32 %v968, %v672
        %v970 = vadd.f32 %v969, %v673
        %v971 = vadd.f32 %v970, %v674
        %v972 = vadd.f32 %v971, %v675
        %v973 = vadd.f32 %v972, %v676
        %v974 = vadd.f32 %v973, %v677
        %v975 = vadd.f32 %v974, %v678
        %v976 = vadd.f32 %v975, %v679
        %v977 = vadd.f32 %v976, %v680
        %v978 = vadd.f32 %v977, %v681
        %v979 = vadd.f32 %v978, %v682
        %v980 = vadd.f32 %v979, %v683
        %v981 = vadd.f32 %v980, %v684
        %v982 = vadd.f32 %v981, %v685
        %v983 = vadd.f32 %v982, %v686
        %v984 = vadd.f32 %v983, %v687
        %v985 = vadd.f32 %v984, %v688
        %v986 = vadd.f32 %v985, %v689
        %v987 = vadd.f32 %v986, %v690
        %v988 = vadd.f32 %v987, %v691
        %v989 = vadd.f32 %v988, %v692
        %v990 = vadd.f32 %v989, %v693
        %v991 = vadd.f32 %v990, %v694
        %v992 = vadd.f32 %v991, %v695
        %v993 = vadd.f32 %v992, %v696
        %v994 = vadd.f32 %v993, %v697
        %v995 = vadd.f32 %v994, %v698
        %v996 = vrot.slane %v995, 4
        %v997 = vadd.f32 %v995, %v996
        %v998 = vrot.slane %v997, 2
        %v999 = vadd.f32 %v997, %v998
        %v1000 = vrot.slane %v999, 1
        %v1001 = vadd.f32 %v999, %v1000
        %v1002 = vadd.f32 %v699, %v700
        %v1003 = vadd.f32 %v1002, %v701
        %v1004 = vadd.f32 %v1003, %v702
        %v1005 = vadd.f32 %v1004, %v703
        %v1006 = vadd.f32 %v1005, %v704
        %v1007 = vadd.f32 %v1006, %v705
        %v1008 = vadd.f32 %v1007, %v706
        %v1009 = vadd.f32 %v1008, %v707
        %v1010 = vadd.f32 %v1009, %v708
        %v1011 = vadd.f32 %v1010, %v709
        %v1012 = vadd.f32 %v1011, %v710
        %v1013 = vadd.f32 %v1012, %v711
        %v1014 = vadd.f32 %v1013, %v712
        %v1015 = vadd.f32 %v1014, %v713
        %v1016 = vadd.f32 %v1015, %v714
        %v1017 = vadd.f32 %v1016, %v715
        %v1018 = vadd.f32 %v1017, %v716
        %v1019 = vadd.f32 %v1018, %v717
        %v1020 = vadd.f32 %v1019, %v718
        %v1021 = vadd.f32 %v1020, %v719
        %v1022 = vadd.f32 %v1021, %v720
        %v1023 = vadd.f32 %v1022, %v721
        %v1024 = vadd.f32 %v1023, %v722
        %v1025 = vadd.f32 %v1024, %v723
        %v1026 = vadd.f32 %v1025, %v724
        %v1027 = vadd.f32 %v1026, %v725
        %v1028 = vadd.f32 %v1027, %v726
        %v1029 = vadd.f32 %v1028, %v727
        %v1030 = vadd.f32 %v1029, %v728
        %v1031 = vadd.f32 %v1030, %v729
        %v1032 = vadd.f32 %v1031, %v730
        %v1033 = vadd.f32 %v1032, %v731
        %v1034 = vadd.f32 %v1033, %v732
        %v1035 = vadd.f32 %v1034, %v733
        %v1036 = vadd.f32 %v1035, %v734
        %v1037 = vrot.slane %v1036, 4
        %v1038 = vadd.f32 %v1036, %v1037
        %v1039 = vrot.slane %v1038, 2
        %v1040 = vadd.f32 %v1038, %v1039
        %v1041 = vrot.slane %v1040, 1
        %v1042 = vadd.f32 %v1040, %v1041
        %v1043 = vadd.f32 %v735, %v736
        %v1044 = vadd.f32 %v1043, %v737
        %v1045 = vadd.f32 %v1044, %v738
        %v1046 = vadd.f32 %v1045, %v739
        %v1047 = vadd.f32 %v1046, %v740
        %v1048 = vadd.f32 %v1047, %v741
        %v1049 = vadd.f32 %v1048, %v742
        %v1050 = vadd.f32 %v1049, %v743
        %v1051 = vadd.f32 %v1050, %v744
        %v1052 = vadd.f32 %v1051, %v745
        %v1053 = vadd.f32 %v1052, %v746
        %v1054 = vadd.f32 %v1053, %v747
        %v1055 = vadd.f32 %v1054, %v748
        %v1056 = vadd.f32 %v1055, %v749
        %v1057 = vadd.f32 %v1056, %v750
        %v1058 = vadd.f32 %v1057, %v751
        %v1059 = vadd.f32 %v1058, %v752
        %v1060 = vadd.f32 %v1059, %v753
        %v1061 = vadd.f32 %v1060, %v754
        %v1062 = vadd.f32 %v1061, %v755
        %v1063 = vadd.f32 %v1062, %v756
        %v1064 = vadd.f32 %v1063, %v757
        %v1065 = vadd.f32 %v1064, %v758
        %v1066 = vadd.f32 %v1065, %v759
        %v1067 = vadd.f32 %v1066, %v760
        %v1068 = vadd.f32 %v1067, %v761
        %v1069 = vadd.f32 %v1068, %v762
        %v1070 = vadd.f32 %v1069, %v763
        %v1071 = vadd.f32 %v1070, %v764
        %v1072 = vadd.f32 %v1071, %v765
        %v1073 = vadd.f32 %v1072, %v766
        %v1074 = vadd.f32 %v1073, %v767
        %v1075 = vadd.f32 %v1074, %v768
        %v1076 = vadd.f32 %v1075, %v769
        %v1077 = vadd.f32 %v1076, %v770
        %v1078 = vrot.slane %v1077, 4
        %v1079 = vadd.f32 %v1077, %v1078
        %v1080 = vrot.slane %v1079, 2
        %v1081 = vadd.f32 %v1079, %v1080
        %v1082 = vrot.slane %v1081, 1
        %v1083 = vadd.f32 %v1081, %v1082
        %v1084 = vadd.f32 %v771, %v772
        %v1085 = vadd.f32 %v1084, %v773
        %v1086 = vadd.f32 %v1085, %v774
        %v1087 = vadd.f32 %v1086, %v775
        %v1088 = vadd.f32 %v1087, %v776
        %v1089 = vadd.f32 %v1088, %v777
        %v1090 = vadd.f32 %v1089, %v778
        %v1091 = vadd.f32 %v1090, %v779
        %v1092 = vadd.f32 %v1091, %v780
        %v1093 = vadd.f32 %v1092, %v781
        %v1094 = vadd.f32 %v1093, %v782
        %v1095 = vadd.f32 %v1094, %v783
        %v1096 = vadd.f32 %v1095, %v784
        %v1097 = vadd.f32 %v1096, %v785
        %v1098 = vadd.f32 %v1097, %v786
        %v1099 = vadd.f32 %v1098, %v787
        %v1100 = vadd.f32 %v1099, %v788
        %v1101 = vadd.f32 %v1100, %v789
        %v1102 = vadd.f32 %v1101, %v790
        %v1103 = vadd.f32 %v1102, %v791
        %v1104 = vadd.f32 %v1103, %v792
        %v1105 = vadd.f32 %v1104, %v793
        %v1106 = vadd.f32 %v1105, %v794
        %v1107 = vadd.f32 %v1106, %v795
        %v1108 = vadd.f32 %v1107, %v796
        %v1109 = vadd.f32 %v1108, %v797
        %v1110 = vadd.f32 %v1109, %v798
        %v1111 = vadd.f32 %v1110, %v799
        %v1112 = vadd.f32 %v1111, %v800
        %v1113 = vadd.f32 %v1112, %v801
        %v1114 = vadd.f32 %v1113, %v802
        %v1115 = vadd.f32 %v1114, %v803
        %v1116 = vadd.f32 %v1115, %v804
        %v1117 = vadd.f32 %v1116, %v805
        %v1118 = vadd.f32 %v1117, %v806
        %v1119 = vrot.slane %v1118, 4
        %v1120 = vadd.f32 %v1118, %v1119
        %v1121 = vrot.slane %v1120, 2
        %v1122 = vadd.f32 %v1120, %v1121
        %v1123 = vrot.slane %v1122, 1
        %v1124 = vadd.f32 %v1122, %v1123
        %v1125 = vadd.f32 %v807, %v808
        %v1126 = vadd.f32 %v1125, %v809
        %v1127 = vadd.f32 %v1126, %v810
        %v1128 = vadd.f32 %v1127, %v811
        %v1129 = vadd.f32 %v1128, %v812
        %v1130 = vadd.f32 %v1129, %v813
        %v1131 = vadd.f32 %v1130, %v814
        %v1132 = vadd.f32 %v1131, %v815
        %v1133 = vadd.f32 %v1132, %v816
        %v1134 = vadd.f32 %v1133, %v817
        %v1135 = vadd.f32 %v1134, %v818
        %v1136 = vadd.f32 %v1135, %v819
        %v1137 = vadd.f32 %v1136, %v820
        %v1138 = vadd.f32 %v1137, %v821
        %v1139 = vadd.f32 %v1138, %v822
        %v1140 = vadd.f32 %v1139, %v823
        %v1141 = vadd.f32 %v1140, %v824
        %v1142 = vadd.f32 %v1141, %v825
        %v1143 = vadd.f32 %v1142, %v826
        %v1144 = vadd.f32 %v1143, %v827
        %v1145 = vadd.f32 %v1144, %v828
        %v1146 = vadd.f32 %v1145, %v829
        %v1147 = vadd.f32 %v1146, %v830
        %v1148 = vadd.f32 %v1147, %v831
        %v1149 = vadd.f32 %v1148, %v832
        %v1150 = vadd.f32 %v1149, %v833
        %v1151 = vadd.f32 %v1150, %v834
        %v1152 = vadd.f32 %v1151, %v835
        %v1153 = vadd.f32 %v1152, %v836
        %v1154 = vadd.f32 %v1153, %v837
        %v1155 = vadd.f32 %v1154, %v838
        %v1156 = vadd.f32 %v1155, %v839
        %v1157 = vadd.f32 %v1156, %v840
        %v1158 = vadd.f32 %v1157, %v841
        %v1159 = vadd.f32 %v1158, %v842
        %v1160 = vrot.slane %v1159, 4
        %v1161 = vadd.f32 %v1159, %v1160
        %v1162 = vrot.slane %v1161, 2
        %v1163 = vadd.f32 %v1161, %v1162
        %v1164 = vrot.slane %v1163, 1
        %v1165 = vadd.f32 %v1163, %v1164
        %v1166 = vadd.f32 %v843, %v844
        %v1167 = vadd.f32 %v1166, %v845
        %v1168 = vadd.f32 %v1167, %v846
        %v1169 = vadd.f32 %v1168, %v847
        %v1170 = vadd.f32 %v1169, %v848
        %v1171 = vadd.f32 %v1170, %v849
        %v1172 = vadd.f32 %v1171, %v850
        %v1173 = vadd.f32 %v1172, %v851
        %v1174 = vadd.f32 %v1173, %v852
        %v1175 = vadd.f32 %v1174, %v853
        %v1176 = vadd.f32 %v1175, %v854
        %v1177 = vadd.f32 %v1176, %v855
        %v1178 = vadd.f32 %v1177, %v856
        %v1179 = vadd.f32 %v1178, %v857
        %v1180 = vadd.f32 %v1179, %v858
        %v1181 = vadd.f32 %v1180, %v859
        %v1182 = vadd.f32 %v1181, %v860
        %v1183 = vadd.f32 %v1182, %v861
        %v1184 = vadd.f32 %v1183, %v862
        %v1185 = vadd.f32 %v1184, %v863
        %v1186 = vadd.f32 %v1185, %v864
        %v1187 = vadd.f32 %v1186, %v865
        %v1188 = vadd.f32 %v1187, %v866
        %v1189 = vadd.f32 %v1188, %v867
        %v1190 = vadd.f32 %v1189, %v868
        %v1191 = vadd.f32 %v1190, %v869
        %v1192 = vadd.f32 %v1191, %v870
        %v1193 = vadd.f32 %v1192, %v871
        %v1194 = vadd.f32 %v1193, %v872
        %v1195 = vadd.f32 %v1194, %v873
        %v1196 = vadd.f32 %v1195, %v874
        %v1197 = vadd.f32 %v1196, %v875
        %v1198 = vadd.f32 %v1197, %v876
        %v1199 = vadd.f32 %v1198, %v877
        %v1200 = vadd.f32 %v1199, %v878
        %v1201 = vrot.slane %v1200, 4
        %v1202 = vadd.f32 %v1200, %v1201
        %v1203 = vrot.slane %v1202, 2
        %v1204 = vadd.f32 %v1202, %v1203
        %v1205 = vrot.slane %v1204, 1
        %v1206 = vadd.f32 %v1204, %v1205
        %v1207 = vld [vmem:[%s2] sm:$0xff]
        %v1208 = vld [vmem:[%s2 + $0x8] sm:$0xff]
        %v1209 = vld [vmem:[%s2 + $0x10] sm:$0xff]
        %v1210 = vld [vmem:[%s2 + $0x18] sm:$0xff]
        %v1211 = vld [vmem:[%s2 + $0x20] sm:$0xff]
        %v1212 = vld [vmem:[%s2 + $0x28] sm:$0xff]
        %v1213 = vld [vmem:[%s2 + $0x30] sm:$0xff]
        %v1214 = vld [vmem:[%s2 + $0x38] sm:$0xff]
        %v1215 = vld [vmem:[%s2 + $0x40] sm:$0xff]
        %v1216 = vld [vmem:[%s2 + $0x48] sm:$0xff]
        %v1217 = vld [vmem:[%s2 + $0x50] sm:$0xff]
        %v1218 = vld [vmem:[%s2 + $0x58] sm:$0xff]
        %v1219 = vld [vmem:[%s2 + $0x60] sm:$0xff]
        %v1220 = vld [vmem:[%s2 + $0x68] sm:$0xff]
        %v1221 = vld [vmem:[%s2 + $0x70] sm:$0xff]
        %v1222 = vld [vmem:[%s2 + $0x78] sm:$0xff]
        %s1223 = sld [smem:[#allocation2]]
        %v1224 = vstv %s1223
        %vm1233 = vcmask 1041409
        %v1234 = vsel %vm1233, %v960, %v919
        %vm1235 = vcmask 1042434
        %v1236 = vsel %vm1235, %v1001, %v1234
        %vm1237 = vcmask 1043459
        %v1238 = vsel %vm1237, %v1042, %v1236
        %vm1239 = vcmask 1044484
        %v1240 = vsel %vm1239, %v1083, %v1238
        %vm1241 = vcmask 1045509
        %v1242 = vsel %vm1241, %v1124, %v1240
        %vm1243 = vcmask 1046534
        %v1244 = vsel %vm1243, %v1165, %v1242
        %vm1245 = vcmask 1047559
        %v1246 = vsel %vm1245, %v1206, %v1244
        %1248 = vmatprep.subr.mxu0 0.0
        %1249 = vmatpush1.msra.mxu0 %v1207
        %1250 = vmatprep.subr.mxu0 0.0
        %1251 = vmatpush1.msra.mxu0 %v1208
        %1252 = vmatprep.subr.mxu0 0.0
        %1253 = vmatpush1.msra.mxu0 %v1209
        %1254 = vmatprep.subr.mxu0 0.0
        %1255 = vmatpush1.msra.mxu0 %v1210
        %1256 = vmatprep.subr.mxu0 0.0
        %1257 = vmatpush1.msra.mxu0 %v1211
        %1258 = vmatprep.subr.mxu0 0.0
        %1259 = vmatpush1.msra.mxu0 %v1212
        %1260 = vmatprep.subr.mxu0 0.0
        %1261 = vmatpush1.msra.mxu0 %v1213
        %1262 = vmatprep.subr.mxu0 0.0
        %1263 = vmatpush1.msra.mxu0 %v1214
        %1264 = vmatprep.subr.mxu0 0.0
        %1265 = vmatpush1.msra.mxu0 %v1215
        %1266 = vmatprep.subr.mxu0 0.0
        %1267 = vmatpush1.msra.mxu0 %v1216
        %1268 = vmatprep.subr.mxu0 0.0
        %1269 = vmatpush1.msra.mxu0 %v1217
        %1270 = vmatprep.subr.mxu0 0.0
        %1271 = vmatpush1.msra.mxu0 %v1218
        %1272 = vmatprep.subr.mxu0 0.0
        %1273 = vmatpush1.msra.mxu0 %v1219
        %1274 = vmatprep.subr.mxu0 0.0
        %1275 = vmatpush1.msra.mxu0 %v1220
        %1276 = vmatprep.subr.mxu0 0.0
        %1277 = vmatpush1.msra.mxu0 %v1221
        %1278 = vmatprep.subr.mxu0 0.0
        %1279 = vmatpush1.msra.mxu0 %v1222
        %1280 = vmatprep.subr.mxu0 0.0
        %1281 = vmatpush1.msra.mxu0 0.0
        %1282 = vmatprep.subr.mxu0 0.0
        %1283 = vmatpush1.msra.mxu0 0.0
        %1284 = vmatprep.subr.mxu0 0.0
        %1285 = vmatpush1.msra.mxu0 0.0
        %1286 = vmatprep.subr.mxu0 0.0
        %1287 = vmatpush1.msra.mxu0 0.0
        %1288 = vmatprep.subr.mxu0 0.0
        %1289 = vmatpush1.msra.mxu0 0.0
        %1290 = vmatprep.subr.mxu0 0.0
        %1291 = vmatpush1.msra.mxu0 0.0
        %1292 = vmatprep.subr.mxu0 0.0
        %1293 = vmatpush1.msra.mxu0 0.0
        %1294 = vmatprep.subr.mxu0 0.0
        %1295 = vmatpush1.msra.mxu0 0.0
        %1296 = vmatprep.subr.mxu0 0.0
        %1297 = vmatpush1.msra.mxu0 0.0
        %1298 = vmatprep.subr.mxu0 0.0
        %1299 = vmatpush1.msra.mxu0 0.0
        %1300 = vmatprep.subr.mxu0 0.0
        %1301 = vmatpush1.msra.mxu0 0.0
        %1302 = vmatprep.subr.mxu0 0.0
        %1303 = vmatpush1.msra.mxu0 0.0
        %1304 = vmatprep.subr.mxu0 0.0
        %1305 = vmatpush1.msra.mxu0 0.0
        %1306 = vmatprep.subr.mxu0 0.0
        %1307 = vmatpush1.msra.mxu0 0.0
        %1308 = vmatprep.subr.mxu0 0.0
        %1309 = vmatpush1.msra.mxu0 0.0
        %1310 = vmatprep.subr.mxu0 0.0
        %1311 = vmatpush1.msra.mxu0 0.0
        %1312 = vmatprep.mubr.f32.mxu0 0.0
        %1313 = vmatmul.mubr.f32.gmra.mrb[0].mxu0 %v1246
        %v1314 = vpop.f32.mrb[0].mxu0
        %v1315 = vadd.f32 %v1224, %v1314
        %v1316 = vpop.f32.mrb[0].mxu0
        %1317 = vdwg.mxu0
        %v1318 = vtanh.pop %v1315
        %1319 = vst [vmem:[%s255] sm:$0xff] %v1318
        %vm1320 = vcmask 523264
        %v1321 = vsel %vm1320, %v267, 0.0
        %1322 = vadd.xlane.f32.xlu0 %v1321
        %v1323 = vpop.xlane.xlu0 %1322
        %v1324 = vsel %vm1320, %v268, 0.0
        %1325 = vadd.xlane.f32.xlu0 %v1324
        %v1326 = vpop.xlane.xlu0 %1325
        %v1327 = vsel %vm1320, %v269, 0.0
        %1328 = vadd.xlane.f32.xlu0 %v1327
        %v1329 = vpop.xlane.xlu0 %1328
        %v1330 = vsel %vm1320, %v270, 0.0
        %1331 = vadd.xlane.f32.xlu0 %v1330
        %v1332 = vpop.xlane.xlu0 %1331
        %v1333 = vsel %vm1320, %v271, 0.0
        %1334 = vadd.xlane.f32.xlu0 %v1333
        %v1335 = vpop.xlane.xlu0 %1334
        %v1336 = vsel %vm1320, %v272, 0.0
        %1337 = vadd.xlane.f32.xlu0 %v1336
        %v1338 = vpop.xlane.xlu0 %1337
        %v1339 = vsel %vm1320, %v273, 0.0
        %1340 = vadd.xlane.f32.xlu0 %v1339
        %v1341 = vpop.xlane.xlu0 %1340
        %v1342 = vsel %vm1320, %v274, 0.0
        %1343 = vadd.xlane.f32.xlu0 %v1342
        %v1344 = vpop.xlane.xlu0 %1343
        %v1345 = vsel %vm1320, %v275, 0.0
        %1346 = vadd.xlane.f32.xlu0 %v1345
        %v1347 = vpop.xlane.xlu0 %1346
        %v1348 = vsel %vm1320, %v276, 0.0
        %1349 = vadd.xlane.f32.xlu0 %v1348
        %v1350 = vpop.xlane.xlu0 %1349
        %v1351 = vsel %vm1320, %v277, 0.0
        %1352 = vadd.xlane.f32.xlu0 %v1351
        %v1353 = vpop.xlane.xlu0 %1352
        %v1354 = vsel %vm1320, %v278, 0.0
        %1355 = vadd.xlane.f32.xlu0 %v1354
        %v1356 = vpop.xlane.xlu0 %1355
        %v1357 = vsel %vm1320, %v279, 0.0
        %1358 = vadd.xlane.f32.xlu0 %v1357
        %v1359 = vpop.xlane.xlu0 %1358
        %v1360 = vsel %vm1320, %v280, 0.0
        %1361 = vadd.xlane.f32.xlu0 %v1360
        %v1362 = vpop.xlane.xlu0 %1361
        %v1363 = vsel %vm1320, %v281, 0.0
        %1364 = vadd.xlane.f32.xlu0 %v1363
        %v1365 = vpop.xlane.xlu0 %1364
        %v1366 = vsel %vm1320, %v282, 0.0
        %1367 = vadd.xlane.f32.xlu0 %v1366
        %v1368 = vpop.xlane.xlu0 %1367
        %v1369 = vsel %vm1320, %v283, 0.0
        %1370 = vadd.xlane.f32.xlu0 %v1369
        %v1371 = vpop.xlane.xlu0 %1370
        %v1372 = vsel %vm1320, %v284, 0.0
        %1373 = vadd.xlane.f32.xlu0 %v1372
        %v1374 = vpop.xlane.xlu0 %1373
        %v1375 = vsel %vm1320, %v285, 0.0
        %1376 = vadd.xlane.f32.xlu0 %v1375
        %v1377 = vpop.xlane.xlu0 %1376
        %v1378 = vsel %vm1320, %v286, 0.0
        %1379 = vadd.xlane.f32.xlu0 %v1378
        %v1380 = vpop.xlane.xlu0 %1379
        %v1381 = vsel %vm1320, %v287, 0.0
        %1382 = vadd.xlane.f32.xlu0 %v1381
        %v1383 = vpop.xlane.xlu0 %1382
        %v1384 = vsel %vm1320, %v288, 0.0
        %1385 = vadd.xlane.f32.xlu0 %v1384
        %v1386 = vpop.xlane.xlu0 %1385
        %v1387 = vsel %vm1320, %v289, 0.0
        %1388 = vadd.xlane.f32.xlu0 %v1387
        %v1389 = vpop.xlane.xlu0 %1388
        %v1390 = vsel %vm1320, %v290, 0.0
        %1391 = vadd.xlane.f32.xlu0 %v1390
        %v1392 = vpop.xlane.xlu0 %1391
        %v1393 = vsel %vm1320, %v291, 0.0
        %1394 = vadd.xlane.f32.xlu0 %v1393
        %v1395 = vpop.xlane.xlu0 %1394
        %v1396 = vsel %vm1320, %v292, 0.0
        %1397 = vadd.xlane.f32.xlu0 %v1396
        %v1398 = vpop.xlane.xlu0 %1397
        %v1399 = vsel %vm1320, %v293, 0.0
        %1400 = vadd.xlane.f32.xlu0 %v1399
        %v1401 = vpop.xlane.xlu0 %1400
        %v1402 = vsel %vm1320, %v294, 0.0
        %1403 = vadd.xlane.f32.xlu0 %v1402
        %v1404 = vpop.xlane.xlu0 %1403
        %v1405 = vsel %vm1320, %v295, 0.0
        %1406 = vadd.xlane.f32.xlu0 %v1405
        %v1407 = vpop.xlane.xlu0 %1406
        %v1408 = vsel %vm1320, %v296, 0.0
        %1409 = vadd.xlane.f32.xlu0 %v1408
        %v1410 = vpop.xlane.xlu0 %1409
        %v1411 = vsel %vm1320, %v297, 0.0
        %1412 = vadd.xlane.f32.xlu0 %v1411
        %v1413 = vpop.xlane.xlu0 %1412
        %v1414 = vsel %vm1320, %v298, 0.0
        %1415 = vadd.xlane.f32.xlu0 %v1414
        %v1416 = vpop.xlane.xlu0 %1415
        %v1417 = vsel %vm1320, %v299, 0.0
        %1418 = vadd.xlane.f32.xlu0 %v1417
        %v1419 = vpop.xlane.xlu0 %1418
        %v1420 = vsel %vm1320, %v300, 0.0
        %1421 = vadd.xlane.f32.xlu0 %v1420
        %v1422 = vpop.xlane.xlu0 %1421
        %v1423 = vsel %vm1320, %v301, 0.0
        %1424 = vadd.xlane.f32.xlu0 %v1423
        %v1425 = vpop.xlane.xlu0 %1424
        %v1426 = vsel %vm1320, %v302, 0.0
        %1427 = vadd.xlane.f32.xlu0 %v1426
        %v1428 = vpop.xlane.xlu0 %1427
        %v1429 = vsel %vm1320, %v303, 0.0
        %1430 = vadd.xlane.f32.xlu0 %v1429
        %v1431 = vpop.xlane.xlu0 %1430
        %v1432 = vsel %vm1320, %v304, 0.0
        %1433 = vadd.xlane.f32.xlu0 %v1432
        %v1434 = vpop.xlane.xlu0 %1433
        %v1435 = vsel %vm1320, %v305, 0.0
        %1436 = vadd.xlane.f32.xlu0 %v1435
        %v1437 = vpop.xlane.xlu0 %1436
        %v1438 = vsel %vm1320, %v306, 0.0
        %1439 = vadd.xlane.f32.xlu0 %v1438
        %v1440 = vpop.xlane.xlu0 %1439
        %v1441 = vsel %vm1320, %v307, 0.0
        %1442 = vadd.xlane.f32.xlu0 %v1441
        %v1443 = vpop.xlane.xlu0 %1442
        %v1444 = vsel %vm1320, %v308, 0.0
        %1445 = vadd.xlane.f32.xlu0 %v1444
        %v1446 = vpop.xlane.xlu0 %1445
        %v1447 = vsel %vm1320, %v309, 0.0
        %1448 = vadd.xlane.f32.xlu0 %v1447
        %v1449 = vpop.xlane.xlu0 %1448
        %v1450 = vsel %vm1320, %v310, 0.0
        %1451 = vadd.xlane.f32.xlu0 %v1450
        %v1452 = vpop.xlane.xlu0 %1451
        %v1453 = vsel %vm1320, %v311, 0.0
        %1454 = vadd.xlane.f32.xlu0 %v1453
        %v1455 = vpop.xlane.xlu0 %1454
        %v1456 = vsel %vm1320, %v312, 0.0
        %1457 = vadd.xlane.f32.xlu0 %v1456
        %v1458 = vpop.xlane.xlu0 %1457
        %v1459 = vsel %vm1320, %v313, 0.0
        %1460 = vadd.xlane.f32.xlu0 %v1459
        %v1461 = vpop.xlane.xlu0 %1460
        %v1462 = vsel %vm1320, %v314, 0.0
        %1463 = vadd.xlane.f32.xlu0 %v1462
        %v1464 = vpop.xlane.xlu0 %1463
        %v1465 = vsel %vm1320, %v315, 0.0
        %1466 = vadd.xlane.f32.xlu0 %v1465
        %v1467 = vpop.xlane.xlu0 %1466
        %v1468 = vsel %vm1320, %v316, 0.0
        %1469 = vadd.xlane.f32.xlu0 %v1468
        %v1470 = vpop.xlane.xlu0 %1469
        %v1471 = vsel %vm1320, %v317, 0.0
        %1472 = vadd.xlane.f32.xlu0 %v1471
        %v1473 = vpop.xlane.xlu0 %1472
        %v1474 = vsel %vm1320, %v318, 0.0
        %1475 = vadd.xlane.f32.xlu0 %v1474
        %v1476 = vpop.xlane.xlu0 %1475
        %v1477 = vsel %vm1320, %v319, 0.0
        %1478 = vadd.xlane.f32.xlu0 %v1477
        %v1479 = vpop.xlane.xlu0 %1478
        %v1480 = vsel %vm1320, %v320, 0.0
        %1481 = vadd.xlane.f32.xlu0 %v1480
        %v1482 = vpop.xlane.xlu0 %1481
        %v1483 = vsel %vm1320, %v321, 0.0
        %1484 = vadd.xlane.f32.xlu0 %v1483
        %v1485 = vpop.xlane.xlu0 %1484
        %v1486 = vsel %vm1320, %v322, 0.0
        %1487 = vadd.xlane.f32.xlu0 %v1486
        %v1488 = vpop.xlane.xlu0 %1487
        %v1489 = vsel %vm1320, %v323, 0.0
        %1490 = vadd.xlane.f32.xlu0 %v1489
        %v1491 = vpop.xlane.xlu0 %1490
        %v1492 = vsel %vm1320, %v324, 0.0
        %1493 = vadd.xlane.f32.xlu0 %v1492
        %v1494 = vpop.xlane.xlu0 %1493
        %v1495 = vsel %vm1320, %v325, 0.0
        %1496 = vadd.xlane.f32.xlu0 %v1495
        %v1497 = vpop.xlane.xlu0 %1496
        %v1498 = vsel %vm1320, %v326, 0.0
        %1499 = vadd.xlane.f32.xlu0 %v1498
        %v1500 = vpop.xlane.xlu0 %1499
        %v1501 = vsel %vm1320, %v327, 0.0
        %1502 = vadd.xlane.f32.xlu0 %v1501
        %v1503 = vpop.xlane.xlu0 %1502
        %v1504 = vsel %vm1320, %v328, 0.0
        %1505 = vadd.xlane.f32.xlu0 %v1504
        %v1506 = vpop.xlane.xlu0 %1505
        %v1507 = vsel %vm1320, %v329, 0.0
        %1508 = vadd.xlane.f32.xlu0 %v1507
        %v1509 = vpop.xlane.xlu0 %1508
        %v1510 = vsel %vm1320, %v330, 0.0
        %1511 = vadd.xlane.f32.xlu0 %v1510
        %v1512 = vpop.xlane.xlu0 %1511
        %v1513 = vsel %vm1320, %v331, 0.0
        %1514 = vadd.xlane.f32.xlu0 %v1513
        %v1515 = vpop.xlane.xlu0 %1514
        %v1516 = vsel %vm1320, %v332, 0.0
        %1517 = vadd.xlane.f32.xlu0 %v1516
        %v1518 = vpop.xlane.xlu0 %1517
        %v1519 = vsel %vm1320, %v333, 0.0
        %1520 = vadd.xlane.f32.xlu0 %v1519
        %v1521 = vpop.xlane.xlu0 %1520
        %v1522 = vsel %vm1320, %v334, 0.0
        %1523 = vadd.xlane.f32.xlu0 %v1522
        %v1524 = vpop.xlane.xlu0 %1523
        %v1525 = vsel %vm1320, %v335, 0.0
        %1526 = vadd.xlane.f32.xlu0 %v1525
        %v1527 = vpop.xlane.xlu0 %1526
        %v1528 = vsel %vm1320, %v336, 0.0
        %1529 = vadd.xlane.f32.xlu0 %v1528
        %v1530 = vpop.xlane.xlu0 %1529
        %v1531 = vsel %vm1320, %v337, 0.0
        %1532 = vadd.xlane.f32.xlu0 %v1531
        %v1533 = vpop.xlane.xlu0 %1532
        %v1534 = vsel %vm1320, %v338, 0.0
        %1535 = vadd.xlane.f32.xlu0 %v1534
        %v1536 = vpop.xlane.xlu0 %1535
        %v1537 = vsel %vm1320, %v339, 0.0
        %1538 = vadd.xlane.f32.xlu0 %v1537
        %v1539 = vpop.xlane.xlu0 %1538
        %v1540 = vsel %vm1320, %v340, 0.0
        %1541 = vadd.xlane.f32.xlu0 %v1540
        %v1542 = vpop.xlane.xlu0 %1541
        %v1543 = vsel %vm1320, %v341, 0.0
        %1544 = vadd.xlane.f32.xlu0 %v1543
        %v1545 = vpop.xlane.xlu0 %1544
        %v1546 = vsel %vm1320, %v342, 0.0
        %1547 = vadd.xlane.f32.xlu0 %v1546
        %v1548 = vpop.xlane.xlu0 %1547
        %v1549 = vsel %vm1320, %v343, 0.0
        %1550 = vadd.xlane.f32.xlu0 %v1549
        %v1551 = vpop.xlane.xlu0 %1550
        %v1552 = vsel %vm1320, %v344, 0.0
        %1553 = vadd.xlane.f32.xlu0 %v1552
        %v1554 = vpop.xlane.xlu0 %1553
        %v1555 = vsel %vm1320, %v345, 0.0
        %1556 = vadd.xlane.f32.xlu0 %v1555
        %v1557 = vpop.xlane.xlu0 %1556
        %v1558 = vsel %vm1320, %v346, 0.0
        %1559 = vadd.xlane.f32.xlu0 %v1558
        %v1560 = vpop.xlane.xlu0 %1559
        %v1561 = vsel %vm1320, %v347, 0.0
        %1562 = vadd.xlane.f32.xlu0 %v1561
        %v1563 = vpop.xlane.xlu0 %1562
        %v1564 = vsel %vm1320, %v348, 0.0
        %1565 = vadd.xlane.f32.xlu0 %v1564
        %v1566 = vpop.xlane.xlu0 %1565
        %v1567 = vsel %vm1320, %v349, 0.0
        %1568 = vadd.xlane.f32.xlu0 %v1567
        %v1569 = vpop.xlane.xlu0 %1568
        %v1570 = vsel %vm1320, %v350, 0.0
        %1571 = vadd.xlane.f32.xlu0 %v1570
        %v1572 = vpop.xlane.xlu0 %1571
        %v1573 = vsel %vm1320, %v351, 0.0
        %1574 = vadd.xlane.f32.xlu0 %v1573
        %v1575 = vpop.xlane.xlu0 %1574
        %v1576 = vsel %vm1320, %v352, 0.0
        %1577 = vadd.xlane.f32.xlu0 %v1576
        %v1578 = vpop.xlane.xlu0 %1577
        %v1579 = vsel %vm1320, %v353, 0.0
        %1580 = vadd.xlane.f32.xlu0 %v1579
        %v1581 = vpop.xlane.xlu0 %1580
        %v1582 = vsel %vm1320, %v354, 0.0
        %1583 = vadd.xlane.f32.xlu0 %v1582
        %v1584 = vpop.xlane.xlu0 %1583
        %v1585 = vsel %vm1320, %v355, 0.0
        %1586 = vadd.xlane.f32.xlu0 %v1585
        %v1587 = vpop.xlane.xlu0 %1586
        %v1588 = vsel %vm1320, %v356, 0.0
        %1589 = vadd.xlane.f32.xlu0 %v1588
        %v1590 = vpop.xlane.xlu0 %1589
        %v1591 = vsel %vm1320, %v357, 0.0
        %1592 = vadd.xlane.f32.xlu0 %v1591
        %v1593 = vpop.xlane.xlu0 %1592
        %v1594 = vsel %vm1320, %v358, 0.0
        %1595 = vadd.xlane.f32.xlu0 %v1594
        %v1596 = vpop.xlane.xlu0 %1595
        %v1597 = vsel %vm1320, %v359, 0.0
        %1598 = vadd.xlane.f32.xlu0 %v1597
        %v1599 = vpop.xlane.xlu0 %1598
        %v1600 = vsel %vm1320, %v360, 0.0
        %1601 = vadd.xlane.f32.xlu0 %v1600
        %v1602 = vpop.xlane.xlu0 %1601
        %v1603 = vsel %vm1320, %v361, 0.0
        %1604 = vadd.xlane.f32.xlu0 %v1603
        %v1605 = vpop.xlane.xlu0 %1604
        %v1606 = vsel %vm1320, %v362, 0.0
        %1607 = vadd.xlane.f32.xlu0 %v1606
        %v1608 = vpop.xlane.xlu0 %1607
        %v1609 = vsel %vm1320, %v363, 0.0
        %1610 = vadd.xlane.f32.xlu0 %v1609
        %v1611 = vpop.xlane.xlu0 %1610
        %v1612 = vsel %vm1320, %v364, 0.0
        %1613 = vadd.xlane.f32.xlu0 %v1612
        %v1614 = vpop.xlane.xlu0 %1613
        %v1615 = vsel %vm1320, %v365, 0.0
        %1616 = vadd.xlane.f32.xlu0 %v1615
        %v1617 = vpop.xlane.xlu0 %1616
        %v1618 = vsel %vm1320, %v366, 0.0
        %1619 = vadd.xlane.f32.xlu0 %v1618
        %v1620 = vpop.xlane.xlu0 %1619
        %v1621 = vsel %vm1320, %v367, 0.0
        %1622 = vadd.xlane.f32.xlu0 %v1621
        %v1623 = vpop.xlane.xlu0 %1622
        %v1624 = vsel %vm1320, %v368, 0.0
        %1625 = vadd.xlane.f32.xlu0 %v1624
        %v1626 = vpop.xlane.xlu0 %1625
        %v1627 = vsel %vm1320, %v369, 0.0
        %1628 = vadd.xlane.f32.xlu0 %v1627
        %v1629 = vpop.xlane.xlu0 %1628
        %v1630 = vsel %vm1320, %v370, 0.0
        %1631 = vadd.xlane.f32.xlu0 %v1630
        %v1632 = vpop.xlane.xlu0 %1631
        %v1633 = vsel %vm1320, %v371, 0.0
        %1634 = vadd.xlane.f32.xlu0 %v1633
        %v1635 = vpop.xlane.xlu0 %1634
        %v1636 = vsel %vm1320, %v372, 0.0
        %1637 = vadd.xlane.f32.xlu0 %v1636
        %v1638 = vpop.xlane.xlu0 %1637
        %v1639 = vsel %vm1320, %v373, 0.0
        %1640 = vadd.xlane.f32.xlu0 %v1639
        %v1641 = vpop.xlane.xlu0 %1640
        %v1642 = vsel %vm1320, %v374, 0.0
        %1643 = vadd.xlane.f32.xlu0 %v1642
        %v1644 = vpop.xlane.xlu0 %1643
        %v1645 = vsel %vm1320, %v375, 0.0
        %1646 = vadd.xlane.f32.xlu0 %v1645
        %v1647 = vpop.xlane.xlu0 %1646
        %v1648 = vsel %vm1320, %v376, 0.0
        %1649 = vadd.xlane.f32.xlu0 %v1648
        %v1650 = vpop.xlane.xlu0 %1649
        %v1651 = vsel %vm1320, %v377, 0.0
        %1652 = vadd.xlane.f32.xlu0 %v1651
        %v1653 = vpop.xlane.xlu0 %1652
        %v1654 = vsel %vm1320, %v378, 0.0
        %1655 = vadd.xlane.f32.xlu0 %v1654
        %v1656 = vpop.xlane.xlu0 %1655
        %v1657 = vsel %vm1320, %v379, 0.0
        %1658 = vadd.xlane.f32.xlu0 %v1657
        %v1659 = vpop.xlane.xlu0 %1658
        %v1660 = vsel %vm1320, %v380, 0.0
        %1661 = vadd.xlane.f32.xlu0 %v1660
        %v1662 = vpop.xlane.xlu0 %1661
        %v1663 = vsel %vm1320, %v381, 0.0
        %1664 = vadd.xlane.f32.xlu0 %v1663
        %v1665 = vpop.xlane.xlu0 %1664
        %v1666 = vsel %vm1320, %v382, 0.0
        %1667 = vadd.xlane.f32.xlu0 %v1666
        %v1668 = vpop.xlane.xlu0 %1667
        %v1669 = vsel %vm1320, %v383, 0.0
        %1670 = vadd.xlane.f32.xlu0 %v1669
        %v1671 = vpop.xlane.xlu0 %1670
        %v1672 = vsel %vm1320, %v384, 0.0
        %1673 = vadd.xlane.f32.xlu0 %v1672
        %v1674 = vpop.xlane.xlu0 %1673
        %v1675 = vsel %vm1320, %v385, 0.0
        %1676 = vadd.xlane.f32.xlu0 %v1675
        %v1677 = vpop.xlane.xlu0 %1676
        %v1678 = vsel %vm1320, %v386, 0.0
        %1679 = vadd.xlane.f32.xlu0 %v1678
        %v1680 = vpop.xlane.xlu0 %1679
        %v1681 = vsel %vm1320, %v387, 0.0
        %1682 = vadd.xlane.f32.xlu0 %v1681
        %v1683 = vpop.xlane.xlu0 %1682
        %v1684 = vsel %vm1320, %v388, 0.0
        %1685 = vadd.xlane.f32.xlu0 %v1684
        %v1686 = vpop.xlane.xlu0 %1685
        %v1687 = vsel %vm1320, %v389, 0.0
        %1688 = vadd.xlane.f32.xlu0 %v1687
        %v1689 = vpop.xlane.xlu0 %1688
        %v1690 = vsel %vm1320, %v390, 0.0
        %1691 = vadd.xlane.f32.xlu0 %v1690
        %v1692 = vpop.xlane.xlu0 %1691
        %v1693 = vsel %vm1320, %v391, 0.0
        %1694 = vadd.xlane.f32.xlu0 %v1693
        %v1695 = vpop.xlane.xlu0 %1694
        %v1696 = vsel %vm1320, %v392, 0.0
        %1697 = vadd.xlane.f32.xlu0 %v1696
        %v1698 = vpop.xlane.xlu0 %1697
        %v1699 = vsel %vm1320, %v393, 0.0
        %1700 = vadd.xlane.f32.xlu0 %v1699
        %v1701 = vpop.xlane.xlu0 %1700
        %v1702 = vsel %vm1320, %v394, 0.0
        %1703 = vadd.xlane.f32.xlu0 %v1702
        %v1704 = vpop.xlane.xlu0 %1703
        %v1705 = vsel %vm1320, %v395, 0.0
        %1706 = vadd.xlane.f32.xlu0 %v1705
        %v1707 = vpop.xlane.xlu0 %1706
        %v1708 = vsel %vm1320, %v396, 0.0
        %1709 = vadd.xlane.f32.xlu0 %v1708
        %v1710 = vpop.xlane.xlu0 %1709
        %v1711 = vsel %vm1320, %v397, 0.0
        %1712 = vadd.xlane.f32.xlu0 %v1711
        %v1713 = vpop.xlane.xlu0 %1712
        %v1714 = vsel %vm1320, %v398, 0.0
        %1715 = vadd.xlane.f32.xlu0 %v1714
        %v1716 = vpop.xlane.xlu0 %1715
        %v1717 = vsel %vm1320, %v399, 0.0
        %1718 = vadd.xlane.f32.xlu0 %v1717
        %v1719 = vpop.xlane.xlu0 %1718
        %v1720 = vsel %vm1320, %v400, 0.0
        %1721 = vadd.xlane.f32.xlu0 %v1720
        %v1722 = vpop.xlane.xlu0 %1721
        %v1723 = vsel %vm1320, %v401, 0.0
        %1724 = vadd.xlane.f32.xlu0 %v1723
        %v1725 = vpop.xlane.xlu0 %1724
        %v1726 = vsel %vm1320, %v402, 0.0
        %1727 = vadd.xlane.f32.xlu0 %v1726
        %v1728 = vpop.xlane.xlu0 %1727
        %v1729 = vsel %vm1320, %v403, 0.0
        %1730 = vadd.xlane.f32.xlu0 %v1729
        %v1731 = vpop.xlane.xlu0 %1730
        %v1732 = vsel %vm1320, %v404, 0.0
        %1733 = vadd.xlane.f32.xlu0 %v1732
        %v1734 = vpop.xlane.xlu0 %1733
        %v1735 = vsel %vm1320, %v405, 0.0
        %1736 = vadd.xlane.f32.xlu0 %v1735
        %v1737 = vpop.xlane.xlu0 %1736
        %v1738 = vsel %vm1320, %v406, 0.0
        %1739 = vadd.xlane.f32.xlu0 %v1738
        %v1740 = vpop.xlane.xlu0 %1739
        %v1741 = vsel %vm1320, %v407, 0.0
        %1742 = vadd.xlane.f32.xlu0 %v1741
        %v1743 = vpop.xlane.xlu0 %1742
        %v1744 = vsel %vm1320, %v408, 0.0
        %1745 = vadd.xlane.f32.xlu0 %v1744
        %v1746 = vpop.xlane.xlu0 %1745
        %v1747 = vsel %vm1320, %v409, 0.0
        %1748 = vadd.xlane.f32.xlu0 %v1747
        %v1749 = vpop.xlane.xlu0 %1748
        %v1750 = vsel %vm1320, %v410, 0.0
        %1751 = vadd.xlane.f32.xlu0 %v1750
        %v1752 = vpop.xlane.xlu0 %1751
        %v1753 = vsel %vm1320, %v411, 0.0
        %1754 = vadd.xlane.f32.xlu0 %v1753
        %v1755 = vpop.xlane.xlu0 %1754
        %v1756 = vsel %vm1320, %v412, 0.0
        %1757 = vadd.xlane.f32.xlu0 %v1756
        %v1758 = vpop.xlane.xlu0 %1757
        %v1759 = vsel %vm1320, %v413, 0.0
        %1760 = vadd.xlane.f32.xlu0 %v1759
        %v1761 = vpop.xlane.xlu0 %1760
        %v1762 = vsel %vm1320, %v414, 0.0
        %1763 = vadd.xlane.f32.xlu0 %v1762
        %v1764 = vpop.xlane.xlu0 %1763
        %v1765 = vsel %vm1320, %v415, 0.0
        %1766 = vadd.xlane.f32.xlu0 %v1765
        %v1767 = vpop.xlane.xlu0 %1766
        %v1768 = vsel %vm1320, %v416, 0.0
        %1769 = vadd.xlane.f32.xlu0 %v1768
        %v1770 = vpop.xlane.xlu0 %1769
        %v1771 = vsel %vm1320, %v417, 0.0
        %1772 = vadd.xlane.f32.xlu0 %v1771
        %v1773 = vpop.xlane.xlu0 %1772
        %v1774 = vsel %vm1320, %v418, 0.0
        %1775 = vadd.xlane.f32.xlu0 %v1774
        %v1776 = vpop.xlane.xlu0 %1775
        %v1777 = vsel %vm1320, %v419, 0.0
        %1778 = vadd.xlane.f32.xlu0 %v1777
        %v1779 = vpop.xlane.xlu0 %1778
        %v1780 = vsel %vm1320, %v420, 0.0
        %1781 = vadd.xlane.f32.xlu0 %v1780
        %v1782 = vpop.xlane.xlu0 %1781
        %v1783 = vsel %vm1320, %v421, 0.0
        %1784 = vadd.xlane.f32.xlu0 %v1783
        %v1785 = vpop.xlane.xlu0 %1784
        %v1786 = vsel %vm1320, %v422, 0.0
        %1787 = vadd.xlane.f32.xlu0 %v1786
        %v1788 = vpop.xlane.xlu0 %1787
        %v1789 = vsel %vm1320, %v423, 0.0
        %1790 = vadd.xlane.f32.xlu0 %v1789
        %v1791 = vpop.xlane.xlu0 %1790
        %v1792 = vsel %vm1320, %v424, 0.0
        %1793 = vadd.xlane.f32.xlu0 %v1792
        %v1794 = vpop.xlane.xlu0 %1793
        %v1795 = vsel %vm1320, %v425, 0.0
        %1796 = vadd.xlane.f32.xlu0 %v1795
        %v1797 = vpop.xlane.xlu0 %1796
        %v1798 = vsel %vm1320, %v426, 0.0
        %1799 = vadd.xlane.f32.xlu0 %v1798
        %v1800 = vpop.xlane.xlu0 %1799
        %v1801 = vsel %vm1320, %v427, 0.0
        %1802 = vadd.xlane.f32.xlu0 %v1801
        %v1803 = vpop.xlane.xlu0 %1802
        %v1804 = vsel %vm1320, %v428, 0.0
        %1805 = vadd.xlane.f32.xlu0 %v1804
        %v1806 = vpop.xlane.xlu0 %1805
        %v1807 = vsel %vm1320, %v429, 0.0
        %1808 = vadd.xlane.f32.xlu0 %v1807
        %v1809 = vpop.xlane.xlu0 %1808
        %v1810 = vsel %vm1320, %v430, 0.0
        %1811 = vadd.xlane.f32.xlu0 %v1810
        %v1812 = vpop.xlane.xlu0 %1811
        %v1813 = vsel %vm1320, %v431, 0.0
        %1814 = vadd.xlane.f32.xlu0 %v1813
        %v1815 = vpop.xlane.xlu0 %1814
        %v1816 = vsel %vm1320, %v432, 0.0
        %1817 = vadd.xlane.f32.xlu0 %v1816
        %v1818 = vpop.xlane.xlu0 %1817
        %v1819 = vsel %vm1320, %v433, 0.0
        %1820 = vadd.xlane.f32.xlu0 %v1819
        %v1821 = vpop.xlane.xlu0 %1820
        %v1822 = vsel %vm1320, %v434, 0.0
        %1823 = vadd.xlane.f32.xlu0 %v1822
        %v1824 = vpop.xlane.xlu0 %1823
        %v1825 = vsel %vm1320, %v435, 0.0
        %1826 = vadd.xlane.f32.xlu0 %v1825
        %v1827 = vpop.xlane.xlu0 %1826
        %v1828 = vsel %vm1320, %v436, 0.0
        %1829 = vadd.xlane.f32.xlu0 %v1828
        %v1830 = vpop.xlane.xlu0 %1829
        %v1831 = vsel %vm1320, %v437, 0.0
        %1832 = vadd.xlane.f32.xlu0 %v1831
        %v1833 = vpop.xlane.xlu0 %1832
        %v1834 = vsel %vm1320, %v438, 0.0
        %1835 = vadd.xlane.f32.xlu0 %v1834
        %v1836 = vpop.xlane.xlu0 %1835
        %v1837 = vsel %vm1320, %v439, 0.0
        %1838 = vadd.xlane.f32.xlu0 %v1837
        %v1839 = vpop.xlane.xlu0 %1838
        %v1840 = vsel %vm1320, %v440, 0.0
        %1841 = vadd.xlane.f32.xlu0 %v1840
        %v1842 = vpop.xlane.xlu0 %1841
        %v1843 = vsel %vm1320, %v441, 0.0
        %1844 = vadd.xlane.f32.xlu0 %v1843
        %v1845 = vpop.xlane.xlu0 %1844
        %v1846 = vsel %vm1320, %v442, 0.0
        %1847 = vadd.xlane.f32.xlu0 %v1846
        %v1848 = vpop.xlane.xlu0 %1847
        %v1849 = vsel %vm1320, %v443, 0.0
        %1850 = vadd.xlane.f32.xlu0 %v1849
        %v1851 = vpop.xlane.xlu0 %1850
        %v1852 = vsel %vm1320, %v444, 0.0
        %1853 = vadd.xlane.f32.xlu0 %v1852
        %v1854 = vpop.xlane.xlu0 %1853
        %v1855 = vsel %vm1320, %v445, 0.0
        %1856 = vadd.xlane.f32.xlu0 %v1855
        %v1857 = vpop.xlane.xlu0 %1856
        %v1858 = vsel %vm1320, %v446, 0.0
        %1859 = vadd.xlane.f32.xlu0 %v1858
        %v1860 = vpop.xlane.xlu0 %1859
        %v1861 = vsel %vm1320, %v447, 0.0
        %1862 = vadd.xlane.f32.xlu0 %v1861
        %v1863 = vpop.xlane.xlu0 %1862
        %v1864 = vsel %vm1320, %v448, 0.0
        %1865 = vadd.xlane.f32.xlu0 %v1864
        %v1866 = vpop.xlane.xlu0 %1865
        %v1867 = vsel %vm1320, %v449, 0.0
        %1868 = vadd.xlane.f32.xlu0 %v1867
        %v1869 = vpop.xlane.xlu0 %1868
        %v1870 = vsel %vm1320, %v450, 0.0
        %1871 = vadd.xlane.f32.xlu0 %v1870
        %v1872 = vpop.xlane.xlu0 %1871
        %v1873 = vsel %vm1320, %v451, 0.0
        %1874 = vadd.xlane.f32.xlu0 %v1873
        %v1875 = vpop.xlane.xlu0 %1874
        %v1876 = vsel %vm1320, %v452, 0.0
        %1877 = vadd.xlane.f32.xlu0 %v1876
        %v1878 = vpop.xlane.xlu0 %1877
        %v1879 = vsel %vm1320, %v453, 0.0
        %1880 = vadd.xlane.f32.xlu0 %v1879
        %v1881 = vpop.xlane.xlu0 %1880
        %v1882 = vsel %vm1320, %v454, 0.0
        %1883 = vadd.xlane.f32.xlu0 %v1882
        %v1884 = vpop.xlane.xlu0 %1883
        %v1885 = vsel %vm1320, %v455, 0.0
        %1886 = vadd.xlane.f32.xlu0 %v1885
        %v1887 = vpop.xlane.xlu0 %1886
        %v1888 = vsel %vm1320, %v456, 0.0
        %1889 = vadd.xlane.f32.xlu0 %v1888
        %v1890 = vpop.xlane.xlu0 %1889
        %v1891 = vsel %vm1320, %v457, 0.0
        %1892 = vadd.xlane.f32.xlu0 %v1891
        %v1893 = vpop.xlane.xlu0 %1892
        %v1894 = vsel %vm1320, %v458, 0.0
        %1895 = vadd.xlane.f32.xlu0 %v1894
        %v1896 = vpop.xlane.xlu0 %1895
        %v1897 = vsel %vm1320, %v459, 0.0
        %1898 = vadd.xlane.f32.xlu0 %v1897
        %v1899 = vpop.xlane.xlu0 %1898
        %v1900 = vsel %vm1320, %v460, 0.0
        %1901 = vadd.xlane.f32.xlu0 %v1900
        %v1902 = vpop.xlane.xlu0 %1901
        %v1903 = vsel %vm1320, %v461, 0.0
        %1904 = vadd.xlane.f32.xlu0 %v1903
        %v1905 = vpop.xlane.xlu0 %1904
        %v1906 = vsel %vm1320, %v462, 0.0
        %1907 = vadd.xlane.f32.xlu0 %v1906
        %v1908 = vpop.xlane.xlu0 %1907
        %v1909 = vsel %vm1320, %v463, 0.0
        %1910 = vadd.xlane.f32.xlu0 %v1909
        %v1911 = vpop.xlane.xlu0 %1910
        %v1912 = vsel %vm1320, %v464, 0.0
        %1913 = vadd.xlane.f32.xlu0 %v1912
        %v1914 = vpop.xlane.xlu0 %1913
        %v1915 = vsel %vm1320, %v465, 0.0
        %1916 = vadd.xlane.f32.xlu0 %v1915
        %v1917 = vpop.xlane.xlu0 %1916
        %v1918 = vsel %vm1320, %v466, 0.0
        %1919 = vadd.xlane.f32.xlu0 %v1918
        %v1920 = vpop.xlane.xlu0 %1919
        %v1921 = vsel %vm1320, %v467, 0.0
        %1922 = vadd.xlane.f32.xlu0 %v1921
        %v1923 = vpop.xlane.xlu0 %1922
        %v1924 = vsel %vm1320, %v468, 0.0
        %1925 = vadd.xlane.f32.xlu0 %v1924
        %v1926 = vpop.xlane.xlu0 %1925
        %v1927 = vsel %vm1320, %v469, 0.0
        %1928 = vadd.xlane.f32.xlu0 %v1927
        %v1929 = vpop.xlane.xlu0 %1928
        %v1930 = vsel %vm1320, %v470, 0.0
        %1931 = vadd.xlane.f32.xlu0 %v1930
        %v1932 = vpop.xlane.xlu0 %1931
        %v1933 = vsel %vm1320, %v471, 0.0
        %1934 = vadd.xlane.f32.xlu0 %v1933
        %v1935 = vpop.xlane.xlu0 %1934
        %v1936 = vsel %vm1320, %v472, 0.0
        %1937 = vadd.xlane.f32.xlu0 %v1936
        %v1938 = vpop.xlane.xlu0 %1937
        %v1939 = vsel %vm1320, %v473, 0.0
        %1940 = vadd.xlane.f32.xlu0 %v1939
        %v1941 = vpop.xlane.xlu0 %1940
        %v1942 = vsel %vm1320, %v474, 0.0
        %1943 = vadd.xlane.f32.xlu0 %v1942
        %v1944 = vpop.xlane.xlu0 %1943
        %v1945 = vsel %vm1320, %v475, 0.0
        %1946 = vadd.xlane.f32.xlu0 %v1945
        %v1947 = vpop.xlane.xlu0 %1946
        %v1948 = vsel %vm1320, %v476, 0.0
        %1949 = vadd.xlane.f32.xlu0 %v1948
        %v1950 = vpop.xlane.xlu0 %1949
        %v1951 = vsel %vm1320, %v477, 0.0
        %1952 = vadd.xlane.f32.xlu0 %v1951
        %v1953 = vpop.xlane.xlu0 %1952
        %v1954 = vsel %vm1320, %v478, 0.0
        %1955 = vadd.xlane.f32.xlu0 %v1954
        %v1956 = vpop.xlane.xlu0 %1955
        %v1957 = vsel %vm1320, %v479, 0.0
        %1958 = vadd.xlane.f32.xlu0 %v1957
        %v1959 = vpop.xlane.xlu0 %1958
        %v1960 = vsel %vm1320, %v480, 0.0
        %1961 = vadd.xlane.f32.xlu0 %v1960
        %v1962 = vpop.xlane.xlu0 %1961
        %v1963 = vsel %vm1320, %v481, 0.0
        %1964 = vadd.xlane.f32.xlu0 %v1963
        %v1965 = vpop.xlane.xlu0 %1964
        %v1966 = vsel %vm1320, %v482, 0.0
        %1967 = vadd.xlane.f32.xlu0 %v1966
        %v1968 = vpop.xlane.xlu0 %1967
        %v1969 = vsel %vm1320, %v483, 0.0
        %1970 = vadd.xlane.f32.xlu0 %v1969
        %v1971 = vpop.xlane.xlu0 %1970
        %v1972 = vsel %vm1320, %v484, 0.0
        %1973 = vadd.xlane.f32.xlu0 %v1972
        %v1974 = vpop.xlane.xlu0 %1973
        %v1975 = vsel %vm1320, %v485, 0.0
        %1976 = vadd.xlane.f32.xlu0 %v1975
        %v1977 = vpop.xlane.xlu0 %1976
        %v1978 = vsel %vm1320, %v486, 0.0
        %1979 = vadd.xlane.f32.xlu0 %v1978
        %v1980 = vpop.xlane.xlu0 %1979
        %v1981 = vsel %vm1320, %v487, 0.0
        %1982 = vadd.xlane.f32.xlu0 %v1981
        %v1983 = vpop.xlane.xlu0 %1982
        %v1984 = vsel %vm1320, %v488, 0.0
        %1985 = vadd.xlane.f32.xlu0 %v1984
        %v1986 = vpop.xlane.xlu0 %1985
        %v1987 = vsel %vm1320, %v489, 0.0
        %1988 = vadd.xlane.f32.xlu0 %v1987
        %v1989 = vpop.xlane.xlu0 %1988
        %v1990 = vsel %vm1320, %v490, 0.0
        %1991 = vadd.xlane.f32.xlu0 %v1990
        %v1992 = vpop.xlane.xlu0 %1991
        %v1993 = vsel %vm1320, %v491, 0.0
        %1994 = vadd.xlane.f32.xlu0 %v1993
        %v1995 = vpop.xlane.xlu0 %1994
        %v1996 = vsel %vm1320, %v492, 0.0
        %1997 = vadd.xlane.f32.xlu0 %v1996
        %v1998 = vpop.xlane.xlu0 %1997
        %v1999 = vsel %vm1320, %v493, 0.0
        %2000 = vadd.xlane.f32.xlu0 %v1999
        %v2001 = vpop.xlane.xlu0 %2000
        %v2002 = vsel %vm1320, %v494, 0.0
        %2003 = vadd.xlane.f32.xlu0 %v2002
        %v2004 = vpop.xlane.xlu0 %2003
        %v2005 = vsel %vm1320, %v495, 0.0
        %2006 = vadd.xlane.f32.xlu0 %v2005
        %v2007 = vpop.xlane.xlu0 %2006
        %v2008 = vsel %vm1320, %v496, 0.0
        %2009 = vadd.xlane.f32.xlu0 %v2008
        %v2010 = vpop.xlane.xlu0 %2009
        %v2011 = vsel %vm1320, %v497, 0.0
        %2012 = vadd.xlane.f32.xlu0 %v2011
        %v2013 = vpop.xlane.xlu0 %2012
        %v2014 = vsel %vm1320, %v498, 0.0
        %2015 = vadd.xlane.f32.xlu0 %v2014
        %v2016 = vpop.xlane.xlu0 %2015
        %v2017 = vsel %vm1320, %v499, 0.0
        %2018 = vadd.xlane.f32.xlu0 %v2017
        %v2019 = vpop.xlane.xlu0 %2018
        %v2020 = vsel %vm1320, %v500, 0.0
        %2021 = vadd.xlane.f32.xlu0 %v2020
        %v2022 = vpop.xlane.xlu0 %2021
        %v2023 = vsel %vm1320, %v501, 0.0
        %2024 = vadd.xlane.f32.xlu0 %v2023
        %v2025 = vpop.xlane.xlu0 %2024
        %v2026 = vsel %vm1320, %v502, 0.0
        %2027 = vadd.xlane.f32.xlu0 %v2026
        %v2028 = vpop.xlane.xlu0 %2027
        %v2029 = vsel %vm1320, %v503, 0.0
        %2030 = vadd.xlane.f32.xlu0 %v2029
        %v2031 = vpop.xlane.xlu0 %2030
        %v2032 = vsel %vm1320, %v504, 0.0
        %2033 = vadd.xlane.f32.xlu0 %v2032
        %v2034 = vpop.xlane.xlu0 %2033
        %v2035 = vsel %vm1320, %v505, 0.0
        %2036 = vadd.xlane.f32.xlu0 %v2035
        %v2037 = vpop.xlane.xlu0 %2036
        %v2038 = vsel %vm1320, %v506, 0.0
        %2039 = vadd.xlane.f32.xlu0 %v2038
        %v2040 = vpop.xlane.xlu0 %2039
        %v2041 = vsel %vm1320, %v507, 0.0
        %2042 = vadd.xlane.f32.xlu0 %v2041
        %v2043 = vpop.xlane.xlu0 %2042
        %v2044 = vsel %vm1320, %v508, 0.0
        %2045 = vadd.xlane.f32.xlu0 %v2044
        %v2046 = vpop.xlane.xlu0 %2045
        %v2047 = vsel %vm1320, %v509, 0.0
        %2048 = vadd.xlane.f32.xlu0 %v2047
        %v2049 = vpop.xlane.xlu0 %2048
        %v2050 = vsel %vm1320, %v510, 0.0
        %2051 = vadd.xlane.f32.xlu0 %v2050
        %v2052 = vpop.xlane.xlu0 %2051
        %v2053 = vsel %vm1320, %v511, 0.0
        %2054 = vadd.xlane.f32.xlu0 %v2053
        %v2055 = vpop.xlane.xlu0 %2054
        %v2056 = vsel %vm1320, %v512, 0.0
        %2057 = vadd.xlane.f32.xlu0 %v2056
        %v2058 = vpop.xlane.xlu0 %2057
        %v2059 = vsel %vm1320, %v513, 0.0
        %2060 = vadd.xlane.f32.xlu0 %v2059
        %v2061 = vpop.xlane.xlu0 %2060
        %v2062 = vsel %vm1320, %v514, 0.0
        %2063 = vadd.xlane.f32.xlu0 %v2062
        %v2064 = vpop.xlane.xlu0 %2063
        %v2065 = vsel %vm1320, %v515, 0.0
        %2066 = vadd.xlane.f32.xlu0 %v2065
        %v2067 = vpop.xlane.xlu0 %2066
        %v2068 = vsel %vm1320, %v516, 0.0
        %2069 = vadd.xlane.f32.xlu0 %v2068
        %v2070 = vpop.xlane.xlu0 %2069
        %v2071 = vsel %vm1320, %v517, 0.0
        %2072 = vadd.xlane.f32.xlu0 %v2071
        %v2073 = vpop.xlane.xlu0 %2072
        %v2074 = vsel %vm1320, %v518, 0.0
        %2075 = vadd.xlane.f32.xlu0 %v2074
        %v2076 = vpop.xlane.xlu0 %2075
        %v2077 = vsel %vm1320, %v519, 0.0
        %2078 = vadd.xlane.f32.xlu0 %v2077
        %v2079 = vpop.xlane.xlu0 %2078
        %v2080 = vsel %vm1320, %v520, 0.0
        %2081 = vadd.xlane.f32.xlu0 %v2080
        %v2082 = vpop.xlane.xlu0 %2081
        %v2083 = vsel %vm1320, %v521, 0.0
        %2084 = vadd.xlane.f32.xlu0 %v2083
        %v2085 = vpop.xlane.xlu0 %2084
        %v2086 = vsel %vm1320, %v522, 0.0
        %2087 = vadd.xlane.f32.xlu0 %v2086
        %v2088 = vpop.xlane.xlu0 %2087
        %v2089 = vsel %vm1320, %v523, 0.0
        %2090 = vadd.xlane.f32.xlu0 %v2089
        %v2091 = vpop.xlane.xlu0 %2090
        %v2092 = vsel %vm1320, %v524, 0.0
        %2093 = vadd.xlane.f32.xlu0 %v2092
        %v2094 = vpop.xlane.xlu0 %2093
        %v2095 = vsel %vm1320, %v525, 0.0
        %2096 = vadd.xlane.f32.xlu0 %v2095
        %v2097 = vpop.xlane.xlu0 %2096
        %v2098 = vsel %vm1320, %v526, 0.0
        %2099 = vadd.xlane.f32.xlu0 %v2098
        %v2100 = vpop.xlane.xlu0 %2099
        %v2101 = vsel %vm1320, %v527, 0.0
        %2102 = vadd.xlane.f32.xlu0 %v2101
        %v2103 = vpop.xlane.xlu0 %2102
        %v2104 = vsel %vm1320, %v528, 0.0
        %2105 = vadd.xlane.f32.xlu0 %v2104
        %v2106 = vpop.xlane.xlu0 %2105
        %v2107 = vsel %vm1320, %v529, 0.0
        %2108 = vadd.xlane.f32.xlu0 %v2107
        %v2109 = vpop.xlane.xlu0 %2108
        %v2110 = vsel %vm1320, %v530, 0.0
        %2111 = vadd.xlane.f32.xlu0 %v2110
        %v2112 = vpop.xlane.xlu0 %2111
        %v2113 = vsel %vm1320, %v531, 0.0
        %2114 = vadd.xlane.f32.xlu0 %v2113
        %v2115 = vpop.xlane.xlu0 %2114
        %v2116 = vsel %vm1320, %v532, 0.0
        %2117 = vadd.xlane.f32.xlu0 %v2116
        %v2118 = vpop.xlane.xlu0 %2117
        %v2119 = vsel %vm1320, %v533, 0.0
        %2120 = vadd.xlane.f32.xlu0 %v2119
        %v2121 = vpop.xlane.xlu0 %2120
        %v2122 = vsel %vm1320, %v534, 0.0
        %2123 = vadd.xlane.f32.xlu0 %v2122
        %v2124 = vpop.xlane.xlu0 %2123
        %v2125 = vsel %vm1320, %v535, 0.0
        %2126 = vadd.xlane.f32.xlu0 %v2125
        %v2127 = vpop.xlane.xlu0 %2126
        %v2128 = vsel %vm1320, %v536, 0.0
        %2129 = vadd.xlane.f32.xlu0 %v2128
        %v2130 = vpop.xlane.xlu0 %2129
        %v2131 = vsel %vm1320, %v537, 0.0
        %2132 = vadd.xlane.f32.xlu0 %v2131
        %v2133 = vpop.xlane.xlu0 %2132
        %v2134 = vsel %vm1320, %v538, 0.0
        %2135 = vadd.xlane.f32.xlu0 %v2134
        %v2136 = vpop.xlane.xlu0 %2135
        %v2137 = vsel %vm1320, %v539, 0.0
        %2138 = vadd.xlane.f32.xlu0 %v2137
        %v2139 = vpop.xlane.xlu0 %2138
        %v2140 = vsel %vm1320, %v540, 0.0
        %2141 = vadd.xlane.f32.xlu0 %v2140
        %v2142 = vpop.xlane.xlu0 %2141
        %v2143 = vsel %vm1320, %v541, 0.0
        %2144 = vadd.xlane.f32.xlu0 %v2143
        %v2145 = vpop.xlane.xlu0 %2144
        %v2146 = vsel %vm1320, %v542, 0.0
        %2147 = vadd.xlane.f32.xlu0 %v2146
        %v2148 = vpop.xlane.xlu0 %2147
        %v2149 = vsel %vm1320, %v543, 0.0
        %2150 = vadd.xlane.f32.xlu0 %v2149
        %v2151 = vpop.xlane.xlu0 %2150
        %v2152 = vsel %vm1320, %v544, 0.0
        %2153 = vadd.xlane.f32.xlu0 %v2152
        %v2154 = vpop.xlane.xlu0 %2153
        %v2155 = vsel %vm1320, %v545, 0.0
        %2156 = vadd.xlane.f32.xlu0 %v2155
        %v2157 = vpop.xlane.xlu0 %2156
        %v2158 = vsel %vm1320, %v546, 0.0
        %2159 = vadd.xlane.f32.xlu0 %v2158
        %v2160 = vpop.xlane.xlu0 %2159
        %v2161 = vsel %vm1320, %v547, 0.0
        %2162 = vadd.xlane.f32.xlu0 %v2161
        %v2163 = vpop.xlane.xlu0 %2162
        %v2164 = vsel %vm1320, %v548, 0.0
        %2165 = vadd.xlane.f32.xlu0 %v2164
        %v2166 = vpop.xlane.xlu0 %2165
        %v2167 = vsel %vm1320, %v549, 0.0
        %2168 = vadd.xlane.f32.xlu0 %v2167
        %v2169 = vpop.xlane.xlu0 %2168
        %v2170 = vsel %vm1320, %v550, 0.0
        %2171 = vadd.xlane.f32.xlu0 %v2170
        %v2172 = vpop.xlane.xlu0 %2171
        %v2173 = vsel %vm1320, %v551, 0.0
        %2174 = vadd.xlane.f32.xlu0 %v2173
        %v2175 = vpop.xlane.xlu0 %2174
        %v2176 = vsel %vm1320, %v552, 0.0
        %2177 = vadd.xlane.f32.xlu0 %v2176
        %v2178 = vpop.xlane.xlu0 %2177
        %v2179 = vsel %vm1320, %v553, 0.0
        %2180 = vadd.xlane.f32.xlu0 %v2179
        %v2181 = vpop.xlane.xlu0 %2180
        %v2182 = vsel %vm1320, %v554, 0.0
        %2183 = vadd.xlane.f32.xlu0 %v2182
        %v2184 = vpop.xlane.xlu0 %2183
        %v2185 = vmul.f32 %v1323, 0.015625
        %v2186 = vmul.f32 %v1326, 0.015625
        %v2187 = vmul.f32 %v1329, 0.015625
        %v2188 = vmul.f32 %v1332, 0.015625
        %v2189 = vmul.f32 %v1335, 0.015625
        %v2190 = vmul.f32 %v1338, 0.015625
        %v2191 = vmul.f32 %v1341, 0.015625
        %v2192 = vmul.f32 %v1344, 0.015625
        %v2193 = vmul.f32 %v1347, 0.015625
        %v2194 = vmul.f32 %v1350, 0.015625
        %v2195 = vmul.f32 %v1353, 0.015625
        %v2196 = vmul.f32 %v1356, 0.015625
        %v2197 = vmul.f32 %v1359, 0.015625
        %v2198 = vmul.f32 %v1362, 0.015625
        %v2199 = vmul.f32 %v1365, 0.015625
        %v2200 = vmul.f32 %v1368, 0.015625
        %v2201 = vmul.f32 %v1371, 0.015625
        %v2202 = vmul.f32 %v1374, 0.015625
        %v2203 = vmul.f32 %v1377, 0.015625
        %v2204 = vmul.f32 %v1380, 0.015625
        %v2205 = vmul.f32 %v1383, 0.015625
        %v2206 = vmul.f32 %v1386, 0.015625
        %v2207 = vmul.f32 %v1389, 0.015625
        %v2208 = vmul.f32 %v1392, 0.015625
        %v2209 = vmul.f32 %v1395, 0.015625
        %v2210 = vmul.f32 %v1398, 0.015625
        %v2211 = vmul.f32 %v1401, 0.015625
        %v2212 = vmul.f32 %v1404, 0.015625
        %v2213 = vmul.f32 %v1407, 0.015625
        %v2214 = vmul.f32 %v1410, 0.015625
        %v2215 = vmul.f32 %v1413, 0.015625
        %v2216 = vmul.f32 %v1416, 0.015625
        %v2217 = vmul.f32 %v1419, 0.015625
        %v2218 = vmul.f32 %v1422, 0.015625
        %v2219 = vmul.f32 %v1425, 0.015625
        %v2220 = vmul.f32 %v1428, 0.015625
        %v2221 = vmul.f32 %v1431, 0.015625
        %v2222 = vmul.f32 %v1434, 0.015625
        %v2223 = vmul.f32 %v1437, 0.015625
        %v2224 = vmul.f32 %v1440, 0.015625
        %v2225 = vmul.f32 %v1443, 0.015625
        %v2226 = vmul.f32 %v1446, 0.015625
        %v2227 = vmul.f32 %v1449, 0.015625
        %v2228 = vmul.f32 %v1452, 0.015625
        %v2229 = vmul.f32 %v1455, 0.015625
        %v2230 = vmul.f32 %v1458, 0.015625
        %v2231 = vmul.f32 %v1461, 0.015625
        %v2232 = vmul.f32 %v1464, 0.015625
        %v2233 = vmul.f32 %v1467, 0.015625
        %v2234 = vmul.f32 %v1470, 0.015625
        %v2235 = vmul.f32 %v1473, 0.015625
        %v2236 = vmul.f32 %v1476, 0.015625
        %v2237 = vmul.f32 %v1479, 0.015625
        %v2238 = vmul.f32 %v1482, 0.015625
        %v2239 = vmul.f32 %v1485, 0.015625
        %v2240 = vmul.f32 %v1488, 0.015625
        %v2241 = vmul.f32 %v1491, 0.015625
        %v2242 = vmul.f32 %v1494, 0.015625
        %v2243 = vmul.f32 %v1497, 0.015625
        %v2244 = vmul.f32 %v1500, 0.015625
        %v2245 = vmul.f32 %v1503, 0.015625
        %v2246 = vmul.f32 %v1506, 0.015625
        %v2247 = vmul.f32 %v1509, 0.015625
        %v2248 = vmul.f32 %v1512, 0.015625
        %v2249 = vmul.f32 %v1515, 0.015625
        %v2250 = vmul.f32 %v1518, 0.015625
        %v2251 = vmul.f32 %v1521, 0.015625
        %v2252 = vmul.f32 %v1524, 0.015625
        %v2253 = vmul.f32 %v1527, 0.015625
        %v2254 = vmul.f32 %v1530, 0.015625
        %v2255 = vmul.f32 %v1533, 0.015625
        %v2256 = vmul.f32 %v1536, 0.015625
        %v2257 = vmul.f32 %v1539, 0.015625
        %v2258 = vmul.f32 %v1542, 0.015625
        %v2259 = vmul.f32 %v1545, 0.015625
        %v2260 = vmul.f32 %v1548, 0.015625
        %v2261 = vmul.f32 %v1551, 0.015625
        %v2262 = vmul.f32 %v1554, 0.015625
        %v2263 = vmul.f32 %v1557, 0.015625
        %v2264 = vmul.f32 %v1560, 0.015625
        %v2265 = vmul.f32 %v1563, 0.015625
        %v2266 = vmul.f32 %v1566, 0.015625
        %v2267 = vmul.f32 %v1569, 0.015625
        %v2268 = vmul.f32 %v1572, 0.015625
        %v2269 = vmul.f32 %v1575, 0.015625
        %v2270 = vmul.f32 %v1578, 0.015625
        %v2271 = vmul.f32 %v1581, 0.015625
        %v2272 = vmul.f32 %v1584, 0.015625
        %v2273 = vmul.f32 %v1587, 0.015625
        %v2274 = vmul.f32 %v1590, 0.015625
        %v2275 = vmul.f32 %v1593, 0.015625
        %v2276 = vmul.f32 %v1596, 0.015625
        %v2277 = vmul.f32 %v1599, 0.015625
        %v2278 = vmul.f32 %v1602, 0.015625
        %v2279 = vmul.f32 %v1605, 0.015625
        %v2280 = vmul.f32 %v1608, 0.015625
        %v2281 = vmul.f32 %v1611, 0.015625
        %v2282 = vmul.f32 %v1614, 0.015625
        %v2283 = vmul.f32 %v1617, 0.015625
        %v2284 = vmul.f32 %v1620, 0.015625
        %v2285 = vmul.f32 %v1623, 0.015625
        %v2286 = vmul.f32 %v1626, 0.015625
        %v2287 = vmul.f32 %v1629, 0.015625
        %v2288 = vmul.f32 %v1632, 0.015625
        %v2289 = vmul.f32 %v1635, 0.015625
        %v2290 = vmul.f32 %v1638, 0.015625
        %v2291 = vmul.f32 %v1641, 0.015625
        %v2292 = vmul.f32 %v1644, 0.015625
        %v2293 = vmul.f32 %v1647, 0.015625
        %v2294 = vmul.f32 %v1650, 0.015625
        %v2295 = vmul.f32 %v1653, 0.015625
        %v2296 = vmul.f32 %v1656, 0.015625
        %v2297 = vmul.f32 %v1659, 0.015625
        %v2298 = vmul.f32 %v1662, 0.015625
        %v2299 = vmul.f32 %v1665, 0.015625
        %v2300 = vmul.f32 %v1668, 0.015625
        %v2301 = vmul.f32 %v1671, 0.015625
        %v2302 = vmul.f32 %v1674, 0.015625
        %v2303 = vmul.f32 %v1677, 0.015625
        %v2304 = vmul.f32 %v1680, 0.015625
        %v2305 = vmul.f32 %v1683, 0.015625
        %v2306 = vmul.f32 %v1686, 0.015625
        %v2307 = vmul.f32 %v1689, 0.015625
        %v2308 = vmul.f32 %v1692, 0.015625
        %v2309 = vmul.f32 %v1695, 0.015625
        %v2310 = vmul.f32 %v1698, 0.015625
        %v2311 = vmul.f32 %v1701, 0.015625
        %v2312 = vmul.f32 %v1704, 0.015625
        %v2313 = vmul.f32 %v1707, 0.015625
        %v2314 = vmul.f32 %v1710, 0.015625
        %v2315 = vmul.f32 %v1713, 0.015625
        %v2316 = vmul.f32 %v1716, 0.015625
        %v2317 = vmul.f32 %v1719, 0.015625
        %v2318 = vmul.f32 %v1722, 0.015625
        %v2319 = vmul.f32 %v1725, 0.015625
        %v2320 = vmul.f32 %v1728, 0.015625
        %v2321 = vmul.f32 %v1731, 0.015625
        %v2322 = vmul.f32 %v1734, 0.015625
        %v2323 = vmul.f32 %v1737, 0.015625
        %v2324 = vmul.f32 %v1740, 0.015625
        %v2325 = vmul.f32 %v1743, 0.015625
        %v2326 = vmul.f32 %v1746, 0.015625
        %v2327 = vmul.f32 %v1749, 0.015625
        %v2328 = vmul.f32 %v1752, 0.015625
        %v2329 = vmul.f32 %v1755, 0.015625
        %v2330 = vmul.f32 %v1758, 0.015625
        %v2331 = vmul.f32 %v1761, 0.015625
        %v2332 = vmul.f32 %v1764, 0.015625
        %v2333 = vmul.f32 %v1767, 0.015625
        %v2334 = vmul.f32 %v1770, 0.015625
        %v2335 = vmul.f32 %v1773, 0.015625
        %v2336 = vmul.f32 %v1776, 0.015625
        %v2337 = vmul.f32 %v1779, 0.015625
        %v2338 = vmul.f32 %v1782, 0.015625
        %v2339 = vmul.f32 %v1785, 0.015625
        %v2340 = vmul.f32 %v1788, 0.015625
        %v2341 = vmul.f32 %v1791, 0.015625
        %v2342 = vmul.f32 %v1794, 0.015625
        %v2343 = vmul.f32 %v1797, 0.015625
        %v2344 = vmul.f32 %v1800, 0.015625
        %v2345 = vmul.f32 %v1803, 0.015625
        %v2346 = vmul.f32 %v1806, 0.015625
        %v2347 = vmul.f32 %v1809, 0.015625
        %v2348 = vmul.f32 %v1812, 0.015625
        %v2349 = vmul.f32 %v1815, 0.015625
        %v2350 = vmul.f32 %v1818, 0.015625
        %v2351 = vmul.f32 %v1821, 0.015625
        %v2352 = vmul.f32 %v1824, 0.015625
        %v2353 = vmul.f32 %v1827, 0.015625
        %v2354 = vmul.f32 %v1830, 0.015625
        %v2355 = vmul.f32 %v1833, 0.015625
        %v2356 = vmul.f32 %v1836, 0.015625
        %v2357 = vmul.f32 %v1839, 0.015625
        %v2358 = vmul.f32 %v1842, 0.015625
        %v2359 = vmul.f32 %v1845, 0.015625
        %v2360 = vmul.f32 %v1848, 0.015625
        %v2361 = vmul.f32 %v1851, 0.015625
        %v2362 = vmul.f32 %v1854, 0.015625
        %v2363 = vmul.f32 %v1857, 0.015625
        %v2364 = vmul.f32 %v1860, 0.015625
        %v2365 = vmul.f32 %v1863, 0.015625
        %v2366 = vmul.f32 %v1866, 0.015625
        %v2367 = vmul.f32 %v1869, 0.015625
        %v2368 = vmul.f32 %v1872, 0.015625
        %v2369 = vmul.f32 %v1875, 0.015625
        %v2370 = vmul.f32 %v1878, 0.015625
        %v2371 = vmul.f32 %v1881, 0.015625
        %v2372 = vmul.f32 %v1884, 0.015625
        %v2373 = vmul.f32 %v1887, 0.015625
        %v2374 = vmul.f32 %v1890, 0.015625
        %v2375 = vmul.f32 %v1893, 0.015625
        %v2376 = vmul.f32 %v1896, 0.015625
        %v2377 = vmul.f32 %v1899, 0.015625
        %v2378 = vmul.f32 %v1902, 0.015625
        %v2379 = vmul.f32 %v1905, 0.015625
        %v2380 = vmul.f32 %v1908, 0.015625
        %v2381 = vmul.f32 %v1911, 0.015625
        %v2382 = vmul.f32 %v1914, 0.015625
        %v2383 = vmul.f32 %v1917, 0.015625
        %v2384 = vmul.f32 %v1920, 0.015625
        %v2385 = vmul.f32 %v1923, 0.015625
        %v2386 = vmul.f32 %v1926, 0.015625
        %v2387 = vmul.f32 %v1929, 0.015625
        %v2388 = vmul.f32 %v1932, 0.015625
        %v2389 = vmul.f32 %v1935, 0.015625
        %v2390 = vmul.f32 %v1938, 0.015625
        %v2391 = vmul.f32 %v1941, 0.015625
        %v2392 = vmul.f32 %v1944, 0.015625
        %v2393 = vmul.f32 %v1947, 0.015625
        %v2394 = vmul.f32 %v1950, 0.015625
        %v2395 = vmul.f32 %v1953, 0.015625
        %v2396 = vmul.f32 %v1956, 0.015625
        %v2397 = vmul.f32 %v1959, 0.015625
        %v2398 = vmul.f32 %v1962, 0.015625
        %v2399 = vmul.f32 %v1965, 0.015625
        %v2400 = vmul.f32 %v1968, 0.015625
        %v2401 = vmul.f32 %v1971, 0.015625
        %v2402 = vmul.f32 %v1974, 0.015625
        %v2403 = vmul.f32 %v1977, 0.015625
        %v2404 = vmul.f32 %v1980, 0.015625
        %v2405 = vmul.f32 %v1983, 0.015625
        %v2406 = vmul.f32 %v1986, 0.015625
        %v2407 = vmul.f32 %v1989, 0.015625
        %v2408 = vmul.f32 %v1992, 0.015625
        %v2409 = vmul.f32 %v1995, 0.015625
        %v2410 = vmul.f32 %v1998, 0.015625
        %v2411 = vmul.f32 %v2001, 0.015625
        %v2412 = vmul.f32 %v2004, 0.015625
        %v2413 = vmul.f32 %v2007, 0.015625
        %v2414 = vmul.f32 %v2010, 0.015625
        %v2415 = vmul.f32 %v2013, 0.015625
        %v2416 = vmul.f32 %v2016, 0.015625
        %v2417 = vmul.f32 %v2019, 0.015625
        %v2418 = vmul.f32 %v2022, 0.015625
        %v2419 = vmul.f32 %v2025, 0.015625
        %v2420 = vmul.f32 %v2028, 0.015625
        %v2421 = vmul.f32 %v2031, 0.015625
        %v2422 = vmul.f32 %v2034, 0.015625
        %v2423 = vmul.f32 %v2037, 0.015625
        %v2424 = vmul.f32 %v2040, 0.015625
        %v2425 = vmul.f32 %v2043, 0.015625
        %v2426 = vmul.f32 %v2046, 0.015625
        %v2427 = vmul.f32 %v2049, 0.015625
        %v2428 = vmul.f32 %v2052, 0.015625
        %v2429 = vmul.f32 %v2055, 0.015625
        %v2430 = vmul.f32 %v2058, 0.015625
        %v2431 = vmul.f32 %v2061, 0.015625
        %v2432 = vmul.f32 %v2064, 0.015625
        %v2433 = vmul.f32 %v2067, 0.015625
        %v2434 = vmul.f32 %v2070, 0.015625
        %v2435 = vmul.f32 %v2073, 0.015625
        %v2436 = vmul.f32 %v2076, 0.015625
        %v2437 = vmul.f32 %v2079, 0.015625
        %v2438 = vmul.f32 %v2082, 0.015625
        %v2439 = vmul.f32 %v2085, 0.015625
        %v2440 = vmul.f32 %v2088, 0.015625
        %v2441 = vmul.f32 %v2091, 0.015625
        %v2442 = vmul.f32 %v2094, 0.015625
        %v2443 = vmul.f32 %v2097, 0.015625
        %v2444 = vmul.f32 %v2100, 0.015625
        %v2445 = vmul.f32 %v2103, 0.015625
        %v2446 = vmul.f32 %v2106, 0.015625
        %v2447 = vmul.f32 %v2109, 0.015625
        %v2448 = vmul.f32 %v2112, 0.015625
        %v2449 = vmul.f32 %v2115, 0.015625
        %v2450 = vmul.f32 %v2118, 0.015625
        %v2451 = vmul.f32 %v2121, 0.015625
        %v2452 = vmul.f32 %v2124, 0.015625
        %v2453 = vmul.f32 %v2127, 0.015625
        %v2454 = vmul.f32 %v2130, 0.015625
        %v2455 = vmul.f32 %v2133, 0.015625
        %v2456 = vmul.f32 %v2136, 0.015625
        %v2457 = vmul.f32 %v2139, 0.015625
        %v2458 = vmul.f32 %v2142, 0.015625
        %v2459 = vmul.f32 %v2145, 0.015625
        %v2460 = vmul.f32 %v2148, 0.015625
        %v2461 = vmul.f32 %v2151, 0.015625
        %v2462 = vmul.f32 %v2154, 0.015625
        %v2463 = vmul.f32 %v2157, 0.015625
        %v2464 = vmul.f32 %v2160, 0.015625
        %v2465 = vmul.f32 %v2163, 0.015625
        %v2466 = vmul.f32 %v2166, 0.015625
        %v2467 = vmul.f32 %v2169, 0.015625
        %v2468 = vmul.f32 %v2172, 0.015625
        %v2469 = vmul.f32 %v2175, 0.015625
        %v2470 = vmul.f32 %v2178, 0.015625
        %v2471 = vmul.f32 %v2181, 0.015625
        %v2472 = vmul.f32 %v2184, 0.015625
        %v2473 = vld [vmem:[%s3] sm:$0xff]
        %v2474 = vld [vmem:[%s3 + $0x8] sm:$0xff]
        %v2475 = vld [vmem:[%s3 + $0x10] sm:$0xff]
        %v2476 = vld [vmem:[%s3 + $0x18] sm:$0xff]
        %v2477 = vld [vmem:[%s3 + $0x20] sm:$0xff]
        %v2478 = vld [vmem:[%s3 + $0x28] sm:$0xff]
        %v2479 = vld [vmem:[%s3 + $0x30] sm:$0xff]
        %v2480 = vld [vmem:[%s3 + $0x38] sm:$0xff]
        %v2481 = vld [vmem:[%s3 + $0x40] sm:$0xff]
        %v2482 = vld [vmem:[%s3 + $0x48] sm:$0xff]
        %v2483 = vld [vmem:[%s3 + $0x50] sm:$0xff]
        %v2484 = vld [vmem:[%s3 + $0x58] sm:$0xff]
        %v2485 = vld [vmem:[%s3 + $0x60] sm:$0xff]
        %v2486 = vld [vmem:[%s3 + $0x68] sm:$0xff]
        %v2487 = vld [vmem:[%s3 + $0x70] sm:$0xff]
        %v2488 = vld [vmem:[%s3 + $0x78] sm:$0xff]
        %v2489 = vld [vmem:[%s3 + $0x80] sm:$0xff]
        %v2490 = vld [vmem:[%s3 + $0x88] sm:$0xff]
        %v2491 = vld [vmem:[%s3 + $0x90] sm:$0xff]
        %v2492 = vld [vmem:[%s3 + $0x98] sm:$0xff]
        %v2493 = vld [vmem:[%s3 + $0xa0] sm:$0xff]
        %v2494 = vld [vmem:[%s3 + $0xa8] sm:$0xff]
        %v2495 = vld [vmem:[%s3 + $0xb0] sm:$0xff]
        %v2496 = vld [vmem:[%s3 + $0xb8] sm:$0xff]
        %v2497 = vld [vmem:[%s3 + $0xc0] sm:$0xff]
        %v2498 = vld [vmem:[%s3 + $0xc8] sm:$0xff]
        %v2499 = vld [vmem:[%s3 + $0xd0] sm:$0xff]
        %v2500 = vld [vmem:[%s3 + $0xd8] sm:$0xff]
        %v2501 = vld [vmem:[%s3 + $0xe0] sm:$0xff]
        %v2502 = vld [vmem:[%s3 + $0xe8] sm:$0xff]
        %v2503 = vld [vmem:[%s3 + $0xf0] sm:$0xff]
        %v2504 = vld [vmem:[%s3 + $0xf8] sm:$0xff]
        %v2505 = vld [vmem:[%s3 + $0x100] sm:$0xff]
        %v2506 = vld [vmem:[%s3 + $0x108] sm:$0xff]
        %v2507 = vld [vmem:[%s3 + $0x110] sm:$0xff]
        %v2508 = vld [vmem:[%s3 + $0x118] sm:$0xff]
        %2797 = vrot.lane.b32.xlu0 %v267, 64
        %v2798 = vpop.permute.xlu0 %2797
        %2799 = vrot.lane.b32.xlu0 %v268, 64
        %v2800 = vpop.permute.xlu0 %2799
        %2801 = vrot.lane.b32.xlu0 %v269, 64
        %v2802 = vpop.permute.xlu0 %2801
        %2803 = vrot.lane.b32.xlu0 %v270, 64
        %v2804 = vpop.permute.xlu0 %2803
        %2805 = vrot.lane.b32.xlu0 %v271, 64
        %v2806 = vpop.permute.xlu0 %2805
        %2807 = vrot.lane.b32.xlu0 %v272, 64
        %v2808 = vpop.permute.xlu0 %2807
        %2809 = vrot.lane.b32.xlu0 %v273, 64
        %v2810 = vpop.permute.xlu0 %2809
        %2811 = vrot.lane.b32.xlu0 %v274, 64
        %v2812 = vpop.permute.xlu0 %2811
        %2813 = vrot.lane.b32.xlu0 %v275, 64
        %v2814 = vpop.permute.xlu0 %2813
        %2815 = vrot.lane.b32.xlu0 %v276, 64
        %v2816 = vpop.permute.xlu0 %2815
        %2817 = vrot.lane.b32.xlu0 %v277, 64
        %v2818 = vpop.permute.xlu0 %2817
        %2819 = vrot.lane.b32.xlu0 %v278, 64
        %v2820 = vpop.permute.xlu0 %2819
        %2821 = vrot.lane.b32.xlu0 %v279, 64
        %v2822 = vpop.permute.xlu0 %2821
        %2823 = vrot.lane.b32.xlu0 %v280, 64
        %v2824 = vpop.permute.xlu0 %2823
        %2825 = vrot.lane.b32.xlu0 %v281, 64
        %v2826 = vpop.permute.xlu0 %2825
        %2827 = vrot.lane.b32.xlu0 %v282, 64
        %v2828 = vpop.permute.xlu0 %2827
        %2829 = vrot.lane.b32.xlu0 %v283, 64
        %v2830 = vpop.permute.xlu0 %2829
        %2831 = vrot.lane.b32.xlu0 %v284, 64
        %v2832 = vpop.permute.xlu0 %2831
        %2833 = vrot.lane.b32.xlu0 %v285, 64
        %v2834 = vpop.permute.xlu0 %2833
        %2835 = vrot.lane.b32.xlu0 %v286, 64
        %v2836 = vpop.permute.xlu0 %2835
        %2837 = vrot.lane.b32.xlu0 %v287, 64
        %v2838 = vpop.permute.xlu0 %2837
        %2839 = vrot.lane.b32.xlu0 %v288, 64
        %v2840 = vpop.permute.xlu0 %2839
        %2841 = vrot.lane.b32.xlu0 %v289, 64
        %v2842 = vpop.permute.xlu0 %2841
        %2843 = vrot.lane.b32.xlu0 %v290, 64
        %v2844 = vpop.permute.xlu0 %2843
        %2845 = vrot.lane.b32.xlu0 %v291, 64
        %v2846 = vpop.permute.xlu0 %2845
        %2847 = vrot.lane.b32.xlu0 %v292, 64
        %v2848 = vpop.permute.xlu0 %2847
        %2849 = vrot.lane.b32.xlu0 %v293, 64
        %v2850 = vpop.permute.xlu0 %2849
        %2851 = vrot.lane.b32.xlu0 %v294, 64
        %v2852 = vpop.permute.xlu0 %2851
        %2853 = vrot.lane.b32.xlu0 %v295, 64
        %v2854 = vpop.permute.xlu0 %2853
        %2855 = vrot.lane.b32.xlu0 %v296, 64
        %v2856 = vpop.permute.xlu0 %2855
        %2857 = vrot.lane.b32.xlu0 %v297, 64
        %v2858 = vpop.permute.xlu0 %2857
        %2859 = vrot.lane.b32.xlu0 %v298, 64
        %v2860 = vpop.permute.xlu0 %2859
        %2861 = vrot.lane.b32.xlu0 %v299, 64
        %v2862 = vpop.permute.xlu0 %2861
        %2863 = vrot.lane.b32.xlu0 %v300, 64
        %v2864 = vpop.permute.xlu0 %2863
        %2865 = vrot.lane.b32.xlu0 %v301, 64
        %v2866 = vpop.permute.xlu0 %2865
        %2867 = vrot.lane.b32.xlu0 %v302, 64
        %v2868 = vpop.permute.xlu0 %2867
        %2869 = vrot.lane.b32.xlu0 %v303, 64
        %v2870 = vpop.permute.xlu0 %2869
        %2871 = vrot.lane.b32.xlu0 %v304, 64
        %v2872 = vpop.permute.xlu0 %2871
        %2873 = vrot.lane.b32.xlu0 %v305, 64
        %v2874 = vpop.permute.xlu0 %2873
        %2875 = vrot.lane.b32.xlu0 %v306, 64
        %v2876 = vpop.permute.xlu0 %2875
        %2877 = vrot.lane.b32.xlu0 %v307, 64
        %v2878 = vpop.permute.xlu0 %2877
        %2879 = vrot.lane.b32.xlu0 %v308, 64
        %v2880 = vpop.permute.xlu0 %2879
        %2881 = vrot.lane.b32.xlu0 %v309, 64
        %v2882 = vpop.permute.xlu0 %2881
        %2883 = vrot.lane.b32.xlu0 %v310, 64
        %v2884 = vpop.permute.xlu0 %2883
        %2885 = vrot.lane.b32.xlu0 %v311, 64
        %v2886 = vpop.permute.xlu0 %2885
        %2887 = vrot.lane.b32.xlu0 %v312, 64
        %v2888 = vpop.permute.xlu0 %2887
        %2889 = vrot.lane.b32.xlu0 %v313, 64
        %v2890 = vpop.permute.xlu0 %2889
        %2891 = vrot.lane.b32.xlu0 %v314, 64
        %v2892 = vpop.permute.xlu0 %2891
        %2893 = vrot.lane.b32.xlu0 %v315, 64
        %v2894 = vpop.permute.xlu0 %2893
        %2895 = vrot.lane.b32.xlu0 %v316, 64
        %v2896 = vpop.permute.xlu0 %2895
        %2897 = vrot.lane.b32.xlu0 %v317, 64
        %v2898 = vpop.permute.xlu0 %2897
        %2899 = vrot.lane.b32.xlu0 %v318, 64
        %v2900 = vpop.permute.xlu0 %2899
        %2901 = vrot.lane.b32.xlu0 %v319, 64
        %v2902 = vpop.permute.xlu0 %2901
        %2903 = vrot.lane.b32.xlu0 %v320, 64
        %v2904 = vpop.permute.xlu0 %2903
        %2905 = vrot.lane.b32.xlu0 %v321, 64
        %v2906 = vpop.permute.xlu0 %2905
        %2907 = vrot.lane.b32.xlu0 %v322, 64
        %v2908 = vpop.permute.xlu0 %2907
        %2909 = vrot.lane.b32.xlu0 %v323, 64
        %v2910 = vpop.permute.xlu0 %2909
        %2911 = vrot.lane.b32.xlu0 %v324, 64
        %v2912 = vpop.permute.xlu0 %2911
        %2913 = vrot.lane.b32.xlu0 %v325, 64
        %v2914 = vpop.permute.xlu0 %2913
        %2915 = vrot.lane.b32.xlu0 %v326, 64
        %v2916 = vpop.permute.xlu0 %2915
        %2917 = vrot.lane.b32.xlu0 %v327, 64
        %v2918 = vpop.permute.xlu0 %2917
        %2919 = vrot.lane.b32.xlu0 %v328, 64
        %v2920 = vpop.permute.xlu0 %2919
        %2921 = vrot.lane.b32.xlu0 %v329, 64
        %v2922 = vpop.permute.xlu0 %2921
        %2923 = vrot.lane.b32.xlu0 %v330, 64
        %v2924 = vpop.permute.xlu0 %2923
        %2925 = vrot.lane.b32.xlu0 %v331, 64
        %v2926 = vpop.permute.xlu0 %2925
        %2927 = vrot.lane.b32.xlu0 %v332, 64
        %v2928 = vpop.permute.xlu0 %2927
        %2929 = vrot.lane.b32.xlu0 %v333, 64
        %v2930 = vpop.permute.xlu0 %2929
        %2931 = vrot.lane.b32.xlu0 %v334, 64
        %v2932 = vpop.permute.xlu0 %2931
        %2933 = vrot.lane.b32.xlu0 %v335, 64
        %v2934 = vpop.permute.xlu0 %2933
        %2935 = vrot.lane.b32.xlu0 %v336, 64
        %v2936 = vpop.permute.xlu0 %2935
        %2937 = vrot.lane.b32.xlu0 %v337, 64
        %v2938 = vpop.permute.xlu0 %2937
        %2939 = vrot.lane.b32.xlu0 %v338, 64
        %v2940 = vpop.permute.xlu0 %2939
        %2941 = vrot.lane.b32.xlu0 %v339, 64
        %v2942 = vpop.permute.xlu0 %2941
        %2943 = vrot.lane.b32.xlu0 %v340, 64
        %v2944 = vpop.permute.xlu0 %2943
        %2945 = vrot.lane.b32.xlu0 %v341, 64
        %v2946 = vpop.permute.xlu0 %2945
        %2947 = vrot.lane.b32.xlu0 %v342, 64
        %v2948 = vpop.permute.xlu0 %2947
        %2949 = vrot.lane.b32.xlu0 %v343, 64
        %v2950 = vpop.permute.xlu0 %2949
        %2951 = vrot.lane.b32.xlu0 %v344, 64
        %v2952 = vpop.permute.xlu0 %2951
        %2953 = vrot.lane.b32.xlu0 %v345, 64
        %v2954 = vpop.permute.xlu0 %2953
        %2955 = vrot.lane.b32.xlu0 %v346, 64
        %v2956 = vpop.permute.xlu0 %2955
        %2957 = vrot.lane.b32.xlu0 %v347, 64
        %v2958 = vpop.permute.xlu0 %2957
        %2959 = vrot.lane.b32.xlu0 %v348, 64
        %v2960 = vpop.permute.xlu0 %2959
        %2961 = vrot.lane.b32.xlu0 %v349, 64
        %v2962 = vpop.permute.xlu0 %2961
        %2963 = vrot.lane.b32.xlu0 %v350, 64
        %v2964 = vpop.permute.xlu0 %2963
        %2965 = vrot.lane.b32.xlu0 %v351, 64
        %v2966 = vpop.permute.xlu0 %2965
        %2967 = vrot.lane.b32.xlu0 %v352, 64
        %v2968 = vpop.permute.xlu0 %2967
        %2969 = vrot.lane.b32.xlu0 %v353, 64
        %v2970 = vpop.permute.xlu0 %2969
        %2971 = vrot.lane.b32.xlu0 %v354, 64
        %v2972 = vpop.permute.xlu0 %2971
        %2973 = vrot.lane.b32.xlu0 %v355, 64
        %v2974 = vpop.permute.xlu0 %2973
        %2975 = vrot.lane.b32.xlu0 %v356, 64
        %v2976 = vpop.permute.xlu0 %2975
        %2977 = vrot.lane.b32.xlu0 %v357, 64
        %v2978 = vpop.permute.xlu0 %2977
        %2979 = vrot.lane.b32.xlu0 %v358, 64
        %v2980 = vpop.permute.xlu0 %2979
        %2981 = vrot.lane.b32.xlu0 %v359, 64
        %v2982 = vpop.permute.xlu0 %2981
        %2983 = vrot.lane.b32.xlu0 %v360, 64
        %v2984 = vpop.permute.xlu0 %2983
        %2985 = vrot.lane.b32.xlu0 %v361, 64
        %v2986 = vpop.permute.xlu0 %2985
        %2987 = vrot.lane.b32.xlu0 %v362, 64
        %v2988 = vpop.permute.xlu0 %2987
        %2989 = vrot.lane.b32.xlu0 %v363, 64
        %v2990 = vpop.permute.xlu0 %2989
        %2991 = vrot.lane.b32.xlu0 %v364, 64
        %v2992 = vpop.permute.xlu0 %2991
        %2993 = vrot.lane.b32.xlu0 %v365, 64
        %v2994 = vpop.permute.xlu0 %2993
        %2995 = vrot.lane.b32.xlu0 %v366, 64
        %v2996 = vpop.permute.xlu0 %2995
        %2997 = vrot.lane.b32.xlu0 %v367, 64
        %v2998 = vpop.permute.xlu0 %2997
        %2999 = vrot.lane.b32.xlu0 %v368, 64
        %v3000 = vpop.permute.xlu0 %2999
        %3001 = vrot.lane.b32.xlu0 %v369, 64
        %v3002 = vpop.permute.xlu0 %3001
        %3003 = vrot.lane.b32.xlu0 %v370, 64
        %v3004 = vpop.permute.xlu0 %3003
        %3005 = vrot.lane.b32.xlu0 %v371, 64
        %v3006 = vpop.permute.xlu0 %3005
        %3007 = vrot.lane.b32.xlu0 %v372, 64
        %v3008 = vpop.permute.xlu0 %3007
        %3009 = vrot.lane.b32.xlu0 %v373, 64
        %v3010 = vpop.permute.xlu0 %3009
        %3011 = vrot.lane.b32.xlu0 %v374, 64
        %v3012 = vpop.permute.xlu0 %3011
        %3013 = vrot.lane.b32.xlu0 %v375, 64
        %v3014 = vpop.permute.xlu0 %3013
        %3015 = vrot.lane.b32.xlu0 %v376, 64
        %v3016 = vpop.permute.xlu0 %3015
        %3017 = vrot.lane.b32.xlu0 %v377, 64
        %v3018 = vpop.permute.xlu0 %3017
        %3019 = vrot.lane.b32.xlu0 %v378, 64
        %v3020 = vpop.permute.xlu0 %3019
        %3021 = vrot.lane.b32.xlu0 %v379, 64
        %v3022 = vpop.permute.xlu0 %3021
        %3023 = vrot.lane.b32.xlu0 %v380, 64
        %v3024 = vpop.permute.xlu0 %3023
        %3025 = vrot.lane.b32.xlu0 %v381, 64
        %v3026 = vpop.permute.xlu0 %3025
        %3027 = vrot.lane.b32.xlu0 %v382, 64
        %v3028 = vpop.permute.xlu0 %3027
        %3029 = vrot.lane.b32.xlu0 %v383, 64
        %v3030 = vpop.permute.xlu0 %3029
        %3031 = vrot.lane.b32.xlu0 %v384, 64
        %v3032 = vpop.permute.xlu0 %3031
        %3033 = vrot.lane.b32.xlu0 %v385, 64
        %v3034 = vpop.permute.xlu0 %3033
        %3035 = vrot.lane.b32.xlu0 %v386, 64
        %v3036 = vpop.permute.xlu0 %3035
        %3037 = vrot.lane.b32.xlu0 %v387, 64
        %v3038 = vpop.permute.xlu0 %3037
        %3039 = vrot.lane.b32.xlu0 %v388, 64
        %v3040 = vpop.permute.xlu0 %3039
        %3041 = vrot.lane.b32.xlu0 %v389, 64
        %v3042 = vpop.permute.xlu0 %3041
        %3043 = vrot.lane.b32.xlu0 %v390, 64
        %v3044 = vpop.permute.xlu0 %3043
        %3045 = vrot.lane.b32.xlu0 %v391, 64
        %v3046 = vpop.permute.xlu0 %3045
        %3047 = vrot.lane.b32.xlu0 %v392, 64
        %v3048 = vpop.permute.xlu0 %3047
        %3049 = vrot.lane.b32.xlu0 %v393, 64
        %v3050 = vpop.permute.xlu0 %3049
        %3051 = vrot.lane.b32.xlu0 %v394, 64
        %v3052 = vpop.permute.xlu0 %3051
        %3053 = vrot.lane.b32.xlu0 %v395, 64
        %v3054 = vpop.permute.xlu0 %3053
        %3055 = vrot.lane.b32.xlu0 %v396, 64
        %v3056 = vpop.permute.xlu0 %3055
        %3057 = vrot.lane.b32.xlu0 %v397, 64
        %v3058 = vpop.permute.xlu0 %3057
        %3059 = vrot.lane.b32.xlu0 %v398, 64
        %v3060 = vpop.permute.xlu0 %3059
        %3061 = vrot.lane.b32.xlu0 %v399, 64
        %v3062 = vpop.permute.xlu0 %3061
        %3063 = vrot.lane.b32.xlu0 %v400, 64
        %v3064 = vpop.permute.xlu0 %3063
        %3065 = vrot.lane.b32.xlu0 %v401, 64
        %v3066 = vpop.permute.xlu0 %3065
        %3067 = vrot.lane.b32.xlu0 %v402, 64
        %v3068 = vpop.permute.xlu0 %3067
        %3069 = vrot.lane.b32.xlu0 %v403, 64
        %v3070 = vpop.permute.xlu0 %3069
        %3071 = vrot.lane.b32.xlu0 %v404, 64
        %v3072 = vpop.permute.xlu0 %3071
        %3073 = vrot.lane.b32.xlu0 %v405, 64
        %v3074 = vpop.permute.xlu0 %3073
        %3075 = vrot.lane.b32.xlu0 %v406, 64
        %v3076 = vpop.permute.xlu0 %3075
        %3077 = vrot.lane.b32.xlu0 %v407, 64
        %v3078 = vpop.permute.xlu0 %3077
        %3079 = vrot.lane.b32.xlu0 %v408, 64
        %v3080 = vpop.permute.xlu0 %3079
        %3081 = vrot.lane.b32.xlu0 %v409, 64
        %v3082 = vpop.permute.xlu0 %3081
        %3083 = vrot.lane.b32.xlu0 %v410, 64
        %v3084 = vpop.permute.xlu0 %3083
        %3085 = vrot.lane.b32.xlu0 %v411, 64
        %v3086 = vpop.permute.xlu0 %3085
        %3087 = vrot.lane.b32.xlu0 %v412, 64
        %v3088 = vpop.permute.xlu0 %3087
        %3089 = vrot.lane.b32.xlu0 %v413, 64
        %v3090 = vpop.permute.xlu0 %3089
        %3091 = vrot.lane.b32.xlu0 %v414, 64
        %v3092 = vpop.permute.xlu0 %3091
        %3093 = vrot.lane.b32.xlu0 %v415, 64
        %v3094 = vpop.permute.xlu0 %3093
        %3095 = vrot.lane.b32.xlu0 %v416, 64
        %v3096 = vpop.permute.xlu0 %3095
        %3097 = vrot.lane.b32.xlu0 %v417, 64
        %v3098 = vpop.permute.xlu0 %3097
        %3099 = vrot.lane.b32.xlu0 %v418, 64
        %v3100 = vpop.permute.xlu0 %3099
        %3101 = vrot.lane.b32.xlu0 %v419, 64
        %v3102 = vpop.permute.xlu0 %3101
        %3103 = vrot.lane.b32.xlu0 %v420, 64
        %v3104 = vpop.permute.xlu0 %3103
        %3105 = vrot.lane.b32.xlu0 %v421, 64
        %v3106 = vpop.permute.xlu0 %3105
        %3107 = vrot.lane.b32.xlu0 %v422, 64
        %v3108 = vpop.permute.xlu0 %3107
        %3109 = vrot.lane.b32.xlu0 %v423, 64
        %v3110 = vpop.permute.xlu0 %3109
        %3111 = vrot.lane.b32.xlu0 %v424, 64
        %v3112 = vpop.permute.xlu0 %3111
        %3113 = vrot.lane.b32.xlu0 %v425, 64
        %v3114 = vpop.permute.xlu0 %3113
        %3115 = vrot.lane.b32.xlu0 %v426, 64
        %v3116 = vpop.permute.xlu0 %3115
        %3117 = vrot.lane.b32.xlu0 %v427, 64
        %v3118 = vpop.permute.xlu0 %3117
        %3119 = vrot.lane.b32.xlu0 %v428, 64
        %v3120 = vpop.permute.xlu0 %3119
        %3121 = vrot.lane.b32.xlu0 %v429, 64
        %v3122 = vpop.permute.xlu0 %3121
        %3123 = vrot.lane.b32.xlu0 %v430, 64
        %v3124 = vpop.permute.xlu0 %3123
        %3125 = vrot.lane.b32.xlu0 %v431, 64
        %v3126 = vpop.permute.xlu0 %3125
        %3127 = vrot.lane.b32.xlu0 %v432, 64
        %v3128 = vpop.permute.xlu0 %3127
        %3129 = vrot.lane.b32.xlu0 %v433, 64
        %v3130 = vpop.permute.xlu0 %3129
        %3131 = vrot.lane.b32.xlu0 %v434, 64
        %v3132 = vpop.permute.xlu0 %3131
        %3133 = vrot.lane.b32.xlu0 %v435, 64
        %v3134 = vpop.permute.xlu0 %3133
        %3135 = vrot.lane.b32.xlu0 %v436, 64
        %v3136 = vpop.permute.xlu0 %3135
        %3137 = vrot.lane.b32.xlu0 %v437, 64
        %v3138 = vpop.permute.xlu0 %3137
        %3139 = vrot.lane.b32.xlu0 %v438, 64
        %v3140 = vpop.permute.xlu0 %3139
        %3141 = vrot.lane.b32.xlu0 %v439, 64
        %v3142 = vpop.permute.xlu0 %3141
        %3143 = vrot.lane.b32.xlu0 %v440, 64
        %v3144 = vpop.permute.xlu0 %3143
        %3145 = vrot.lane.b32.xlu0 %v441, 64
        %v3146 = vpop.permute.xlu0 %3145
        %3147 = vrot.lane.b32.xlu0 %v442, 64
        %v3148 = vpop.permute.xlu0 %3147
        %3149 = vrot.lane.b32.xlu0 %v443, 64
        %v3150 = vpop.permute.xlu0 %3149
        %3151 = vrot.lane.b32.xlu0 %v444, 64
        %v3152 = vpop.permute.xlu0 %3151
        %3153 = vrot.lane.b32.xlu0 %v445, 64
        %v3154 = vpop.permute.xlu0 %3153
        %3155 = vrot.lane.b32.xlu0 %v446, 64
        %v3156 = vpop.permute.xlu0 %3155
        %3157 = vrot.lane.b32.xlu0 %v447, 64
        %v3158 = vpop.permute.xlu0 %3157
        %3159 = vrot.lane.b32.xlu0 %v448, 64
        %v3160 = vpop.permute.xlu0 %3159
        %3161 = vrot.lane.b32.xlu0 %v449, 64
        %v3162 = vpop.permute.xlu0 %3161
        %3163 = vrot.lane.b32.xlu0 %v450, 64
        %v3164 = vpop.permute.xlu0 %3163
        %3165 = vrot.lane.b32.xlu0 %v451, 64
        %v3166 = vpop.permute.xlu0 %3165
        %3167 = vrot.lane.b32.xlu0 %v452, 64
        %v3168 = vpop.permute.xlu0 %3167
        %3169 = vrot.lane.b32.xlu0 %v453, 64
        %v3170 = vpop.permute.xlu0 %3169
        %3171 = vrot.lane.b32.xlu0 %v454, 64
        %v3172 = vpop.permute.xlu0 %3171
        %3173 = vrot.lane.b32.xlu0 %v455, 64
        %v3174 = vpop.permute.xlu0 %3173
        %3175 = vrot.lane.b32.xlu0 %v456, 64
        %v3176 = vpop.permute.xlu0 %3175
        %3177 = vrot.lane.b32.xlu0 %v457, 64
        %v3178 = vpop.permute.xlu0 %3177
        %3179 = vrot.lane.b32.xlu0 %v458, 64
        %v3180 = vpop.permute.xlu0 %3179
        %3181 = vrot.lane.b32.xlu0 %v459, 64
        %v3182 = vpop.permute.xlu0 %3181
        %3183 = vrot.lane.b32.xlu0 %v460, 64
        %v3184 = vpop.permute.xlu0 %3183
        %3185 = vrot.lane.b32.xlu0 %v461, 64
        %v3186 = vpop.permute.xlu0 %3185
        %3187 = vrot.lane.b32.xlu0 %v462, 64
        %v3188 = vpop.permute.xlu0 %3187
        %3189 = vrot.lane.b32.xlu0 %v463, 64
        %v3190 = vpop.permute.xlu0 %3189
        %3191 = vrot.lane.b32.xlu0 %v464, 64
        %v3192 = vpop.permute.xlu0 %3191
        %3193 = vrot.lane.b32.xlu0 %v465, 64
        %v3194 = vpop.permute.xlu0 %3193
        %3195 = vrot.lane.b32.xlu0 %v466, 64
        %v3196 = vpop.permute.xlu0 %3195
        %3197 = vrot.lane.b32.xlu0 %v467, 64
        %v3198 = vpop.permute.xlu0 %3197
        %3199 = vrot.lane.b32.xlu0 %v468, 64
        %v3200 = vpop.permute.xlu0 %3199
        %3201 = vrot.lane.b32.xlu0 %v469, 64
        %v3202 = vpop.permute.xlu0 %3201
        %3203 = vrot.lane.b32.xlu0 %v470, 64
        %v3204 = vpop.permute.xlu0 %3203
        %3205 = vrot.lane.b32.xlu0 %v471, 64
        %v3206 = vpop.permute.xlu0 %3205
        %3207 = vrot.lane.b32.xlu0 %v472, 64
        %v3208 = vpop.permute.xlu0 %3207
        %3209 = vrot.lane.b32.xlu0 %v473, 64
        %v3210 = vpop.permute.xlu0 %3209
        %3211 = vrot.lane.b32.xlu0 %v474, 64
        %v3212 = vpop.permute.xlu0 %3211
        %3213 = vrot.lane.b32.xlu0 %v475, 64
        %v3214 = vpop.permute.xlu0 %3213
        %3215 = vrot.lane.b32.xlu0 %v476, 64
        %v3216 = vpop.permute.xlu0 %3215
        %3217 = vrot.lane.b32.xlu0 %v477, 64
        %v3218 = vpop.permute.xlu0 %3217
        %3219 = vrot.lane.b32.xlu0 %v478, 64
        %v3220 = vpop.permute.xlu0 %3219
        %3221 = vrot.lane.b32.xlu0 %v479, 64
        %v3222 = vpop.permute.xlu0 %3221
        %3223 = vrot.lane.b32.xlu0 %v480, 64
        %v3224 = vpop.permute.xlu0 %3223
        %3225 = vrot.lane.b32.xlu0 %v481, 64
        %v3226 = vpop.permute.xlu0 %3225
        %3227 = vrot.lane.b32.xlu0 %v482, 64
        %v3228 = vpop.permute.xlu0 %3227
        %3229 = vrot.lane.b32.xlu0 %v483, 64
        %v3230 = vpop.permute.xlu0 %3229
        %3231 = vrot.lane.b32.xlu0 %v484, 64
        %v3232 = vpop.permute.xlu0 %3231
        %3233 = vrot.lane.b32.xlu0 %v485, 64
        %v3234 = vpop.permute.xlu0 %3233
        %3235 = vrot.lane.b32.xlu0 %v486, 64
        %v3236 = vpop.permute.xlu0 %3235
        %3237 = vrot.lane.b32.xlu0 %v487, 64
        %v3238 = vpop.permute.xlu0 %3237
        %3239 = vrot.lane.b32.xlu0 %v488, 64
        %v3240 = vpop.permute.xlu0 %3239
        %3241 = vrot.lane.b32.xlu0 %v489, 64
        %v3242 = vpop.permute.xlu0 %3241
        %3243 = vrot.lane.b32.xlu0 %v490, 64
        %v3244 = vpop.permute.xlu0 %3243
        %3245 = vrot.lane.b32.xlu0 %v491, 64
        %v3246 = vpop.permute.xlu0 %3245
        %3247 = vrot.lane.b32.xlu0 %v492, 64
        %v3248 = vpop.permute.xlu0 %3247
        %3249 = vrot.lane.b32.xlu0 %v493, 64
        %v3250 = vpop.permute.xlu0 %3249
        %3251 = vrot.lane.b32.xlu0 %v494, 64
        %v3252 = vpop.permute.xlu0 %3251
        %3253 = vrot.lane.b32.xlu0 %v495, 64
        %v3254 = vpop.permute.xlu0 %3253
        %3255 = vrot.lane.b32.xlu0 %v496, 64
        %v3256 = vpop.permute.xlu0 %3255
        %3257 = vrot.lane.b32.xlu0 %v497, 64
        %v3258 = vpop.permute.xlu0 %3257
        %3259 = vrot.lane.b32.xlu0 %v498, 64
        %v3260 = vpop.permute.xlu0 %3259
        %3261 = vrot.lane.b32.xlu0 %v499, 64
        %v3262 = vpop.permute.xlu0 %3261
        %3263 = vrot.lane.b32.xlu0 %v500, 64
        %v3264 = vpop.permute.xlu0 %3263
        %3265 = vrot.lane.b32.xlu0 %v501, 64
        %v3266 = vpop.permute.xlu0 %3265
        %3267 = vrot.lane.b32.xlu0 %v502, 64
        %v3268 = vpop.permute.xlu0 %3267
        %3269 = vrot.lane.b32.xlu0 %v503, 64
        %v3270 = vpop.permute.xlu0 %3269
        %3271 = vrot.lane.b32.xlu0 %v504, 64
        %v3272 = vpop.permute.xlu0 %3271
        %3273 = vrot.lane.b32.xlu0 %v505, 64
        %v3274 = vpop.permute.xlu0 %3273
        %3275 = vrot.lane.b32.xlu0 %v506, 64
        %v3276 = vpop.permute.xlu0 %3275
        %3277 = vrot.lane.b32.xlu0 %v507, 64
        %v3278 = vpop.permute.xlu0 %3277
        %3279 = vrot.lane.b32.xlu0 %v508, 64
        %v3280 = vpop.permute.xlu0 %3279
        %3281 = vrot.lane.b32.xlu0 %v509, 64
        %v3282 = vpop.permute.xlu0 %3281
        %3283 = vrot.lane.b32.xlu0 %v510, 64
        %v3284 = vpop.permute.xlu0 %3283
        %3285 = vrot.lane.b32.xlu0 %v511, 64
        %v3286 = vpop.permute.xlu0 %3285
        %3287 = vrot.lane.b32.xlu0 %v512, 64
        %v3288 = vpop.permute.xlu0 %3287
        %3289 = vrot.lane.b32.xlu0 %v513, 64
        %v3290 = vpop.permute.xlu0 %3289
        %3291 = vrot.lane.b32.xlu0 %v514, 64
        %v3292 = vpop.permute.xlu0 %3291
        %3293 = vrot.lane.b32.xlu0 %v515, 64
        %v3294 = vpop.permute.xlu0 %3293
        %3295 = vrot.lane.b32.xlu0 %v516, 64
        %v3296 = vpop.permute.xlu0 %3295
        %3297 = vrot.lane.b32.xlu0 %v517, 64
        %v3298 = vpop.permute.xlu0 %3297
        %3299 = vrot.lane.b32.xlu0 %v518, 64
        %v3300 = vpop.permute.xlu0 %3299
        %3301 = vrot.lane.b32.xlu0 %v519, 64
        %v3302 = vpop.permute.xlu0 %3301
        %3303 = vrot.lane.b32.xlu0 %v520, 64
        %v3304 = vpop.permute.xlu0 %3303
        %3305 = vrot.lane.b32.xlu0 %v521, 64
        %v3306 = vpop.permute.xlu0 %3305
        %3307 = vrot.lane.b32.xlu0 %v522, 64
        %v3308 = vpop.permute.xlu0 %3307
        %3309 = vrot.lane.b32.xlu0 %v523, 64
        %v3310 = vpop.permute.xlu0 %3309
        %3311 = vrot.lane.b32.xlu0 %v524, 64
        %v3312 = vpop.permute.xlu0 %3311
        %3313 = vrot.lane.b32.xlu0 %v525, 64
        %v3314 = vpop.permute.xlu0 %3313
        %3315 = vrot.lane.b32.xlu0 %v526, 64
        %v3316 = vpop.permute.xlu0 %3315
        %3317 = vrot.lane.b32.xlu0 %v527, 64
        %v3318 = vpop.permute.xlu0 %3317
        %3319 = vrot.lane.b32.xlu0 %v528, 64
        %v3320 = vpop.permute.xlu0 %3319
        %3321 = vrot.lane.b32.xlu0 %v529, 64
        %v3322 = vpop.permute.xlu0 %3321
        %3323 = vrot.lane.b32.xlu0 %v530, 64
        %v3324 = vpop.permute.xlu0 %3323
        %3325 = vrot.lane.b32.xlu0 %v531, 64
        %v3326 = vpop.permute.xlu0 %3325
        %3327 = vrot.lane.b32.xlu0 %v532, 64
        %v3328 = vpop.permute.xlu0 %3327
        %3329 = vrot.lane.b32.xlu0 %v533, 64
        %v3330 = vpop.permute.xlu0 %3329
        %3331 = vrot.lane.b32.xlu0 %v534, 64
        %v3332 = vpop.permute.xlu0 %3331
        %3333 = vrot.lane.b32.xlu0 %v535, 64
        %v3334 = vpop.permute.xlu0 %3333
        %3335 = vrot.lane.b32.xlu0 %v536, 64
        %v3336 = vpop.permute.xlu0 %3335
        %3337 = vrot.lane.b32.xlu0 %v537, 64
        %v3338 = vpop.permute.xlu0 %3337
        %3339 = vrot.lane.b32.xlu0 %v538, 64
        %v3340 = vpop.permute.xlu0 %3339
        %3341 = vrot.lane.b32.xlu0 %v539, 64
        %v3342 = vpop.permute.xlu0 %3341
        %3343 = vrot.lane.b32.xlu0 %v540, 64
        %v3344 = vpop.permute.xlu0 %3343
        %3345 = vrot.lane.b32.xlu0 %v541, 64
        %v3346 = vpop.permute.xlu0 %3345
        %3347 = vrot.lane.b32.xlu0 %v542, 64
        %v3348 = vpop.permute.xlu0 %3347
        %3349 = vrot.lane.b32.xlu0 %v543, 64
        %v3350 = vpop.permute.xlu0 %3349
        %3351 = vrot.lane.b32.xlu0 %v544, 64
        %v3352 = vpop.permute.xlu0 %3351
        %3353 = vrot.lane.b32.xlu0 %v545, 64
        %v3354 = vpop.permute.xlu0 %3353
        %3355 = vrot.lane.b32.xlu0 %v546, 64
        %v3356 = vpop.permute.xlu0 %3355
        %3357 = vrot.lane.b32.xlu0 %v547, 64
        %v3358 = vpop.permute.xlu0 %3357
        %3359 = vrot.lane.b32.xlu0 %v548, 64
        %v3360 = vpop.permute.xlu0 %3359
        %3361 = vrot.lane.b32.xlu0 %v549, 64
        %v3362 = vpop.permute.xlu0 %3361
        %3363 = vrot.lane.b32.xlu0 %v550, 64
        %v3364 = vpop.permute.xlu0 %3363
        %3365 = vrot.lane.b32.xlu0 %v551, 64
        %v3366 = vpop.permute.xlu0 %3365
        %3367 = vrot.lane.b32.xlu0 %v552, 64
        %v3368 = vpop.permute.xlu0 %3367
        %3369 = vrot.lane.b32.xlu0 %v553, 64
        %v3370 = vpop.permute.xlu0 %3369
        %3371 = vrot.lane.b32.xlu0 %v554, 64
        %v3372 = vpop.permute.xlu0 %3371
        %v3661 = vsel %vm1320, %v2798, 0.0
        %3662 = vadd.xlane.f32.xlu0 %v3661
        %v3663 = vpop.xlane.xlu0 %3662
        %v3664 = vsel %vm1320, %v2800, 0.0
        %3665 = vadd.xlane.f32.xlu0 %v3664
        %v3666 = vpop.xlane.xlu0 %3665
        %v3667 = vsel %vm1320, %v2802, 0.0
        %3668 = vadd.xlane.f32.xlu0 %v3667
        %v3669 = vpop.xlane.xlu0 %3668
        %v3670 = vsel %vm1320, %v2804, 0.0
        %3671 = vadd.xlane.f32.xlu0 %v3670
        %v3672 = vpop.xlane.xlu0 %3671
        %v3673 = vsel %vm1320, %v2806, 0.0
        %3674 = vadd.xlane.f32.xlu0 %v3673
        %v3675 = vpop.xlane.xlu0 %3674
        %v3676 = vsel %vm1320, %v2808, 0.0
        %3677 = vadd.xlane.f32.xlu0 %v3676
        %v3678 = vpop.xlane.xlu0 %3677
        %v3679 = vsel %vm1320, %v2810, 0.0
        %3680 = vadd.xlane.f32.xlu0 %v3679
        %v3681 = vpop.xlane.xlu0 %3680
        %v3682 = vsel %vm1320, %v2812, 0.0
        %3683 = vadd.xlane.f32.xlu0 %v3682
        %v3684 = vpop.xlane.xlu0 %3683
        %v3685 = vsel %vm1320, %v2814, 0.0
        %3686 = vadd.xlane.f32.xlu0 %v3685
        %v3687 = vpop.xlane.xlu0 %3686
        %v3688 = vsel %vm1320, %v2816, 0.0
        %3689 = vadd.xlane.f32.xlu0 %v3688
        %v3690 = vpop.xlane.xlu0 %3689
        %v3691 = vsel %vm1320, %v2818, 0.0
        %3692 = vadd.xlane.f32.xlu0 %v3691
        %v3693 = vpop.xlane.xlu0 %3692
        %v3694 = vsel %vm1320, %v2820, 0.0
        %3695 = vadd.xlane.f32.xlu0 %v3694
        %v3696 = vpop.xlane.xlu0 %3695
        %v3697 = vsel %vm1320, %v2822, 0.0
        %3698 = vadd.xlane.f32.xlu0 %v3697
        %v3699 = vpop.xlane.xlu0 %3698
        %v3700 = vsel %vm1320, %v2824, 0.0
        %3701 = vadd.xlane.f32.xlu0 %v3700
        %v3702 = vpop.xlane.xlu0 %3701
        %v3703 = vsel %vm1320, %v2826, 0.0
        %3704 = vadd.xlane.f32.xlu0 %v3703
        %v3705 = vpop.xlane.xlu0 %3704
        %v3706 = vsel %vm1320, %v2828, 0.0
        %3707 = vadd.xlane.f32.xlu0 %v3706
        %v3708 = vpop.xlane.xlu0 %3707
        %v3709 = vsel %vm1320, %v2830, 0.0
        %3710 = vadd.xlane.f32.xlu0 %v3709
        %v3711 = vpop.xlane.xlu0 %3710
        %v3712 = vsel %vm1320, %v2832, 0.0
        %3713 = vadd.xlane.f32.xlu0 %v3712
        %v3714 = vpop.xlane.xlu0 %3713
        %v3715 = vsel %vm1320, %v2834, 0.0
        %3716 = vadd.xlane.f32.xlu0 %v3715
        %v3717 = vpop.xlane.xlu0 %3716
        %v3718 = vsel %vm1320, %v2836, 0.0
        %3719 = vadd.xlane.f32.xlu0 %v3718
        %v3720 = vpop.xlane.xlu0 %3719
        %v3721 = vsel %vm1320, %v2838, 0.0
        %3722 = vadd.xlane.f32.xlu0 %v3721
        %v3723 = vpop.xlane.xlu0 %3722
        %v3724 = vsel %vm1320, %v2840, 0.0
        %3725 = vadd.xlane.f32.xlu0 %v3724
        %v3726 = vpop.xlane.xlu0 %3725
        %v3727 = vsel %vm1320, %v2842, 0.0
        %3728 = vadd.xlane.f32.xlu0 %v3727
        %v3729 = vpop.xlane.xlu0 %3728
        %v3730 = vsel %vm1320, %v2844, 0.0
        %3731 = vadd.xlane.f32.xlu0 %v3730
        %v3732 = vpop.xlane.xlu0 %3731
        %v3733 = vsel %vm1320, %v2846, 0.0
        %3734 = vadd.xlane.f32.xlu0 %v3733
        %v3735 = vpop.xlane.xlu0 %3734
        %v3736 = vsel %vm1320, %v2848, 0.0
        %3737 = vadd.xlane.f32.xlu0 %v3736
        %v3738 = vpop.xlane.xlu0 %3737
        %v3739 = vsel %vm1320, %v2850, 0.0
        %3740 = vadd.xlane.f32.xlu0 %v3739
        %v3741 = vpop.xlane.xlu0 %3740
        %v3742 = vsel %vm1320, %v2852, 0.0
        %3743 = vadd.xlane.f32.xlu0 %v3742
        %v3744 = vpop.xlane.xlu0 %3743
        %v3745 = vsel %vm1320, %v2854, 0.0
        %3746 = vadd.xlane.f32.xlu0 %v3745
        %v3747 = vpop.xlane.xlu0 %3746
        %v3748 = vsel %vm1320, %v2856, 0.0
        %3749 = vadd.xlane.f32.xlu0 %v3748
        %v3750 = vpop.xlane.xlu0 %3749
        %v3751 = vsel %vm1320, %v2858, 0.0
        %3752 = vadd.xlane.f32.xlu0 %v3751
        %v3753 = vpop.xlane.xlu0 %3752
        %v3754 = vsel %vm1320, %v2860, 0.0
        %3755 = vadd.xlane.f32.xlu0 %v3754
        %v3756 = vpop.xlane.xlu0 %3755
        %v3757 = vsel %vm1320, %v2862, 0.0
        %3758 = vadd.xlane.f32.xlu0 %v3757
        %v3759 = vpop.xlane.xlu0 %3758
        %v3760 = vsel %vm1320, %v2864, 0.0
        %3761 = vadd.xlane.f32.xlu0 %v3760
        %v3762 = vpop.xlane.xlu0 %3761
        %v3763 = vsel %vm1320, %v2866, 0.0
        %3764 = vadd.xlane.f32.xlu0 %v3763
        %v3765 = vpop.xlane.xlu0 %3764
        %v3766 = vsel %vm1320, %v2868, 0.0
        %3767 = vadd.xlane.f32.xlu0 %v3766
        %v3768 = vpop.xlane.xlu0 %3767
        %v3769 = vsel %vm1320, %v2870, 0.0
        %3770 = vadd.xlane.f32.xlu0 %v3769
        %v3771 = vpop.xlane.xlu0 %3770
        %v3772 = vsel %vm1320, %v2872, 0.0
        %3773 = vadd.xlane.f32.xlu0 %v3772
        %v3774 = vpop.xlane.xlu0 %3773
        %v3775 = vsel %vm1320, %v2874, 0.0
        %3776 = vadd.xlane.f32.xlu0 %v3775
        %v3777 = vpop.xlane.xlu0 %3776
        %v3778 = vsel %vm1320, %v2876, 0.0
        %3779 = vadd.xlane.f32.xlu0 %v3778
        %v3780 = vpop.xlane.xlu0 %3779
        %v3781 = vsel %vm1320, %v2878, 0.0
        %3782 = vadd.xlane.f32.xlu0 %v3781
        %v3783 = vpop.xlane.xlu0 %3782
        %v3784 = vsel %vm1320, %v2880, 0.0
        %3785 = vadd.xlane.f32.xlu0 %v3784
        %v3786 = vpop.xlane.xlu0 %3785
        %v3787 = vsel %vm1320, %v2882, 0.0
        %3788 = vadd.xlane.f32.xlu0 %v3787
        %v3789 = vpop.xlane.xlu0 %3788
        %v3790 = vsel %vm1320, %v2884, 0.0
        %3791 = vadd.xlane.f32.xlu0 %v3790
        %v3792 = vpop.xlane.xlu0 %3791
        %v3793 = vsel %vm1320, %v2886, 0.0
        %3794 = vadd.xlane.f32.xlu0 %v3793
        %v3795 = vpop.xlane.xlu0 %3794
        %v3796 = vsel %vm1320, %v2888, 0.0
        %3797 = vadd.xlane.f32.xlu0 %v3796
        %v3798 = vpop.xlane.xlu0 %3797
        %v3799 = vsel %vm1320, %v2890, 0.0
        %3800 = vadd.xlane.f32.xlu0 %v3799
        %v3801 = vpop.xlane.xlu0 %3800
        %v3802 = vsel %vm1320, %v2892, 0.0
        %3803 = vadd.xlane.f32.xlu0 %v3802
        %v3804 = vpop.xlane.xlu0 %3803
        %v3805 = vsel %vm1320, %v2894, 0.0
        %3806 = vadd.xlane.f32.xlu0 %v3805
        %v3807 = vpop.xlane.xlu0 %3806
        %v3808 = vsel %vm1320, %v2896, 0.0
        %3809 = vadd.xlane.f32.xlu0 %v3808
        %v3810 = vpop.xlane.xlu0 %3809
        %v3811 = vsel %vm1320, %v2898, 0.0
        %3812 = vadd.xlane.f32.xlu0 %v3811
        %v3813 = vpop.xlane.xlu0 %3812
        %v3814 = vsel %vm1320, %v2900, 0.0
        %3815 = vadd.xlane.f32.xlu0 %v3814
        %v3816 = vpop.xlane.xlu0 %3815
        %v3817 = vsel %vm1320, %v2902, 0.0
        %3818 = vadd.xlane.f32.xlu0 %v3817
        %v3819 = vpop.xlane.xlu0 %3818
        %v3820 = vsel %vm1320, %v2904, 0.0
        %3821 = vadd.xlane.f32.xlu0 %v3820
        %v3822 = vpop.xlane.xlu0 %3821
        %v3823 = vsel %vm1320, %v2906, 0.0
        %3824 = vadd.xlane.f32.xlu0 %v3823
        %v3825 = vpop.xlane.xlu0 %3824
        %v3826 = vsel %vm1320, %v2908, 0.0
        %3827 = vadd.xlane.f32.xlu0 %v3826
        %v3828 = vpop.xlane.xlu0 %3827
        %v3829 = vsel %vm1320, %v2910, 0.0
        %3830 = vadd.xlane.f32.xlu0 %v3829
        %v3831 = vpop.xlane.xlu0 %3830
        %v3832 = vsel %vm1320, %v2912, 0.0
        %3833 = vadd.xlane.f32.xlu0 %v3832
        %v3834 = vpop.xlane.xlu0 %3833
        %v3835 = vsel %vm1320, %v2914, 0.0
        %3836 = vadd.xlane.f32.xlu0 %v3835
        %v3837 = vpop.xlane.xlu0 %3836
        %v3838 = vsel %vm1320, %v2916, 0.0
        %3839 = vadd.xlane.f32.xlu0 %v3838
        %v3840 = vpop.xlane.xlu0 %3839
        %v3841 = vsel %vm1320, %v2918, 0.0
        %3842 = vadd.xlane.f32.xlu0 %v3841
        %v3843 = vpop.xlane.xlu0 %3842
        %v3844 = vsel %vm1320, %v2920, 0.0
        %3845 = vadd.xlane.f32.xlu0 %v3844
        %v3846 = vpop.xlane.xlu0 %3845
        %v3847 = vsel %vm1320, %v2922, 0.0
        %3848 = vadd.xlane.f32.xlu0 %v3847
        %v3849 = vpop.xlane.xlu0 %3848
        %v3850 = vsel %vm1320, %v2924, 0.0
        %3851 = vadd.xlane.f32.xlu0 %v3850
        %v3852 = vpop.xlane.xlu0 %3851
        %v3853 = vsel %vm1320, %v2926, 0.0
        %3854 = vadd.xlane.f32.xlu0 %v3853
        %v3855 = vpop.xlane.xlu0 %3854
        %v3856 = vsel %vm1320, %v2928, 0.0
        %3857 = vadd.xlane.f32.xlu0 %v3856
        %v3858 = vpop.xlane.xlu0 %3857
        %v3859 = vsel %vm1320, %v2930, 0.0
        %3860 = vadd.xlane.f32.xlu0 %v3859
        %v3861 = vpop.xlane.xlu0 %3860
        %v3862 = vsel %vm1320, %v2932, 0.0
        %3863 = vadd.xlane.f32.xlu0 %v3862
        %v3864 = vpop.xlane.xlu0 %3863
        %v3865 = vsel %vm1320, %v2934, 0.0
        %3866 = vadd.xlane.f32.xlu0 %v3865
        %v3867 = vpop.xlane.xlu0 %3866
        %v3868 = vsel %vm1320, %v2936, 0.0
        %3869 = vadd.xlane.f32.xlu0 %v3868
        %v3870 = vpop.xlane.xlu0 %3869
        %v3871 = vsel %vm1320, %v2938, 0.0
        %3872 = vadd.xlane.f32.xlu0 %v3871
        %v3873 = vpop.xlane.xlu0 %3872
        %v3874 = vsel %vm1320, %v2940, 0.0
        %3875 = vadd.xlane.f32.xlu0 %v3874
        %v3876 = vpop.xlane.xlu0 %3875
        %v3877 = vsel %vm1320, %v2942, 0.0
        %3878 = vadd.xlane.f32.xlu0 %v3877
        %v3879 = vpop.xlane.xlu0 %3878
        %v3880 = vsel %vm1320, %v2944, 0.0
        %3881 = vadd.xlane.f32.xlu0 %v3880
        %v3882 = vpop.xlane.xlu0 %3881
        %v3883 = vsel %vm1320, %v2946, 0.0
        %3884 = vadd.xlane.f32.xlu0 %v3883
        %v3885 = vpop.xlane.xlu0 %3884
        %v3886 = vsel %vm1320, %v2948, 0.0
        %3887 = vadd.xlane.f32.xlu0 %v3886
        %v3888 = vpop.xlane.xlu0 %3887
        %v3889 = vsel %vm1320, %v2950, 0.0
        %3890 = vadd.xlane.f32.xlu0 %v3889
        %v3891 = vpop.xlane.xlu0 %3890
        %v3892 = vsel %vm1320, %v2952, 0.0
        %3893 = vadd.xlane.f32.xlu0 %v3892
        %v3894 = vpop.xlane.xlu0 %3893
        %v3895 = vsel %vm1320, %v2954, 0.0
        %3896 = vadd.xlane.f32.xlu0 %v3895
        %v3897 = vpop.xlane.xlu0 %3896
        %v3898 = vsel %vm1320, %v2956, 0.0
        %3899 = vadd.xlane.f32.xlu0 %v3898
        %v3900 = vpop.xlane.xlu0 %3899
        %v3901 = vsel %vm1320, %v2958, 0.0
        %3902 = vadd.xlane.f32.xlu0 %v3901
        %v3903 = vpop.xlane.xlu0 %3902
        %v3904 = vsel %vm1320, %v2960, 0.0
        %3905 = vadd.xlane.f32.xlu0 %v3904
        %v3906 = vpop.xlane.xlu0 %3905
        %v3907 = vsel %vm1320, %v2962, 0.0
        %3908 = vadd.xlane.f32.xlu0 %v3907
        %v3909 = vpop.xlane.xlu0 %3908
        %v3910 = vsel %vm1320, %v2964, 0.0
        %3911 = vadd.xlane.f32.xlu0 %v3910
        %v3912 = vpop.xlane.xlu0 %3911
        %v3913 = vsel %vm1320, %v2966, 0.0
        %3914 = vadd.xlane.f32.xlu0 %v3913
        %v3915 = vpop.xlane.xlu0 %3914
        %v3916 = vsel %vm1320, %v2968, 0.0
        %3917 = vadd.xlane.f32.xlu0 %v3916
        %v3918 = vpop.xlane.xlu0 %3917
        %v3919 = vsel %vm1320, %v2970, 0.0
        %3920 = vadd.xlane.f32.xlu0 %v3919
        %v3921 = vpop.xlane.xlu0 %3920
        %v3922 = vsel %vm1320, %v2972, 0.0
        %3923 = vadd.xlane.f32.xlu0 %v3922
        %v3924 = vpop.xlane.xlu0 %3923
        %v3925 = vsel %vm1320, %v2974, 0.0
        %3926 = vadd.xlane.f32.xlu0 %v3925
        %v3927 = vpop.xlane.xlu0 %3926
        %v3928 = vsel %vm1320, %v2976, 0.0
        %3929 = vadd.xlane.f32.xlu0 %v3928
        %v3930 = vpop.xlane.xlu0 %3929
        %v3931 = vsel %vm1320, %v2978, 0.0
        %3932 = vadd.xlane.f32.xlu0 %v3931
        %v3933 = vpop.xlane.xlu0 %3932
        %v3934 = vsel %vm1320, %v2980, 0.0
        %3935 = vadd.xlane.f32.xlu0 %v3934
        %v3936 = vpop.xlane.xlu0 %3935
        %v3937 = vsel %vm1320, %v2982, 0.0
        %3938 = vadd.xlane.f32.xlu0 %v3937
        %v3939 = vpop.xlane.xlu0 %3938
        %v3940 = vsel %vm1320, %v2984, 0.0
        %3941 = vadd.xlane.f32.xlu0 %v3940
        %v3942 = vpop.xlane.xlu0 %3941
        %v3943 = vsel %vm1320, %v2986, 0.0
        %3944 = vadd.xlane.f32.xlu0 %v3943
        %v3945 = vpop.xlane.xlu0 %3944
        %v3946 = vsel %vm1320, %v2988, 0.0
        %3947 = vadd.xlane.f32.xlu0 %v3946
        %v3948 = vpop.xlane.xlu0 %3947
        %v3949 = vsel %vm1320, %v2990, 0.0
        %3950 = vadd.xlane.f32.xlu0 %v3949
        %v3951 = vpop.xlane.xlu0 %3950
        %v3952 = vsel %vm1320, %v2992, 0.0
        %3953 = vadd.xlane.f32.xlu0 %v3952
        %v3954 = vpop.xlane.xlu0 %3953
        %v3955 = vsel %vm1320, %v2994, 0.0
        %3956 = vadd.xlane.f32.xlu0 %v3955
        %v3957 = vpop.xlane.xlu0 %3956
        %v3958 = vsel %vm1320, %v2996, 0.0
        %3959 = vadd.xlane.f32.xlu0 %v3958
        %v3960 = vpop.xlane.xlu0 %3959
        %v3961 = vsel %vm1320, %v2998, 0.0
        %3962 = vadd.xlane.f32.xlu0 %v3961
        %v3963 = vpop.xlane.xlu0 %3962
        %v3964 = vsel %vm1320, %v3000, 0.0
        %3965 = vadd.xlane.f32.xlu0 %v3964
        %v3966 = vpop.xlane.xlu0 %3965
        %v3967 = vsel %vm1320, %v3002, 0.0
        %3968 = vadd.xlane.f32.xlu0 %v3967
        %v3969 = vpop.xlane.xlu0 %3968
        %v3970 = vsel %vm1320, %v3004, 0.0
        %3971 = vadd.xlane.f32.xlu0 %v3970
        %v3972 = vpop.xlane.xlu0 %3971
        %v3973 = vsel %vm1320, %v3006, 0.0
        %3974 = vadd.xlane.f32.xlu0 %v3973
        %v3975 = vpop.xlane.xlu0 %3974
        %v3976 = vsel %vm1320, %v3008, 0.0
        %3977 = vadd.xlane.f32.xlu0 %v3976
        %v3978 = vpop.xlane.xlu0 %3977
        %v3979 = vsel %vm1320, %v3010, 0.0
        %3980 = vadd.xlane.f32.xlu0 %v3979
        %v3981 = vpop.xlane.xlu0 %3980
        %v3982 = vsel %vm1320, %v3012, 0.0
        %3983 = vadd.xlane.f32.xlu0 %v3982
        %v3984 = vpop.xlane.xlu0 %3983
        %v3985 = vsel %vm1320, %v3014, 0.0
        %3986 = vadd.xlane.f32.xlu0 %v3985
        %v3987 = vpop.xlane.xlu0 %3986
        %v3988 = vsel %vm1320, %v3016, 0.0
        %3989 = vadd.xlane.f32.xlu0 %v3988
        %v3990 = vpop.xlane.xlu0 %3989
        %v3991 = vsel %vm1320, %v3018, 0.0
        %3992 = vadd.xlane.f32.xlu0 %v3991
        %v3993 = vpop.xlane.xlu0 %3992
        %v3994 = vsel %vm1320, %v3020, 0.0
        %3995 = vadd.xlane.f32.xlu0 %v3994
        %v3996 = vpop.xlane.xlu0 %3995
        %v3997 = vsel %vm1320, %v3022, 0.0
        %3998 = vadd.xlane.f32.xlu0 %v3997
        %v3999 = vpop.xlane.xlu0 %3998
        %v4000 = vsel %vm1320, %v3024, 0.0
        %4001 = vadd.xlane.f32.xlu0 %v4000
        %v4002 = vpop.xlane.xlu0 %4001
        %v4003 = vsel %vm1320, %v3026, 0.0
        %4004 = vadd.xlane.f32.xlu0 %v4003
        %v4005 = vpop.xlane.xlu0 %4004
        %v4006 = vsel %vm1320, %v3028, 0.0
        %4007 = vadd.xlane.f32.xlu0 %v4006
        %v4008 = vpop.xlane.xlu0 %4007
        %v4009 = vsel %vm1320, %v3030, 0.0
        %4010 = vadd.xlane.f32.xlu0 %v4009
        %v4011 = vpop.xlane.xlu0 %4010
        %v4012 = vsel %vm1320, %v3032, 0.0
        %4013 = vadd.xlane.f32.xlu0 %v4012
        %v4014 = vpop.xlane.xlu0 %4013
        %v4015 = vsel %vm1320, %v3034, 0.0
        %4016 = vadd.xlane.f32.xlu0 %v4015
        %v4017 = vpop.xlane.xlu0 %4016
        %v4018 = vsel %vm1320, %v3036, 0.0
        %4019 = vadd.xlane.f32.xlu0 %v4018
        %v4020 = vpop.xlane.xlu0 %4019
        %v4021 = vsel %vm1320, %v3038, 0.0
        %4022 = vadd.xlane.f32.xlu0 %v4021
        %v4023 = vpop.xlane.xlu0 %4022
        %v4024 = vsel %vm1320, %v3040, 0.0
        %4025 = vadd.xlane.f32.xlu0 %v4024
        %v4026 = vpop.xlane.xlu0 %4025
        %v4027 = vsel %vm1320, %v3042, 0.0
        %4028 = vadd.xlane.f32.xlu0 %v4027
        %v4029 = vpop.xlane.xlu0 %4028
        %v4030 = vsel %vm1320, %v3044, 0.0
        %4031 = vadd.xlane.f32.xlu0 %v4030
        %v4032 = vpop.xlane.xlu0 %4031
        %v4033 = vsel %vm1320, %v3046, 0.0
        %4034 = vadd.xlane.f32.xlu0 %v4033
        %v4035 = vpop.xlane.xlu0 %4034
        %v4036 = vsel %vm1320, %v3048, 0.0
        %4037 = vadd.xlane.f32.xlu0 %v4036
        %v4038 = vpop.xlane.xlu0 %4037
        %v4039 = vsel %vm1320, %v3050, 0.0
        %4040 = vadd.xlane.f32.xlu0 %v4039
        %v4041 = vpop.xlane.xlu0 %4040
        %v4042 = vsel %vm1320, %v3052, 0.0
        %4043 = vadd.xlane.f32.xlu0 %v4042
        %v4044 = vpop.xlane.xlu0 %4043
        %v4045 = vsel %vm1320, %v3054, 0.0
        %4046 = vadd.xlane.f32.xlu0 %v4045
        %v4047 = vpop.xlane.xlu0 %4046
        %v4048 = vsel %vm1320, %v3056, 0.0
        %4049 = vadd.xlane.f32.xlu0 %v4048
        %v4050 = vpop.xlane.xlu0 %4049
        %v4051 = vsel %vm1320, %v3058, 0.0
        %4052 = vadd.xlane.f32.xlu0 %v4051
        %v4053 = vpop.xlane.xlu0 %4052
        %v4054 = vsel %vm1320, %v3060, 0.0
        %4055 = vadd.xlane.f32.xlu0 %v4054
        %v4056 = vpop.xlane.xlu0 %4055
        %v4057 = vsel %vm1320, %v3062, 0.0
        %4058 = vadd.xlane.f32.xlu0 %v4057
        %v4059 = vpop.xlane.xlu0 %4058
        %v4060 = vsel %vm1320, %v3064, 0.0
        %4061 = vadd.xlane.f32.xlu0 %v4060
        %v4062 = vpop.xlane.xlu0 %4061
        %v4063 = vsel %vm1320, %v3066, 0.0
        %4064 = vadd.xlane.f32.xlu0 %v4063
        %v4065 = vpop.xlane.xlu0 %4064
        %v4066 = vsel %vm1320, %v3068, 0.0
        %4067 = vadd.xlane.f32.xlu0 %v4066
        %v4068 = vpop.xlane.xlu0 %4067
        %v4069 = vsel %vm1320, %v3070, 0.0
        %4070 = vadd.xlane.f32.xlu0 %v4069
        %v4071 = vpop.xlane.xlu0 %4070
        %v4072 = vsel %vm1320, %v3072, 0.0
        %4073 = vadd.xlane.f32.xlu0 %v4072
        %v4074 = vpop.xlane.xlu0 %4073
        %v4075 = vsel %vm1320, %v3074, 0.0
        %4076 = vadd.xlane.f32.xlu0 %v4075
        %v4077 = vpop.xlane.xlu0 %4076
        %v4078 = vsel %vm1320, %v3076, 0.0
        %4079 = vadd.xlane.f32.xlu0 %v4078
        %v4080 = vpop.xlane.xlu0 %4079
        %v4081 = vsel %vm1320, %v3078, 0.0
        %4082 = vadd.xlane.f32.xlu0 %v4081
        %v4083 = vpop.xlane.xlu0 %4082
        %v4084 = vsel %vm1320, %v3080, 0.0
        %4085 = vadd.xlane.f32.xlu0 %v4084
        %v4086 = vpop.xlane.xlu0 %4085
        %v4087 = vsel %vm1320, %v3082, 0.0
        %4088 = vadd.xlane.f32.xlu0 %v4087
        %v4089 = vpop.xlane.xlu0 %4088
        %v4090 = vsel %vm1320, %v3084, 0.0
        %4091 = vadd.xlane.f32.xlu0 %v4090
        %v4092 = vpop.xlane.xlu0 %4091
        %v4093 = vsel %vm1320, %v3086, 0.0
        %4094 = vadd.xlane.f32.xlu0 %v4093
        %v4095 = vpop.xlane.xlu0 %4094
        %v4096 = vsel %vm1320, %v3088, 0.0
        %4097 = vadd.xlane.f32.xlu0 %v4096
        %v4098 = vpop.xlane.xlu0 %4097
        %v4099 = vsel %vm1320, %v3090, 0.0
        %4100 = vadd.xlane.f32.xlu0 %v4099
        %v4101 = vpop.xlane.xlu0 %4100
        %v4102 = vsel %vm1320, %v3092, 0.0
        %4103 = vadd.xlane.f32.xlu0 %v4102
        %v4104 = vpop.xlane.xlu0 %4103
        %v4105 = vsel %vm1320, %v3094, 0.0
        %4106 = vadd.xlane.f32.xlu0 %v4105
        %v4107 = vpop.xlane.xlu0 %4106
        %v4108 = vsel %vm1320, %v3096, 0.0
        %4109 = vadd.xlane.f32.xlu0 %v4108
        %v4110 = vpop.xlane.xlu0 %4109
        %v4111 = vsel %vm1320, %v3098, 0.0
        %4112 = vadd.xlane.f32.xlu0 %v4111
        %v4113 = vpop.xlane.xlu0 %4112
        %v4114 = vsel %vm1320, %v3100, 0.0
        %4115 = vadd.xlane.f32.xlu0 %v4114
        %v4116 = vpop.xlane.xlu0 %4115
        %v4117 = vsel %vm1320, %v3102, 0.0
        %4118 = vadd.xlane.f32.xlu0 %v4117
        %v4119 = vpop.xlane.xlu0 %4118
        %v4120 = vsel %vm1320, %v3104, 0.0
        %4121 = vadd.xlane.f32.xlu0 %v4120
        %v4122 = vpop.xlane.xlu0 %4121
        %v4123 = vsel %vm1320, %v3106, 0.0
        %4124 = vadd.xlane.f32.xlu0 %v4123
        %v4125 = vpop.xlane.xlu0 %4124
        %v4126 = vsel %vm1320, %v3108, 0.0
        %4127 = vadd.xlane.f32.xlu0 %v4126
        %v4128 = vpop.xlane.xlu0 %4127
        %v4129 = vsel %vm1320, %v3110, 0.0
        %4130 = vadd.xlane.f32.xlu0 %v4129
        %v4131 = vpop.xlane.xlu0 %4130
        %v4132 = vsel %vm1320, %v3112, 0.0
        %4133 = vadd.xlane.f32.xlu0 %v4132
        %v4134 = vpop.xlane.xlu0 %4133
        %v4135 = vsel %vm1320, %v3114, 0.0
        %4136 = vadd.xlane.f32.xlu0 %v4135
        %v4137 = vpop.xlane.xlu0 %4136
        %v4138 = vsel %vm1320, %v3116, 0.0
        %4139 = vadd.xlane.f32.xlu0 %v4138
        %v4140 = vpop.xlane.xlu0 %4139
        %v4141 = vsel %vm1320, %v3118, 0.0
        %4142 = vadd.xlane.f32.xlu0 %v4141
        %v4143 = vpop.xlane.xlu0 %4142
        %v4144 = vsel %vm1320, %v3120, 0.0
        %4145 = vadd.xlane.f32.xlu0 %v4144
        %v4146 = vpop.xlane.xlu0 %4145
        %v4147 = vsel %vm1320, %v3122, 0.0
        %4148 = vadd.xlane.f32.xlu0 %v4147
        %v4149 = vpop.xlane.xlu0 %4148
        %v4150 = vsel %vm1320, %v3124, 0.0
        %4151 = vadd.xlane.f32.xlu0 %v4150
        %v4152 = vpop.xlane.xlu0 %4151
        %v4153 = vsel %vm1320, %v3126, 0.0
        %4154 = vadd.xlane.f32.xlu0 %v4153
        %v4155 = vpop.xlane.xlu0 %4154
        %v4156 = vsel %vm1320, %v3128, 0.0
        %4157 = vadd.xlane.f32.xlu0 %v4156
        %v4158 = vpop.xlane.xlu0 %4157
        %v4159 = vsel %vm1320, %v3130, 0.0
        %4160 = vadd.xlane.f32.xlu0 %v4159
        %v4161 = vpop.xlane.xlu0 %4160
        %v4162 = vsel %vm1320, %v3132, 0.0
        %4163 = vadd.xlane.f32.xlu0 %v4162
        %v4164 = vpop.xlane.xlu0 %4163
        %v4165 = vsel %vm1320, %v3134, 0.0
        %4166 = vadd.xlane.f32.xlu0 %v4165
        %v4167 = vpop.xlane.xlu0 %4166
        %v4168 = vsel %vm1320, %v3136, 0.0
        %4169 = vadd.xlane.f32.xlu0 %v4168
        %v4170 = vpop.xlane.xlu0 %4169
        %v4171 = vsel %vm1320, %v3138, 0.0
        %4172 = vadd.xlane.f32.xlu0 %v4171
        %v4173 = vpop.xlane.xlu0 %4172
        %v4174 = vsel %vm1320, %v3140, 0.0
        %4175 = vadd.xlane.f32.xlu0 %v4174
        %v4176 = vpop.xlane.xlu0 %4175
        %v4177 = vsel %vm1320, %v3142, 0.0
        %4178 = vadd.xlane.f32.xlu0 %v4177
        %v4179 = vpop.xlane.xlu0 %4178
        %v4180 = vsel %vm1320, %v3144, 0.0
        %4181 = vadd.xlane.f32.xlu0 %v4180
        %v4182 = vpop.xlane.xlu0 %4181
        %v4183 = vsel %vm1320, %v3146, 0.0
        %4184 = vadd.xlane.f32.xlu0 %v4183
        %v4185 = vpop.xlane.xlu0 %4184
        %v4186 = vsel %vm1320, %v3148, 0.0
        %4187 = vadd.xlane.f32.xlu0 %v4186
        %v4188 = vpop.xlane.xlu0 %4187
        %v4189 = vsel %vm1320, %v3150, 0.0
        %4190 = vadd.xlane.f32.xlu0 %v4189
        %v4191 = vpop.xlane.xlu0 %4190
        %v4192 = vsel %vm1320, %v3152, 0.0
        %4193 = vadd.xlane.f32.xlu0 %v4192
        %v4194 = vpop.xlane.xlu0 %4193
        %v4195 = vsel %vm1320, %v3154, 0.0
        %4196 = vadd.xlane.f32.xlu0 %v4195
        %v4197 = vpop.xlane.xlu0 %4196
        %v4198 = vsel %vm1320, %v3156, 0.0
        %4199 = vadd.xlane.f32.xlu0 %v4198
        %v4200 = vpop.xlane.xlu0 %4199
        %v4201 = vsel %vm1320, %v3158, 0.0
        %4202 = vadd.xlane.f32.xlu0 %v4201
        %v4203 = vpop.xlane.xlu0 %4202
        %v4204 = vsel %vm1320, %v3160, 0.0
        %4205 = vadd.xlane.f32.xlu0 %v4204
        %v4206 = vpop.xlane.xlu0 %4205
        %v4207 = vsel %vm1320, %v3162, 0.0
        %4208 = vadd.xlane.f32.xlu0 %v4207
        %v4209 = vpop.xlane.xlu0 %4208
        %v4210 = vsel %vm1320, %v3164, 0.0
        %4211 = vadd.xlane.f32.xlu0 %v4210
        %v4212 = vpop.xlane.xlu0 %4211
        %v4213 = vsel %vm1320, %v3166, 0.0
        %4214 = vadd.xlane.f32.xlu0 %v4213
        %v4215 = vpop.xlane.xlu0 %4214
        %v4216 = vsel %vm1320, %v3168, 0.0
        %4217 = vadd.xlane.f32.xlu0 %v4216
        %v4218 = vpop.xlane.xlu0 %4217
        %v4219 = vsel %vm1320, %v3170, 0.0
        %4220 = vadd.xlane.f32.xlu0 %v4219
        %v4221 = vpop.xlane.xlu0 %4220
        %v4222 = vsel %vm1320, %v3172, 0.0
        %4223 = vadd.xlane.f32.xlu0 %v4222
        %v4224 = vpop.xlane.xlu0 %4223
        %v4225 = vsel %vm1320, %v3174, 0.0
        %4226 = vadd.xlane.f32.xlu0 %v4225
        %v4227 = vpop.xlane.xlu0 %4226
        %v4228 = vsel %vm1320, %v3176, 0.0
        %4229 = vadd.xlane.f32.xlu0 %v4228
        %v4230 = vpop.xlane.xlu0 %4229
        %v4231 = vsel %vm1320, %v3178, 0.0
        %4232 = vadd.xlane.f32.xlu0 %v4231
        %v4233 = vpop.xlane.xlu0 %4232
        %v4234 = vsel %vm1320, %v3180, 0.0
        %4235 = vadd.xlane.f32.xlu0 %v4234
        %v4236 = vpop.xlane.xlu0 %4235
        %v4237 = vsel %vm1320, %v3182, 0.0
        %4238 = vadd.xlane.f32.xlu0 %v4237
        %v4239 = vpop.xlane.xlu0 %4238
        %v4240 = vsel %vm1320, %v3184, 0.0
        %4241 = vadd.xlane.f32.xlu0 %v4240
        %v4242 = vpop.xlane.xlu0 %4241
        %v4243 = vsel %vm1320, %v3186, 0.0
        %4244 = vadd.xlane.f32.xlu0 %v4243
        %v4245 = vpop.xlane.xlu0 %4244
        %v4246 = vsel %vm1320, %v3188, 0.0
        %4247 = vadd.xlane.f32.xlu0 %v4246
        %v4248 = vpop.xlane.xlu0 %4247
        %v4249 = vsel %vm1320, %v3190, 0.0
        %4250 = vadd.xlane.f32.xlu0 %v4249
        %v4251 = vpop.xlane.xlu0 %4250
        %v4252 = vsel %vm1320, %v3192, 0.0
        %4253 = vadd.xlane.f32.xlu0 %v4252
        %v4254 = vpop.xlane.xlu0 %4253
        %v4255 = vsel %vm1320, %v3194, 0.0
        %4256 = vadd.xlane.f32.xlu0 %v4255
        %v4257 = vpop.xlane.xlu0 %4256
        %v4258 = vsel %vm1320, %v3196, 0.0
        %4259 = vadd.xlane.f32.xlu0 %v4258
        %v4260 = vpop.xlane.xlu0 %4259
        %v4261 = vsel %vm1320, %v3198, 0.0
        %4262 = vadd.xlane.f32.xlu0 %v4261
        %v4263 = vpop.xlane.xlu0 %4262
        %v4264 = vsel %vm1320, %v3200, 0.0
        %4265 = vadd.xlane.f32.xlu0 %v4264
        %v4266 = vpop.xlane.xlu0 %4265
        %v4267 = vsel %vm1320, %v3202, 0.0
        %4268 = vadd.xlane.f32.xlu0 %v4267
        %v4269 = vpop.xlane.xlu0 %4268
        %v4270 = vsel %vm1320, %v3204, 0.0
        %4271 = vadd.xlane.f32.xlu0 %v4270
        %v4272 = vpop.xlane.xlu0 %4271
        %v4273 = vsel %vm1320, %v3206, 0.0
        %4274 = vadd.xlane.f32.xlu0 %v4273
        %v4275 = vpop.xlane.xlu0 %4274
        %v4276 = vsel %vm1320, %v3208, 0.0
        %4277 = vadd.xlane.f32.xlu0 %v4276
        %v4278 = vpop.xlane.xlu0 %4277
        %v4279 = vsel %vm1320, %v3210, 0.0
        %4280 = vadd.xlane.f32.xlu0 %v4279
        %v4281 = vpop.xlane.xlu0 %4280
        %v4282 = vsel %vm1320, %v3212, 0.0
        %4283 = vadd.xlane.f32.xlu0 %v4282
        %v4284 = vpop.xlane.xlu0 %4283
        %v4285 = vsel %vm1320, %v3214, 0.0
        %4286 = vadd.xlane.f32.xlu0 %v4285
        %v4287 = vpop.xlane.xlu0 %4286
        %v4288 = vsel %vm1320, %v3216, 0.0
        %4289 = vadd.xlane.f32.xlu0 %v4288
        %v4290 = vpop.xlane.xlu0 %4289
        %v4291 = vsel %vm1320, %v3218, 0.0
        %4292 = vadd.xlane.f32.xlu0 %v4291
        %v4293 = vpop.xlane.xlu0 %4292
        %v4294 = vsel %vm1320, %v3220, 0.0
        %4295 = vadd.xlane.f32.xlu0 %v4294
        %v4296 = vpop.xlane.xlu0 %4295
        %v4297 = vsel %vm1320, %v3222, 0.0
        %4298 = vadd.xlane.f32.xlu0 %v4297
        %v4299 = vpop.xlane.xlu0 %4298
        %v4300 = vsel %vm1320, %v3224, 0.0
        %4301 = vadd.xlane.f32.xlu0 %v4300
        %v4302 = vpop.xlane.xlu0 %4301
        %v4303 = vsel %vm1320, %v3226, 0.0
        %4304 = vadd.xlane.f32.xlu0 %v4303
        %v4305 = vpop.xlane.xlu0 %4304
        %v4306 = vsel %vm1320, %v3228, 0.0
        %4307 = vadd.xlane.f32.xlu0 %v4306
        %v4308 = vpop.xlane.xlu0 %4307
        %v4309 = vsel %vm1320, %v3230, 0.0
        %4310 = vadd.xlane.f32.xlu0 %v4309
        %v4311 = vpop.xlane.xlu0 %4310
        %v4312 = vsel %vm1320, %v3232, 0.0
        %4313 = vadd.xlane.f32.xlu0 %v4312
        %v4314 = vpop.xlane.xlu0 %4313
        %v4315 = vsel %vm1320, %v3234, 0.0
        %4316 = vadd.xlane.f32.xlu0 %v4315
        %v4317 = vpop.xlane.xlu0 %4316
        %v4318 = vsel %vm1320, %v3236, 0.0
        %4319 = vadd.xlane.f32.xlu0 %v4318
        %v4320 = vpop.xlane.xlu0 %4319
        %v4321 = vsel %vm1320, %v3238, 0.0
        %4322 = vadd.xlane.f32.xlu0 %v4321
        %v4323 = vpop.xlane.xlu0 %4322
        %v4324 = vsel %vm1320, %v3240, 0.0
        %4325 = vadd.xlane.f32.xlu0 %v4324
        %v4326 = vpop.xlane.xlu0 %4325
        %v4327 = vsel %vm1320, %v3242, 0.0
        %4328 = vadd.xlane.f32.xlu0 %v4327
        %v4329 = vpop.xlane.xlu0 %4328
        %v4330 = vsel %vm1320, %v3244, 0.0
        %4331 = vadd.xlane.f32.xlu0 %v4330
        %v4332 = vpop.xlane.xlu0 %4331
        %v4333 = vsel %vm1320, %v3246, 0.0
        %4334 = vadd.xlane.f32.xlu0 %v4333
        %v4335 = vpop.xlane.xlu0 %4334
        %v4336 = vsel %vm1320, %v3248, 0.0
        %4337 = vadd.xlane.f32.xlu0 %v4336
        %v4338 = vpop.xlane.xlu0 %4337
        %v4339 = vsel %vm1320, %v3250, 0.0
        %4340 = vadd.xlane.f32.xlu0 %v4339
        %v4341 = vpop.xlane.xlu0 %4340
        %v4342 = vsel %vm1320, %v3252, 0.0
        %4343 = vadd.xlane.f32.xlu0 %v4342
        %v4344 = vpop.xlane.xlu0 %4343
        %v4345 = vsel %vm1320, %v3254, 0.0
        %4346 = vadd.xlane.f32.xlu0 %v4345
        %v4347 = vpop.xlane.xlu0 %4346
        %v4348 = vsel %vm1320, %v3256, 0.0
        %4349 = vadd.xlane.f32.xlu0 %v4348
        %v4350 = vpop.xlane.xlu0 %4349
        %v4351 = vsel %vm1320, %v3258, 0.0
        %4352 = vadd.xlane.f32.xlu0 %v4351
        %v4353 = vpop.xlane.xlu0 %4352
        %v4354 = vsel %vm1320, %v3260, 0.0
        %4355 = vadd.xlane.f32.xlu0 %v4354
        %v4356 = vpop.xlane.xlu0 %4355
        %v4357 = vsel %vm1320, %v3262, 0.0
        %4358 = vadd.xlane.f32.xlu0 %v4357
        %v4359 = vpop.xlane.xlu0 %4358
        %v4360 = vsel %vm1320, %v3264, 0.0
        %4361 = vadd.xlane.f32.xlu0 %v4360
        %v4362 = vpop.xlane.xlu0 %4361
        %v4363 = vsel %vm1320, %v3266, 0.0
        %4364 = vadd.xlane.f32.xlu0 %v4363
        %v4365 = vpop.xlane.xlu0 %4364
        %v4366 = vsel %vm1320, %v3268, 0.0
        %4367 = vadd.xlane.f32.xlu0 %v4366
        %v4368 = vpop.xlane.xlu0 %4367
        %v4369 = vsel %vm1320, %v3270, 0.0
        %4370 = vadd.xlane.f32.xlu0 %v4369
        %v4371 = vpop.xlane.xlu0 %4370
        %v4372 = vsel %vm1320, %v3272, 0.0
        %4373 = vadd.xlane.f32.xlu0 %v4372
        %v4374 = vpop.xlane.xlu0 %4373
        %v4375 = vsel %vm1320, %v3274, 0.0
        %4376 = vadd.xlane.f32.xlu0 %v4375
        %v4377 = vpop.xlane.xlu0 %4376
        %v4378 = vsel %vm1320, %v3276, 0.0
        %4379 = vadd.xlane.f32.xlu0 %v4378
        %v4380 = vpop.xlane.xlu0 %4379
        %v4381 = vsel %vm1320, %v3278, 0.0
        %4382 = vadd.xlane.f32.xlu0 %v4381
        %v4383 = vpop.xlane.xlu0 %4382
        %v4384 = vsel %vm1320, %v3280, 0.0
        %4385 = vadd.xlane.f32.xlu0 %v4384
        %v4386 = vpop.xlane.xlu0 %4385
        %v4387 = vsel %vm1320, %v3282, 0.0
        %4388 = vadd.xlane.f32.xlu0 %v4387
        %v4389 = vpop.xlane.xlu0 %4388
        %v4390 = vsel %vm1320, %v3284, 0.0
        %4391 = vadd.xlane.f32.xlu0 %v4390
        %v4392 = vpop.xlane.xlu0 %4391
        %v4393 = vsel %vm1320, %v3286, 0.0
        %4394 = vadd.xlane.f32.xlu0 %v4393
        %v4395 = vpop.xlane.xlu0 %4394
        %v4396 = vsel %vm1320, %v3288, 0.0
        %4397 = vadd.xlane.f32.xlu0 %v4396
        %v4398 = vpop.xlane.xlu0 %4397
        %v4399 = vsel %vm1320, %v3290, 0.0
        %4400 = vadd.xlane.f32.xlu0 %v4399
        %v4401 = vpop.xlane.xlu0 %4400
        %v4402 = vsel %vm1320, %v3292, 0.0
        %4403 = vadd.xlane.f32.xlu0 %v4402
        %v4404 = vpop.xlane.xlu0 %4403
        %v4405 = vsel %vm1320, %v3294, 0.0
        %4406 = vadd.xlane.f32.xlu0 %v4405
        %v4407 = vpop.xlane.xlu0 %4406
        %v4408 = vsel %vm1320, %v3296, 0.0
        %4409 = vadd.xlane.f32.xlu0 %v4408
        %v4410 = vpop.xlane.xlu0 %4409
        %v4411 = vsel %vm1320, %v3298, 0.0
        %4412 = vadd.xlane.f32.xlu0 %v4411
        %v4413 = vpop.xlane.xlu0 %4412
        %v4414 = vsel %vm1320, %v3300, 0.0
        %4415 = vadd.xlane.f32.xlu0 %v4414
        %v4416 = vpop.xlane.xlu0 %4415
        %v4417 = vsel %vm1320, %v3302, 0.0
        %4418 = vadd.xlane.f32.xlu0 %v4417
        %v4419 = vpop.xlane.xlu0 %4418
        %v4420 = vsel %vm1320, %v3304, 0.0
        %4421 = vadd.xlane.f32.xlu0 %v4420
        %v4422 = vpop.xlane.xlu0 %4421
        %v4423 = vsel %vm1320, %v3306, 0.0
        %4424 = vadd.xlane.f32.xlu0 %v4423
        %v4425 = vpop.xlane.xlu0 %4424
        %v4426 = vsel %vm1320, %v3308, 0.0
        %4427 = vadd.xlane.f32.xlu0 %v4426
        %v4428 = vpop.xlane.xlu0 %4427
        %v4429 = vsel %vm1320, %v3310, 0.0
        %4430 = vadd.xlane.f32.xlu0 %v4429
        %v4431 = vpop.xlane.xlu0 %4430
        %v4432 = vsel %vm1320, %v3312, 0.0
        %4433 = vadd.xlane.f32.xlu0 %v4432
        %v4434 = vpop.xlane.xlu0 %4433
        %v4435 = vsel %vm1320, %v3314, 0.0
        %4436 = vadd.xlane.f32.xlu0 %v4435
        %v4437 = vpop.xlane.xlu0 %4436
        %v4438 = vsel %vm1320, %v3316, 0.0
        %4439 = vadd.xlane.f32.xlu0 %v4438
        %v4440 = vpop.xlane.xlu0 %4439
        %v4441 = vsel %vm1320, %v3318, 0.0
        %4442 = vadd.xlane.f32.xlu0 %v4441
        %v4443 = vpop.xlane.xlu0 %4442
        %v4444 = vsel %vm1320, %v3320, 0.0
        %4445 = vadd.xlane.f32.xlu0 %v4444
        %v4446 = vpop.xlane.xlu0 %4445
        %v4447 = vsel %vm1320, %v3322, 0.0
        %4448 = vadd.xlane.f32.xlu0 %v4447
        %v4449 = vpop.xlane.xlu0 %4448
        %v4450 = vsel %vm1320, %v3324, 0.0
        %4451 = vadd.xlane.f32.xlu0 %v4450
        %v4452 = vpop.xlane.xlu0 %4451
        %v4453 = vsel %vm1320, %v3326, 0.0
        %4454 = vadd.xlane.f32.xlu0 %v4453
        %v4455 = vpop.xlane.xlu0 %4454
        %v4456 = vsel %vm1320, %v3328, 0.0
        %4457 = vadd.xlane.f32.xlu0 %v4456
        %v4458 = vpop.xlane.xlu0 %4457
        %v4459 = vsel %vm1320, %v3330, 0.0
        %4460 = vadd.xlane.f32.xlu0 %v4459
        %v4461 = vpop.xlane.xlu0 %4460
        %v4462 = vsel %vm1320, %v3332, 0.0
        %4463 = vadd.xlane.f32.xlu0 %v4462
        %v4464 = vpop.xlane.xlu0 %4463
        %v4465 = vsel %vm1320, %v3334, 0.0
        %4466 = vadd.xlane.f32.xlu0 %v4465
        %v4467 = vpop.xlane.xlu0 %4466
        %v4468 = vsel %vm1320, %v3336, 0.0
        %4469 = vadd.xlane.f32.xlu0 %v4468
        %v4470 = vpop.xlane.xlu0 %4469
        %v4471 = vsel %vm1320, %v3338, 0.0
        %4472 = vadd.xlane.f32.xlu0 %v4471
        %v4473 = vpop.xlane.xlu0 %4472
        %v4474 = vsel %vm1320, %v3340, 0.0
        %4475 = vadd.xlane.f32.xlu0 %v4474
        %v4476 = vpop.xlane.xlu0 %4475
        %v4477 = vsel %vm1320, %v3342, 0.0
        %4478 = vadd.xlane.f32.xlu0 %v4477
        %v4479 = vpop.xlane.xlu0 %4478
        %v4480 = vsel %vm1320, %v3344, 0.0
        %4481 = vadd.xlane.f32.xlu0 %v4480
        %v4482 = vpop.xlane.xlu0 %4481
        %v4483 = vsel %vm1320, %v3346, 0.0
        %4484 = vadd.xlane.f32.xlu0 %v4483
        %v4485 = vpop.xlane.xlu0 %4484
        %v4486 = vsel %vm1320, %v3348, 0.0
        %4487 = vadd.xlane.f32.xlu0 %v4486
        %v4488 = vpop.xlane.xlu0 %4487
        %v4489 = vsel %vm1320, %v3350, 0.0
        %4490 = vadd.xlane.f32.xlu0 %v4489
        %v4491 = vpop.xlane.xlu0 %4490
        %v4492 = vsel %vm1320, %v3352, 0.0
        %4493 = vadd.xlane.f32.xlu0 %v4492
        %v4494 = vpop.xlane.xlu0 %4493
        %v4495 = vsel %vm1320, %v3354, 0.0
        %4496 = vadd.xlane.f32.xlu0 %v4495
        %v4497 = vpop.xlane.xlu0 %4496
        %v4498 = vsel %vm1320, %v3356, 0.0
        %4499 = vadd.xlane.f32.xlu0 %v4498
        %v4500 = vpop.xlane.xlu0 %4499
        %v4501 = vsel %vm1320, %v3358, 0.0
        %4502 = vadd.xlane.f32.xlu0 %v4501
        %v4503 = vpop.xlane.xlu0 %4502
        %v4504 = vsel %vm1320, %v3360, 0.0
        %4505 = vadd.xlane.f32.xlu0 %v4504
        %v4506 = vpop.xlane.xlu0 %4505
        %v4507 = vsel %vm1320, %v3362, 0.0
        %4508 = vadd.xlane.f32.xlu0 %v4507
        %v4509 = vpop.xlane.xlu0 %4508
        %v4510 = vsel %vm1320, %v3364, 0.0
        %4511 = vadd.xlane.f32.xlu0 %v4510
        %v4512 = vpop.xlane.xlu0 %4511
        %v4513 = vsel %vm1320, %v3366, 0.0
        %4514 = vadd.xlane.f32.xlu0 %v4513
        %v4515 = vpop.xlane.xlu0 %4514
        %v4516 = vsel %vm1320, %v3368, 0.0
        %4517 = vadd.xlane.f32.xlu0 %v4516
        %v4518 = vpop.xlane.xlu0 %4517
        %v4519 = vsel %vm1320, %v3370, 0.0
        %4520 = vadd.xlane.f32.xlu0 %v4519
        %v4521 = vpop.xlane.xlu0 %4520
        %v4522 = vsel %vm1320, %v3372, 0.0
        %4523 = vadd.xlane.f32.xlu0 %v4522
        %v4524 = vpop.xlane.xlu0 %4523
        %v4525 = vmul.f32 %v3663, 0.015625
        %v4526 = vmul.f32 %v3666, 0.015625
        %v4527 = vmul.f32 %v3669, 0.015625
        %v4528 = vmul.f32 %v3672, 0.015625
        %v4529 = vmul.f32 %v3675, 0.015625
        %v4530 = vmul.f32 %v3678, 0.015625
        %v4531 = vmul.f32 %v3681, 0.015625
        %v4532 = vmul.f32 %v3684, 0.015625
        %v4533 = vmul.f32 %v3687, 0.015625
        %v4534 = vmul.f32 %v3690, 0.015625
        %v4535 = vmul.f32 %v3693, 0.015625
        %v4536 = vmul.f32 %v3696, 0.015625
        %v4537 = vmul.f32 %v3699, 0.015625
        %v4538 = vmul.f32 %v3702, 0.015625
        %v4539 = vmul.f32 %v3705, 0.015625
        %v4540 = vmul.f32 %v3708, 0.015625
        %v4541 = vmul.f32 %v3711, 0.015625
        %v4542 = vmul.f32 %v3714, 0.015625
        %v4543 = vmul.f32 %v3717, 0.015625
        %v4544 = vmul.f32 %v3720, 0.015625
        %v4545 = vmul.f32 %v3723, 0.015625
        %v4546 = vmul.f32 %v3726, 0.015625
        %v4547 = vmul.f32 %v3729, 0.015625
        %v4548 = vmul.f32 %v3732, 0.015625
        %v4549 = vmul.f32 %v3735, 0.015625
        %v4550 = vmul.f32 %v3738, 0.015625
        %v4551 = vmul.f32 %v3741, 0.015625
        %v4552 = vmul.f32 %v3744, 0.015625
        %v4553 = vmul.f32 %v3747, 0.015625
        %v4554 = vmul.f32 %v3750, 0.015625
        %v4555 = vmul.f32 %v3753, 0.015625
        %v4556 = vmul.f32 %v3756, 0.015625
        %v4557 = vmul.f32 %v3759, 0.015625
        %v4558 = vmul.f32 %v3762, 0.015625
        %v4559 = vmul.f32 %v3765, 0.015625
        %v4560 = vmul.f32 %v3768, 0.015625
        %v4561 = vmul.f32 %v3771, 0.015625
        %v4562 = vmul.f32 %v3774, 0.015625
        %v4563 = vmul.f32 %v3777, 0.015625
        %v4564 = vmul.f32 %v3780, 0.015625
        %v4565 = vmul.f32 %v3783, 0.015625
        %v4566 = vmul.f32 %v3786, 0.015625
        %v4567 = vmul.f32 %v3789, 0.015625
        %v4568 = vmul.f32 %v3792, 0.015625
        %v4569 = vmul.f32 %v3795, 0.015625
        %v4570 = vmul.f32 %v3798, 0.015625
        %v4571 = vmul.f32 %v3801, 0.015625
        %v4572 = vmul.f32 %v3804, 0.015625
        %v4573 = vmul.f32 %v3807, 0.015625
        %v4574 = vmul.f32 %v3810, 0.015625
        %v4575 = vmul.f32 %v3813, 0.015625
        %v4576 = vmul.f32 %v3816, 0.015625
        %v4577 = vmul.f32 %v3819, 0.015625
        %v4578 = vmul.f32 %v3822, 0.015625
        %v4579 = vmul.f32 %v3825, 0.015625
        %v4580 = vmul.f32 %v3828, 0.015625
        %v4581 = vmul.f32 %v3831, 0.015625
        %v4582 = vmul.f32 %v3834, 0.015625
        %v4583 = vmul.f32 %v3837, 0.015625
        %v4584 = vmul.f32 %v3840, 0.015625
        %v4585 = vmul.f32 %v3843, 0.015625
        %v4586 = vmul.f32 %v3846, 0.015625
        %v4587 = vmul.f32 %v3849, 0.015625
        %v4588 = vmul.f32 %v3852, 0.015625
        %v4589 = vmul.f32 %v3855, 0.015625
        %v4590 = vmul.f32 %v3858, 0.015625
        %v4591 = vmul.f32 %v3861, 0.015625
        %v4592 = vmul.f32 %v3864, 0.015625
        %v4593 = vmul.f32 %v3867, 0.015625
        %v4594 = vmul.f32 %v3870, 0.015625
        %v4595 = vmul.f32 %v3873, 0.015625
        %v4596 = vmul.f32 %v3876, 0.015625
        %v4597 = vmul.f32 %v3879, 0.015625
        %v4598 = vmul.f32 %v3882, 0.015625
        %v4599 = vmul.f32 %v3885, 0.015625
        %v4600 = vmul.f32 %v3888, 0.015625
        %v4601 = vmul.f32 %v3891, 0.015625
        %v4602 = vmul.f32 %v3894, 0.015625
        %v4603 = vmul.f32 %v3897, 0.015625
        %v4604 = vmul.f32 %v3900, 0.015625
        %v4605 = vmul.f32 %v3903, 0.015625
        %v4606 = vmul.f32 %v3906, 0.015625
        %v4607 = vmul.f32 %v3909, 0.015625
        %v4608 = vmul.f32 %v3912, 0.015625
        %v4609 = vmul.f32 %v3915, 0.015625
        %v4610 = vmul.f32 %v3918, 0.015625
        %v4611 = vmul.f32 %v3921, 0.015625
        %v4612 = vmul.f32 %v3924, 0.015625
        %v4613 = vmul.f32 %v3927, 0.015625
        %v4614 = vmul.f32 %v3930, 0.015625
        %v4615 = vmul.f32 %v3933, 0.015625
        %v4616 = vmul.f32 %v3936, 0.015625
        %v4617 = vmul.f32 %v3939, 0.015625
        %v4618 = vmul.f32 %v3942, 0.015625
        %v4619 = vmul.f32 %v3945, 0.015625
        %v4620 = vmul.f32 %v3948, 0.015625
        %v4621 = vmul.f32 %v3951, 0.015625
        %v4622 = vmul.f32 %v3954, 0.015625
        %v4623 = vmul.f32 %v3957, 0.015625
        %v4624 = vmul.f32 %v3960, 0.015625
        %v4625 = vmul.f32 %v3963, 0.015625
        %v4626 = vmul.f32 %v3966, 0.015625
        %v4627 = vmul.f32 %v3969, 0.015625
        %v4628 = vmul.f32 %v3972, 0.015625
        %v4629 = vmul.f32 %v3975, 0.015625
        %v4630 = vmul.f32 %v3978, 0.015625
        %v4631 = vmul.f32 %v3981, 0.015625
        %v4632 = vmul.f32 %v3984, 0.015625
        %v4633 = vmul.f32 %v3987, 0.015625
        %v4634 = vmul.f32 %v3990, 0.015625
        %v4635 = vmul.f32 %v3993, 0.015625
        %v4636 = vmul.f32 %v3996, 0.015625
        %v4637 = vmul.f32 %v3999, 0.015625
        %v4638 = vmul.f32 %v4002, 0.015625
        %v4639 = vmul.f32 %v4005, 0.015625
        %v4640 = vmul.f32 %v4008, 0.015625
        %v4641 = vmul.f32 %v4011, 0.015625
        %v4642 = vmul.f32 %v4014, 0.015625
        %v4643 = vmul.f32 %v4017, 0.015625
        %v4644 = vmul.f32 %v4020, 0.015625
        %v4645 = vmul.f32 %v4023, 0.015625
        %v4646 = vmul.f32 %v4026, 0.015625
        %v4647 = vmul.f32 %v4029, 0.015625
        %v4648 = vmul.f32 %v4032, 0.015625
        %v4649 = vmul.f32 %v4035, 0.015625
        %v4650 = vmul.f32 %v4038, 0.015625
        %v4651 = vmul.f32 %v4041, 0.015625
        %v4652 = vmul.f32 %v4044, 0.015625
        %v4653 = vmul.f32 %v4047, 0.015625
        %v4654 = vmul.f32 %v4050, 0.015625
        %v4655 = vmul.f32 %v4053, 0.015625
        %v4656 = vmul.f32 %v4056, 0.015625
        %v4657 = vmul.f32 %v4059, 0.015625
        %v4658 = vmul.f32 %v4062, 0.015625
        %v4659 = vmul.f32 %v4065, 0.015625
        %v4660 = vmul.f32 %v4068, 0.015625
        %v4661 = vmul.f32 %v4071, 0.015625
        %v4662 = vmul.f32 %v4074, 0.015625
        %v4663 = vmul.f32 %v4077, 0.015625
        %v4664 = vmul.f32 %v4080, 0.015625
        %v4665 = vmul.f32 %v4083, 0.015625
        %v4666 = vmul.f32 %v4086, 0.015625
        %v4667 = vmul.f32 %v4089, 0.015625
        %v4668 = vmul.f32 %v4092, 0.015625
        %v4669 = vmul.f32 %v4095, 0.015625
        %v4670 = vmul.f32 %v4098, 0.015625
        %v4671 = vmul.f32 %v4101, 0.015625
        %v4672 = vmul.f32 %v4104, 0.015625
        %v4673 = vmul.f32 %v4107, 0.015625
        %v4674 = vmul.f32 %v4110, 0.015625
        %v4675 = vmul.f32 %v4113, 0.015625
        %v4676 = vmul.f32 %v4116, 0.015625
        %v4677 = vmul.f32 %v4119, 0.015625
        %v4678 = vmul.f32 %v4122, 0.015625
        %v4679 = vmul.f32 %v4125, 0.015625
        %v4680 = vmul.f32 %v4128, 0.015625
        %v4681 = vmul.f32 %v4131, 0.015625
        %v4682 = vmul.f32 %v4134, 0.015625
        %v4683 = vmul.f32 %v4137, 0.015625
        %v4684 = vmul.f32 %v4140, 0.015625
        %v4685 = vmul.f32 %v4143, 0.015625
        %v4686 = vmul.f32 %v4146, 0.015625
        %v4687 = vmul.f32 %v4149, 0.015625
        %v4688 = vmul.f32 %v4152, 0.015625
        %v4689 = vmul.f32 %v4155, 0.015625
        %v4690 = vmul.f32 %v4158, 0.015625
        %v4691 = vmul.f32 %v4161, 0.015625
        %v4692 = vmul.f32 %v4164, 0.015625
        %v4693 = vmul.f32 %v4167, 0.015625
        %v4694 = vmul.f32 %v4170, 0.015625
        %v4695 = vmul.f32 %v4173, 0.015625
        %v4696 = vmul.f32 %v4176, 0.015625
        %v4697 = vmul.f32 %v4179, 0.015625
        %v4698 = vmul.f32 %v4182, 0.015625
        %v4699 = vmul.f32 %v4185, 0.015625
        %v4700 = vmul.f32 %v4188, 0.015625
        %v4701 = vmul.f32 %v4191, 0.015625
        %v4702 = vmul.f32 %v4194, 0.015625
        %v4703 = vmul.f32 %v4197, 0.015625
        %v4704 = vmul.f32 %v4200, 0.015625
        %v4705 = vmul.f32 %v4203, 0.015625
        %v4706 = vmul.f32 %v4206, 0.015625
        %v4707 = vmul.f32 %v4209, 0.015625
        %v4708 = vmul.f32 %v4212, 0.015625
        %v4709 = vmul.f32 %v4215, 0.015625
        %v4710 = vmul.f32 %v4218, 0.015625
        %v4711 = vmul.f32 %v4221, 0.015625
        %v4712 = vmul.f32 %v4224, 0.015625
        %v4713 = vmul.f32 %v4227, 0.015625
        %v4714 = vmul.f32 %v4230, 0.015625
        %v4715 = vmul.f32 %v4233, 0.015625
        %v4716 = vmul.f32 %v4236, 0.015625
        %v4717 = vmul.f32 %v4239, 0.015625
        %v4718 = vmul.f32 %v4242, 0.015625
        %v4719 = vmul.f32 %v4245, 0.015625
        %v4720 = vmul.f32 %v4248, 0.015625
        %v4721 = vmul.f32 %v4251, 0.015625
        %v4722 = vmul.f32 %v4254, 0.015625
        %v4723 = vmul.f32 %v4257, 0.015625
        %v4724 = vmul.f32 %v4260, 0.015625
        %v4725 = vmul.f32 %v4263, 0.015625
        %v4726 = vmul.f32 %v4266, 0.015625
        %v4727 = vmul.f32 %v4269, 0.015625
        %v4728 = vmul.f32 %v4272, 0.015625
        %v4729 = vmul.f32 %v4275, 0.015625
        %v4730 = vmul.f32 %v4278, 0.015625
        %v4731 = vmul.f32 %v4281, 0.015625
        %v4732 = vmul.f32 %v4284, 0.015625
        %v4733 = vmul.f32 %v4287, 0.015625
        %v4734 = vmul.f32 %v4290, 0.015625
        %v4735 = vmul.f32 %v4293, 0.015625
        %v4736 = vmul.f32 %v4296, 0.015625
        %v4737 = vmul.f32 %v4299, 0.015625
        %v4738 = vmul.f32 %v4302, 0.015625
        %v4739 = vmul.f32 %v4305, 0.015625
        %v4740 = vmul.f32 %v4308, 0.015625
        %v4741 = vmul.f32 %v4311, 0.015625
        %v4742 = vmul.f32 %v4314, 0.015625
        %v4743 = vmul.f32 %v4317, 0.015625
        %v4744 = vmul.f32 %v4320, 0.015625
        %v4745 = vmul.f32 %v4323, 0.015625
        %v4746 = vmul.f32 %v4326, 0.015625
        %v4747 = vmul.f32 %v4329, 0.015625
        %v4748 = vmul.f32 %v4332, 0.015625
        %v4749 = vmul.f32 %v4335, 0.015625
        %v4750 = vmul.f32 %v4338, 0.015625
        %v4751 = vmul.f32 %v4341, 0.015625
        %v4752 = vmul.f32 %v4344, 0.015625
        %v4753 = vmul.f32 %v4347, 0.015625
        %v4754 = vmul.f32 %v4350, 0.015625
        %v4755 = vmul.f32 %v4353, 0.015625
        %v4756 = vmul.f32 %v4356, 0.015625
        %v4757 = vmul.f32 %v4359, 0.015625
        %v4758 = vmul.f32 %v4362, 0.015625
        %v4759 = vmul.f32 %v4365, 0.015625
        %v4760 = vmul.f32 %v4368, 0.015625
        %v4761 = vmul.f32 %v4371, 0.015625
        %v4762 = vmul.f32 %v4374, 0.015625
        %v4763 = vmul.f32 %v4377, 0.015625
        %v4764 = vmul.f32 %v4380, 0.015625
        %v4765 = vmul.f32 %v4383, 0.015625
        %v4766 = vmul.f32 %v4386, 0.015625
        %v4767 = vmul.f32 %v4389, 0.015625
        %v4768 = vmul.f32 %v4392, 0.015625
        %v4769 = vmul.f32 %v4395, 0.015625
        %v4770 = vmul.f32 %v4398, 0.015625
        %v4771 = vmul.f32 %v4401, 0.015625
        %v4772 = vmul.f32 %v4404, 0.015625
        %v4773 = vmul.f32 %v4407, 0.015625
        %v4774 = vmul.f32 %v4410, 0.015625
        %v4775 = vmul.f32 %v4413, 0.015625
        %v4776 = vmul.f32 %v4416, 0.015625
        %v4777 = vmul.f32 %v4419, 0.015625
        %v4778 = vmul.f32 %v4422, 0.015625
        %v4779 = vmul.f32 %v4425, 0.015625
        %v4780 = vmul.f32 %v4428, 0.015625
        %v4781 = vmul.f32 %v4431, 0.015625
        %v4782 = vmul.f32 %v4434, 0.015625
        %v4783 = vmul.f32 %v4437, 0.015625
        %v4784 = vmul.f32 %v4440, 0.015625
        %v4785 = vmul.f32 %v4443, 0.015625
        %v4786 = vmul.f32 %v4446, 0.015625
        %v4787 = vmul.f32 %v4449, 0.015625
        %v4788 = vmul.f32 %v4452, 0.015625
        %v4789 = vmul.f32 %v4455, 0.015625
        %v4790 = vmul.f32 %v4458, 0.015625
        %v4791 = vmul.f32 %v4461, 0.015625
        %v4792 = vmul.f32 %v4464, 0.015625
        %v4793 = vmul.f32 %v4467, 0.015625
        %v4794 = vmul.f32 %v4470, 0.015625
        %v4795 = vmul.f32 %v4473, 0.015625
        %v4796 = vmul.f32 %v4476, 0.015625
        %v4797 = vmul.f32 %v4479, 0.015625
        %v4798 = vmul.f32 %v4482, 0.015625
        %v4799 = vmul.f32 %v4485, 0.015625
        %v4800 = vmul.f32 %v4488, 0.015625
        %v4801 = vmul.f32 %v4491, 0.015625
        %v4802 = vmul.f32 %v4494, 0.015625
        %v4803 = vmul.f32 %v4497, 0.015625
        %v4804 = vmul.f32 %v4500, 0.015625
        %v4805 = vmul.f32 %v4503, 0.015625
        %v4806 = vmul.f32 %v4506, 0.015625
        %v4807 = vmul.f32 %v4509, 0.015625
        %v4808 = vmul.f32 %v4512, 0.015625
        %v4809 = vmul.f32 %v4515, 0.015625
        %v4810 = vmul.f32 %v4518, 0.015625
        %v4811 = vmul.f32 %v4521, 0.015625
        %v4812 = vmul.f32 %v4524, 0.015625
        %s4813 = scalar_lea.vmem %s3, 288
        %v4814 = vld [vmem:[%s4813] sm:$0xff]
        %v4815 = vld [vmem:[%s4813 + $0x8] sm:$0xff]
        %v4816 = vld [vmem:[%s4813 + $0x10] sm:$0xff]
        %v4817 = vld [vmem:[%s4813 + $0x18] sm:$0xff]
        %v4818 = vld [vmem:[%s4813 + $0x20] sm:$0xff]
        %v4819 = vld [vmem:[%s4813 + $0x28] sm:$0xff]
        %v4820 = vld [vmem:[%s4813 + $0x30] sm:$0xff]
        %v4821 = vld [vmem:[%s4813 + $0x38] sm:$0xff]
        %v4822 = vld [vmem:[%s4813 + $0x40] sm:$0xff]
        %v4823 = vld [vmem:[%s4813 + $0x48] sm:$0xff]
        %v4824 = vld [vmem:[%s4813 + $0x50] sm:$0xff]
        %v4825 = vld [vmem:[%s4813 + $0x58] sm:$0xff]
        %v4826 = vld [vmem:[%s4813 + $0x60] sm:$0xff]
        %v4827 = vld [vmem:[%s4813 + $0x68] sm:$0xff]
        %v4828 = vld [vmem:[%s4813 + $0x70] sm:$0xff]
        %v4829 = vld [vmem:[%s4813 + $0x78] sm:$0xff]
        %v4830 = vld [vmem:[%s4813 + $0x80] sm:$0xff]
        %v4831 = vld [vmem:[%s4813 + $0x88] sm:$0xff]
        %v4832 = vld [vmem:[%s4813 + $0x90] sm:$0xff]
        %v4833 = vld [vmem:[%s4813 + $0x98] sm:$0xff]
        %v4834 = vld [vmem:[%s4813 + $0xa0] sm:$0xff]
        %v4835 = vld [vmem:[%s4813 + $0xa8] sm:$0xff]
        %v4836 = vld [vmem:[%s4813 + $0xb0] sm:$0xff]
        %v4837 = vld [vmem:[%s4813 + $0xb8] sm:$0xff]
        %v4838 = vld [vmem:[%s4813 + $0xc0] sm:$0xff]
        %v4839 = vld [vmem:[%s4813 + $0xc8] sm:$0xff]
        %v4840 = vld [vmem:[%s4813 + $0xd0] sm:$0xff]
        %v4841 = vld [vmem:[%s4813 + $0xd8] sm:$0xff]
        %v4842 = vld [vmem:[%s4813 + $0xe0] sm:$0xff]
        %v4843 = vld [vmem:[%s4813 + $0xe8] sm:$0xff]
        %v4844 = vld [vmem:[%s4813 + $0xf0] sm:$0xff]
        %v4845 = vld [vmem:[%s4813 + $0xf8] sm:$0xff]
        %v4846 = vld [vmem:[%s4813 + $0x100] sm:$0xff]
        %v4847 = vld [vmem:[%s4813 + $0x108] sm:$0xff]
        %v4848 = vld [vmem:[%s4813 + $0x110] sm:$0xff]
        %v4849 = vld [vmem:[%s4813 + $0x118] sm:$0xff]
        %v5138 = vlaneseq
        %v5139 = vand.u32 %v5138, 127
        %v5140 = vlaneseq
        %v5141 = vshrl.u32 %v5140, 7
        %v5142 = vsub.s32 %v5139, %v5141
        %v5143 = vrot.slane %v4525, %v5142
        %v5144 = vadd.s32 %v5139, 4294967288
        %v5145 = vlaneseq
        %v5146 = vshrl.u32 %v5145, 7
        %v5147 = vsub.s32 %v5144, %v5146
        %v5148 = vrot.slane %v4526, %v5147
        %vm5149 = vcmask 130112
        %v5150 = vsel %vm5149, %v5148, %v5143
        %v5151 = vadd.s32 %v5139, 4294967280
        %v5152 = vlaneseq
        %v5153 = vshrl.u32 %v5152, 7
        %v5154 = vsub.s32 %v5151, %v5153
        %v5155 = vrot.slane %v4527, %v5154
        %vm5156 = vcmask 195712
        %v5157 = vsel %vm5156, %v5155, %v5150
        %v5158 = vadd.s32 %v5139, 4294967272
        %v5159 = vlaneseq
        %v5160 = vshrl.u32 %v5159, 7
        %v5161 = vsub.s32 %v5158, %v5160
        %v5162 = vrot.slane %v4528, %v5161
        %vm5163 = vcmask 261312
        %v5164 = vsel %vm5163, %v5162, %v5157
        %v5165 = vadd.s32 %v5139, 4294967264
        %v5166 = vlaneseq
        %v5167 = vshrl.u32 %v5166, 7
        %v5168 = vsub.s32 %v5165, %v5167
        %v5169 = vrot.slane %v4529, %v5168
        %vm5170 = vcmask 326912
        %v5171 = vsel %vm5170, %v5169, %v5164
        %v5172 = vadd.s32 %v5139, 4294967256
        %v5173 = vlaneseq
        %v5174 = vshrl.u32 %v5173, 7
        %v5175 = vsub.s32 %v5172, %v5174
        %v5176 = vrot.slane %v4530, %v5175
        %vm5177 = vcmask 392512
        %v5178 = vsel %vm5177, %v5176, %v5171
        %v5179 = vadd.s32 %v5139, 4294967248
        %v5180 = vlaneseq
        %v5181 = vshrl.u32 %v5180, 7
        %v5182 = vsub.s32 %v5179, %v5181
        %v5183 = vrot.slane %v4531, %v5182
        %vm5184 = vcmask 458112
        %v5185 = vsel %vm5184, %v5183, %v5178
        %v5186 = vadd.s32 %v5139, 4294967240
        %v5187 = vlaneseq
        %v5188 = vshrl.u32 %v5187, 7
        %v5189 = vsub.s32 %v5186, %v5188
        %v5190 = vrot.slane %v4532, %v5189
        %vm5191 = vcmask 523712
        %v5192 = vsel %vm5191, %v5190, %v5185
        %v5193 = vadd.s32 %v5139, 4294967232
        %v5194 = vlaneseq
        %v5195 = vshrl.u32 %v5194, 7
        %v5196 = vsub.s32 %v5193, %v5195
        %v5197 = vrot.slane %v4533, %v5196
        %vm5198 = vcmask 589312
        %v5199 = vsel %vm5198, %v5197, %v5192
        %v5200 = vadd.s32 %v5139, 4294967224
        %v5201 = vlaneseq
        %v5202 = vshrl.u32 %v5201, 7
        %v5203 = vsub.s32 %v5200, %v5202
        %v5204 = vrot.slane %v4534, %v5203
        %vm5205 = vcmask 654912
        %v5206 = vsel %vm5205, %v5204, %v5199
        %v5207 = vadd.s32 %v5139, 4294967216
        %v5208 = vlaneseq
        %v5209 = vshrl.u32 %v5208, 7
        %v5210 = vsub.s32 %v5207, %v5209
        %v5211 = vrot.slane %v4535, %v5210
        %vm5212 = vcmask 720512
        %v5213 = vsel %vm5212, %v5211, %v5206
        %v5214 = vadd.s32 %v5139, 4294967208
        %v5215 = vlaneseq
        %v5216 = vshrl.u32 %v5215, 7
        %v5217 = vsub.s32 %v5214, %v5216
        %v5218 = vrot.slane %v4536, %v5217
        %vm5219 = vcmask 786112
        %v5220 = vsel %vm5219, %v5218, %v5213
        %v5221 = vadd.s32 %v5139, 4294967200
        %v5222 = vlaneseq
        %v5223 = vshrl.u32 %v5222, 7
        %v5224 = vsub.s32 %v5221, %v5223
        %v5225 = vrot.slane %v4537, %v5224
        %vm5226 = vcmask 851712
        %v5227 = vsel %vm5226, %v5225, %v5220
        %v5228 = vadd.s32 %v5139, 4294967192
        %v5229 = vlaneseq
        %v5230 = vshrl.u32 %v5229, 7
        %v5231 = vsub.s32 %v5228, %v5230
        %v5232 = vrot.slane %v4538, %v5231
        %vm5233 = vcmask 917312
        %v5234 = vsel %vm5233, %v5232, %v5227
        %v5235 = vadd.s32 %v5139, 4294967184
        %v5236 = vlaneseq
        %v5237 = vshrl.u32 %v5236, 7
        %v5238 = vsub.s32 %v5235, %v5237
        %v5239 = vrot.slane %v4539, %v5238
        %vm5240 = vcmask 982912
        %v5241 = vsel %vm5240, %v5239, %v5234
        %v5242 = vadd.s32 %v5139, 4294967176
        %v5243 = vlaneseq
        %v5244 = vshrl.u32 %v5243, 7
        %v5245 = vsub.s32 %v5242, %v5244
        %v5246 = vrot.slane %v4540, %v5245
        %vm5247 = vcmask 1048512
        %v5248 = vsel %vm5247, %v5246, %v5241
        %v5249 = vlaneseq
        %v5250 = vshrl.u32 %v5249, 7
        %v5251 = vsub.s32 %v5139, %v5250
        %v5252 = vrot.slane %v4541, %v5251
        %v5253 = vlaneseq
        %v5254 = vshrl.u32 %v5253, 7
        %v5255 = vsub.s32 %v5144, %v5254
        %v5256 = vrot.slane %v4542, %v5255
        %v5257 = vsel %vm5149, %v5256, %v5252
        %v5258 = vlaneseq
        %v5259 = vshrl.u32 %v5258, 7
        %v5260 = vsub.s32 %v5151, %v5259
        %v5261 = vrot.slane %v4543, %v5260
        %v5262 = vsel %vm5156, %v5261, %v5257
        %v5263 = vlaneseq
        %v5264 = vshrl.u32 %v5263, 7
        %v5265 = vsub.s32 %v5158, %v5264
        %v5266 = vrot.slane %v4544, %v5265
        %v5267 = vsel %vm5163, %v5266, %v5262
        %v5268 = vlaneseq
        %v5269 = vshrl.u32 %v5268, 7
        %v5270 = vsub.s32 %v5165, %v5269
        %v5271 = vrot.slane %v4545, %v5270
        %v5272 = vsel %vm5170, %v5271, %v5267
        %v5273 = vlaneseq
        %v5274 = vshrl.u32 %v5273, 7
        %v5275 = vsub.s32 %v5172, %v5274
        %v5276 = vrot.slane %v4546, %v5275
        %v5277 = vsel %vm5177, %v5276, %v5272
        %v5278 = vlaneseq
        %v5279 = vshrl.u32 %v5278, 7
        %v5280 = vsub.s32 %v5179, %v5279
        %v5281 = vrot.slane %v4547, %v5280
        %v5282 = vsel %vm5184, %v5281, %v5277
        %v5283 = vlaneseq
        %v5284 = vshrl.u32 %v5283, 7
        %v5285 = vsub.s32 %v5186, %v5284
        %v5286 = vrot.slane %v4548, %v5285
        %v5287 = vsel %vm5191, %v5286, %v5282
        %v5288 = vlaneseq
        %v5289 = vshrl.u32 %v5288, 7
        %v5290 = vsub.s32 %v5193, %v5289
        %v5291 = vrot.slane %v4549, %v5290
        %v5292 = vsel %vm5198, %v5291, %v5287
        %v5293 = vlaneseq
        %v5294 = vshrl.u32 %v5293, 7
        %v5295 = vsub.s32 %v5200, %v5294
        %v5296 = vrot.slane %v4550, %v5295
        %v5297 = vsel %vm5205, %v5296, %v5292
        %v5298 = vlaneseq
        %v5299 = vshrl.u32 %v5298, 7
        %v5300 = vsub.s32 %v5207, %v5299
        %v5301 = vrot.slane %v4551, %v5300
        %v5302 = vsel %vm5212, %v5301, %v5297
        %v5303 = vlaneseq
        %v5304 = vshrl.u32 %v5303, 7
        %v5305 = vsub.s32 %v5214, %v5304
        %v5306 = vrot.slane %v4552, %v5305
        %v5307 = vsel %vm5219, %v5306, %v5302
        %v5308 = vlaneseq
        %v5309 = vshrl.u32 %v5308, 7
        %v5310 = vsub.s32 %v5221, %v5309
        %v5311 = vrot.slane %v4553, %v5310
        %v5312 = vsel %vm5226, %v5311, %v5307
        %v5313 = vlaneseq
        %v5314 = vshrl.u32 %v5313, 7
        %v5315 = vsub.s32 %v5228, %v5314
        %v5316 = vrot.slane %v4554, %v5315
        %v5317 = vsel %vm5233, %v5316, %v5312
        %v5318 = vlaneseq
        %v5319 = vshrl.u32 %v5318, 7
        %v5320 = vsub.s32 %v5235, %v5319
        %v5321 = vrot.slane %v4555, %v5320
        %v5322 = vsel %vm5240, %v5321, %v5317
        %v5323 = vlaneseq
        %v5324 = vshrl.u32 %v5323, 7
        %v5325 = vsub.s32 %v5242, %v5324
        %v5326 = vrot.slane %v4556, %v5325
        %v5327 = vsel %vm5247, %v5326, %v5322
        %v5328 = vlaneseq
        %v5329 = vshrl.u32 %v5328, 7
        %v5330 = vsub.s32 %v5139, %v5329
        %v5331 = vrot.slane %v4557, %v5330
        %v5332 = vlaneseq
        %v5333 = vshrl.u32 %v5332, 7
        %v5334 = vsub.s32 %v5144, %v5333
        %v5335 = vrot.slane %v4558, %v5334
        %v5336 = vsel %vm5149, %v5335, %v5331
        %v5337 = vlaneseq
        %v5338 = vshrl.u32 %v5337, 7
        %v5339 = vsub.s32 %v5151, %v5338
        %v5340 = vrot.slane %v4559, %v5339
        %v5341 = vsel %vm5156, %v5340, %v5336
        %v5342 = vlaneseq
        %v5343 = vshrl.u32 %v5342, 7
        %v5344 = vsub.s32 %v5158, %v5343
        %v5345 = vrot.slane %v4560, %v5344
        %v5346 = vsel %vm5163, %v5345, %v5341
        %v5347 = vlaneseq
        %v5348 = vshrl.u32 %v5347, 7
        %v5349 = vsub.s32 %v5139, %v5348
        %v5350 = vrot.slane %v4561, %v5349
        %v5351 = vlaneseq
        %v5352 = vshrl.u32 %v5351, 7
        %v5353 = vsub.s32 %v5144, %v5352
        %v5354 = vrot.slane %v4562, %v5353
        %v5355 = vsel %vm5149, %v5354, %v5350
        %v5356 = vlaneseq
        %v5357 = vshrl.u32 %v5356, 7
        %v5358 = vsub.s32 %v5151, %v5357
        %v5359 = vrot.slane %v4563, %v5358
        %v5360 = vsel %vm5156, %v5359, %v5355
        %v5361 = vlaneseq
        %v5362 = vshrl.u32 %v5361, 7
        %v5363 = vsub.s32 %v5158, %v5362
        %v5364 = vrot.slane %v4564, %v5363
        %v5365 = vsel %vm5163, %v5364, %v5360
        %v5366 = vlaneseq
        %v5367 = vshrl.u32 %v5366, 7
        %v5368 = vsub.s32 %v5165, %v5367
        %v5369 = vrot.slane %v4565, %v5368
        %v5370 = vsel %vm5170, %v5369, %v5365
        %v5371 = vlaneseq
        %v5372 = vshrl.u32 %v5371, 7
        %v5373 = vsub.s32 %v5172, %v5372
        %v5374 = vrot.slane %v4566, %v5373
        %v5375 = vsel %vm5177, %v5374, %v5370
        %v5376 = vlaneseq
        %v5377 = vshrl.u32 %v5376, 7
        %v5378 = vsub.s32 %v5179, %v5377
        %v5379 = vrot.slane %v4567, %v5378
        %v5380 = vsel %vm5184, %v5379, %v5375
        %v5381 = vlaneseq
        %v5382 = vshrl.u32 %v5381, 7
        %v5383 = vsub.s32 %v5186, %v5382
        %v5384 = vrot.slane %v4568, %v5383
        %v5385 = vsel %vm5191, %v5384, %v5380
        %v5386 = vlaneseq
        %v5387 = vshrl.u32 %v5386, 7
        %v5388 = vsub.s32 %v5193, %v5387
        %v5389 = vrot.slane %v4569, %v5388
        %v5390 = vsel %vm5198, %v5389, %v5385
        %v5391 = vlaneseq
        %v5392 = vshrl.u32 %v5391, 7
        %v5393 = vsub.s32 %v5200, %v5392
        %v5394 = vrot.slane %v4570, %v5393
        %v5395 = vsel %vm5205, %v5394, %v5390
        %v5396 = vlaneseq
        %v5397 = vshrl.u32 %v5396, 7
        %v5398 = vsub.s32 %v5207, %v5397
        %v5399 = vrot.slane %v4571, %v5398
        %v5400 = vsel %vm5212, %v5399, %v5395
        %v5401 = vlaneseq
        %v5402 = vshrl.u32 %v5401, 7
        %v5403 = vsub.s32 %v5214, %v5402
        %v5404 = vrot.slane %v4572, %v5403
        %v5405 = vsel %vm5219, %v5404, %v5400
        %v5406 = vlaneseq
        %v5407 = vshrl.u32 %v5406, 7
        %v5408 = vsub.s32 %v5221, %v5407
        %v5409 = vrot.slane %v4573, %v5408
        %v5410 = vsel %vm5226, %v5409, %v5405
        %v5411 = vlaneseq
        %v5412 = vshrl.u32 %v5411, 7
        %v5413 = vsub.s32 %v5228, %v5412
        %v5414 = vrot.slane %v4574, %v5413
        %v5415 = vsel %vm5233, %v5414, %v5410
        %v5416 = vlaneseq
        %v5417 = vshrl.u32 %v5416, 7
        %v5418 = vsub.s32 %v5235, %v5417
        %v5419 = vrot.slane %v4575, %v5418
        %v5420 = vsel %vm5240, %v5419, %v5415
        %v5421 = vlaneseq
        %v5422 = vshrl.u32 %v5421, 7
        %v5423 = vsub.s32 %v5242, %v5422
        %v5424 = vrot.slane %v4576, %v5423
        %v5425 = vsel %vm5247, %v5424, %v5420
        %v5426 = vlaneseq
        %v5427 = vshrl.u32 %v5426, 7
        %v5428 = vsub.s32 %v5139, %v5427
        %v5429 = vrot.slane %v4577, %v5428
        %v5430 = vlaneseq
        %v5431 = vshrl.u32 %v5430, 7
        %v5432 = vsub.s32 %v5144, %v5431
        %v5433 = vrot.slane %v4578, %v5432
        %v5434 = vsel %vm5149, %v5433, %v5429
        %v5435 = vlaneseq
        %v5436 = vshrl.u32 %v5435, 7
        %v5437 = vsub.s32 %v5151, %v5436
        %v5438 = vrot.slane %v4579, %v5437
        %v5439 = vsel %vm5156, %v5438, %v5434
        %v5440 = vlaneseq
        %v5441 = vshrl.u32 %v5440, 7
        %v5442 = vsub.s32 %v5158, %v5441
        %v5443 = vrot.slane %v4580, %v5442
        %v5444 = vsel %vm5163, %v5443, %v5439
        %v5445 = vlaneseq
        %v5446 = vshrl.u32 %v5445, 7
        %v5447 = vsub.s32 %v5165, %v5446
        %v5448 = vrot.slane %v4581, %v5447
        %v5449 = vsel %vm5170, %v5448, %v5444
        %v5450 = vlaneseq
        %v5451 = vshrl.u32 %v5450, 7
        %v5452 = vsub.s32 %v5172, %v5451
        %v5453 = vrot.slane %v4582, %v5452
        %v5454 = vsel %vm5177, %v5453, %v5449
        %v5455 = vlaneseq
        %v5456 = vshrl.u32 %v5455, 7
        %v5457 = vsub.s32 %v5179, %v5456
        %v5458 = vrot.slane %v4583, %v5457
        %v5459 = vsel %vm5184, %v5458, %v5454
        %v5460 = vlaneseq
        %v5461 = vshrl.u32 %v5460, 7
        %v5462 = vsub.s32 %v5186, %v5461
        %v5463 = vrot.slane %v4584, %v5462
        %v5464 = vsel %vm5191, %v5463, %v5459
        %v5465 = vlaneseq
        %v5466 = vshrl.u32 %v5465, 7
        %v5467 = vsub.s32 %v5193, %v5466
        %v5468 = vrot.slane %v4585, %v5467
        %v5469 = vsel %vm5198, %v5468, %v5464
        %v5470 = vlaneseq
        %v5471 = vshrl.u32 %v5470, 7
        %v5472 = vsub.s32 %v5200, %v5471
        %v5473 = vrot.slane %v4586, %v5472
        %v5474 = vsel %vm5205, %v5473, %v5469
        %v5475 = vlaneseq
        %v5476 = vshrl.u32 %v5475, 7
        %v5477 = vsub.s32 %v5207, %v5476
        %v5478 = vrot.slane %v4587, %v5477
        %v5479 = vsel %vm5212, %v5478, %v5474
        %v5480 = vlaneseq
        %v5481 = vshrl.u32 %v5480, 7
        %v5482 = vsub.s32 %v5214, %v5481
        %v5483 = vrot.slane %v4588, %v5482
        %v5484 = vsel %vm5219, %v5483, %v5479
        %v5485 = vlaneseq
        %v5486 = vshrl.u32 %v5485, 7
        %v5487 = vsub.s32 %v5221, %v5486
        %v5488 = vrot.slane %v4589, %v5487
        %v5489 = vsel %vm5226, %v5488, %v5484
        %v5490 = vlaneseq
        %v5491 = vshrl.u32 %v5490, 7
        %v5492 = vsub.s32 %v5228, %v5491
        %v5493 = vrot.slane %v4590, %v5492
        %v5494 = vsel %vm5233, %v5493, %v5489
        %v5495 = vlaneseq
        %v5496 = vshrl.u32 %v5495, 7
        %v5497 = vsub.s32 %v5235, %v5496
        %v5498 = vrot.slane %v4591, %v5497
        %v5499 = vsel %vm5240, %v5498, %v5494
        %v5500 = vlaneseq
        %v5501 = vshrl.u32 %v5500, 7
        %v5502 = vsub.s32 %v5242, %v5501
        %v5503 = vrot.slane %v4592, %v5502
        %v5504 = vsel %vm5247, %v5503, %v5499
        %v5505 = vlaneseq
        %v5506 = vshrl.u32 %v5505, 7
        %v5507 = vsub.s32 %v5139, %v5506
        %v5508 = vrot.slane %v4593, %v5507
        %v5509 = vlaneseq
        %v5510 = vshrl.u32 %v5509, 7
        %v5511 = vsub.s32 %v5144, %v5510
        %v5512 = vrot.slane %v4594, %v5511
        %v5513 = vsel %vm5149, %v5512, %v5508
        %v5514 = vlaneseq
        %v5515 = vshrl.u32 %v5514, 7
        %v5516 = vsub.s32 %v5151, %v5515
        %v5517 = vrot.slane %v4595, %v5516
        %v5518 = vsel %vm5156, %v5517, %v5513
        %v5519 = vlaneseq
        %v5520 = vshrl.u32 %v5519, 7
        %v5521 = vsub.s32 %v5158, %v5520
        %v5522 = vrot.slane %v4596, %v5521
        %v5523 = vsel %vm5163, %v5522, %v5518
        %v5524 = vlaneseq
        %v5525 = vshrl.u32 %v5524, 7
        %v5526 = vsub.s32 %v5139, %v5525
        %v5527 = vrot.slane %v4597, %v5526
        %v5528 = vlaneseq
        %v5529 = vshrl.u32 %v5528, 7
        %v5530 = vsub.s32 %v5144, %v5529
        %v5531 = vrot.slane %v4598, %v5530
        %v5532 = vsel %vm5149, %v5531, %v5527
        %v5533 = vlaneseq
        %v5534 = vshrl.u32 %v5533, 7
        %v5535 = vsub.s32 %v5151, %v5534
        %v5536 = vrot.slane %v4599, %v5535
        %v5537 = vsel %vm5156, %v5536, %v5532
        %v5538 = vlaneseq
        %v5539 = vshrl.u32 %v5538, 7
        %v5540 = vsub.s32 %v5158, %v5539
        %v5541 = vrot.slane %v4600, %v5540
        %v5542 = vsel %vm5163, %v5541, %v5537
        %v5543 = vlaneseq
        %v5544 = vshrl.u32 %v5543, 7
        %v5545 = vsub.s32 %v5165, %v5544
        %v5546 = vrot.slane %v4601, %v5545
        %v5547 = vsel %vm5170, %v5546, %v5542
        %v5548 = vlaneseq
        %v5549 = vshrl.u32 %v5548, 7
        %v5550 = vsub.s32 %v5172, %v5549
        %v5551 = vrot.slane %v4602, %v5550
        %v5552 = vsel %vm5177, %v5551, %v5547
        %v5553 = vlaneseq
        %v5554 = vshrl.u32 %v5553, 7
        %v5555 = vsub.s32 %v5179, %v5554
        %v5556 = vrot.slane %v4603, %v5555
        %v5557 = vsel %vm5184, %v5556, %v5552
        %v5558 = vlaneseq
        %v5559 = vshrl.u32 %v5558, 7
        %v5560 = vsub.s32 %v5186, %v5559
        %v5561 = vrot.slane %v4604, %v5560
        %v5562 = vsel %vm5191, %v5561, %v5557
        %v5563 = vlaneseq
        %v5564 = vshrl.u32 %v5563, 7
        %v5565 = vsub.s32 %v5193, %v5564
        %v5566 = vrot.slane %v4605, %v5565
        %v5567 = vsel %vm5198, %v5566, %v5562
        %v5568 = vlaneseq
        %v5569 = vshrl.u32 %v5568, 7
        %v5570 = vsub.s32 %v5200, %v5569
        %v5571 = vrot.slane %v4606, %v5570
        %v5572 = vsel %vm5205, %v5571, %v5567
        %v5573 = vlaneseq
        %v5574 = vshrl.u32 %v5573, 7
        %v5575 = vsub.s32 %v5207, %v5574
        %v5576 = vrot.slane %v4607, %v5575
        %v5577 = vsel %vm5212, %v5576, %v5572
        %v5578 = vlaneseq
        %v5579 = vshrl.u32 %v5578, 7
        %v5580 = vsub.s32 %v5214, %v5579
        %v5581 = vrot.slane %v4608, %v5580
        %v5582 = vsel %vm5219, %v5581, %v5577
        %v5583 = vlaneseq
        %v5584 = vshrl.u32 %v5583, 7
        %v5585 = vsub.s32 %v5221, %v5584
        %v5586 = vrot.slane %v4609, %v5585
        %v5587 = vsel %vm5226, %v5586, %v5582
        %v5588 = vlaneseq
        %v5589 = vshrl.u32 %v5588, 7
        %v5590 = vsub.s32 %v5228, %v5589
        %v5591 = vrot.slane %v4610, %v5590
        %v5592 = vsel %vm5233, %v5591, %v5587
        %v5593 = vlaneseq
        %v5594 = vshrl.u32 %v5593, 7
        %v5595 = vsub.s32 %v5235, %v5594
        %v5596 = vrot.slane %v4611, %v5595
        %v5597 = vsel %vm5240, %v5596, %v5592
        %v5598 = vlaneseq
        %v5599 = vshrl.u32 %v5598, 7
        %v5600 = vsub.s32 %v5242, %v5599
        %v5601 = vrot.slane %v4612, %v5600
        %v5602 = vsel %vm5247, %v5601, %v5597
        %v5603 = vlaneseq
        %v5604 = vshrl.u32 %v5603, 7
        %v5605 = vsub.s32 %v5139, %v5604
        %v5606 = vrot.slane %v4613, %v5605
        %v5607 = vlaneseq
        %v5608 = vshrl.u32 %v5607, 7
        %v5609 = vsub.s32 %v5144, %v5608
        %v5610 = vrot.slane %v4614, %v5609
        %v5611 = vsel %vm5149, %v5610, %v5606
        %v5612 = vlaneseq
        %v5613 = vshrl.u32 %v5612, 7
        %v5614 = vsub.s32 %v5151, %v5613
        %v5615 = vrot.slane %v4615, %v5614
        %v5616 = vsel %vm5156, %v5615, %v5611
        %v5617 = vlaneseq
        %v5618 = vshrl.u32 %v5617, 7
        %v5619 = vsub.s32 %v5158, %v5618
        %v5620 = vrot.slane %v4616, %v5619
        %v5621 = vsel %vm5163, %v5620, %v5616
        %v5622 = vlaneseq
        %v5623 = vshrl.u32 %v5622, 7
        %v5624 = vsub.s32 %v5165, %v5623
        %v5625 = vrot.slane %v4617, %v5624
        %v5626 = vsel %vm5170, %v5625, %v5621
        %v5627 = vlaneseq
        %v5628 = vshrl.u32 %v5627, 7
        %v5629 = vsub.s32 %v5172, %v5628
        %v5630 = vrot.slane %v4618, %v5629
        %v5631 = vsel %vm5177, %v5630, %v5626
        %v5632 = vlaneseq
        %v5633 = vshrl.u32 %v5632, 7
        %v5634 = vsub.s32 %v5179, %v5633
        %v5635 = vrot.slane %v4619, %v5634
        %v5636 = vsel %vm5184, %v5635, %v5631
        %v5637 = vlaneseq
        %v5638 = vshrl.u32 %v5637, 7
        %v5639 = vsub.s32 %v5186, %v5638
        %v5640 = vrot.slane %v4620, %v5639
        %v5641 = vsel %vm5191, %v5640, %v5636
        %v5642 = vlaneseq
        %v5643 = vshrl.u32 %v5642, 7
        %v5644 = vsub.s32 %v5193, %v5643
        %v5645 = vrot.slane %v4621, %v5644
        %v5646 = vsel %vm5198, %v5645, %v5641
        %v5647 = vlaneseq
        %v5648 = vshrl.u32 %v5647, 7
        %v5649 = vsub.s32 %v5200, %v5648
        %v5650 = vrot.slane %v4622, %v5649
        %v5651 = vsel %vm5205, %v5650, %v5646
        %v5652 = vlaneseq
        %v5653 = vshrl.u32 %v5652, 7
        %v5654 = vsub.s32 %v5207, %v5653
        %v5655 = vrot.slane %v4623, %v5654
        %v5656 = vsel %vm5212, %v5655, %v5651
        %v5657 = vlaneseq
        %v5658 = vshrl.u32 %v5657, 7
        %v5659 = vsub.s32 %v5214, %v5658
        %v5660 = vrot.slane %v4624, %v5659
        %v5661 = vsel %vm5219, %v5660, %v5656
        %v5662 = vlaneseq
        %v5663 = vshrl.u32 %v5662, 7
        %v5664 = vsub.s32 %v5221, %v5663
        %v5665 = vrot.slane %v4625, %v5664
        %v5666 = vsel %vm5226, %v5665, %v5661
        %v5667 = vlaneseq
        %v5668 = vshrl.u32 %v5667, 7
        %v5669 = vsub.s32 %v5228, %v5668
        %v5670 = vrot.slane %v4626, %v5669
        %v5671 = vsel %vm5233, %v5670, %v5666
        %v5672 = vlaneseq
        %v5673 = vshrl.u32 %v5672, 7
        %v5674 = vsub.s32 %v5235, %v5673
        %v5675 = vrot.slane %v4627, %v5674
        %v5676 = vsel %vm5240, %v5675, %v5671
        %v5677 = vlaneseq
        %v5678 = vshrl.u32 %v5677, 7
        %v5679 = vsub.s32 %v5242, %v5678
        %v5680 = vrot.slane %v4628, %v5679
        %v5681 = vsel %vm5247, %v5680, %v5676
        %v5682 = vlaneseq
        %v5683 = vshrl.u32 %v5682, 7
        %v5684 = vsub.s32 %v5139, %v5683
        %v5685 = vrot.slane %v4629, %v5684
        %v5686 = vlaneseq
        %v5687 = vshrl.u32 %v5686, 7
        %v5688 = vsub.s32 %v5144, %v5687
        %v5689 = vrot.slane %v4630, %v5688
        %v5690 = vsel %vm5149, %v5689, %v5685
        %v5691 = vlaneseq
        %v5692 = vshrl.u32 %v5691, 7
        %v5693 = vsub.s32 %v5151, %v5692
        %v5694 = vrot.slane %v4631, %v5693
        %v5695 = vsel %vm5156, %v5694, %v5690
        %v5696 = vlaneseq
        %v5697 = vshrl.u32 %v5696, 7
        %v5698 = vsub.s32 %v5158, %v5697
        %v5699 = vrot.slane %v4632, %v5698
        %v5700 = vsel %vm5163, %v5699, %v5695
        %v5701 = vlaneseq
        %v5702 = vshrl.u32 %v5701, 7
        %v5703 = vsub.s32 %v5139, %v5702
        %v5704 = vrot.slane %v4633, %v5703
        %v5705 = vlaneseq
        %v5706 = vshrl.u32 %v5705, 7
        %v5707 = vsub.s32 %v5144, %v5706
        %v5708 = vrot.slane %v4634, %v5707
        %v5709 = vsel %vm5149, %v5708, %v5704
        %v5710 = vlaneseq
        %v5711 = vshrl.u32 %v5710, 7
        %v5712 = vsub.s32 %v5151, %v5711
        %v5713 = vrot.slane %v4635, %v5712
        %v5714 = vsel %vm5156, %v5713, %v5709
        %v5715 = vlaneseq
        %v5716 = vshrl.u32 %v5715, 7
        %v5717 = vsub.s32 %v5158, %v5716
        %v5718 = vrot.slane %v4636, %v5717
        %v5719 = vsel %vm5163, %v5718, %v5714
        %v5720 = vlaneseq
        %v5721 = vshrl.u32 %v5720, 7
        %v5722 = vsub.s32 %v5165, %v5721
        %v5723 = vrot.slane %v4637, %v5722
        %v5724 = vsel %vm5170, %v5723, %v5719
        %v5725 = vlaneseq
        %v5726 = vshrl.u32 %v5725, 7
        %v5727 = vsub.s32 %v5172, %v5726
        %v5728 = vrot.slane %v4638, %v5727
        %v5729 = vsel %vm5177, %v5728, %v5724
        %v5730 = vlaneseq
        %v5731 = vshrl.u32 %v5730, 7
        %v5732 = vsub.s32 %v5179, %v5731
        %v5733 = vrot.slane %v4639, %v5732
        %v5734 = vsel %vm5184, %v5733, %v5729
        %v5735 = vlaneseq
        %v5736 = vshrl.u32 %v5735, 7
        %v5737 = vsub.s32 %v5186, %v5736
        %v5738 = vrot.slane %v4640, %v5737
        %v5739 = vsel %vm5191, %v5738, %v5734
        %v5740 = vlaneseq
        %v5741 = vshrl.u32 %v5740, 7
        %v5742 = vsub.s32 %v5193, %v5741
        %v5743 = vrot.slane %v4641, %v5742
        %v5744 = vsel %vm5198, %v5743, %v5739
        %v5745 = vlaneseq
        %v5746 = vshrl.u32 %v5745, 7
        %v5747 = vsub.s32 %v5200, %v5746
        %v5748 = vrot.slane %v4642, %v5747
        %v5749 = vsel %vm5205, %v5748, %v5744
        %v5750 = vlaneseq
        %v5751 = vshrl.u32 %v5750, 7
        %v5752 = vsub.s32 %v5207, %v5751
        %v5753 = vrot.slane %v4643, %v5752
        %v5754 = vsel %vm5212, %v5753, %v5749
        %v5755 = vlaneseq
        %v5756 = vshrl.u32 %v5755, 7
        %v5757 = vsub.s32 %v5214, %v5756
        %v5758 = vrot.slane %v4644, %v5757
        %v5759 = vsel %vm5219, %v5758, %v5754
        %v5760 = vlaneseq
        %v5761 = vshrl.u32 %v5760, 7
        %v5762 = vsub.s32 %v5221, %v5761
        %v5763 = vrot.slane %v4645, %v5762
        %v5764 = vsel %vm5226, %v5763, %v5759
        %v5765 = vlaneseq
        %v5766 = vshrl.u32 %v5765, 7
        %v5767 = vsub.s32 %v5228, %v5766
        %v5768 = vrot.slane %v4646, %v5767
        %v5769 = vsel %vm5233, %v5768, %v5764
        %v5770 = vlaneseq
        %v5771 = vshrl.u32 %v5770, 7
        %v5772 = vsub.s32 %v5235, %v5771
        %v5773 = vrot.slane %v4647, %v5772
        %v5774 = vsel %vm5240, %v5773, %v5769
        %v5775 = vlaneseq
        %v5776 = vshrl.u32 %v5775, 7
        %v5777 = vsub.s32 %v5242, %v5776
        %v5778 = vrot.slane %v4648, %v5777
        %v5779 = vsel %vm5247, %v5778, %v5774
        %v5780 = vlaneseq
        %v5781 = vshrl.u32 %v5780, 7
        %v5782 = vsub.s32 %v5139, %v5781
        %v5783 = vrot.slane %v4649, %v5782
        %v5784 = vlaneseq
        %v5785 = vshrl.u32 %v5784, 7
        %v5786 = vsub.s32 %v5144, %v5785
        %v5787 = vrot.slane %v4650, %v5786
        %v5788 = vsel %vm5149, %v5787, %v5783
        %v5789 = vlaneseq
        %v5790 = vshrl.u32 %v5789, 7
        %v5791 = vsub.s32 %v5151, %v5790
        %v5792 = vrot.slane %v4651, %v5791
        %v5793 = vsel %vm5156, %v5792, %v5788
        %v5794 = vlaneseq
        %v5795 = vshrl.u32 %v5794, 7
        %v5796 = vsub.s32 %v5158, %v5795
        %v5797 = vrot.slane %v4652, %v5796
        %v5798 = vsel %vm5163, %v5797, %v5793
        %v5799 = vlaneseq
        %v5800 = vshrl.u32 %v5799, 7
        %v5801 = vsub.s32 %v5165, %v5800
        %v5802 = vrot.slane %v4653, %v5801
        %v5803 = vsel %vm5170, %v5802, %v5798
        %v5804 = vlaneseq
        %v5805 = vshrl.u32 %v5804, 7
        %v5806 = vsub.s32 %v5172, %v5805
        %v5807 = vrot.slane %v4654, %v5806
        %v5808 = vsel %vm5177, %v5807, %v5803
        %v5809 = vlaneseq
        %v5810 = vshrl.u32 %v5809, 7
        %v5811 = vsub.s32 %v5179, %v5810
        %v5812 = vrot.slane %v4655, %v5811
        %v5813 = vsel %vm5184, %v5812, %v5808
        %v5814 = vlaneseq
        %v5815 = vshrl.u32 %v5814, 7
        %v5816 = vsub.s32 %v5186, %v5815
        %v5817 = vrot.slane %v4656, %v5816
        %v5818 = vsel %vm5191, %v5817, %v5813
        %v5819 = vlaneseq
        %v5820 = vshrl.u32 %v5819, 7
        %v5821 = vsub.s32 %v5193, %v5820
        %v5822 = vrot.slane %v4657, %v5821
        %v5823 = vsel %vm5198, %v5822, %v5818
        %v5824 = vlaneseq
        %v5825 = vshrl.u32 %v5824, 7
        %v5826 = vsub.s32 %v5200, %v5825
        %v5827 = vrot.slane %v4658, %v5826
        %v5828 = vsel %vm5205, %v5827, %v5823
        %v5829 = vlaneseq
        %v5830 = vshrl.u32 %v5829, 7
        %v5831 = vsub.s32 %v5207, %v5830
        %v5832 = vrot.slane %v4659, %v5831
        %v5833 = vsel %vm5212, %v5832, %v5828
        %v5834 = vlaneseq
        %v5835 = vshrl.u32 %v5834, 7
        %v5836 = vsub.s32 %v5214, %v5835
        %v5837 = vrot.slane %v4660, %v5836
        %v5838 = vsel %vm5219, %v5837, %v5833
        %v5839 = vlaneseq
        %v5840 = vshrl.u32 %v5839, 7
        %v5841 = vsub.s32 %v5221, %v5840
        %v5842 = vrot.slane %v4661, %v5841
        %v5843 = vsel %vm5226, %v5842, %v5838
        %v5844 = vlaneseq
        %v5845 = vshrl.u32 %v5844, 7
        %v5846 = vsub.s32 %v5228, %v5845
        %v5847 = vrot.slane %v4662, %v5846
        %v5848 = vsel %vm5233, %v5847, %v5843
        %v5849 = vlaneseq
        %v5850 = vshrl.u32 %v5849, 7
        %v5851 = vsub.s32 %v5235, %v5850
        %v5852 = vrot.slane %v4663, %v5851
        %v5853 = vsel %vm5240, %v5852, %v5848
        %v5854 = vlaneseq
        %v5855 = vshrl.u32 %v5854, 7
        %v5856 = vsub.s32 %v5242, %v5855
        %v5857 = vrot.slane %v4664, %v5856
        %v5858 = vsel %vm5247, %v5857, %v5853
        %v5859 = vlaneseq
        %v5860 = vshrl.u32 %v5859, 7
        %v5861 = vsub.s32 %v5139, %v5860
        %v5862 = vrot.slane %v4665, %v5861
        %v5863 = vlaneseq
        %v5864 = vshrl.u32 %v5863, 7
        %v5865 = vsub.s32 %v5144, %v5864
        %v5866 = vrot.slane %v4666, %v5865
        %v5867 = vsel %vm5149, %v5866, %v5862
        %v5868 = vlaneseq
        %v5869 = vshrl.u32 %v5868, 7
        %v5870 = vsub.s32 %v5151, %v5869
        %v5871 = vrot.slane %v4667, %v5870
        %v5872 = vsel %vm5156, %v5871, %v5867
        %v5873 = vlaneseq
        %v5874 = vshrl.u32 %v5873, 7
        %v5875 = vsub.s32 %v5158, %v5874
        %v5876 = vrot.slane %v4668, %v5875
        %v5877 = vsel %vm5163, %v5876, %v5872
        %v5878 = vlaneseq
        %v5879 = vshrl.u32 %v5878, 7
        %v5880 = vsub.s32 %v5139, %v5879
        %v5881 = vrot.slane %v4669, %v5880
        %v5882 = vlaneseq
        %v5883 = vshrl.u32 %v5882, 7
        %v5884 = vsub.s32 %v5144, %v5883
        %v5885 = vrot.slane %v4670, %v5884
        %v5886 = vsel %vm5149, %v5885, %v5881
        %v5887 = vlaneseq
        %v5888 = vshrl.u32 %v5887, 7
        %v5889 = vsub.s32 %v5151, %v5888
        %v5890 = vrot.slane %v4671, %v5889
        %v5891 = vsel %vm5156, %v5890, %v5886
        %v5892 = vlaneseq
        %v5893 = vshrl.u32 %v5892, 7
        %v5894 = vsub.s32 %v5158, %v5893
        %v5895 = vrot.slane %v4672, %v5894
        %v5896 = vsel %vm5163, %v5895, %v5891
        %v5897 = vlaneseq
        %v5898 = vshrl.u32 %v5897, 7
        %v5899 = vsub.s32 %v5165, %v5898
        %v5900 = vrot.slane %v4673, %v5899
        %v5901 = vsel %vm5170, %v5900, %v5896
        %v5902 = vlaneseq
        %v5903 = vshrl.u32 %v5902, 7
        %v5904 = vsub.s32 %v5172, %v5903
        %v5905 = vrot.slane %v4674, %v5904
        %v5906 = vsel %vm5177, %v5905, %v5901
        %v5907 = vlaneseq
        %v5908 = vshrl.u32 %v5907, 7
        %v5909 = vsub.s32 %v5179, %v5908
        %v5910 = vrot.slane %v4675, %v5909
        %v5911 = vsel %vm5184, %v5910, %v5906
        %v5912 = vlaneseq
        %v5913 = vshrl.u32 %v5912, 7
        %v5914 = vsub.s32 %v5186, %v5913
        %v5915 = vrot.slane %v4676, %v5914
        %v5916 = vsel %vm5191, %v5915, %v5911
        %v5917 = vlaneseq
        %v5918 = vshrl.u32 %v5917, 7
        %v5919 = vsub.s32 %v5193, %v5918
        %v5920 = vrot.slane %v4677, %v5919
        %v5921 = vsel %vm5198, %v5920, %v5916
        %v5922 = vlaneseq
        %v5923 = vshrl.u32 %v5922, 7
        %v5924 = vsub.s32 %v5200, %v5923
        %v5925 = vrot.slane %v4678, %v5924
        %v5926 = vsel %vm5205, %v5925, %v5921
        %v5927 = vlaneseq
        %v5928 = vshrl.u32 %v5927, 7
        %v5929 = vsub.s32 %v5207, %v5928
        %v5930 = vrot.slane %v4679, %v5929
        %v5931 = vsel %vm5212, %v5930, %v5926
        %v5932 = vlaneseq
        %v5933 = vshrl.u32 %v5932, 7
        %v5934 = vsub.s32 %v5214, %v5933
        %v5935 = vrot.slane %v4680, %v5934
        %v5936 = vsel %vm5219, %v5935, %v5931
        %v5937 = vlaneseq
        %v5938 = vshrl.u32 %v5937, 7
        %v5939 = vsub.s32 %v5221, %v5938
        %v5940 = vrot.slane %v4681, %v5939
        %v5941 = vsel %vm5226, %v5940, %v5936
        %v5942 = vlaneseq
        %v5943 = vshrl.u32 %v5942, 7
        %v5944 = vsub.s32 %v5228, %v5943
        %v5945 = vrot.slane %v4682, %v5944
        %v5946 = vsel %vm5233, %v5945, %v5941
        %v5947 = vlaneseq
        %v5948 = vshrl.u32 %v5947, 7
        %v5949 = vsub.s32 %v5235, %v5948
        %v5950 = vrot.slane %v4683, %v5949
        %v5951 = vsel %vm5240, %v5950, %v5946
        %v5952 = vlaneseq
        %v5953 = vshrl.u32 %v5952, 7
        %v5954 = vsub.s32 %v5242, %v5953
        %v5955 = vrot.slane %v4684, %v5954
        %v5956 = vsel %vm5247, %v5955, %v5951
        %v5957 = vlaneseq
        %v5958 = vshrl.u32 %v5957, 7
        %v5959 = vsub.s32 %v5139, %v5958
        %v5960 = vrot.slane %v4685, %v5959
        %v5961 = vlaneseq
        %v5962 = vshrl.u32 %v5961, 7
        %v5963 = vsub.s32 %v5144, %v5962
        %v5964 = vrot.slane %v4686, %v5963
        %v5965 = vsel %vm5149, %v5964, %v5960
        %v5966 = vlaneseq
        %v5967 = vshrl.u32 %v5966, 7
        %v5968 = vsub.s32 %v5151, %v5967
        %v5969 = vrot.slane %v4687, %v5968
        %v5970 = vsel %vm5156, %v5969, %v5965
        %v5971 = vlaneseq
        %v5972 = vshrl.u32 %v5971, 7
        %v5973 = vsub.s32 %v5158, %v5972
        %v5974 = vrot.slane %v4688, %v5973
        %v5975 = vsel %vm5163, %v5974, %v5970
        %v5976 = vlaneseq
        %v5977 = vshrl.u32 %v5976, 7
        %v5978 = vsub.s32 %v5165, %v5977
        %v5979 = vrot.slane %v4689, %v5978
        %v5980 = vsel %vm5170, %v5979, %v5975
        %v5981 = vlaneseq
        %v5982 = vshrl.u32 %v5981, 7
        %v5983 = vsub.s32 %v5172, %v5982
        %v5984 = vrot.slane %v4690, %v5983
        %v5985 = vsel %vm5177, %v5984, %v5980
        %v5986 = vlaneseq
        %v5987 = vshrl.u32 %v5986, 7
        %v5988 = vsub.s32 %v5179, %v5987
        %v5989 = vrot.slane %v4691, %v5988
        %v5990 = vsel %vm5184, %v5989, %v5985
        %v5991 = vlaneseq
        %v5992 = vshrl.u32 %v5991, 7
        %v5993 = vsub.s32 %v5186, %v5992
        %v5994 = vrot.slane %v4692, %v5993
        %v5995 = vsel %vm5191, %v5994, %v5990
        %v5996 = vlaneseq
        %v5997 = vshrl.u32 %v5996, 7
        %v5998 = vsub.s32 %v5193, %v5997
        %v5999 = vrot.slane %v4693, %v5998
        %v6000 = vsel %vm5198, %v5999, %v5995
        %v6001 = vlaneseq
        %v6002 = vshrl.u32 %v6001, 7
        %v6003 = vsub.s32 %v5200, %v6002
        %v6004 = vrot.slane %v4694, %v6003
        %v6005 = vsel %vm5205, %v6004, %v6000
        %v6006 = vlaneseq
        %v6007 = vshrl.u32 %v6006, 7
        %v6008 = vsub.s32 %v5207, %v6007
        %v6009 = vrot.slane %v4695, %v6008
        %v6010 = vsel %vm5212, %v6009, %v6005
        %v6011 = vlaneseq
        %v6012 = vshrl.u32 %v6011, 7
        %v6013 = vsub.s32 %v5214, %v6012
        %v6014 = vrot.slane %v4696, %v6013
        %v6015 = vsel %vm5219, %v6014, %v6010
        %v6016 = vlaneseq
        %v6017 = vshrl.u32 %v6016, 7
        %v6018 = vsub.s32 %v5221, %v6017
        %v6019 = vrot.slane %v4697, %v6018
        %v6020 = vsel %vm5226, %v6019, %v6015
        %v6021 = vlaneseq
        %v6022 = vshrl.u32 %v6021, 7
        %v6023 = vsub.s32 %v5228, %v6022
        %v6024 = vrot.slane %v4698, %v6023
        %v6025 = vsel %vm5233, %v6024, %v6020
        %v6026 = vlaneseq
        %v6027 = vshrl.u32 %v6026, 7
        %v6028 = vsub.s32 %v5235, %v6027
        %v6029 = vrot.slane %v4699, %v6028
        %v6030 = vsel %vm5240, %v6029, %v6025
        %v6031 = vlaneseq
        %v6032 = vshrl.u32 %v6031, 7
        %v6033 = vsub.s32 %v5242, %v6032
        %v6034 = vrot.slane %v4700, %v6033
        %v6035 = vsel %vm5247, %v6034, %v6030
        %v6036 = vlaneseq
        %v6037 = vshrl.u32 %v6036, 7
        %v6038 = vsub.s32 %v5139, %v6037
        %v6039 = vrot.slane %v4701, %v6038
        %v6040 = vlaneseq
        %v6041 = vshrl.u32 %v6040, 7
        %v6042 = vsub.s32 %v5144, %v6041
        %v6043 = vrot.slane %v4702, %v6042
        %v6044 = vsel %vm5149, %v6043, %v6039
        %v6045 = vlaneseq
        %v6046 = vshrl.u32 %v6045, 7
        %v6047 = vsub.s32 %v5151, %v6046
        %v6048 = vrot.slane %v4703, %v6047
        %v6049 = vsel %vm5156, %v6048, %v6044
        %v6050 = vlaneseq
        %v6051 = vshrl.u32 %v6050, 7
        %v6052 = vsub.s32 %v5158, %v6051
        %v6053 = vrot.slane %v4704, %v6052
        %v6054 = vsel %vm5163, %v6053, %v6049
        %v6055 = vlaneseq
        %v6056 = vshrl.u32 %v6055, 7
        %v6057 = vsub.s32 %v5139, %v6056
        %v6058 = vrot.slane %v4705, %v6057
        %v6059 = vlaneseq
        %v6060 = vshrl.u32 %v6059, 7
        %v6061 = vsub.s32 %v5144, %v6060
        %v6062 = vrot.slane %v4706, %v6061
        %v6063 = vsel %vm5149, %v6062, %v6058
        %v6064 = vlaneseq
        %v6065 = vshrl.u32 %v6064, 7
        %v6066 = vsub.s32 %v5151, %v6065
        %v6067 = vrot.slane %v4707, %v6066
        %v6068 = vsel %vm5156, %v6067, %v6063
        %v6069 = vlaneseq
        %v6070 = vshrl.u32 %v6069, 7
        %v6071 = vsub.s32 %v5158, %v6070
        %v6072 = vrot.slane %v4708, %v6071
        %v6073 = vsel %vm5163, %v6072, %v6068
        %v6074 = vlaneseq
        %v6075 = vshrl.u32 %v6074, 7
        %v6076 = vsub.s32 %v5165, %v6075
        %v6077 = vrot.slane %v4709, %v6076
        %v6078 = vsel %vm5170, %v6077, %v6073
        %v6079 = vlaneseq
        %v6080 = vshrl.u32 %v6079, 7
        %v6081 = vsub.s32 %v5172, %v6080
        %v6082 = vrot.slane %v4710, %v6081
        %v6083 = vsel %vm5177, %v6082, %v6078
        %v6084 = vlaneseq
        %v6085 = vshrl.u32 %v6084, 7
        %v6086 = vsub.s32 %v5179, %v6085
        %v6087 = vrot.slane %v4711, %v6086
        %v6088 = vsel %vm5184, %v6087, %v6083
        %v6089 = vlaneseq
        %v6090 = vshrl.u32 %v6089, 7
        %v6091 = vsub.s32 %v5186, %v6090
        %v6092 = vrot.slane %v4712, %v6091
        %v6093 = vsel %vm5191, %v6092, %v6088
        %v6094 = vlaneseq
        %v6095 = vshrl.u32 %v6094, 7
        %v6096 = vsub.s32 %v5193, %v6095
        %v6097 = vrot.slane %v4713, %v6096
        %v6098 = vsel %vm5198, %v6097, %v6093
        %v6099 = vlaneseq
        %v6100 = vshrl.u32 %v6099, 7
        %v6101 = vsub.s32 %v5200, %v6100
        %v6102 = vrot.slane %v4714, %v6101
        %v6103 = vsel %vm5205, %v6102, %v6098
        %v6104 = vlaneseq
        %v6105 = vshrl.u32 %v6104, 7
        %v6106 = vsub.s32 %v5207, %v6105
        %v6107 = vrot.slane %v4715, %v6106
        %v6108 = vsel %vm5212, %v6107, %v6103
        %v6109 = vlaneseq
        %v6110 = vshrl.u32 %v6109, 7
        %v6111 = vsub.s32 %v5214, %v6110
        %v6112 = vrot.slane %v4716, %v6111
        %v6113 = vsel %vm5219, %v6112, %v6108
        %v6114 = vlaneseq
        %v6115 = vshrl.u32 %v6114, 7
        %v6116 = vsub.s32 %v5221, %v6115
        %v6117 = vrot.slane %v4717, %v6116
        %v6118 = vsel %vm5226, %v6117, %v6113
        %v6119 = vlaneseq
        %v6120 = vshrl.u32 %v6119, 7
        %v6121 = vsub.s32 %v5228, %v6120
        %v6122 = vrot.slane %v4718, %v6121
        %v6123 = vsel %vm5233, %v6122, %v6118
        %v6124 = vlaneseq
        %v6125 = vshrl.u32 %v6124, 7
        %v6126 = vsub.s32 %v5235, %v6125
        %v6127 = vrot.slane %v4719, %v6126
        %v6128 = vsel %vm5240, %v6127, %v6123
        %v6129 = vlaneseq
        %v6130 = vshrl.u32 %v6129, 7
        %v6131 = vsub.s32 %v5242, %v6130
        %v6132 = vrot.slane %v4720, %v6131
        %v6133 = vsel %vm5247, %v6132, %v6128
        %v6134 = vlaneseq
        %v6135 = vshrl.u32 %v6134, 7
        %v6136 = vsub.s32 %v5139, %v6135
        %v6137 = vrot.slane %v4721, %v6136
        %v6138 = vlaneseq
        %v6139 = vshrl.u32 %v6138, 7
        %v6140 = vsub.s32 %v5144, %v6139
        %v6141 = vrot.slane %v4722, %v6140
        %v6142 = vsel %vm5149, %v6141, %v6137
        %v6143 = vlaneseq
        %v6144 = vshrl.u32 %v6143, 7
        %v6145 = vsub.s32 %v5151, %v6144
        %v6146 = vrot.slane %v4723, %v6145
        %v6147 = vsel %vm5156, %v6146, %v6142
        %v6148 = vlaneseq
        %v6149 = vshrl.u32 %v6148, 7
        %v6150 = vsub.s32 %v5158, %v6149
        %v6151 = vrot.slane %v4724, %v6150
        %v6152 = vsel %vm5163, %v6151, %v6147
        %v6153 = vlaneseq
        %v6154 = vshrl.u32 %v6153, 7
        %v6155 = vsub.s32 %v5165, %v6154
        %v6156 = vrot.slane %v4725, %v6155
        %v6157 = vsel %vm5170, %v6156, %v6152
        %v6158 = vlaneseq
        %v6159 = vshrl.u32 %v6158, 7
        %v6160 = vsub.s32 %v5172, %v6159
        %v6161 = vrot.slane %v4726, %v6160
        %v6162 = vsel %vm5177, %v6161, %v6157
        %v6163 = vlaneseq
        %v6164 = vshrl.u32 %v6163, 7
        %v6165 = vsub.s32 %v5179, %v6164
        %v6166 = vrot.slane %v4727, %v6165
        %v6167 = vsel %vm5184, %v6166, %v6162
        %v6168 = vlaneseq
        %v6169 = vshrl.u32 %v6168, 7
        %v6170 = vsub.s32 %v5186, %v6169
        %v6171 = vrot.slane %v4728, %v6170
        %v6172 = vsel %vm5191, %v6171, %v6167
        %v6173 = vlaneseq
        %v6174 = vshrl.u32 %v6173, 7
        %v6175 = vsub.s32 %v5193, %v6174
        %v6176 = vrot.slane %v4729, %v6175
        %v6177 = vsel %vm5198, %v6176, %v6172
        %v6178 = vlaneseq
        %v6179 = vshrl.u32 %v6178, 7
        %v6180 = vsub.s32 %v5200, %v6179
        %v6181 = vrot.slane %v4730, %v6180
        %v6182 = vsel %vm5205, %v6181, %v6177
        %v6183 = vlaneseq
        %v6184 = vshrl.u32 %v6183, 7
        %v6185 = vsub.s32 %v5207, %v6184
        %v6186 = vrot.slane %v4731, %v6185
        %v6187 = vsel %vm5212, %v6186, %v6182
        %v6188 = vlaneseq
        %v6189 = vshrl.u32 %v6188, 7
        %v6190 = vsub.s32 %v5214, %v6189
        %v6191 = vrot.slane %v4732, %v6190
        %v6192 = vsel %vm5219, %v6191, %v6187
        %v6193 = vlaneseq
        %v6194 = vshrl.u32 %v6193, 7
        %v6195 = vsub.s32 %v5221, %v6194
        %v6196 = vrot.slane %v4733, %v6195
        %v6197 = vsel %vm5226, %v6196, %v6192
        %v6198 = vlaneseq
        %v6199 = vshrl.u32 %v6198, 7
        %v6200 = vsub.s32 %v5228, %v6199
        %v6201 = vrot.slane %v4734, %v6200
        %v6202 = vsel %vm5233, %v6201, %v6197
        %v6203 = vlaneseq
        %v6204 = vshrl.u32 %v6203, 7
        %v6205 = vsub.s32 %v5235, %v6204
        %v6206 = vrot.slane %v4735, %v6205
        %v6207 = vsel %vm5240, %v6206, %v6202
        %v6208 = vlaneseq
        %v6209 = vshrl.u32 %v6208, 7
        %v6210 = vsub.s32 %v5242, %v6209
        %v6211 = vrot.slane %v4736, %v6210
        %v6212 = vsel %vm5247, %v6211, %v6207
        %v6213 = vlaneseq
        %v6214 = vshrl.u32 %v6213, 7
        %v6215 = vsub.s32 %v5139, %v6214
        %v6216 = vrot.slane %v4737, %v6215
        %v6217 = vlaneseq
        %v6218 = vshrl.u32 %v6217, 7
        %v6219 = vsub.s32 %v5144, %v6218
        %v6220 = vrot.slane %v4738, %v6219
        %v6221 = vsel %vm5149, %v6220, %v6216
        %v6222 = vlaneseq
        %v6223 = vshrl.u32 %v6222, 7
        %v6224 = vsub.s32 %v5151, %v6223
        %v6225 = vrot.slane %v4739, %v6224
        %v6226 = vsel %vm5156, %v6225, %v6221
        %v6227 = vlaneseq
        %v6228 = vshrl.u32 %v6227, 7
        %v6229 = vsub.s32 %v5158, %v6228
        %v6230 = vrot.slane %v4740, %v6229
        %v6231 = vsel %vm5163, %v6230, %v6226
        %v6232 = vlaneseq
        %v6233 = vshrl.u32 %v6232, 7
        %v6234 = vsub.s32 %v5139, %v6233
        %v6235 = vrot.slane %v4741, %v6234
        %v6236 = vlaneseq
        %v6237 = vshrl.u32 %v6236, 7
        %v6238 = vsub.s32 %v5144, %v6237
        %v6239 = vrot.slane %v4742, %v6238
        %v6240 = vsel %vm5149, %v6239, %v6235
        %v6241 = vlaneseq
        %v6242 = vshrl.u32 %v6241, 7
        %v6243 = vsub.s32 %v5151, %v6242
        %v6244 = vrot.slane %v4743, %v6243
        %v6245 = vsel %vm5156, %v6244, %v6240
        %v6246 = vlaneseq
        %v6247 = vshrl.u32 %v6246, 7
        %v6248 = vsub.s32 %v5158, %v6247
        %v6249 = vrot.slane %v4744, %v6248
        %v6250 = vsel %vm5163, %v6249, %v6245
        %v6251 = vlaneseq
        %v6252 = vshrl.u32 %v6251, 7
        %v6253 = vsub.s32 %v5165, %v6252
        %v6254 = vrot.slane %v4745, %v6253
        %v6255 = vsel %vm5170, %v6254, %v6250
        %v6256 = vlaneseq
        %v6257 = vshrl.u32 %v6256, 7
        %v6258 = vsub.s32 %v5172, %v6257
        %v6259 = vrot.slane %v4746, %v6258
        %v6260 = vsel %vm5177, %v6259, %v6255
        %v6261 = vlaneseq
        %v6262 = vshrl.u32 %v6261, 7
        %v6263 = vsub.s32 %v5179, %v6262
        %v6264 = vrot.slane %v4747, %v6263
        %v6265 = vsel %vm5184, %v6264, %v6260
        %v6266 = vlaneseq
        %v6267 = vshrl.u32 %v6266, 7
        %v6268 = vsub.s32 %v5186, %v6267
        %v6269 = vrot.slane %v4748, %v6268
        %v6270 = vsel %vm5191, %v6269, %v6265
        %v6271 = vlaneseq
        %v6272 = vshrl.u32 %v6271, 7
        %v6273 = vsub.s32 %v5193, %v6272
        %v6274 = vrot.slane %v4749, %v6273
        %v6275 = vsel %vm5198, %v6274, %v6270
        %v6276 = vlaneseq
        %v6277 = vshrl.u32 %v6276, 7
        %v6278 = vsub.s32 %v5200, %v6277
        %v6279 = vrot.slane %v4750, %v6278
        %v6280 = vsel %vm5205, %v6279, %v6275
        %v6281 = vlaneseq
        %v6282 = vshrl.u32 %v6281, 7
        %v6283 = vsub.s32 %v5207, %v6282
        %v6284 = vrot.slane %v4751, %v6283
        %v6285 = vsel %vm5212, %v6284, %v6280
        %v6286 = vlaneseq
        %v6287 = vshrl.u32 %v6286, 7
        %v6288 = vsub.s32 %v5214, %v6287
        %v6289 = vrot.slane %v4752, %v6288
        %v6290 = vsel %vm5219, %v6289, %v6285
        %v6291 = vlaneseq
        %v6292 = vshrl.u32 %v6291, 7
        %v6293 = vsub.s32 %v5221, %v6292
        %v6294 = vrot.slane %v4753, %v6293
        %v6295 = vsel %vm5226, %v6294, %v6290
        %v6296 = vlaneseq
        %v6297 = vshrl.u32 %v6296, 7
        %v6298 = vsub.s32 %v5228, %v6297
        %v6299 = vrot.slane %v4754, %v6298
        %v6300 = vsel %vm5233, %v6299, %v6295
        %v6301 = vlaneseq
        %v6302 = vshrl.u32 %v6301, 7
        %v6303 = vsub.s32 %v5235, %v6302
        %v6304 = vrot.slane %v4755, %v6303
        %v6305 = vsel %vm5240, %v6304, %v6300
        %v6306 = vlaneseq
        %v6307 = vshrl.u32 %v6306, 7
        %v6308 = vsub.s32 %v5242, %v6307
        %v6309 = vrot.slane %v4756, %v6308
        %v6310 = vsel %vm5247, %v6309, %v6305
        %v6311 = vlaneseq
        %v6312 = vshrl.u32 %v6311, 7
        %v6313 = vsub.s32 %v5139, %v6312
        %v6314 = vrot.slane %v4757, %v6313
        %v6315 = vlaneseq
        %v6316 = vshrl.u32 %v6315, 7
        %v6317 = vsub.s32 %v5144, %v6316
        %v6318 = vrot.slane %v4758, %v6317
        %v6319 = vsel %vm5149, %v6318, %v6314
        %v6320 = vlaneseq
        %v6321 = vshrl.u32 %v6320, 7
        %v6322 = vsub.s32 %v5151, %v6321
        %v6323 = vrot.slane %v4759, %v6322
        %v6324 = vsel %vm5156, %v6323, %v6319
        %v6325 = vlaneseq
        %v6326 = vshrl.u32 %v6325, 7
        %v6327 = vsub.s32 %v5158, %v6326
        %v6328 = vrot.slane %v4760, %v6327
        %v6329 = vsel %vm5163, %v6328, %v6324
        %v6330 = vlaneseq
        %v6331 = vshrl.u32 %v6330, 7
        %v6332 = vsub.s32 %v5165, %v6331
        %v6333 = vrot.slane %v4761, %v6332
        %v6334 = vsel %vm5170, %v6333, %v6329
        %v6335 = vlaneseq
        %v6336 = vshrl.u32 %v6335, 7
        %v6337 = vsub.s32 %v5172, %v6336
        %v6338 = vrot.slane %v4762, %v6337
        %v6339 = vsel %vm5177, %v6338, %v6334
        %v6340 = vlaneseq
        %v6341 = vshrl.u32 %v6340, 7
        %v6342 = vsub.s32 %v5179, %v6341
        %v6343 = vrot.slane %v4763, %v6342
        %v6344 = vsel %vm5184, %v6343, %v6339
        %v6345 = vlaneseq
        %v6346 = vshrl.u32 %v6345, 7
        %v6347 = vsub.s32 %v5186, %v6346
        %v6348 = vrot.slane %v4764, %v6347
        %v6349 = vsel %vm5191, %v6348, %v6344
        %v6350 = vlaneseq
        %v6351 = vshrl.u32 %v6350, 7
        %v6352 = vsub.s32 %v5193, %v6351
        %v6353 = vrot.slane %v4765, %v6352
        %v6354 = vsel %vm5198, %v6353, %v6349
        %v6355 = vlaneseq
        %v6356 = vshrl.u32 %v6355, 7
        %v6357 = vsub.s32 %v5200, %v6356
        %v6358 = vrot.slane %v4766, %v6357
        %v6359 = vsel %vm5205, %v6358, %v6354
        %v6360 = vlaneseq
        %v6361 = vshrl.u32 %v6360, 7
        %v6362 = vsub.s32 %v5207, %v6361
        %v6363 = vrot.slane %v4767, %v6362
        %v6364 = vsel %vm5212, %v6363, %v6359
        %v6365 = vlaneseq
        %v6366 = vshrl.u32 %v6365, 7
        %v6367 = vsub.s32 %v5214, %v6366
        %v6368 = vrot.slane %v4768, %v6367
        %v6369 = vsel %vm5219, %v6368, %v6364
        %v6370 = vlaneseq
        %v6371 = vshrl.u32 %v6370, 7
        %v6372 = vsub.s32 %v5221, %v6371
        %v6373 = vrot.slane %v4769, %v6372
        %v6374 = vsel %vm5226, %v6373, %v6369
        %v6375 = vlaneseq
        %v6376 = vshrl.u32 %v6375, 7
        %v6377 = vsub.s32 %v5228, %v6376
        %v6378 = vrot.slane %v4770, %v6377
        %v6379 = vsel %vm5233, %v6378, %v6374
        %v6380 = vlaneseq
        %v6381 = vshrl.u32 %v6380, 7
        %v6382 = vsub.s32 %v5235, %v6381
        %v6383 = vrot.slane %v4771, %v6382
        %v6384 = vsel %vm5240, %v6383, %v6379
        %v6385 = vlaneseq
        %v6386 = vshrl.u32 %v6385, 7
        %v6387 = vsub.s32 %v5242, %v6386
        %v6388 = vrot.slane %v4772, %v6387
        %v6389 = vsel %vm5247, %v6388, %v6384
        %v6390 = vlaneseq
        %v6391 = vshrl.u32 %v6390, 7
        %v6392 = vsub.s32 %v5139, %v6391
        %v6393 = vrot.slane %v4773, %v6392
        %v6394 = vlaneseq
        %v6395 = vshrl.u32 %v6394, 7
        %v6396 = vsub.s32 %v5144, %v6395
        %v6397 = vrot.slane %v4774, %v6396
        %v6398 = vsel %vm5149, %v6397, %v6393
        %v6399 = vlaneseq
        %v6400 = vshrl.u32 %v6399, 7
        %v6401 = vsub.s32 %v5151, %v6400
        %v6402 = vrot.slane %v4775, %v6401
        %v6403 = vsel %vm5156, %v6402, %v6398
        %v6404 = vlaneseq
        %v6405 = vshrl.u32 %v6404, 7
        %v6406 = vsub.s32 %v5158, %v6405
        %v6407 = vrot.slane %v4776, %v6406
        %v6408 = vsel %vm5163, %v6407, %v6403
        %v6409 = vlaneseq
        %v6410 = vshrl.u32 %v6409, 7
        %v6411 = vsub.s32 %v5139, %v6410
        %v6412 = vrot.slane %v4777, %v6411
        %v6413 = vlaneseq
        %v6414 = vshrl.u32 %v6413, 7
        %v6415 = vsub.s32 %v5144, %v6414
        %v6416 = vrot.slane %v4778, %v6415
        %v6417 = vsel %vm5149, %v6416, %v6412
        %v6418 = vlaneseq
        %v6419 = vshrl.u32 %v6418, 7
        %v6420 = vsub.s32 %v5151, %v6419
        %v6421 = vrot.slane %v4779, %v6420
        %v6422 = vsel %vm5156, %v6421, %v6417
        %v6423 = vlaneseq
        %v6424 = vshrl.u32 %v6423, 7
        %v6425 = vsub.s32 %v5158, %v6424
        %v6426 = vrot.slane %v4780, %v6425
        %v6427 = vsel %vm5163, %v6426, %v6422
        %v6428 = vlaneseq
        %v6429 = vshrl.u32 %v6428, 7
        %v6430 = vsub.s32 %v5165, %v6429
        %v6431 = vrot.slane %v4781, %v6430
        %v6432 = vsel %vm5170, %v6431, %v6427
        %v6433 = vlaneseq
        %v6434 = vshrl.u32 %v6433, 7
        %v6435 = vsub.s32 %v5172, %v6434
        %v6436 = vrot.slane %v4782, %v6435
        %v6437 = vsel %vm5177, %v6436, %v6432
        %v6438 = vlaneseq
        %v6439 = vshrl.u32 %v6438, 7
        %v6440 = vsub.s32 %v5179, %v6439
        %v6441 = vrot.slane %v4783, %v6440
        %v6442 = vsel %vm5184, %v6441, %v6437
        %v6443 = vlaneseq
        %v6444 = vshrl.u32 %v6443, 7
        %v6445 = vsub.s32 %v5186, %v6444
        %v6446 = vrot.slane %v4784, %v6445
        %v6447 = vsel %vm5191, %v6446, %v6442
        %v6448 = vlaneseq
        %v6449 = vshrl.u32 %v6448, 7
        %v6450 = vsub.s32 %v5193, %v6449
        %v6451 = vrot.slane %v4785, %v6450
        %v6452 = vsel %vm5198, %v6451, %v6447
        %v6453 = vlaneseq
        %v6454 = vshrl.u32 %v6453, 7
        %v6455 = vsub.s32 %v5200, %v6454
        %v6456 = vrot.slane %v4786, %v6455
        %v6457 = vsel %vm5205, %v6456, %v6452
        %v6458 = vlaneseq
        %v6459 = vshrl.u32 %v6458, 7
        %v6460 = vsub.s32 %v5207, %v6459
        %v6461 = vrot.slane %v4787, %v6460
        %v6462 = vsel %vm5212, %v6461, %v6457
        %v6463 = vlaneseq
        %v6464 = vshrl.u32 %v6463, 7
        %v6465 = vsub.s32 %v5214, %v6464
        %v6466 = vrot.slane %v4788, %v6465
        %v6467 = vsel %vm5219, %v6466, %v6462
        %v6468 = vlaneseq
        %v6469 = vshrl.u32 %v6468, 7
        %v6470 = vsub.s32 %v5221, %v6469
        %v6471 = vrot.slane %v4789, %v6470
        %v6472 = vsel %vm5226, %v6471, %v6467
        %v6473 = vlaneseq
        %v6474 = vshrl.u32 %v6473, 7
        %v6475 = vsub.s32 %v5228, %v6474
        %v6476 = vrot.slane %v4790, %v6475
        %v6477 = vsel %vm5233, %v6476, %v6472
        %v6478 = vlaneseq
        %v6479 = vshrl.u32 %v6478, 7
        %v6480 = vsub.s32 %v5235, %v6479
        %v6481 = vrot.slane %v4791, %v6480
        %v6482 = vsel %vm5240, %v6481, %v6477
        %v6483 = vlaneseq
        %v6484 = vshrl.u32 %v6483, 7
        %v6485 = vsub.s32 %v5242, %v6484
        %v6486 = vrot.slane %v4792, %v6485
        %v6487 = vsel %vm5247, %v6486, %v6482
        %v6488 = vlaneseq
        %v6489 = vshrl.u32 %v6488, 7
        %v6490 = vsub.s32 %v5139, %v6489
        %v6491 = vrot.slane %v4793, %v6490
        %v6492 = vlaneseq
        %v6493 = vshrl.u32 %v6492, 7
        %v6494 = vsub.s32 %v5144, %v6493
        %v6495 = vrot.slane %v4794, %v6494
        %v6496 = vsel %vm5149, %v6495, %v6491
        %v6497 = vlaneseq
        %v6498 = vshrl.u32 %v6497, 7
        %v6499 = vsub.s32 %v5151, %v6498
        %v6500 = vrot.slane %v4795, %v6499
        %v6501 = vsel %vm5156, %v6500, %v6496
        %v6502 = vlaneseq
        %v6503 = vshrl.u32 %v6502, 7
        %v6504 = vsub.s32 %v5158, %v6503
        %v6505 = vrot.slane %v4796, %v6504
        %v6506 = vsel %vm5163, %v6505, %v6501
        %v6507 = vlaneseq
        %v6508 = vshrl.u32 %v6507, 7
        %v6509 = vsub.s32 %v5165, %v6508
        %v6510 = vrot.slane %v4797, %v6509
        %v6511 = vsel %vm5170, %v6510, %v6506
        %v6512 = vlaneseq
        %v6513 = vshrl.u32 %v6512, 7
        %v6514 = vsub.s32 %v5172, %v6513
        %v6515 = vrot.slane %v4798, %v6514
        %v6516 = vsel %vm5177, %v6515, %v6511
        %v6517 = vlaneseq
        %v6518 = vshrl.u32 %v6517, 7
        %v6519 = vsub.s32 %v5179, %v6518
        %v6520 = vrot.slane %v4799, %v6519
        %v6521 = vsel %vm5184, %v6520, %v6516
        %v6522 = vlaneseq
        %v6523 = vshrl.u32 %v6522, 7
        %v6524 = vsub.s32 %v5186, %v6523
        %v6525 = vrot.slane %v4800, %v6524
        %v6526 = vsel %vm5191, %v6525, %v6521
        %v6527 = vlaneseq
        %v6528 = vshrl.u32 %v6527, 7
        %v6529 = vsub.s32 %v5193, %v6528
        %v6530 = vrot.slane %v4801, %v6529
        %v6531 = vsel %vm5198, %v6530, %v6526
        %v6532 = vlaneseq
        %v6533 = vshrl.u32 %v6532, 7
        %v6534 = vsub.s32 %v5200, %v6533
        %v6535 = vrot.slane %v4802, %v6534
        %v6536 = vsel %vm5205, %v6535, %v6531
        %v6537 = vlaneseq
        %v6538 = vshrl.u32 %v6537, 7
        %v6539 = vsub.s32 %v5207, %v6538
        %v6540 = vrot.slane %v4803, %v6539
        %v6541 = vsel %vm5212, %v6540, %v6536
        %v6542 = vlaneseq
        %v6543 = vshrl.u32 %v6542, 7
        %v6544 = vsub.s32 %v5214, %v6543
        %v6545 = vrot.slane %v4804, %v6544
        %v6546 = vsel %vm5219, %v6545, %v6541
        %v6547 = vlaneseq
        %v6548 = vshrl.u32 %v6547, 7
        %v6549 = vsub.s32 %v5221, %v6548
        %v6550 = vrot.slane %v4805, %v6549
        %v6551 = vsel %vm5226, %v6550, %v6546
        %v6552 = vlaneseq
        %v6553 = vshrl.u32 %v6552, 7
        %v6554 = vsub.s32 %v5228, %v6553
        %v6555 = vrot.slane %v4806, %v6554
        %v6556 = vsel %vm5233, %v6555, %v6551
        %v6557 = vlaneseq
        %v6558 = vshrl.u32 %v6557, 7
        %v6559 = vsub.s32 %v5235, %v6558
        %v6560 = vrot.slane %v4807, %v6559
        %v6561 = vsel %vm5240, %v6560, %v6556
        %v6562 = vlaneseq
        %v6563 = vshrl.u32 %v6562, 7
        %v6564 = vsub.s32 %v5242, %v6563
        %v6565 = vrot.slane %v4808, %v6564
        %v6566 = vsel %vm5247, %v6565, %v6561
        %v6567 = vlaneseq
        %v6568 = vshrl.u32 %v6567, 7
        %v6569 = vsub.s32 %v5139, %v6568
        %v6570 = vrot.slane %v4809, %v6569
        %v6571 = vlaneseq
        %v6572 = vshrl.u32 %v6571, 7
        %v6573 = vsub.s32 %v5144, %v6572
        %v6574 = vrot.slane %v4810, %v6573
        %v6575 = vsel %vm5149, %v6574, %v6570
        %v6576 = vlaneseq
        %v6577 = vshrl.u32 %v6576, 7
        %v6578 = vsub.s32 %v5151, %v6577
        %v6579 = vrot.slane %v4811, %v6578
        %v6580 = vsel %vm5156, %v6579, %v6575
        %v6581 = vlaneseq
        %v6582 = vshrl.u32 %v6581, 7
        %v6583 = vsub.s32 %v5158, %v6582
        %v6584 = vrot.slane %v4812, %v6583
        %v6585 = vsel %vm5163, %v6584, %v6580
        %v6586 = vsel %vm1233, %v5425, %v5248
        %v6587 = vsel %vm1235, %v5602, %v6586
        %v6588 = vsel %vm1237, %v5779, %v6587
        %v6589 = vsel %vm1239, %v5956, %v6588
        %v6590 = vsel %vm1241, %v6133, %v6589
        %v6591 = vsel %vm1243, %v6310, %v6590
        %v6592 = vsel %vm1245, %v6487, %v6591
        %v6593 = vsel %vm1233, %v5504, %v5327
        %v6594 = vsel %vm1235, %v5681, %v6593
        %v6595 = vsel %vm1237, %v5858, %v6594
        %v6596 = vsel %vm1239, %v6035, %v6595
        %v6597 = vsel %vm1241, %v6212, %v6596
        %v6598 = vsel %vm1243, %v6389, %v6597
        %v6599 = vsel %vm1245, %v6566, %v6598
        %v6600 = vsel %vm1233, %v5523, %v5346
        %v6601 = vsel %vm1235, %v5700, %v6600
        %v6602 = vsel %vm1237, %v5877, %v6601
        %v6603 = vsel %vm1239, %v6054, %v6602
        %v6604 = vsel %vm1241, %v6231, %v6603
        %v6605 = vsel %vm1243, %v6408, %v6604
        %v6606 = vsel %vm1245, %v6585, %v6605
        %vm6609 = vcmask 261120
        %v6610 = vsel %vm6609, %v6606, 0
        %6612 = vmatprep.subr.mxu0 0.0
        %6613 = vmatpush1.msra.mxu0 %v4814
        %6614 = vmatprep.subr.mxu0 0.0
        %6615 = vmatpush1.msra.mxu0 %v4815
        %6616 = vmatprep.subr.mxu0 0.0
        %6617 = vmatpush1.msra.mxu0 %v4816
        %6618 = vmatprep.subr.mxu0 0.0
        %6619 = vmatpush1.msra.mxu0 %v4817
        %6620 = vmatprep.subr.mxu0 0.0
        %6621 = vmatpush1.msra.mxu0 %v4818
        %6622 = vmatprep.subr.mxu0 0.0
        %6623 = vmatpush1.msra.mxu0 %v4819
        %6624 = vmatprep.subr.mxu0 0.0
        %6625 = vmatpush1.msra.mxu0 %v4820
        %6626 = vmatprep.subr.mxu0 0.0
        %6627 = vmatpush1.msra.mxu0 %v4821
        %6628 = vmatprep.subr.mxu0 0.0
        %6629 = vmatpush1.msra.mxu0 %v4822
        %6630 = vmatprep.subr.mxu0 0.0
        %6631 = vmatpush1.msra.mxu0 %v4823
        %6632 = vmatprep.subr.mxu0 0.0
        %6633 = vmatpush1.msra.mxu0 %v4824
        %6634 = vmatprep.subr.mxu0 0.0
        %6635 = vmatpush1.msra.mxu0 %v4825
        %6636 = vmatprep.subr.mxu0 0.0
        %6637 = vmatpush1.msra.mxu0 %v4826
        %6638 = vmatprep.subr.mxu0 0.0
        %6639 = vmatpush1.msra.mxu0 %v4827
        %6640 = vmatprep.subr.mxu0 0.0
        %6641 = vmatpush1.msra.mxu0 %v4828
        %6642 = vmatprep.subr.mxu0 0.0
        %6643 = vmatpush1.msra.mxu0 %v4829
        %6644 = vmatprep.subr.mxu0 0.0
        %6645 = vmatpush1.msra.mxu0 %v4830
        %6646 = vmatprep.subr.mxu0 0.0
        %6647 = vmatpush1.msra.mxu0 %v4831
        %6648 = vmatprep.subr.mxu0 0.0
        %6649 = vmatpush1.msra.mxu0 %v4832
        %6650 = vmatprep.subr.mxu0 0.0
        %6651 = vmatpush1.msra.mxu0 %v4833
        %6652 = vmatprep.subr.mxu0 0.0
        %6653 = vmatpush1.msra.mxu0 %v4834
        %6654 = vmatprep.subr.mxu0 0.0
        %6655 = vmatpush1.msra.mxu0 %v4835
        %6656 = vmatprep.subr.mxu0 0.0
        %6657 = vmatpush1.msra.mxu0 %v4836
        %6658 = vmatprep.subr.mxu0 0.0
        %6659 = vmatpush1.msra.mxu0 %v4837
        %6660 = vmatprep.subr.mxu0 0.0
        %6661 = vmatpush1.msra.mxu0 %v4838
        %6662 = vmatprep.subr.mxu0 0.0
        %6663 = vmatpush1.msra.mxu0 %v4839
        %6664 = vmatprep.subr.mxu0 0.0
        %6665 = vmatpush1.msra.mxu0 %v4840
        %6666 = vmatprep.subr.mxu0 0.0
        %6667 = vmatpush1.msra.mxu0 %v4841
        %6668 = vmatprep.subr.mxu0 0.0
        %6669 = vmatpush1.msra.mxu0 %v4842
        %6670 = vmatprep.subr.mxu0 0.0
        %6671 = vmatpush1.msra.mxu0 %v4843
        %6672 = vmatprep.subr.mxu0 0.0
        %6673 = vmatpush1.msra.mxu0 %v4844
        %6674 = vmatprep.subr.mxu0 0.0
        %6675 = vmatpush1.msra.mxu0 %v4845
        %6676 = vmatprep.mubr.f32.mxu0 %v6599
        %6677 = vmatmul.mubr.f32.gmra.mrb[0].mxu0 %v6592
        %v6678 = vpop.f32.mrb[0].mxu0
        %v6679 = vadd.f32 0.0, %v6678
        %v6680 = vpop.f32.mrb[0].mxu0
        %6681 = vdwg.mxu0
        %6682 = vmatprep.subr.mxu0 0.0
        %6683 = vmatpush1.msra.mxu0 %v4846
        %6684 = vmatprep.subr.mxu0 0.0
        %6685 = vmatpush1.msra.mxu0 %v4847
        %6686 = vmatprep.subr.mxu0 0.0
        %6687 = vmatpush1.msra.mxu0 %v4848
        %6688 = vmatprep.subr.mxu0 0.0
        %6689 = vmatpush1.msra.mxu0 %v4849
        %6690 = vmatprep.subr.mxu0 0.0
        %6691 = vmatpush1.msra.mxu0 0.0
        %6692 = vmatprep.subr.mxu0 0.0
        %6693 = vmatpush1.msra.mxu0 0.0
        %6694 = vmatprep.subr.mxu0 0.0
        %6695 = vmatpush1.msra.mxu0 0.0
        %6696 = vmatprep.subr.mxu0 0.0
        %6697 = vmatpush1.msra.mxu0 0.0
        %6698 = vmatprep.subr.mxu0 0.0
        %6699 = vmatpush1.msra.mxu0 0.0
        %6700 = vmatprep.subr.mxu0 0.0
        %6701 = vmatpush1.msra.mxu0 0.0
        %6702 = vmatprep.subr.mxu0 0.0
        %6703 = vmatpush1.msra.mxu0 0.0
        %6704 = vmatprep.subr.mxu0 0.0
        %6705 = vmatpush1.msra.mxu0 0.0
        %6706 = vmatprep.subr.mxu0 0.0
        %6707 = vmatpush1.msra.mxu0 0.0
        %6708 = vmatprep.subr.mxu0 0.0
        %6709 = vmatpush1.msra.mxu0 0.0
        %6710 = vmatprep.subr.mxu0 0.0
        %6711 = vmatpush1.msra.mxu0 0.0
        %6712 = vmatprep.subr.mxu0 0.0
        %6713 = vmatpush1.msra.mxu0 0.0
        %6714 = vmatprep.subr.mxu0 0.0
        %6715 = vmatpush1.msra.mxu0 0.0
        %6716 = vmatprep.subr.mxu0 0.0
        %6717 = vmatpush1.msra.mxu0 0.0
        %6718 = vmatprep.subr.mxu0 0.0
        %6719 = vmatpush1.msra.mxu0 0.0
        %6720 = vmatprep.subr.mxu0 0.0
        %6721 = vmatpush1.msra.mxu0 0.0
        %6722 = vmatprep.subr.mxu0 0.0
        %6723 = vmatpush1.msra.mxu0 0.0
        %6724 = vmatprep.subr.mxu0 0.0
        %6725 = vmatpush1.msra.mxu0 0.0
        %6726 = vmatprep.subr.mxu0 0.0
        %6727 = vmatpush1.msra.mxu0 0.0
        %6728 = vmatprep.subr.mxu0 0.0
        %6729 = vmatpush1.msra.mxu0 0.0
        %6730 = vmatprep.subr.mxu0 0.0
        %6731 = vmatpush1.msra.mxu0 0.0
        %6732 = vmatprep.subr.mxu0 0.0
        %6733 = vmatpush1.msra.mxu0 0.0
        %6734 = vmatprep.subr.mxu0 0.0
        %6735 = vmatpush1.msra.mxu0 0.0
        %6736 = vmatprep.subr.mxu0 0.0
        %6737 = vmatpush1.msra.mxu0 0.0
        %6738 = vmatprep.subr.mxu0 0.0
        %6739 = vmatpush1.msra.mxu0 0.0
        %6740 = vmatprep.subr.mxu0 0.0
        %6741 = vmatpush1.msra.mxu0 0.0
        %6742 = vmatprep.subr.mxu0 0.0
        %6743 = vmatpush1.msra.mxu0 0.0
        %6744 = vmatprep.subr.mxu0 0.0
        %6745 = vmatpush1.msra.mxu0 0.0
        %6746 = vmatprep.mubr.f32.mxu0 0.0
        %6747 = vmatmul.mubr.f32.gmra.mrb[0].mxu0 %v6610
        %v6748 = vpop.f32.mrb[0].mxu0
        %v6749 = vadd.f32 %v6679, %v6748
        %v6750 = vpop.f32.mrb[0].mxu0
        %6751 = vdwg.mxu0
        %v7040 = vlaneseq
        %v7041 = vshrl.u32 %v7040, 7
        %v7042 = vsub.s32 %v5139, %v7041
        %v7043 = vrot.slane %v2185, %v7042
        %v7044 = vlaneseq
        %v7045 = vshrl.u32 %v7044, 7
        %v7046 = vsub.s32 %v5144, %v7045
        %v7047 = vrot.slane %v2186, %v7046
        %v7048 = vsel %vm5149, %v7047, %v7043
        %v7049 = vlaneseq
        %v7050 = vshrl.u32 %v7049, 7
        %v7051 = vsub.s32 %v5151, %v7050
        %v7052 = vrot.slane %v2187, %v7051
        %v7053 = vsel %vm5156, %v7052, %v7048
        %v7054 = vlaneseq
        %v7055 = vshrl.u32 %v7054, 7
        %v7056 = vsub.s32 %v5158, %v7055
        %v7057 = vrot.slane %v2188, %v7056
        %v7058 = vsel %vm5163, %v7057, %v7053
        %v7059 = vlaneseq
        %v7060 = vshrl.u32 %v7059, 7
        %v7061 = vsub.s32 %v5165, %v7060
        %v7062 = vrot.slane %v2189, %v7061
        %v7063 = vsel %vm5170, %v7062, %v7058
        %v7064 = vlaneseq
        %v7065 = vshrl.u32 %v7064, 7
        %v7066 = vsub.s32 %v5172, %v7065
        %v7067 = vrot.slane %v2190, %v7066
        %v7068 = vsel %vm5177, %v7067, %v7063
        %v7069 = vlaneseq
        %v7070 = vshrl.u32 %v7069, 7
        %v7071 = vsub.s32 %v5179, %v7070
        %v7072 = vrot.slane %v2191, %v7071
        %v7073 = vsel %vm5184, %v7072, %v7068
        %v7074 = vlaneseq
        %v7075 = vshrl.u32 %v7074, 7
        %v7076 = vsub.s32 %v5186, %v7075
        %v7077 = vrot.slane %v2192, %v7076
        %v7078 = vsel %vm5191, %v7077, %v7073
        %v7079 = vlaneseq
        %v7080 = vshrl.u32 %v7079, 7
        %v7081 = vsub.s32 %v5193, %v7080
        %v7082 = vrot.slane %v2193, %v7081
        %v7083 = vsel %vm5198, %v7082, %v7078
        %v7084 = vlaneseq
        %v7085 = vshrl.u32 %v7084, 7
        %v7086 = vsub.s32 %v5200, %v7085
        %v7087 = vrot.slane %v2194, %v7086
        %v7088 = vsel %vm5205, %v7087, %v7083
        %v7089 = vlaneseq
        %v7090 = vshrl.u32 %v7089, 7
        %v7091 = vsub.s32 %v5207, %v7090
        %v7092 = vrot.slane %v2195, %v7091
        %v7093 = vsel %vm5212, %v7092, %v7088
        %v7094 = vlaneseq
        %v7095 = vshrl.u32 %v7094, 7
        %v7096 = vsub.s32 %v5214, %v7095
        %v7097 = vrot.slane %v2196, %v7096
        %v7098 = vsel %vm5219, %v7097, %v7093
        %v7099 = vlaneseq
        %v7100 = vshrl.u32 %v7099, 7
        %v7101 = vsub.s32 %v5221, %v7100
        %v7102 = vrot.slane %v2197, %v7101
        %v7103 = vsel %vm5226, %v7102, %v7098
        %v7104 = vlaneseq
        %v7105 = vshrl.u32 %v7104, 7
        %v7106 = vsub.s32 %v5228, %v7105
        %v7107 = vrot.slane %v2198, %v7106
        %v7108 = vsel %vm5233, %v7107, %v7103
        %v7109 = vlaneseq
        %v7110 = vshrl.u32 %v7109, 7
        %v7111 = vsub.s32 %v5235, %v7110
        %v7112 = vrot.slane %v2199, %v7111
        %v7113 = vsel %vm5240, %v7112, %v7108
        %v7114 = vlaneseq
        %v7115 = vshrl.u32 %v7114, 7
        %v7116 = vsub.s32 %v5242, %v7115
        %v7117 = vrot.slane %v2200, %v7116
        %v7118 = vsel %vm5247, %v7117, %v7113
        %v7119 = vlaneseq
        %v7120 = vshrl.u32 %v7119, 7
        %v7121 = vsub.s32 %v5139, %v7120
        %v7122 = vrot.slane %v2201, %v7121
        %v7123 = vlaneseq
        %v7124 = vshrl.u32 %v7123, 7
        %v7125 = vsub.s32 %v5144, %v7124
        %v7126 = vrot.slane %v2202, %v7125
        %v7127 = vsel %vm5149, %v7126, %v7122
        %v7128 = vlaneseq
        %v7129 = vshrl.u32 %v7128, 7
        %v7130 = vsub.s32 %v5151, %v7129
        %v7131 = vrot.slane %v2203, %v7130
        %v7132 = vsel %vm5156, %v7131, %v7127
        %v7133 = vlaneseq
        %v7134 = vshrl.u32 %v7133, 7
        %v7135 = vsub.s32 %v5158, %v7134
        %v7136 = vrot.slane %v2204, %v7135
        %v7137 = vsel %vm5163, %v7136, %v7132
        %v7138 = vlaneseq
        %v7139 = vshrl.u32 %v7138, 7
        %v7140 = vsub.s32 %v5165, %v7139
        %v7141 = vrot.slane %v2205, %v7140
        %v7142 = vsel %vm5170, %v7141, %v7137
        %v7143 = vlaneseq
        %v7144 = vshrl.u32 %v7143, 7
        %v7145 = vsub.s32 %v5172, %v7144
        %v7146 = vrot.slane %v2206, %v7145
        %v7147 = vsel %vm5177, %v7146, %v7142
        %v7148 = vlaneseq
        %v7149 = vshrl.u32 %v7148, 7
        %v7150 = vsub.s32 %v5179, %v7149
        %v7151 = vrot.slane %v2207, %v7150
        %v7152 = vsel %vm5184, %v7151, %v7147
        %v7153 = vlaneseq
        %v7154 = vshrl.u32 %v7153, 7
        %v7155 = vsub.s32 %v5186, %v7154
        %v7156 = vrot.slane %v2208, %v7155
        %v7157 = vsel %vm5191, %v7156, %v7152
        %v7158 = vlaneseq
        %v7159 = vshrl.u32 %v7158, 7
        %v7160 = vsub.s32 %v5193, %v7159
        %v7161 = vrot.slane %v2209, %v7160
        %v7162 = vsel %vm5198, %v7161, %v7157
        %v7163 = vlaneseq
        %v7164 = vshrl.u32 %v7163, 7
        %v7165 = vsub.s32 %v5200, %v7164
        %v7166 = vrot.slane %v2210, %v7165
        %v7167 = vsel %vm5205, %v7166, %v7162
        %v7168 = vlaneseq
        %v7169 = vshrl.u32 %v7168, 7
        %v7170 = vsub.s32 %v5207, %v7169
        %v7171 = vrot.slane %v2211, %v7170
        %v7172 = vsel %vm5212, %v7171, %v7167
        %v7173 = vlaneseq
        %v7174 = vshrl.u32 %v7173, 7
        %v7175 = vsub.s32 %v5214, %v7174
        %v7176 = vrot.slane %v2212, %v7175
        %v7177 = vsel %vm5219, %v7176, %v7172
        %v7178 = vlaneseq
        %v7179 = vshrl.u32 %v7178, 7
        %v7180 = vsub.s32 %v5221, %v7179
        %v7181 = vrot.slane %v2213, %v7180
        %v7182 = vsel %vm5226, %v7181, %v7177
        %v7183 = vlaneseq
        %v7184 = vshrl.u32 %v7183, 7
        %v7185 = vsub.s32 %v5228, %v7184
        %v7186 = vrot.slane %v2214, %v7185
        %v7187 = vsel %vm5233, %v7186, %v7182
        %v7188 = vlaneseq
        %v7189 = vshrl.u32 %v7188, 7
        %v7190 = vsub.s32 %v5235, %v7189
        %v7191 = vrot.slane %v2215, %v7190
        %v7192 = vsel %vm5240, %v7191, %v7187
        %v7193 = vlaneseq
        %v7194 = vshrl.u32 %v7193, 7
        %v7195 = vsub.s32 %v5242, %v7194
        %v7196 = vrot.slane %v2216, %v7195
        %v7197 = vsel %vm5247, %v7196, %v7192
        %v7198 = vlaneseq
        %v7199 = vshrl.u32 %v7198, 7
        %v7200 = vsub.s32 %v5139, %v7199
        %v7201 = vrot.slane %v2217, %v7200
        %v7202 = vlaneseq
        %v7203 = vshrl.u32 %v7202, 7
        %v7204 = vsub.s32 %v5144, %v7203
        %v7205 = vrot.slane %v2218, %v7204
        %v7206 = vsel %vm5149, %v7205, %v7201
        %v7207 = vlaneseq
        %v7208 = vshrl.u32 %v7207, 7
        %v7209 = vsub.s32 %v5151, %v7208
        %v7210 = vrot.slane %v2219, %v7209
        %v7211 = vsel %vm5156, %v7210, %v7206
        %v7212 = vlaneseq
        %v7213 = vshrl.u32 %v7212, 7
        %v7214 = vsub.s32 %v5158, %v7213
        %v7215 = vrot.slane %v2220, %v7214
        %v7216 = vsel %vm5163, %v7215, %v7211
        %v7217 = vlaneseq
        %v7218 = vshrl.u32 %v7217, 7
        %v7219 = vsub.s32 %v5139, %v7218
        %v7220 = vrot.slane %v2221, %v7219
        %v7221 = vlaneseq
        %v7222 = vshrl.u32 %v7221, 7
        %v7223 = vsub.s32 %v5144, %v7222
        %v7224 = vrot.slane %v2222, %v7223
        %v7225 = vsel %vm5149, %v7224, %v7220
        %v7226 = vlaneseq
        %v7227 = vshrl.u32 %v7226, 7
        %v7228 = vsub.s32 %v5151, %v7227
        %v7229 = vrot.slane %v2223, %v7228
        %v7230 = vsel %vm5156, %v7229, %v7225
        %v7231 = vlaneseq
        %v7232 = vshrl.u32 %v7231, 7
        %v7233 = vsub.s32 %v5158, %v7232
        %v7234 = vrot.slane %v2224, %v7233
        %v7235 = vsel %vm5163, %v7234, %v7230
        %v7236 = vlaneseq
        %v7237 = vshrl.u32 %v7236, 7
        %v7238 = vsub.s32 %v5165, %v7237
        %v7239 = vrot.slane %v2225, %v7238
        %v7240 = vsel %vm5170, %v7239, %v7235
        %v7241 = vlaneseq
        %v7242 = vshrl.u32 %v7241, 7
        %v7243 = vsub.s32 %v5172, %v7242
        %v7244 = vrot.slane %v2226, %v7243
        %v7245 = vsel %vm5177, %v7244, %v7240
        %v7246 = vlaneseq
        %v7247 = vshrl.u32 %v7246, 7
        %v7248 = vsub.s32 %v5179, %v7247
        %v7249 = vrot.slane %v2227, %v7248
        %v7250 = vsel %vm5184, %v7249, %v7245
        %v7251 = vlaneseq
        %v7252 = vshrl.u32 %v7251, 7
        %v7253 = vsub.s32 %v5186, %v7252
        %v7254 = vrot.slane %v2228, %v7253
        %v7255 = vsel %vm5191, %v7254, %v7250
        %v7256 = vlaneseq
        %v7257 = vshrl.u32 %v7256, 7
        %v7258 = vsub.s32 %v5193, %v7257
        %v7259 = vrot.slane %v2229, %v7258
        %v7260 = vsel %vm5198, %v7259, %v7255
        %v7261 = vlaneseq
        %v7262 = vshrl.u32 %v7261, 7
        %v7263 = vsub.s32 %v5200, %v7262
        %v7264 = vrot.slane %v2230, %v7263
        %v7265 = vsel %vm5205, %v7264, %v7260
        %v7266 = vlaneseq
        %v7267 = vshrl.u32 %v7266, 7
        %v7268 = vsub.s32 %v5207, %v7267
        %v7269 = vrot.slane %v2231, %v7268
        %v7270 = vsel %vm5212, %v7269, %v7265
        %v7271 = vlaneseq
        %v7272 = vshrl.u32 %v7271, 7
        %v7273 = vsub.s32 %v5214, %v7272
        %v7274 = vrot.slane %v2232, %v7273
        %v7275 = vsel %vm5219, %v7274, %v7270
        %v7276 = vlaneseq
        %v7277 = vshrl.u32 %v7276, 7
        %v7278 = vsub.s32 %v5221, %v7277
        %v7279 = vrot.slane %v2233, %v7278
        %v7280 = vsel %vm5226, %v7279, %v7275
        %v7281 = vlaneseq
        %v7282 = vshrl.u32 %v7281, 7
        %v7283 = vsub.s32 %v5228, %v7282
        %v7284 = vrot.slane %v2234, %v7283
        %v7285 = vsel %vm5233, %v7284, %v7280
        %v7286 = vlaneseq
        %v7287 = vshrl.u32 %v7286, 7
        %v7288 = vsub.s32 %v5235, %v7287
        %v7289 = vrot.slane %v2235, %v7288
        %v7290 = vsel %vm5240, %v7289, %v7285
        %v7291 = vlaneseq
        %v7292 = vshrl.u32 %v7291, 7
        %v7293 = vsub.s32 %v5242, %v7292
        %v7294 = vrot.slane %v2236, %v7293
        %v7295 = vsel %vm5247, %v7294, %v7290
        %v7296 = vlaneseq
        %v7297 = vshrl.u32 %v7296, 7
        %v7298 = vsub.s32 %v5139, %v7297
        %v7299 = vrot.slane %v2237, %v7298
        %v7300 = vlaneseq
        %v7301 = vshrl.u32 %v7300, 7
        %v7302 = vsub.s32 %v5144, %v7301
        %v7303 = vrot.slane %v2238, %v7302
        %v7304 = vsel %vm5149, %v7303, %v7299
        %v7305 = vlaneseq
        %v7306 = vshrl.u32 %v7305, 7
        %v7307 = vsub.s32 %v5151, %v7306
        %v7308 = vrot.slane %v2239, %v7307
        %v7309 = vsel %vm5156, %v7308, %v7304
        %v7310 = vlaneseq
        %v7311 = vshrl.u32 %v7310, 7
        %v7312 = vsub.s32 %v5158, %v7311
        %v7313 = vrot.slane %v2240, %v7312
        %v7314 = vsel %vm5163, %v7313, %v7309
        %v7315 = vlaneseq
        %v7316 = vshrl.u32 %v7315, 7
        %v7317 = vsub.s32 %v5165, %v7316
        %v7318 = vrot.slane %v2241, %v7317
        %v7319 = vsel %vm5170, %v7318, %v7314
        %v7320 = vlaneseq
        %v7321 = vshrl.u32 %v7320, 7
        %v7322 = vsub.s32 %v5172, %v7321
        %v7323 = vrot.slane %v2242, %v7322
        %v7324 = vsel %vm5177, %v7323, %v7319
        %v7325 = vlaneseq
        %v7326 = vshrl.u32 %v7325, 7
        %v7327 = vsub.s32 %v5179, %v7326
        %v7328 = vrot.slane %v2243, %v7327
        %v7329 = vsel %vm5184, %v7328, %v7324
        %v7330 = vlaneseq
        %v7331 = vshrl.u32 %v7330, 7
        %v7332 = vsub.s32 %v5186, %v7331
        %v7333 = vrot.slane %v2244, %v7332
        %v7334 = vsel %vm5191, %v7333, %v7329
        %v7335 = vlaneseq
        %v7336 = vshrl.u32 %v7335, 7
        %v7337 = vsub.s32 %v5193, %v7336
        %v7338 = vrot.slane %v2245, %v7337
        %v7339 = vsel %vm5198, %v7338, %v7334
        %v7340 = vlaneseq
        %v7341 = vshrl.u32 %v7340, 7
        %v7342 = vsub.s32 %v5200, %v7341
        %v7343 = vrot.slane %v2246, %v7342
        %v7344 = vsel %vm5205, %v7343, %v7339
        %v7345 = vlaneseq
        %v7346 = vshrl.u32 %v7345, 7
        %v7347 = vsub.s32 %v5207, %v7346
        %v7348 = vrot.slane %v2247, %v7347
        %v7349 = vsel %vm5212, %v7348, %v7344
        %v7350 = vlaneseq
        %v7351 = vshrl.u32 %v7350, 7
        %v7352 = vsub.s32 %v5214, %v7351
        %v7353 = vrot.slane %v2248, %v7352
        %v7354 = vsel %vm5219, %v7353, %v7349
        %v7355 = vlaneseq
        %v7356 = vshrl.u32 %v7355, 7
        %v7357 = vsub.s32 %v5221, %v7356
        %v7358 = vrot.slane %v2249, %v7357
        %v7359 = vsel %vm5226, %v7358, %v7354
        %v7360 = vlaneseq
        %v7361 = vshrl.u32 %v7360, 7
        %v7362 = vsub.s32 %v5228, %v7361
        %v7363 = vrot.slane %v2250, %v7362
        %v7364 = vsel %vm5233, %v7363, %v7359
        %v7365 = vlaneseq
        %v7366 = vshrl.u32 %v7365, 7
        %v7367 = vsub.s32 %v5235, %v7366
        %v7368 = vrot.slane %v2251, %v7367
        %v7369 = vsel %vm5240, %v7368, %v7364
        %v7370 = vlaneseq
        %v7371 = vshrl.u32 %v7370, 7
        %v7372 = vsub.s32 %v5242, %v7371
        %v7373 = vrot.slane %v2252, %v7372
        %v7374 = vsel %vm5247, %v7373, %v7369
        %v7375 = vlaneseq
        %v7376 = vshrl.u32 %v7375, 7
        %v7377 = vsub.s32 %v5139, %v7376
        %v7378 = vrot.slane %v2253, %v7377
        %v7379 = vlaneseq
        %v7380 = vshrl.u32 %v7379, 7
        %v7381 = vsub.s32 %v5144, %v7380
        %v7382 = vrot.slane %v2254, %v7381
        %v7383 = vsel %vm5149, %v7382, %v7378
        %v7384 = vlaneseq
        %v7385 = vshrl.u32 %v7384, 7
        %v7386 = vsub.s32 %v5151, %v7385
        %v7387 = vrot.slane %v2255, %v7386
        %v7388 = vsel %vm5156, %v7387, %v7383
        %v7389 = vlaneseq
        %v7390 = vshrl.u32 %v7389, 7
        %v7391 = vsub.s32 %v5158, %v7390
        %v7392 = vrot.slane %v2256, %v7391
        %v7393 = vsel %vm5163, %v7392, %v7388
        %v7394 = vlaneseq
        %v7395 = vshrl.u32 %v7394, 7
        %v7396 = vsub.s32 %v5139, %v7395
        %v7397 = vrot.slane %v2257, %v7396
        %v7398 = vlaneseq
        %v7399 = vshrl.u32 %v7398, 7
        %v7400 = vsub.s32 %v5144, %v7399
        %v7401 = vrot.slane %v2258, %v7400
        %v7402 = vsel %vm5149, %v7401, %v7397
        %v7403 = vlaneseq
        %v7404 = vshrl.u32 %v7403, 7
        %v7405 = vsub.s32 %v5151, %v7404
        %v7406 = vrot.slane %v2259, %v7405
        %v7407 = vsel %vm5156, %v7406, %v7402
        %v7408 = vlaneseq
        %v7409 = vshrl.u32 %v7408, 7
        %v7410 = vsub.s32 %v5158, %v7409
        %v7411 = vrot.slane %v2260, %v7410
        %v7412 = vsel %vm5163, %v7411, %v7407
        %v7413 = vlaneseq
        %v7414 = vshrl.u32 %v7413, 7
        %v7415 = vsub.s32 %v5165, %v7414
        %v7416 = vrot.slane %v2261, %v7415
        %v7417 = vsel %vm5170, %v7416, %v7412
        %v7418 = vlaneseq
        %v7419 = vshrl.u32 %v7418, 7
        %v7420 = vsub.s32 %v5172, %v7419
        %v7421 = vrot.slane %v2262, %v7420
        %v7422 = vsel %vm5177, %v7421, %v7417
        %v7423 = vlaneseq
        %v7424 = vshrl.u32 %v7423, 7
        %v7425 = vsub.s32 %v5179, %v7424
        %v7426 = vrot.slane %v2263, %v7425
        %v7427 = vsel %vm5184, %v7426, %v7422
        %v7428 = vlaneseq
        %v7429 = vshrl.u32 %v7428, 7
        %v7430 = vsub.s32 %v5186, %v7429
        %v7431 = vrot.slane %v2264, %v7430
        %v7432 = vsel %vm5191, %v7431, %v7427
        %v7433 = vlaneseq
        %v7434 = vshrl.u32 %v7433, 7
        %v7435 = vsub.s32 %v5193, %v7434
        %v7436 = vrot.slane %v2265, %v7435
        %v7437 = vsel %vm5198, %v7436, %v7432
        %v7438 = vlaneseq
        %v7439 = vshrl.u32 %v7438, 7
        %v7440 = vsub.s32 %v5200, %v7439
        %v7441 = vrot.slane %v2266, %v7440
        %v7442 = vsel %vm5205, %v7441, %v7437
        %v7443 = vlaneseq
        %v7444 = vshrl.u32 %v7443, 7
        %v7445 = vsub.s32 %v5207, %v7444
        %v7446 = vrot.slane %v2267, %v7445
        %v7447 = vsel %vm5212, %v7446, %v7442
        %v7448 = vlaneseq
        %v7449 = vshrl.u32 %v7448, 7
        %v7450 = vsub.s32 %v5214, %v7449
        %v7451 = vrot.slane %v2268, %v7450
        %v7452 = vsel %vm5219, %v7451, %v7447
        %v7453 = vlaneseq
        %v7454 = vshrl.u32 %v7453, 7
        %v7455 = vsub.s32 %v5221, %v7454
        %v7456 = vrot.slane %v2269, %v7455
        %v7457 = vsel %vm5226, %v7456, %v7452
        %v7458 = vlaneseq
        %v7459 = vshrl.u32 %v7458, 7
        %v7460 = vsub.s32 %v5228, %v7459
        %v7461 = vrot.slane %v2270, %v7460
        %v7462 = vsel %vm5233, %v7461, %v7457
        %v7463 = vlaneseq
        %v7464 = vshrl.u32 %v7463, 7
        %v7465 = vsub.s32 %v5235, %v7464
        %v7466 = vrot.slane %v2271, %v7465
        %v7467 = vsel %vm5240, %v7466, %v7462
        %v7468 = vlaneseq
        %v7469 = vshrl.u32 %v7468, 7
        %v7470 = vsub.s32 %v5242, %v7469
        %v7471 = vrot.slane %v2272, %v7470
        %v7472 = vsel %vm5247, %v7471, %v7467
        %v7473 = vlaneseq
        %v7474 = vshrl.u32 %v7473, 7
        %v7475 = vsub.s32 %v5139, %v7474
        %v7476 = vrot.slane %v2273, %v7475
        %v7477 = vlaneseq
        %v7478 = vshrl.u32 %v7477, 7
        %v7479 = vsub.s32 %v5144, %v7478
        %v7480 = vrot.slane %v2274, %v7479
        %v7481 = vsel %vm5149, %v7480, %v7476
        %v7482 = vlaneseq
        %v7483 = vshrl.u32 %v7482, 7
        %v7484 = vsub.s32 %v5151, %v7483
        %v7485 = vrot.slane %v2275, %v7484
        %v7486 = vsel %vm5156, %v7485, %v7481
        %v7487 = vlaneseq
        %v7488 = vshrl.u32 %v7487, 7
        %v7489 = vsub.s32 %v5158, %v7488
        %v7490 = vrot.slane %v2276, %v7489
        %v7491 = vsel %vm5163, %v7490, %v7486
        %v7492 = vlaneseq
        %v7493 = vshrl.u32 %v7492, 7
        %v7494 = vsub.s32 %v5165, %v7493
        %v7495 = vrot.slane %v2277, %v7494
        %v7496 = vsel %vm5170, %v7495, %v7491
        %v7497 = vlaneseq
        %v7498 = vshrl.u32 %v7497, 7
        %v7499 = vsub.s32 %v5172, %v7498
        %v7500 = vrot.slane %v2278, %v7499
        %v7501 = vsel %vm5177, %v7500, %v7496
        %v7502 = vlaneseq
        %v7503 = vshrl.u32 %v7502, 7
        %v7504 = vsub.s32 %v5179, %v7503
        %v7505 = vrot.slane %v2279, %v7504
        %v7506 = vsel %vm5184, %v7505, %v7501
        %v7507 = vlaneseq
        %v7508 = vshrl.u32 %v7507, 7
        %v7509 = vsub.s32 %v5186, %v7508
        %v7510 = vrot.slane %v2280, %v7509
        %v7511 = vsel %vm5191, %v7510, %v7506
        %v7512 = vlaneseq
        %v7513 = vshrl.u32 %v7512, 7
        %v7514 = vsub.s32 %v5193, %v7513
        %v7515 = vrot.slane %v2281, %v7514
        %v7516 = vsel %vm5198, %v7515, %v7511
        %v7517 = vlaneseq
        %v7518 = vshrl.u32 %v7517, 7
        %v7519 = vsub.s32 %v5200, %v7518
        %v7520 = vrot.slane %v2282, %v7519
        %v7521 = vsel %vm5205, %v7520, %v7516
        %v7522 = vlaneseq
        %v7523 = vshrl.u32 %v7522, 7
        %v7524 = vsub.s32 %v5207, %v7523
        %v7525 = vrot.slane %v2283, %v7524
        %v7526 = vsel %vm5212, %v7525, %v7521
        %v7527 = vlaneseq
        %v7528 = vshrl.u32 %v7527, 7
        %v7529 = vsub.s32 %v5214, %v7528
        %v7530 = vrot.slane %v2284, %v7529
        %v7531 = vsel %vm5219, %v7530, %v7526
        %v7532 = vlaneseq
        %v7533 = vshrl.u32 %v7532, 7
        %v7534 = vsub.s32 %v5221, %v7533
        %v7535 = vrot.slane %v2285, %v7534
        %v7536 = vsel %vm5226, %v7535, %v7531
        %v7537 = vlaneseq
        %v7538 = vshrl.u32 %v7537, 7
        %v7539 = vsub.s32 %v5228, %v7538
        %v7540 = vrot.slane %v2286, %v7539
        %v7541 = vsel %vm5233, %v7540, %v7536
        %v7542 = vlaneseq
        %v7543 = vshrl.u32 %v7542, 7
        %v7544 = vsub.s32 %v5235, %v7543
        %v7545 = vrot.slane %v2287, %v7544
        %v7546 = vsel %vm5240, %v7545, %v7541
        %v7547 = vlaneseq
        %v7548 = vshrl.u32 %v7547, 7
        %v7549 = vsub.s32 %v5242, %v7548
        %v7550 = vrot.slane %v2288, %v7549
        %v7551 = vsel %vm5247, %v7550, %v7546
        %v7552 = vlaneseq
        %v7553 = vshrl.u32 %v7552, 7
        %v7554 = vsub.s32 %v5139, %v7553
        %v7555 = vrot.slane %v2289, %v7554
        %v7556 = vlaneseq
        %v7557 = vshrl.u32 %v7556, 7
        %v7558 = vsub.s32 %v5144, %v7557
        %v7559 = vrot.slane %v2290, %v7558
        %v7560 = vsel %vm5149, %v7559, %v7555
        %v7561 = vlaneseq
        %v7562 = vshrl.u32 %v7561, 7
        %v7563 = vsub.s32 %v5151, %v7562
        %v7564 = vrot.slane %v2291, %v7563
        %v7565 = vsel %vm5156, %v7564, %v7560
        %v7566 = vlaneseq
        %v7567 = vshrl.u32 %v7566, 7
        %v7568 = vsub.s32 %v5158, %v7567
        %v7569 = vrot.slane %v2292, %v7568
        %v7570 = vsel %vm5163, %v7569, %v7565
        %v7571 = vlaneseq
        %v7572 = vshrl.u32 %v7571, 7
        %v7573 = vsub.s32 %v5139, %v7572
        %v7574 = vrot.slane %v2293, %v7573
        %v7575 = vlaneseq
        %v7576 = vshrl.u32 %v7575, 7
        %v7577 = vsub.s32 %v5144, %v7576
        %v7578 = vrot.slane %v2294, %v7577
        %v7579 = vsel %vm5149, %v7578, %v7574
        %v7580 = vlaneseq
        %v7581 = vshrl.u32 %v7580, 7
        %v7582 = vsub.s32 %v5151, %v7581
        %v7583 = vrot.slane %v2295, %v7582
        %v7584 = vsel %vm5156, %v7583, %v7579
        %v7585 = vlaneseq
        %v7586 = vshrl.u32 %v7585, 7
        %v7587 = vsub.s32 %v5158, %v7586
        %v7588 = vrot.slane %v2296, %v7587
        %v7589 = vsel %vm5163, %v7588, %v7584
        %v7590 = vlaneseq
        %v7591 = vshrl.u32 %v7590, 7
        %v7592 = vsub.s32 %v5165, %v7591
        %v7593 = vrot.slane %v2297, %v7592
        %v7594 = vsel %vm5170, %v7593, %v7589
        %v7595 = vlaneseq
        %v7596 = vshrl.u32 %v7595, 7
        %v7597 = vsub.s32 %v5172, %v7596
        %v7598 = vrot.slane %v2298, %v7597
        %v7599 = vsel %vm5177, %v7598, %v7594
        %v7600 = vlaneseq
        %v7601 = vshrl.u32 %v7600, 7
        %v7602 = vsub.s32 %v5179, %v7601
        %v7603 = vrot.slane %v2299, %v7602
        %v7604 = vsel %vm5184, %v7603, %v7599
        %v7605 = vlaneseq
        %v7606 = vshrl.u32 %v7605, 7
        %v7607 = vsub.s32 %v5186, %v7606
        %v7608 = vrot.slane %v2300, %v7607
        %v7609 = vsel %vm5191, %v7608, %v7604
        %v7610 = vlaneseq
        %v7611 = vshrl.u32 %v7610, 7
        %v7612 = vsub.s32 %v5193, %v7611
        %v7613 = vrot.slane %v2301, %v7612
        %v7614 = vsel %vm5198, %v7613, %v7609
        %v7615 = vlaneseq
        %v7616 = vshrl.u32 %v7615, 7
        %v7617 = vsub.s32 %v5200, %v7616
        %v7618 = vrot.slane %v2302, %v7617
        %v7619 = vsel %vm5205, %v7618, %v7614
        %v7620 = vlaneseq
        %v7621 = vshrl.u32 %v7620, 7
        %v7622 = vsub.s32 %v5207, %v7621
        %v7623 = vrot.slane %v2303, %v7622
        %v7624 = vsel %vm5212, %v7623, %v7619
        %v7625 = vlaneseq
        %v7626 = vshrl.u32 %v7625, 7
        %v7627 = vsub.s32 %v5214, %v7626
        %v7628 = vrot.slane %v2304, %v7627
        %v7629 = vsel %vm5219, %v7628, %v7624
        %v7630 = vlaneseq
        %v7631 = vshrl.u32 %v7630, 7
        %v7632 = vsub.s32 %v5221, %v7631
        %v7633 = vrot.slane %v2305, %v7632
        %v7634 = vsel %vm5226, %v7633, %v7629
        %v7635 = vlaneseq
        %v7636 = vshrl.u32 %v7635, 7
        %v7637 = vsub.s32 %v5228, %v7636
        %v7638 = vrot.slane %v2306, %v7637
        %v7639 = vsel %vm5233, %v7638, %v7634
        %v7640 = vlaneseq
        %v7641 = vshrl.u32 %v7640, 7
        %v7642 = vsub.s32 %v5235, %v7641
        %v7643 = vrot.slane %v2307, %v7642
        %v7644 = vsel %vm5240, %v7643, %v7639
        %v7645 = vlaneseq
        %v7646 = vshrl.u32 %v7645, 7
        %v7647 = vsub.s32 %v5242, %v7646
        %v7648 = vrot.slane %v2308, %v7647
        %v7649 = vsel %vm5247, %v7648, %v7644
        %v7650 = vlaneseq
        %v7651 = vshrl.u32 %v7650, 7
        %v7652 = vsub.s32 %v5139, %v7651
        %v7653 = vrot.slane %v2309, %v7652
        %v7654 = vlaneseq
        %v7655 = vshrl.u32 %v7654, 7
        %v7656 = vsub.s32 %v5144, %v7655
        %v7657 = vrot.slane %v2310, %v7656
        %v7658 = vsel %vm5149, %v7657, %v7653
        %v7659 = vlaneseq
        %v7660 = vshrl.u32 %v7659, 7
        %v7661 = vsub.s32 %v5151, %v7660
        %v7662 = vrot.slane %v2311, %v7661
        %v7663 = vsel %vm5156, %v7662, %v7658
        %v7664 = vlaneseq
        %v7665 = vshrl.u32 %v7664, 7
        %v7666 = vsub.s32 %v5158, %v7665
        %v7667 = vrot.slane %v2312, %v7666
        %v7668 = vsel %vm5163, %v7667, %v7663
        %v7669 = vlaneseq
        %v7670 = vshrl.u32 %v7669, 7
        %v7671 = vsub.s32 %v5165, %v7670
        %v7672 = vrot.slane %v2313, %v7671
        %v7673 = vsel %vm5170, %v7672, %v7668
        %v7674 = vlaneseq
        %v7675 = vshrl.u32 %v7674, 7
        %v7676 = vsub.s32 %v5172, %v7675
        %v7677 = vrot.slane %v2314, %v7676
        %v7678 = vsel %vm5177, %v7677, %v7673
        %v7679 = vlaneseq
        %v7680 = vshrl.u32 %v7679, 7
        %v7681 = vsub.s32 %v5179, %v7680
        %v7682 = vrot.slane %v2315, %v7681
        %v7683 = vsel %vm5184, %v7682, %v7678
        %v7684 = vlaneseq
        %v7685 = vshrl.u32 %v7684, 7
        %v7686 = vsub.s32 %v5186, %v7685
        %v7687 = vrot.slane %v2316, %v7686
        %v7688 = vsel %vm5191, %v7687, %v7683
        %v7689 = vlaneseq
        %v7690 = vshrl.u32 %v7689, 7
        %v7691 = vsub.s32 %v5193, %v7690
        %v7692 = vrot.slane %v2317, %v7691
        %v7693 = vsel %vm5198, %v7692, %v7688
        %v7694 = vlaneseq
        %v7695 = vshrl.u32 %v7694, 7
        %v7696 = vsub.s32 %v5200, %v7695
        %v7697 = vrot.slane %v2318, %v7696
        %v7698 = vsel %vm5205, %v7697, %v7693
        %v7699 = vlaneseq
        %v7700 = vshrl.u32 %v7699, 7
        %v7701 = vsub.s32 %v5207, %v7700
        %v7702 = vrot.slane %v2319, %v7701
        %v7703 = vsel %vm5212, %v7702, %v7698
        %v7704 = vlaneseq
        %v7705 = vshrl.u32 %v7704, 7
        %v7706 = vsub.s32 %v5214, %v7705
        %v7707 = vrot.slane %v2320, %v7706
        %v7708 = vsel %vm5219, %v7707, %v7703
        %v7709 = vlaneseq
        %v7710 = vshrl.u32 %v7709, 7
        %v7711 = vsub.s32 %v5221, %v7710
        %v7712 = vrot.slane %v2321, %v7711
        %v7713 = vsel %vm5226, %v7712, %v7708
        %v7714 = vlaneseq
        %v7715 = vshrl.u32 %v7714, 7
        %v7716 = vsub.s32 %v5228, %v7715
        %v7717 = vrot.slane %v2322, %v7716
        %v7718 = vsel %vm5233, %v7717, %v7713
        %v7719 = vlaneseq
        %v7720 = vshrl.u32 %v7719, 7
        %v7721 = vsub.s32 %v5235, %v7720
        %v7722 = vrot.slane %v2323, %v7721
        %v7723 = vsel %vm5240, %v7722, %v7718
        %v7724 = vlaneseq
        %v7725 = vshrl.u32 %v7724, 7
        %v7726 = vsub.s32 %v5242, %v7725
        %v7727 = vrot.slane %v2324, %v7726
        %v7728 = vsel %vm5247, %v7727, %v7723
        %v7729 = vlaneseq
        %v7730 = vshrl.u32 %v7729, 7
        %v7731 = vsub.s32 %v5139, %v7730
        %v7732 = vrot.slane %v2325, %v7731
        %v7733 = vlaneseq
        %v7734 = vshrl.u32 %v7733, 7
        %v7735 = vsub.s32 %v5144, %v7734
        %v7736 = vrot.slane %v2326, %v7735
        %v7737 = vsel %vm5149, %v7736, %v7732
        %v7738 = vlaneseq
        %v7739 = vshrl.u32 %v7738, 7
        %v7740 = vsub.s32 %v5151, %v7739
        %v7741 = vrot.slane %v2327, %v7740
        %v7742 = vsel %vm5156, %v7741, %v7737
        %v7743 = vlaneseq
        %v7744 = vshrl.u32 %v7743, 7
        %v7745 = vsub.s32 %v5158, %v7744
        %v7746 = vrot.slane %v2328, %v7745
        %v7747 = vsel %vm5163, %v7746, %v7742
        %v7748 = vlaneseq
        %v7749 = vshrl.u32 %v7748, 7
        %v7750 = vsub.s32 %v5139, %v7749
        %v7751 = vrot.slane %v2329, %v7750
        %v7752 = vlaneseq
        %v7753 = vshrl.u32 %v7752, 7
        %v7754 = vsub.s32 %v5144, %v7753
        %v7755 = vrot.slane %v2330, %v7754
        %v7756 = vsel %vm5149, %v7755, %v7751
        %v7757 = vlaneseq
        %v7758 = vshrl.u32 %v7757, 7
        %v7759 = vsub.s32 %v5151, %v7758
        %v7760 = vrot.slane %v2331, %v7759
        %v7761 = vsel %vm5156, %v7760, %v7756
        %v7762 = vlaneseq
        %v7763 = vshrl.u32 %v7762, 7
        %v7764 = vsub.s32 %v5158, %v7763
        %v7765 = vrot.slane %v2332, %v7764
        %v7766 = vsel %vm5163, %v7765, %v7761
        %v7767 = vlaneseq
        %v7768 = vshrl.u32 %v7767, 7
        %v7769 = vsub.s32 %v5165, %v7768
        %v7770 = vrot.slane %v2333, %v7769
        %v7771 = vsel %vm5170, %v7770, %v7766
        %v7772 = vlaneseq
        %v7773 = vshrl.u32 %v7772, 7
        %v7774 = vsub.s32 %v5172, %v7773
        %v7775 = vrot.slane %v2334, %v7774
        %v7776 = vsel %vm5177, %v7775, %v7771
        %v7777 = vlaneseq
        %v7778 = vshrl.u32 %v7777, 7
        %v7779 = vsub.s32 %v5179, %v7778
        %v7780 = vrot.slane %v2335, %v7779
        %v7781 = vsel %vm5184, %v7780, %v7776
        %v7782 = vlaneseq
        %v7783 = vshrl.u32 %v7782, 7
        %v7784 = vsub.s32 %v5186, %v7783
        %v7785 = vrot.slane %v2336, %v7784
        %v7786 = vsel %vm5191, %v7785, %v7781
        %v7787 = vlaneseq
        %v7788 = vshrl.u32 %v7787, 7
        %v7789 = vsub.s32 %v5193, %v7788
        %v7790 = vrot.slane %v2337, %v7789
        %v7791 = vsel %vm5198, %v7790, %v7786
        %v7792 = vlaneseq
        %v7793 = vshrl.u32 %v7792, 7
        %v7794 = vsub.s32 %v5200, %v7793
        %v7795 = vrot.slane %v2338, %v7794
        %v7796 = vsel %vm5205, %v7795, %v7791
        %v7797 = vlaneseq
        %v7798 = vshrl.u32 %v7797, 7
        %v7799 = vsub.s32 %v5207, %v7798
        %v7800 = vrot.slane %v2339, %v7799
        %v7801 = vsel %vm5212, %v7800, %v7796
        %v7802 = vlaneseq
        %v7803 = vshrl.u32 %v7802, 7
        %v7804 = vsub.s32 %v5214, %v7803
        %v7805 = vrot.slane %v2340, %v7804
        %v7806 = vsel %vm5219, %v7805, %v7801
        %v7807 = vlaneseq
        %v7808 = vshrl.u32 %v7807, 7
        %v7809 = vsub.s32 %v5221, %v7808
        %v7810 = vrot.slane %v2341, %v7809
        %v7811 = vsel %vm5226, %v7810, %v7806
        %v7812 = vlaneseq
        %v7813 = vshrl.u32 %v7812, 7
        %v7814 = vsub.s32 %v5228, %v7813
        %v7815 = vrot.slane %v2342, %v7814
        %v7816 = vsel %vm5233, %v7815, %v7811
        %v7817 = vlaneseq
        %v7818 = vshrl.u32 %v7817, 7
        %v7819 = vsub.s32 %v5235, %v7818
        %v7820 = vrot.slane %v2343, %v7819
        %v7821 = vsel %vm5240, %v7820, %v7816
        %v7822 = vlaneseq
        %v7823 = vshrl.u32 %v7822, 7
        %v7824 = vsub.s32 %v5242, %v7823
        %v7825 = vrot.slane %v2344, %v7824
        %v7826 = vsel %vm5247, %v7825, %v7821
        %v7827 = vlaneseq
        %v7828 = vshrl.u32 %v7827, 7
        %v7829 = vsub.s32 %v5139, %v7828
        %v7830 = vrot.slane %v2345, %v7829
        %v7831 = vlaneseq
        %v7832 = vshrl.u32 %v7831, 7
        %v7833 = vsub.s32 %v5144, %v7832
        %v7834 = vrot.slane %v2346, %v7833
        %v7835 = vsel %vm5149, %v7834, %v7830
        %v7836 = vlaneseq
        %v7837 = vshrl.u32 %v7836, 7
        %v7838 = vsub.s32 %v5151, %v7837
        %v7839 = vrot.slane %v2347, %v7838
        %v7840 = vsel %vm5156, %v7839, %v7835
        %v7841 = vlaneseq
        %v7842 = vshrl.u32 %v7841, 7
        %v7843 = vsub.s32 %v5158, %v7842
        %v7844 = vrot.slane %v2348, %v7843
        %v7845 = vsel %vm5163, %v7844, %v7840
        %v7846 = vlaneseq
        %v7847 = vshrl.u32 %v7846, 7
        %v7848 = vsub.s32 %v5165, %v7847
        %v7849 = vrot.slane %v2349, %v7848
        %v7850 = vsel %vm5170, %v7849, %v7845
        %v7851 = vlaneseq
        %v7852 = vshrl.u32 %v7851, 7
        %v7853 = vsub.s32 %v5172, %v7852
        %v7854 = vrot.slane %v2350, %v7853
        %v7855 = vsel %vm5177, %v7854, %v7850
        %v7856 = vlaneseq
        %v7857 = vshrl.u32 %v7856, 7
        %v7858 = vsub.s32 %v5179, %v7857
        %v7859 = vrot.slane %v2351, %v7858
        %v7860 = vsel %vm5184, %v7859, %v7855
        %v7861 = vlaneseq
        %v7862 = vshrl.u32 %v7861, 7
        %v7863 = vsub.s32 %v5186, %v7862
        %v7864 = vrot.slane %v2352, %v7863
        %v7865 = vsel %vm5191, %v7864, %v7860
        %v7866 = vlaneseq
        %v7867 = vshrl.u32 %v7866, 7
        %v7868 = vsub.s32 %v5193, %v7867
        %v7869 = vrot.slane %v2353, %v7868
        %v7870 = vsel %vm5198, %v7869, %v7865
        %v7871 = vlaneseq
        %v7872 = vshrl.u32 %v7871, 7
        %v7873 = vsub.s32 %v5200, %v7872
        %v7874 = vrot.slane %v2354, %v7873
        %v7875 = vsel %vm5205, %v7874, %v7870
        %v7876 = vlaneseq
        %v7877 = vshrl.u32 %v7876, 7
        %v7878 = vsub.s32 %v5207, %v7877
        %v7879 = vrot.slane %v2355, %v7878
        %v7880 = vsel %vm5212, %v7879, %v7875
        %v7881 = vlaneseq
        %v7882 = vshrl.u32 %v7881, 7
        %v7883 = vsub.s32 %v5214, %v7882
        %v7884 = vrot.slane %v2356, %v7883
        %v7885 = vsel %vm5219, %v7884, %v7880
        %v7886 = vlaneseq
        %v7887 = vshrl.u32 %v7886, 7
        %v7888 = vsub.s32 %v5221, %v7887
        %v7889 = vrot.slane %v2357, %v7888
        %v7890 = vsel %vm5226, %v7889, %v7885
        %v7891 = vlaneseq
        %v7892 = vshrl.u32 %v7891, 7
        %v7893 = vsub.s32 %v5228, %v7892
        %v7894 = vrot.slane %v2358, %v7893
        %v7895 = vsel %vm5233, %v7894, %v7890
        %v7896 = vlaneseq
        %v7897 = vshrl.u32 %v7896, 7
        %v7898 = vsub.s32 %v5235, %v7897
        %v7899 = vrot.slane %v2359, %v7898
        %v7900 = vsel %vm5240, %v7899, %v7895
        %v7901 = vlaneseq
        %v7902 = vshrl.u32 %v7901, 7
        %v7903 = vsub.s32 %v5242, %v7902
        %v7904 = vrot.slane %v2360, %v7903
        %v7905 = vsel %vm5247, %v7904, %v7900
        %v7906 = vlaneseq
        %v7907 = vshrl.u32 %v7906, 7
        %v7908 = vsub.s32 %v5139, %v7907
        %v7909 = vrot.slane %v2361, %v7908
        %v7910 = vlaneseq
        %v7911 = vshrl.u32 %v7910, 7
        %v7912 = vsub.s32 %v5144, %v7911
        %v7913 = vrot.slane %v2362, %v7912
        %v7914 = vsel %vm5149, %v7913, %v7909
        %v7915 = vlaneseq
        %v7916 = vshrl.u32 %v7915, 7
        %v7917 = vsub.s32 %v5151, %v7916
        %v7918 = vrot.slane %v2363, %v7917
        %v7919 = vsel %vm5156, %v7918, %v7914
        %v7920 = vlaneseq
        %v7921 = vshrl.u32 %v7920, 7
        %v7922 = vsub.s32 %v5158, %v7921
        %v7923 = vrot.slane %v2364, %v7922
        %v7924 = vsel %vm5163, %v7923, %v7919
        %v7925 = vlaneseq
        %v7926 = vshrl.u32 %v7925, 7
        %v7927 = vsub.s32 %v5139, %v7926
        %v7928 = vrot.slane %v2365, %v7927
        %v7929 = vlaneseq
        %v7930 = vshrl.u32 %v7929, 7
        %v7931 = vsub.s32 %v5144, %v7930
        %v7932 = vrot.slane %v2366, %v7931
        %v7933 = vsel %vm5149, %v7932, %v7928
        %v7934 = vlaneseq
        %v7935 = vshrl.u32 %v7934, 7
        %v7936 = vsub.s32 %v5151, %v7935
        %v7937 = vrot.slane %v2367, %v7936
        %v7938 = vsel %vm5156, %v7937, %v7933
        %v7939 = vlaneseq
        %v7940 = vshrl.u32 %v7939, 7
        %v7941 = vsub.s32 %v5158, %v7940
        %v7942 = vrot.slane %v2368, %v7941
        %v7943 = vsel %vm5163, %v7942, %v7938
        %v7944 = vlaneseq
        %v7945 = vshrl.u32 %v7944, 7
        %v7946 = vsub.s32 %v5165, %v7945
        %v7947 = vrot.slane %v2369, %v7946
        %v7948 = vsel %vm5170, %v7947, %v7943
        %v7949 = vlaneseq
        %v7950 = vshrl.u32 %v7949, 7
        %v7951 = vsub.s32 %v5172, %v7950
        %v7952 = vrot.slane %v2370, %v7951
        %v7953 = vsel %vm5177, %v7952, %v7948
        %v7954 = vlaneseq
        %v7955 = vshrl.u32 %v7954, 7
        %v7956 = vsub.s32 %v5179, %v7955
        %v7957 = vrot.slane %v2371, %v7956
        %v7958 = vsel %vm5184, %v7957, %v7953
        %v7959 = vlaneseq
        %v7960 = vshrl.u32 %v7959, 7
        %v7961 = vsub.s32 %v5186, %v7960
        %v7962 = vrot.slane %v2372, %v7961
        %v7963 = vsel %vm5191, %v7962, %v7958
        %v7964 = vlaneseq
        %v7965 = vshrl.u32 %v7964, 7
        %v7966 = vsub.s32 %v5193, %v7965
        %v7967 = vrot.slane %v2373, %v7966
        %v7968 = vsel %vm5198, %v7967, %v7963
        %v7969 = vlaneseq
        %v7970 = vshrl.u32 %v7969, 7
        %v7971 = vsub.s32 %v5200, %v7970
        %v7972 = vrot.slane %v2374, %v7971
        %v7973 = vsel %vm5205, %v7972, %v7968
        %v7974 = vlaneseq
        %v7975 = vshrl.u32 %v7974, 7
        %v7976 = vsub.s32 %v5207, %v7975
        %v7977 = vrot.slane %v2375, %v7976
        %v7978 = vsel %vm5212, %v7977, %v7973
        %v7979 = vlaneseq
        %v7980 = vshrl.u32 %v7979, 7
        %v7981 = vsub.s32 %v5214, %v7980
        %v7982 = vrot.slane %v2376, %v7981
        %v7983 = vsel %vm5219, %v7982, %v7978
        %v7984 = vlaneseq
        %v7985 = vshrl.u32 %v7984, 7
        %v7986 = vsub.s32 %v5221, %v7985
        %v7987 = vrot.slane %v2377, %v7986
        %v7988 = vsel %vm5226, %v7987, %v7983
        %v7989 = vlaneseq
        %v7990 = vshrl.u32 %v7989, 7
        %v7991 = vsub.s32 %v5228, %v7990
        %v7992 = vrot.slane %v2378, %v7991
        %v7993 = vsel %vm5233, %v7992, %v7988
        %v7994 = vlaneseq
        %v7995 = vshrl.u32 %v7994, 7
        %v7996 = vsub.s32 %v5235, %v7995
        %v7997 = vrot.slane %v2379, %v7996
        %v7998 = vsel %vm5240, %v7997, %v7993
        %v7999 = vlaneseq
        %v8000 = vshrl.u32 %v7999, 7
        %v8001 = vsub.s32 %v5242, %v8000
        %v8002 = vrot.slane %v2380, %v8001
        %v8003 = vsel %vm5247, %v8002, %v7998
        %v8004 = vlaneseq
        %v8005 = vshrl.u32 %v8004, 7
        %v8006 = vsub.s32 %v5139, %v8005
        %v8007 = vrot.slane %v2381, %v8006
        %v8008 = vlaneseq
        %v8009 = vshrl.u32 %v8008, 7
        %v8010 = vsub.s32 %v5144, %v8009
        %v8011 = vrot.slane %v2382, %v8010
        %v8012 = vsel %vm5149, %v8011, %v8007
        %v8013 = vlaneseq
        %v8014 = vshrl.u32 %v8013, 7
        %v8015 = vsub.s32 %v5151, %v8014
        %v8016 = vrot.slane %v2383, %v8015
        %v8017 = vsel %vm5156, %v8016, %v8012
        %v8018 = vlaneseq
        %v8019 = vshrl.u32 %v8018, 7
        %v8020 = vsub.s32 %v5158, %v8019
        %v8021 = vrot.slane %v2384, %v8020
        %v8022 = vsel %vm5163, %v8021, %v8017
        %v8023 = vlaneseq
        %v8024 = vshrl.u32 %v8023, 7
        %v8025 = vsub.s32 %v5165, %v8024
        %v8026 = vrot.slane %v2385, %v8025
        %v8027 = vsel %vm5170, %v8026, %v8022
        %v8028 = vlaneseq
        %v8029 = vshrl.u32 %v8028, 7
        %v8030 = vsub.s32 %v5172, %v8029
        %v8031 = vrot.slane %v2386, %v8030
        %v8032 = vsel %vm5177, %v8031, %v8027
        %v8033 = vlaneseq
        %v8034 = vshrl.u32 %v8033, 7
        %v8035 = vsub.s32 %v5179, %v8034
        %v8036 = vrot.slane %v2387, %v8035
        %v8037 = vsel %vm5184, %v8036, %v8032
        %v8038 = vlaneseq
        %v8039 = vshrl.u32 %v8038, 7
        %v8040 = vsub.s32 %v5186, %v8039
        %v8041 = vrot.slane %v2388, %v8040
        %v8042 = vsel %vm5191, %v8041, %v8037
        %v8043 = vlaneseq
        %v8044 = vshrl.u32 %v8043, 7
        %v8045 = vsub.s32 %v5193, %v8044
        %v8046 = vrot.slane %v2389, %v8045
        %v8047 = vsel %vm5198, %v8046, %v8042
        %v8048 = vlaneseq
        %v8049 = vshrl.u32 %v8048, 7
        %v8050 = vsub.s32 %v5200, %v8049
        %v8051 = vrot.slane %v2390, %v8050
        %v8052 = vsel %vm5205, %v8051, %v8047
        %v8053 = vlaneseq
        %v8054 = vshrl.u32 %v8053, 7
        %v8055 = vsub.s32 %v5207, %v8054
        %v8056 = vrot.slane %v2391, %v8055
        %v8057 = vsel %vm5212, %v8056, %v8052
        %v8058 = vlaneseq
        %v8059 = vshrl.u32 %v8058, 7
        %v8060 = vsub.s32 %v5214, %v8059
        %v8061 = vrot.slane %v2392, %v8060
        %v8062 = vsel %vm5219, %v8061, %v8057
        %v8063 = vlaneseq
        %v8064 = vshrl.u32 %v8063, 7
        %v8065 = vsub.s32 %v5221, %v8064
        %v8066 = vrot.slane %v2393, %v8065
        %v8067 = vsel %vm5226, %v8066, %v8062
        %v8068 = vlaneseq
        %v8069 = vshrl.u32 %v8068, 7
        %v8070 = vsub.s32 %v5228, %v8069
        %v8071 = vrot.slane %v2394, %v8070
        %v8072 = vsel %vm5233, %v8071, %v8067
        %v8073 = vlaneseq
        %v8074 = vshrl.u32 %v8073, 7
        %v8075 = vsub.s32 %v5235, %v8074
        %v8076 = vrot.slane %v2395, %v8075
        %v8077 = vsel %vm5240, %v8076, %v8072
        %v8078 = vlaneseq
        %v8079 = vshrl.u32 %v8078, 7
        %v8080 = vsub.s32 %v5242, %v8079
        %v8081 = vrot.slane %v2396, %v8080
        %v8082 = vsel %vm5247, %v8081, %v8077
        %v8083 = vlaneseq
        %v8084 = vshrl.u32 %v8083, 7
        %v8085 = vsub.s32 %v5139, %v8084
        %v8086 = vrot.slane %v2397, %v8085
        %v8087 = vlaneseq
        %v8088 = vshrl.u32 %v8087, 7
        %v8089 = vsub.s32 %v5144, %v8088
        %v8090 = vrot.slane %v2398, %v8089
        %v8091 = vsel %vm5149, %v8090, %v8086
        %v8092 = vlaneseq
        %v8093 = vshrl.u32 %v8092, 7
        %v8094 = vsub.s32 %v5151, %v8093
        %v8095 = vrot.slane %v2399, %v8094
        %v8096 = vsel %vm5156, %v8095, %v8091
        %v8097 = vlaneseq
        %v8098 = vshrl.u32 %v8097, 7
        %v8099 = vsub.s32 %v5158, %v8098
        %v8100 = vrot.slane %v2400, %v8099
        %v8101 = vsel %vm5163, %v8100, %v8096
        %v8102 = vlaneseq
        %v8103 = vshrl.u32 %v8102, 7
        %v8104 = vsub.s32 %v5139, %v8103
        %v8105 = vrot.slane %v2401, %v8104
        %v8106 = vlaneseq
        %v8107 = vshrl.u32 %v8106, 7
        %v8108 = vsub.s32 %v5144, %v8107
        %v8109 = vrot.slane %v2402, %v8108
        %v8110 = vsel %vm5149, %v8109, %v8105
        %v8111 = vlaneseq
        %v8112 = vshrl.u32 %v8111, 7
        %v8113 = vsub.s32 %v5151, %v8112
        %v8114 = vrot.slane %v2403, %v8113
        %v8115 = vsel %vm5156, %v8114, %v8110
        %v8116 = vlaneseq
        %v8117 = vshrl.u32 %v8116, 7
        %v8118 = vsub.s32 %v5158, %v8117
        %v8119 = vrot.slane %v2404, %v8118
        %v8120 = vsel %vm5163, %v8119, %v8115
        %v8121 = vlaneseq
        %v8122 = vshrl.u32 %v8121, 7
        %v8123 = vsub.s32 %v5165, %v8122
        %v8124 = vrot.slane %v2405, %v8123
        %v8125 = vsel %vm5170, %v8124, %v8120
        %v8126 = vlaneseq
        %v8127 = vshrl.u32 %v8126, 7
        %v8128 = vsub.s32 %v5172, %v8127
        %v8129 = vrot.slane %v2406, %v8128
        %v8130 = vsel %vm5177, %v8129, %v8125
        %v8131 = vlaneseq
        %v8132 = vshrl.u32 %v8131, 7
        %v8133 = vsub.s32 %v5179, %v8132
        %v8134 = vrot.slane %v2407, %v8133
        %v8135 = vsel %vm5184, %v8134, %v8130
        %v8136 = vlaneseq
        %v8137 = vshrl.u32 %v8136, 7
        %v8138 = vsub.s32 %v5186, %v8137
        %v8139 = vrot.slane %v2408, %v8138
        %v8140 = vsel %vm5191, %v8139, %v8135
        %v8141 = vlaneseq
        %v8142 = vshrl.u32 %v8141, 7
        %v8143 = vsub.s32 %v5193, %v8142
        %v8144 = vrot.slane %v2409, %v8143
        %v8145 = vsel %vm5198, %v8144, %v8140
        %v8146 = vlaneseq
        %v8147 = vshrl.u32 %v8146, 7
        %v8148 = vsub.s32 %v5200, %v8147
        %v8149 = vrot.slane %v2410, %v8148
        %v8150 = vsel %vm5205, %v8149, %v8145
        %v8151 = vlaneseq
        %v8152 = vshrl.u32 %v8151, 7
        %v8153 = vsub.s32 %v5207, %v8152
        %v8154 = vrot.slane %v2411, %v8153
        %v8155 = vsel %vm5212, %v8154, %v8150
        %v8156 = vlaneseq
        %v8157 = vshrl.u32 %v8156, 7
        %v8158 = vsub.s32 %v5214, %v8157
        %v8159 = vrot.slane %v2412, %v8158
        %v8160 = vsel %vm5219, %v8159, %v8155
        %v8161 = vlaneseq
        %v8162 = vshrl.u32 %v8161, 7
        %v8163 = vsub.s32 %v5221, %v8162
        %v8164 = vrot.slane %v2413, %v8163
        %v8165 = vsel %vm5226, %v8164, %v8160
        %v8166 = vlaneseq
        %v8167 = vshrl.u32 %v8166, 7
        %v8168 = vsub.s32 %v5228, %v8167
        %v8169 = vrot.slane %v2414, %v8168
        %v8170 = vsel %vm5233, %v8169, %v8165
        %v8171 = vlaneseq
        %v8172 = vshrl.u32 %v8171, 7
        %v8173 = vsub.s32 %v5235, %v8172
        %v8174 = vrot.slane %v2415, %v8173
        %v8175 = vsel %vm5240, %v8174, %v8170
        %v8176 = vlaneseq
        %v8177 = vshrl.u32 %v8176, 7
        %v8178 = vsub.s32 %v5242, %v8177
        %v8179 = vrot.slane %v2416, %v8178
        %v8180 = vsel %vm5247, %v8179, %v8175
        %v8181 = vlaneseq
        %v8182 = vshrl.u32 %v8181, 7
        %v8183 = vsub.s32 %v5139, %v8182
        %v8184 = vrot.slane %v2417, %v8183
        %v8185 = vlaneseq
        %v8186 = vshrl.u32 %v8185, 7
        %v8187 = vsub.s32 %v5144, %v8186
        %v8188 = vrot.slane %v2418, %v8187
        %v8189 = vsel %vm5149, %v8188, %v8184
        %v8190 = vlaneseq
        %v8191 = vshrl.u32 %v8190, 7
        %v8192 = vsub.s32 %v5151, %v8191
        %v8193 = vrot.slane %v2419, %v8192
        %v8194 = vsel %vm5156, %v8193, %v8189
        %v8195 = vlaneseq
        %v8196 = vshrl.u32 %v8195, 7
        %v8197 = vsub.s32 %v5158, %v8196
        %v8198 = vrot.slane %v2420, %v8197
        %v8199 = vsel %vm5163, %v8198, %v8194
        %v8200 = vlaneseq
        %v8201 = vshrl.u32 %v8200, 7
        %v8202 = vsub.s32 %v5165, %v8201
        %v8203 = vrot.slane %v2421, %v8202
        %v8204 = vsel %vm5170, %v8203, %v8199
        %v8205 = vlaneseq
        %v8206 = vshrl.u32 %v8205, 7
        %v8207 = vsub.s32 %v5172, %v8206
        %v8208 = vrot.slane %v2422, %v8207
        %v8209 = vsel %vm5177, %v8208, %v8204
        %v8210 = vlaneseq
        %v8211 = vshrl.u32 %v8210, 7
        %v8212 = vsub.s32 %v5179, %v8211
        %v8213 = vrot.slane %v2423, %v8212
        %v8214 = vsel %vm5184, %v8213, %v8209
        %v8215 = vlaneseq
        %v8216 = vshrl.u32 %v8215, 7
        %v8217 = vsub.s32 %v5186, %v8216
        %v8218 = vrot.slane %v2424, %v8217
        %v8219 = vsel %vm5191, %v8218, %v8214
        %v8220 = vlaneseq
        %v8221 = vshrl.u32 %v8220, 7
        %v8222 = vsub.s32 %v5193, %v8221
        %v8223 = vrot.slane %v2425, %v8222
        %v8224 = vsel %vm5198, %v8223, %v8219
        %v8225 = vlaneseq
        %v8226 = vshrl.u32 %v8225, 7
        %v8227 = vsub.s32 %v5200, %v8226
        %v8228 = vrot.slane %v2426, %v8227
        %v8229 = vsel %vm5205, %v8228, %v8224
        %v8230 = vlaneseq
        %v8231 = vshrl.u32 %v8230, 7
        %v8232 = vsub.s32 %v5207, %v8231
        %v8233 = vrot.slane %v2427, %v8232
        %v8234 = vsel %vm5212, %v8233, %v8229
        %v8235 = vlaneseq
        %v8236 = vshrl.u32 %v8235, 7
        %v8237 = vsub.s32 %v5214, %v8236
        %v8238 = vrot.slane %v2428, %v8237
        %v8239 = vsel %vm5219, %v8238, %v8234
        %v8240 = vlaneseq
        %v8241 = vshrl.u32 %v8240, 7
        %v8242 = vsub.s32 %v5221, %v8241
        %v8243 = vrot.slane %v2429, %v8242
        %v8244 = vsel %vm5226, %v8243, %v8239
        %v8245 = vlaneseq
        %v8246 = vshrl.u32 %v8245, 7
        %v8247 = vsub.s32 %v5228, %v8246
        %v8248 = vrot.slane %v2430, %v8247
        %v8249 = vsel %vm5233, %v8248, %v8244
        %v8250 = vlaneseq
        %v8251 = vshrl.u32 %v8250, 7
        %v8252 = vsub.s32 %v5235, %v8251
        %v8253 = vrot.slane %v2431, %v8252
        %v8254 = vsel %vm5240, %v8253, %v8249
        %v8255 = vlaneseq
        %v8256 = vshrl.u32 %v8255, 7
        %v8257 = vsub.s32 %v5242, %v8256
        %v8258 = vrot.slane %v2432, %v8257
        %v8259 = vsel %vm5247, %v8258, %v8254
        %v8260 = vlaneseq
        %v8261 = vshrl.u32 %v8260, 7
        %v8262 = vsub.s32 %v5139, %v8261
        %v8263 = vrot.slane %v2433, %v8262
        %v8264 = vlaneseq
        %v8265 = vshrl.u32 %v8264, 7
        %v8266 = vsub.s32 %v5144, %v8265
        %v8267 = vrot.slane %v2434, %v8266
        %v8268 = vsel %vm5149, %v8267, %v8263
        %v8269 = vlaneseq
        %v8270 = vshrl.u32 %v8269, 7
        %v8271 = vsub.s32 %v5151, %v8270
        %v8272 = vrot.slane %v2435, %v8271
        %v8273 = vsel %vm5156, %v8272, %v8268
        %v8274 = vlaneseq
        %v8275 = vshrl.u32 %v8274, 7
        %v8276 = vsub.s32 %v5158, %v8275
        %v8277 = vrot.slane %v2436, %v8276
        %v8278 = vsel %vm5163, %v8277, %v8273
        %v8279 = vlaneseq
        %v8280 = vshrl.u32 %v8279, 7
        %v8281 = vsub.s32 %v5139, %v8280
        %v8282 = vrot.slane %v2437, %v8281
        %v8283 = vlaneseq
        %v8284 = vshrl.u32 %v8283, 7
        %v8285 = vsub.s32 %v5144, %v8284
        %v8286 = vrot.slane %v2438, %v8285
        %v8287 = vsel %vm5149, %v8286, %v8282
        %v8288 = vlaneseq
        %v8289 = vshrl.u32 %v8288, 7
        %v8290 = vsub.s32 %v5151, %v8289
        %v8291 = vrot.slane %v2439, %v8290
        %v8292 = vsel %vm5156, %v8291, %v8287
        %v8293 = vlaneseq
        %v8294 = vshrl.u32 %v8293, 7
        %v8295 = vsub.s32 %v5158, %v8294
        %v8296 = vrot.slane %v2440, %v8295
        %v8297 = vsel %vm5163, %v8296, %v8292
        %v8298 = vlaneseq
        %v8299 = vshrl.u32 %v8298, 7
        %v8300 = vsub.s32 %v5165, %v8299
        %v8301 = vrot.slane %v2441, %v8300
        %v8302 = vsel %vm5170, %v8301, %v8297
        %v8303 = vlaneseq
        %v8304 = vshrl.u32 %v8303, 7
        %v8305 = vsub.s32 %v5172, %v8304
        %v8306 = vrot.slane %v2442, %v8305
        %v8307 = vsel %vm5177, %v8306, %v8302
        %v8308 = vlaneseq
        %v8309 = vshrl.u32 %v8308, 7
        %v8310 = vsub.s32 %v5179, %v8309
        %v8311 = vrot.slane %v2443, %v8310
        %v8312 = vsel %vm5184, %v8311, %v8307
        %v8313 = vlaneseq
        %v8314 = vshrl.u32 %v8313, 7
        %v8315 = vsub.s32 %v5186, %v8314
        %v8316 = vrot.slane %v2444, %v8315
        %v8317 = vsel %vm5191, %v8316, %v8312
        %v8318 = vlaneseq
        %v8319 = vshrl.u32 %v8318, 7
        %v8320 = vsub.s32 %v5193, %v8319
        %v8321 = vrot.slane %v2445, %v8320
        %v8322 = vsel %vm5198, %v8321, %v8317
        %v8323 = vlaneseq
        %v8324 = vshrl.u32 %v8323, 7
        %v8325 = vsub.s32 %v5200, %v8324
        %v8326 = vrot.slane %v2446, %v8325
        %v8327 = vsel %vm5205, %v8326, %v8322
        %v8328 = vlaneseq
        %v8329 = vshrl.u32 %v8328, 7
        %v8330 = vsub.s32 %v5207, %v8329
        %v8331 = vrot.slane %v2447, %v8330
        %v8332 = vsel %vm5212, %v8331, %v8327
        %v8333 = vlaneseq
        %v8334 = vshrl.u32 %v8333, 7
        %v8335 = vsub.s32 %v5214, %v8334
        %v8336 = vrot.slane %v2448, %v8335
        %v8337 = vsel %vm5219, %v8336, %v8332
        %v8338 = vlaneseq
        %v8339 = vshrl.u32 %v8338, 7
        %v8340 = vsub.s32 %v5221, %v8339
        %v8341 = vrot.slane %v2449, %v8340
        %v8342 = vsel %vm5226, %v8341, %v8337
        %v8343 = vlaneseq
        %v8344 = vshrl.u32 %v8343, 7
        %v8345 = vsub.s32 %v5228, %v8344
        %v8346 = vrot.slane %v2450, %v8345
        %v8347 = vsel %vm5233, %v8346, %v8342
        %v8348 = vlaneseq
        %v8349 = vshrl.u32 %v8348, 7
        %v8350 = vsub.s32 %v5235, %v8349
        %v8351 = vrot.slane %v2451, %v8350
        %v8352 = vsel %vm5240, %v8351, %v8347
        %v8353 = vlaneseq
        %v8354 = vshrl.u32 %v8353, 7
        %v8355 = vsub.s32 %v5242, %v8354
        %v8356 = vrot.slane %v2452, %v8355
        %v8357 = vsel %vm5247, %v8356, %v8352
        %v8358 = vlaneseq
        %v8359 = vshrl.u32 %v8358, 7
        %v8360 = vsub.s32 %v5139, %v8359
        %v8361 = vrot.slane %v2453, %v8360
        %v8362 = vlaneseq
        %v8363 = vshrl.u32 %v8362, 7
        %v8364 = vsub.s32 %v5144, %v8363
        %v8365 = vrot.slane %v2454, %v8364
        %v8366 = vsel %vm5149, %v8365, %v8361
        %v8367 = vlaneseq
        %v8368 = vshrl.u32 %v8367, 7
        %v8369 = vsub.s32 %v5151, %v8368
        %v8370 = vrot.slane %v2455, %v8369
        %v8371 = vsel %vm5156, %v8370, %v8366
        %v8372 = vlaneseq
        %v8373 = vshrl.u32 %v8372, 7
        %v8374 = vsub.s32 %v5158, %v8373
        %v8375 = vrot.slane %v2456, %v8374
        %v8376 = vsel %vm5163, %v8375, %v8371
        %v8377 = vlaneseq
        %v8378 = vshrl.u32 %v8377, 7
        %v8379 = vsub.s32 %v5165, %v8378
        %v8380 = vrot.slane %v2457, %v8379
        %v8381 = vsel %vm5170, %v8380, %v8376
        %v8382 = vlaneseq
        %v8383 = vshrl.u32 %v8382, 7
        %v8384 = vsub.s32 %v5172, %v8383
        %v8385 = vrot.slane %v2458, %v8384
        %v8386 = vsel %vm5177, %v8385, %v8381
        %v8387 = vlaneseq
        %v8388 = vshrl.u32 %v8387, 7
        %v8389 = vsub.s32 %v5179, %v8388
        %v8390 = vrot.slane %v2459, %v8389
        %v8391 = vsel %vm5184, %v8390, %v8386
        %v8392 = vlaneseq
        %v8393 = vshrl.u32 %v8392, 7
        %v8394 = vsub.s32 %v5186, %v8393
        %v8395 = vrot.slane %v2460, %v8394
        %v8396 = vsel %vm5191, %v8395, %v8391
        %v8397 = vlaneseq
        %v8398 = vshrl.u32 %v8397, 7
        %v8399 = vsub.s32 %v5193, %v8398
        %v8400 = vrot.slane %v2461, %v8399
        %v8401 = vsel %vm5198, %v8400, %v8396
        %v8402 = vlaneseq
        %v8403 = vshrl.u32 %v8402, 7
        %v8404 = vsub.s32 %v5200, %v8403
        %v8405 = vrot.slane %v2462, %v8404
        %v8406 = vsel %vm5205, %v8405, %v8401
        %v8407 = vlaneseq
        %v8408 = vshrl.u32 %v8407, 7
        %v8409 = vsub.s32 %v5207, %v8408
        %v8410 = vrot.slane %v2463, %v8409
        %v8411 = vsel %vm5212, %v8410, %v8406
        %v8412 = vlaneseq
        %v8413 = vshrl.u32 %v8412, 7
        %v8414 = vsub.s32 %v5214, %v8413
        %v8415 = vrot.slane %v2464, %v8414
        %v8416 = vsel %vm5219, %v8415, %v8411
        %v8417 = vlaneseq
        %v8418 = vshrl.u32 %v8417, 7
        %v8419 = vsub.s32 %v5221, %v8418
        %v8420 = vrot.slane %v2465, %v8419
        %v8421 = vsel %vm5226, %v8420, %v8416
        %v8422 = vlaneseq
        %v8423 = vshrl.u32 %v8422, 7
        %v8424 = vsub.s32 %v5228, %v8423
        %v8425 = vrot.slane %v2466, %v8424
        %v8426 = vsel %vm5233, %v8425, %v8421
        %v8427 = vlaneseq
        %v8428 = vshrl.u32 %v8427, 7
        %v8429 = vsub.s32 %v5235, %v8428
        %v8430 = vrot.slane %v2467, %v8429
        %v8431 = vsel %vm5240, %v8430, %v8426
        %v8432 = vlaneseq
        %v8433 = vshrl.u32 %v8432, 7
        %v8434 = vsub.s32 %v5242, %v8433
        %v8435 = vrot.slane %v2468, %v8434
        %v8436 = vsel %vm5247, %v8435, %v8431
        %v8437 = vlaneseq
        %v8438 = vshrl.u32 %v8437, 7
        %v8439 = vsub.s32 %v5139, %v8438
        %v8440 = vrot.slane %v2469, %v8439
        %v8441 = vlaneseq
        %v8442 = vshrl.u32 %v8441, 7
        %v8443 = vsub.s32 %v5144, %v8442
        %v8444 = vrot.slane %v2470, %v8443
        %v8445 = vsel %vm5149, %v8444, %v8440
        %v8446 = vlaneseq
        %v8447 = vshrl.u32 %v8446, 7
        %v8448 = vsub.s32 %v5151, %v8447
        %v8449 = vrot.slane %v2471, %v8448
        %v8450 = vsel %vm5156, %v8449, %v8445
        %v8451 = vlaneseq
        %v8452 = vshrl.u32 %v8451, 7
        %v8453 = vsub.s32 %v5158, %v8452
        %v8454 = vrot.slane %v2472, %v8453
        %v8455 = vsel %vm5163, %v8454, %v8450
        %v8456 = vsel %vm1233, %v7295, %v7118
        %v8457 = vsel %vm1235, %v7472, %v8456
        %v8458 = vsel %vm1237, %v7649, %v8457
        %v8459 = vsel %vm1239, %v7826, %v8458
        %v8460 = vsel %vm1241, %v8003, %v8459
        %v8461 = vsel %vm1243, %v8180, %v8460
        %v8462 = vsel %vm1245, %v8357, %v8461
        %v8463 = vsel %vm1233, %v7374, %v7197
        %v8464 = vsel %vm1235, %v7551, %v8463
        %v8465 = vsel %vm1237, %v7728, %v8464
        %v8466 = vsel %vm1239, %v7905, %v8465
        %v8467 = vsel %vm1241, %v8082, %v8466
        %v8468 = vsel %vm1243, %v8259, %v8467
        %v8469 = vsel %vm1245, %v8436, %v8468
        %v8470 = vsel %vm1233, %v7393, %v7216
        %v8471 = vsel %vm1235, %v7570, %v8470
        %v8472 = vsel %vm1237, %v7747, %v8471
        %v8473 = vsel %vm1239, %v7924, %v8472
        %v8474 = vsel %vm1241, %v8101, %v8473
        %v8475 = vsel %vm1243, %v8278, %v8474
        %v8476 = vsel %vm1245, %v8455, %v8475
        %v8479 = vsel %vm6609, %v8476, 0
        %8481 = vmatprep.subr.mxu0 0.0
        %8482 = vmatpush1.msra.mxu0 %v2473
        %8483 = vmatprep.subr.mxu0 0.0
        %8484 = vmatpush1.msra.mxu0 %v2474
        %8485 = vmatprep.subr.mxu0 0.0
        %8486 = vmatpush1.msra.mxu0 %v2475
        %8487 = vmatprep.subr.mxu0 0.0
        %8488 = vmatpush1.msra.mxu0 %v2476
        %8489 = vmatprep.subr.mxu0 0.0
        %8490 = vmatpush1.msra.mxu0 %v2477
        %8491 = vmatprep.subr.mxu0 0.0
        %8492 = vmatpush1.msra.mxu0 %v2478
        %8493 = vmatprep.subr.mxu0 0.0
        %8494 = vmatpush1.msra.mxu0 %v2479
        %8495 = vmatprep.subr.mxu0 0.0
        %8496 = vmatpush1.msra.mxu0 %v2480
        %8497 = vmatprep.subr.mxu0 0.0
        %8498 = vmatpush1.msra.mxu0 %v2481
        %8499 = vmatprep.subr.mxu0 0.0
        %8500 = vmatpush1.msra.mxu0 %v2482
        %8501 = vmatprep.subr.mxu0 0.0
        %8502 = vmatpush1.msra.mxu0 %v2483
        %8503 = vmatprep.subr.mxu0 0.0
        %8504 = vmatpush1.msra.mxu0 %v2484
        %8505 = vmatprep.subr.mxu0 0.0
        %8506 = vmatpush1.msra.mxu0 %v2485
        %8507 = vmatprep.subr.mxu0 0.0
        %8508 = vmatpush1.msra.mxu0 %v2486
        %8509 = vmatprep.subr.mxu0 0.0
        %8510 = vmatpush1.msra.mxu0 %v2487
        %8511 = vmatprep.subr.mxu0 0.0
        %8512 = vmatpush1.msra.mxu0 %v2488
        %8513 = vmatprep.subr.mxu0 0.0
        %8514 = vmatpush1.msra.mxu0 %v2489
        %8515 = vmatprep.subr.mxu0 0.0
        %8516 = vmatpush1.msra.mxu0 %v2490
        %8517 = vmatprep.subr.mxu0 0.0
        %8518 = vmatpush1.msra.mxu0 %v2491
        %8519 = vmatprep.subr.mxu0 0.0
        %8520 = vmatpush1.msra.mxu0 %v2492
        %8521 = vmatprep.subr.mxu0 0.0
        %8522 = vmatpush1.msra.mxu0 %v2493
        %8523 = vmatprep.subr.mxu0 0.0
        %8524 = vmatpush1.msra.mxu0 %v2494
        %8525 = vmatprep.subr.mxu0 0.0
        %8526 = vmatpush1.msra.mxu0 %v2495
        %8527 = vmatprep.subr.mxu0 0.0
        %8528 = vmatpush1.msra.mxu0 %v2496
        %8529 = vmatprep.subr.mxu0 0.0
        %8530 = vmatpush1.msra.mxu0 %v2497
        %8531 = vmatprep.subr.mxu0 0.0
        %8532 = vmatpush1.msra.mxu0 %v2498
        %8533 = vmatprep.subr.mxu0 0.0
        %8534 = vmatpush1.msra.mxu0 %v2499
        %8535 = vmatprep.subr.mxu0 0.0
        %8536 = vmatpush1.msra.mxu0 %v2500
        %8537 = vmatprep.subr.mxu0 0.0
        %8538 = vmatpush1.msra.mxu0 %v2501
        %8539 = vmatprep.subr.mxu0 0.0
        %8540 = vmatpush1.msra.mxu0 %v2502
        %8541 = vmatprep.subr.mxu0 0.0
        %8542 = vmatpush1.msra.mxu0 %v2503
        %8543 = vmatprep.subr.mxu0 0.0
        %8544 = vmatpush1.msra.mxu0 %v2504
        %8545 = vmatprep.mubr.f32.mxu0 %v8469
        %8546 = vmatmul.mubr.f32.gmra.mrb[0].mxu0 %v8462
        %v8547 = vpop.f32.mrb[0].mxu0
        %v8548 = vadd.f32 %v6749, %v8547
        %v8549 = vpop.f32.mrb[0].mxu0
        %8550 = vdwg.mxu0
        %8551 = vmatprep.subr.mxu0 0.0
        %8552 = vmatpush1.msra.mxu0 %v2505
        %8553 = vmatprep.subr.mxu0 0.0
        %8554 = vmatpush1.msra.mxu0 %v2506
        %8555 = vmatprep.subr.mxu0 0.0
        %8556 = vmatpush1.msra.mxu0 %v2507
        %8557 = vmatprep.subr.mxu0 0.0
        %8558 = vmatpush1.msra.mxu0 %v2508
        %8559 = vmatprep.subr.mxu0 0.0
        %8560 = vmatpush1.msra.mxu0 0.0
        %8561 = vmatprep.subr.mxu0 0.0
        %8562 = vmatpush1.msra.mxu0 0.0
        %8563 = vmatprep.subr.mxu0 0.0
        %8564 = vmatpush1.msra.mxu0 0.0
        %8565 = vmatprep.subr.mxu0 0.0
        %8566 = vmatpush1.msra.mxu0 0.0
        %8567 = vmatprep.subr.mxu0 0.0
        %8568 = vmatpush1.msra.mxu0 0.0
        %8569 = vmatprep.subr.mxu0 0.0
        %8570 = vmatpush1.msra.mxu0 0.0
        %8571 = vmatprep.subr.mxu0 0.0
        %8572 = vmatpush1.msra.mxu0 0.0
        %8573 = vmatprep.subr.mxu0 0.0
        %8574 = vmatpush1.msra.mxu0 0.0
        %8575 = vmatprep.subr.mxu0 0.0
        %8576 = vmatpush1.msra.mxu0 0.0
        %8577 = vmatprep.subr.mxu0 0.0
        %8578 = vmatpush1.msra.mxu0 0.0
        %8579 = vmatprep.subr.mxu0 0.0
        %8580 = vmatpush1.msra.mxu0 0.0
        %8581 = vmatprep.subr.mxu0 0.0
        %8582 = vmatpush1.msra.mxu0 0.0
        %8583 = vmatprep.subr.mxu0 0.0
        %8584 = vmatpush1.msra.mxu0 0.0
        %8585 = vmatprep.subr.mxu0 0.0
        %8586 = vmatpush1.msra.mxu0 0.0
        %8587 = vmatprep.subr.mxu0 0.0
        %8588 = vmatpush1.msra.mxu0 0.0
        %8589 = vmatprep.subr.mxu0 0.0
        %8590 = vmatpush1.msra.mxu0 0.0
        %8591 = vmatprep.subr.mxu0 0.0
        %8592 = vmatpush1.msra.mxu0 0.0
        %8593 = vmatprep.subr.mxu0 0.0
        %8594 = vmatpush1.msra.mxu0 0.0
        %8595 = vmatprep.subr.mxu0 0.0
        %8596 = vmatpush1.msra.mxu0 0.0
        %8597 = vmatprep.subr.mxu0 0.0
        %8598 = vmatpush1.msra.mxu0 0.0
        %8599 = vmatprep.subr.mxu0 0.0
        %8600 = vmatpush1.msra.mxu0 0.0
        %8601 = vmatprep.subr.mxu0 0.0
        %8602 = vmatpush1.msra.mxu0 0.0
        %8603 = vmatprep.subr.mxu0 0.0
        %8604 = vmatpush1.msra.mxu0 0.0
        %8605 = vmatprep.subr.mxu0 0.0
        %8606 = vmatpush1.msra.mxu0 0.0
        %8607 = vmatprep.subr.mxu0 0.0
        %8608 = vmatpush1.msra.mxu0 0.0
        %8609 = vmatprep.subr.mxu0 0.0
        %8610 = vmatpush1.msra.mxu0 0.0
        %8611 = vmatprep.subr.mxu0 0.0
        %8612 = vmatpush1.msra.mxu0 0.0
        %8613 = vmatprep.subr.mxu0 0.0
        %8614 = vmatpush1.msra.mxu0 0.0
        %8615 = vmatprep.mubr.f32.mxu0 0.0
        %8616 = vmatmul.mubr.f32.gmra.mrb[0].mxu0 %v8479
        %v8617 = vpop.f32.mrb[0].mxu0
        %v8618 = vadd.f32 %v8548, %v8617
        %v8619 = vpop.f32.mrb[0].mxu0
        %8620 = vdwg.mxu0
        %8621 = vst [vmem:[%s266] sm:$0xff] %v8618
        %p8622 = scmp.lt.s32.totalorder %s22, 1
        %s8623 = scalar_select %p8622, %s22, 1
        %s8624 = smul.addr %s8623, 8
        %s8625 = scalar_lea.vmem %s5, %s8624
        %s8626 = sand.u32 %s166, 1
        %s8627 = scalar_lea.sflag [#allocation4], %s8626
        %s8628 = sand.u32 %s166, 1
        %s8629 = smul.addr %s8628, 8
        %s8630 = scalar_lea.vmem [#allocation3], %s8629
        // Predicated region
        $region41: #{dcl_head.1} parent=39 // pred_check
          %p8631 = pneg %p150
        $region42: #{dcl_head.1} parent=39 // pred_check_branch
          %8633 = sbr.rel (%p8631) target = $region44
        $region43: #{dcl_head.1} parent=39 // pred_region
          _
        $region44: #{dcl_head.1} parent=39 // pred_fallthru
          _
        // Predicated region
        $region45: #{dcl_head.1} parent=39 // pred_check
          %p8634 = pneg %p176
        $region46: #{dcl_head.1} parent=39 // pred_check_branch
          %8636 = sbr.rel (%p8634) target = $region48
        $region47: #{dcl_head.1} parent=39 // pred_region
          %s8638 = ssub.s32 128, 128
          %8639 = vsyncadd %s8627, %s8638
          %s8640 = smul.addr %s22, 128
          %s8641 = scalar_lea.hbm %s6, %s8640
          %s8643 = sshll.u32 %s8630, 4
          %s8644 = int_to_ptr.vmem [resolvable:$true] %s8643
          %8646 = dma.vmem_to_hbm [thread:$0]  %s8644, 128, %s8641, %s8627
        $region48: #{dcl_head.1} parent=39 // pred_fallthru
          _
      $region40: #{dcl_head.1} parent=5 // pred_fallthru
        _
      %p8647 = scmp.le.s32.totalorder 2, %s17
      // Predicated region
      $region49: #{dcl_head.1} parent=5 // pred_check
        %p8648 = pneg %p8647
      $region50: #{dcl_head.1} parent=5 // pred_check_branch
        %8650 = sbr.rel (%p8648) target = $region52
      $region51: #{dcl_head.1} parent=5 // pred_region
        %s8651 = ssub.s32 %s17, 2
        // Predicated region
        $region53: #{dcl_head.1} parent=51 // pred_check
          %p8652 = pneg %p156
        $region54: #{dcl_head.1} parent=51 // pred_check_branch
          %8654 = sbr.rel (%p8652) target = $region56
        $region55: #{dcl_head.1} parent=51 // pred_region
          %p8655 = scmp.lt.s32.totalorder %s23, 1
          %s8656 = scalar_select %p8655, %s23, 1
          %s8657 = smul.addr %s8656, 8
          %s8658 = scalar_lea.vmem %s5, %s8657
        $region56: #{dcl_head.1} parent=51 // pred_fallthru
          _
        // Predicated region
        $region57: #{dcl_head.1} parent=51 // pred_check
          %p8659 = pneg %p182
        $region58: #{dcl_head.1} parent=51 // pred_check_branch
          %8661 = sbr.rel (%p8659) target = $region60
        $region59: #{dcl_head.1} parent=51 // pred_region
          %s8662 = sand.u32 %s167, 1
          %s8663 = scalar_lea.sflag [#allocation4], %s8662
          %s8664 = sand.u32 %s167, 1
          %s8665 = smul.addr %s8664, 8
          %s8666 = scalar_lea.vmem [#allocation3], %s8665
          %8667 = dma.done %s8663, 128
        $region60: #{dcl_head.1} parent=51 // pred_fallthru
          _
      $region52: #{dcl_head.1} parent=5 // pred_fallthru
        _
    $region6: #{dcl_head.1} parent=1 // loop_footer
      %s21 = sadd.s32 1, %s17
    $region7: #{dcl_head.1} parent=1 // loop_footer_branch
      %16 = sbr.rel target = $region3
    $region8: #{dcl_head.1} parent=1 // loop_exit
      _
    %8668 = vsyncpa [#allocation4], 1
    %s8669 = scalar_lea.sflag [#allocation4], 1
    %8670 = vsyncpa %s8669, 1

</llo_original>
